<compile_context>
chip_gen: v5e
topology: v5e:2x2
jax: 0.10.0
libtpu: 0.0.40
codegen_flags: <defaults>
</compile_context>

<pallas_src>
import functools

import jax
import jax.numpy as jnp
from jax import lax
from jax.experimental import pallas as pl
from jax.experimental.pallas import tpu as pltpu


# ------------------------------ fused kernel --------------------------------

def _r_fused_kernel(x_ref, qkvw_ref, qkvb_ref, wzt_ref, wzb_ref, cw_ref,
                    o_ref, zp_ref, y1_ref, *, num_block):
    """Whole R.forward for ONE image, channel-first.

    x_ref   : (Cin, H*W)      VMEM  flattened NCHW input planes
    qkvw_ref: (3*Ci, Cin)     VMEM  stacked [theta; phi; g] 1x1 weights (transposed)
    qkvb_ref: (3*Ci, 1)       VMEM  stacked biases
    wzt_ref : (Cin, Ci)       VMEM  W_z weight (transposed)
    wzb_ref : (Cin, 1)        VMEM  W_z bias
    cw_ref  : (flat,)         SMEM  [w1 | b1 | w2 | b2] conv weights & biases
    o_ref   : (Cout, H, W)    VMEM  final output planes (NCHW overall)
    zp_ref  : (Cin, H+4, W+4) VMEM  scratch: non-local output, zero-padded by 2
    y1_ref  : (mid, H+2, W+2) VMEM  scratch: conv1 output on the extended domain
    """
    Cin, L = x_ref.shape
    Cout, H, W = o_ref.shape
    mid = y1_ref.shape[0]
    Ci = qkvw_ref.shape[0] // 3
    Hb = H // num_block
    Lr = Hb * W
    He, We = H + 2, W + 2

    # ---------------- non-local block (channel-first, lane-dense) ----------------
    x = x_ref[...]                                                      # (Cin, L)
    # fused QKV projection for the whole image: one small MXU pass
    qkv = jnp.dot(qkvw_ref[...], x,
                  preferred_element_type=jnp.float32) + qkvb_ref[...]   # (3*Ci, L)
    theta = qkv[0:Ci]
    phi = qkv[Ci:2 * Ci]
    g = qkv[2 * Ci:3 * Ci]

    # zero the 2-pixel halo; the interior is overwritten by the region scatter.
    zp_ref[...] = jnp.zeros_like(zp_ref)

    for b in range(num_block):                          # static unroll (4)
        lo = b * Lr
        th_r = theta[:, lo:lo + Lr]                     # (Ci, Lr)
        ph_r = phi[:, lo:lo + Lr]
        g_r = g[:, lo:lo + Lr]
        # scores f[l, m] = sum_c th_r[c, l] * ph_r[c, m]  -> (Lr, Lr)
        f = lax.dot_general(th_r, ph_r, (((0,), (0,)), ((), ())),
                            preferred_element_type=jnp.float32)
        f = f - jnp.max(f, axis=-1, keepdims=True)
        p = jnp.exp(f)
        attn = p / jnp.sum(p, axis=-1, keepdims=True)   # exact divide (parity)
        # y_r[c, l] = sum_m g_r[c, m] * attn[l, m]       -> (Ci, Lr)
        y_r = lax.dot_general(g_r, attn, (((1,), (1,)), ((), ())),
                              preferred_element_type=jnp.float32)
        z_r = (jnp.dot(wzt_ref[...], y_r, preferred_element_type=jnp.float32)
               + wzb_ref[...] + x[:, lo:lo + Lr])       # residual, (Cin, Lr)
        # scatter this region's rows into the 2-padded spatial scratch (NCHW planes)
        for hl in range(Hb):
            gh = b * Hb + hl
            zp_ref[:, 2 + gh, 2:2 + W] = z_r[:, hl * W:(hl + 1) * W]

    # ------- conv1 (3x3, pad=1) evaluated on the extended (H+2, W+2) domain -------
    # interior mask (hoisted once): forces conv1's halo ring to the zero padding
    # that conv2 expects from PyTorch.
    ii = lax.broadcasted_iota(jnp.int32, (He, We), 0)
    jj = lax.broadcasted_iota(jnp.int32, (He, We), 1)
    interior = ((ii >= 1) & (ii <= H) & (jj >= 1) & (jj <= W)).astype(jnp.float32)

    b1_off = 9 * Cin * mid
    w2_off = b1_off + mid
    b2_off = w2_off + 9 * mid * Cout

    acc1 = [jnp.full((He, We), cw_ref[b1_off + m], jnp.float32) for m in range(mid)]
    for dy in range(3):
        for dx in range(3):
            for c in range(Cin):
                plane = zp_ref[c, dy:dy + He, dx:dx + We]
                base = (dy * 3 + dx) * Cin * mid + c * mid
                for m in range(mid):
                    acc1[m] = acc1[m] + plane * cw_ref[base + m]
    for m in range(mid):
        y1_ref[m] = acc1[m] * interior

    # -------- conv2 (3x3, pad=1) + fused InstanceNorm2d(eps=1e-5, affine=False) ----
    acc2 = [jnp.full((H, W), cw_ref[b2_off + o], jnp.float32) for o in range(Cout)]
    for dy in range(3):
        for dx in range(3):
            for m in range(mid):
                plane = y1_ref[m, dy:dy + H, dx:dx + W]
                base = w2_off + (dy * 3 + dx) * mid * Cout + m * Cout
                for o in range(Cout):
                    acc2[o] = acc2[o] + plane * cw_ref[base + o]

    inv_hw = 1.0 / float(H * W)
    for o in range(Cout):
        a = acc2[o]
        mean = jnp.sum(jnp.sum(a, axis=1, keepdims=True), axis=0, keepdims=True) * inv_hw
        d = a - mean
        var = jnp.sum(jnp.sum(d * d, axis=1, keepdims=True), axis=0, keepdims=True) * inv_hw
        # LeakyReLU(True): negative_slope == 1.0 -> identity, nothing to apply.
        o_ref[o] = d * lax.rsqrt(var + 1e-5)


# ------------------------------ host wrapper ---------------------------------

def r_forward(x_nchw, params, num_block=4):
    x = x_nchw.astype(jnp.float32)
    N, Cin, H, W = x.shape
    assert H % num_block == 0
    L = H * W
    Ci = params["theta_w"].shape[1]
    mid = params["w1"].shape[-1]
    Cout = params["w2"].shape[-1]

    x_flat = x.reshape(N, Cin, L)        # contiguous NCHW -> free metadata reshape

    # pack the six 1x1-projection operands into two arrays (fewer DMA descriptors)
    qkv_w = jnp.concatenate(
        [params["theta_w"].T, params["phi_w"].T, params["g_w"].T], axis=0)       # (3*Ci, Cin)
    qkv_b = jnp.concatenate(
        [params["theta_b"], params["phi_b"], params["g_b"]], axis=1).reshape(3 * Ci, 1)
    wz_t = params["wz_w"].T                                                       # (Cin, Ci)
    wz_b = params["wz_b"].reshape(Cin, 1)
    # pack both convs' weights and biases into one flat SMEM vector
    cw = jnp.concatenate([params["w1"].reshape(-1), params["b1"].reshape(-1),
                          params["w2"].reshape(-1), params["b2"].reshape(-1)])

    kernel = functools.partial(_r_fused_kernel, num_block=num_block)
    smem = pl.BlockSpec(memory_space=pltpu.MemorySpace.SMEM)
    return pl.pallas_call(
        kernel,
        out_shape=jax.ShapeDtypeStruct((N, Cout, H, W), jnp.float32),
        grid=(N,),
        in_specs=[
            pl.BlockSpec((None, Cin, L), lambda n: (n, 0, 0)),
            pl.BlockSpec((3 * Ci, Cin), lambda n: (0, 0)),
            pl.BlockSpec((3 * Ci, 1), lambda n: (0, 0)),
            pl.BlockSpec((Cin, Ci), lambda n: (0, 0)),
            pl.BlockSpec((Cin, 1), lambda n: (0, 0)),
            smem,
        ],
        out_specs=pl.BlockSpec((None, Cout, H, W), lambda n: (n, 0, 0, 0)),
        scratch_shapes=[
            pltpu.VMEM((Cin, H + 4, W + 4), jnp.float32),
            pltpu.VMEM((mid, H + 2, W + 2), jnp.float32),
        ],
        compiler_params=pltpu.CompilerParams(
            dimension_semantics=("parallel",),           # 2-wide: both v7x TCs busy
            vmem_limit_bytes=32 * 1024 * 1024),
    )(x_flat, qkv_w, qkv_b, wz_t, wz_b, cw)


# --------------------------- deterministic params ----------------------------

def init_params(key, in_ch, ou_ch):
    ci = in_ch // 2     # non-local inter channels
    mid = in_ch // 3    # first conv output channels
    ks = jax.random.split(key, 10)

    def w(k, shape, fan_in):
        return jax.random.normal(k, shape, jnp.float32) / jnp.sqrt(float(fan_in))

    return {
        # non-local block 1x1 convs (as matrices) + biases
        "theta_w": w(ks[0], (in_ch, ci), in_ch), "theta_b": 0.01 * jnp.ones((1, ci), jnp.float32),
        "phi_w":   w(ks[1], (in_ch, ci), in_ch), "phi_b":   0.02 * jnp.ones((1, ci), jnp.float32),
        "g_w":     w(ks[2], (in_ch, ci), in_ch), "g_b":     0.03 * jnp.ones((1, ci), jnp.float32),
        "wz_w":    w(ks[3], (ci, in_ch), ci),    "wz_b":    0.01 * jnp.ones((1, in_ch), jnp.float32),
        # 3x3 convs, HWIO layout
        "w1": w(ks[4], (3, 3, in_ch, mid), 9 * in_ch), "b1": 0.01 * jnp.ones((mid,), jnp.float32),
        "w2": w(ks[5], (3, 3, mid, ou_ch), 9 * mid),   "b2": 0.02 * jnp.ones((ou_ch,), jnp.float32),
    }


# ------------------------------ pure-JAX check -------------------------------

def reference(x_nchw, p, num_block):
    with jax.default_matmul_precision("highest"):
        x = jnp.transpose(x_nchw, (0, 2, 3, 1)).astype(jnp.float32)
        N, H, W, C = x.shape
        xr = x.reshape(N, num_block, (H // num_block) * W, C)
        th = xr @ p["theta_w"] + p["theta_b"]
        ph = xr @ p["phi_w"] + p["phi_b"]
        g = xr @ p["g_w"] + p["g_b"]
        f = jnp.einsum("nblc,nbmc->nblm", th, ph)
        attn = jax.nn.softmax(f, axis=-1)
        y = jnp.einsum("nblm,nbmc->nblc", attn, g)
        x = (y @ p["wz_w"] + p["wz_b"] + xr).reshape(N, H, W, C)
        dn = ("NHWC", "HWIO", "NHWC")
        x = lax.conv_general_dilated(x, p["w1"], (1, 1), "SAME", dimension_numbers=dn) + p["b1"]
        x = lax.conv_general_dilated(x, p["w2"], (1, 1), "SAME", dimension_numbers=dn) + p["b2"]
        mean = jnp.mean(x, axis=(1, 2), keepdims=True)
        var = jnp.mean(jnp.square(x - mean), axis=(1, 2), keepdims=True)
        y = (x - mean) * lax.rsqrt(var + 1e-5)
        y = jnp.where(y >= 0.0, y, 1.0 * y)   # LeakyReLU(negative_slope=1.0) == identity
        return jnp.transpose(y, (0, 3, 1, 2))


if __name__ == "__main__":
    in_ch, ou_ch = 6, 4          # in_ch // 3 = 2, in_ch // 2 = 3
    N, H, W = 2, 16, 16
    num_block = 4

    key = jax.random.PRNGKey(0)
    kx, kp = jax.random.split(key)
    x = jax.random.normal(kx, (N, in_ch, H, W), jnp.float32)
    params = init_params(kp, in_ch, ou_ch)

    fwd = jax.jit(r_forward, static_argnames=("num_block",))
    out = jax.block_until_ready(fwd(x, params, num_block=num_block))
    assert out.shape == (N, ou_ch, H, W), out.shape

    ref = reference(x, params, num_block)
    # Softmax division is now exact and the reference runs at HIGHEST precision;
    # the 1e-2 bound leaves explicit margin for the MXU's default-precision
    # (bf16-pass) handling of f32 matmuls inside the kernel.
    err = float(jnp.max(jnp.abs(out - ref)))
    assert jnp.allclose(out, ref, atol=1e-2, rtol=1e-2), err

    print("KERNEL_OK")
</pallas_src>

<mosaic_0001>
module attributes {stable_mosaic.version = 11 : i64} {
  func.func @_r_fused_kernel(%arg0: i32, %arg1: memref<1x6x256xf32, #tpu.memory_space<vmem>>, %arg2: memref<9x6xf32, #tpu.memory_space<vmem>>, %arg3: memref<9x1xf32, #tpu.memory_space<vmem>>, %arg4: memref<6x3xf32, #tpu.memory_space<vmem>>, %arg5: memref<6x1xf32, #tpu.memory_space<vmem>>, %arg6: memref<186xf32, #tpu.memory_space<smem>>, %arg7: memref<1x4x16x16xf32, #tpu.memory_space<vmem>>, %arg8: memref<6x20x20xf32, #tpu.memory_space<vmem>>, %arg9: memref<2x18x18xf32, #tpu.memory_space<vmem>>) attributes {dimension_semantics = [#tpu.dimension_semantics<parallel>], iteration_bounds = array<i64: 2>, scalar_prefetch = 0 : i64, scratch_operands = 2 : i64, tpu.core_type = #tpu.core_type<tc>, window_params = [{transform_indices = @transform_0, window_bounds = array<i64: 1, 6, 256>}, {pipeline_mode = #tpu.pipeline_mode<synchronous>, transform_indices = @transform_1, window_bounds = array<i64: 9, 6>}, {pipeline_mode = #tpu.pipeline_mode<synchronous>, transform_indices = @transform_2, window_bounds = array<i64: 9, 1>}, {pipeline_mode = #tpu.pipeline_mode<synchronous>, transform_indices = @transform_3, window_bounds = array<i64: 6, 3>}, {pipeline_mode = #tpu.pipeline_mode<synchronous>, transform_indices = @transform_4, window_bounds = array<i64: 6, 1>}, {transform_indices = @transform_5, window_bounds = array<i64: 186>}, {transform_indices = @transform_6, window_bounds = array<i64: 1, 4, 16, 16>}]} {
    %c0 = arith.constant 0 : index
    %c0_0 = arith.constant 0 : index
    %c0_1 = arith.constant 0 : index
    %0 = vector.load %arg1[%c0, %c0_0, %c0_1] : memref<1x6x256xf32, #tpu.memory_space<vmem>>, vector<1x6x256xf32>
    %1 = vector.shape_cast %0 : vector<1x6x256xf32> to vector<6x256xf32>
    %c0_2 = arith.constant 0 : index
    %c0_3 = arith.constant 0 : index
    %2 = vector.load %arg2[%c0_2, %c0_3] : memref<9x6xf32, #tpu.memory_space<vmem>>, vector<9x6xf32>
    %cst = arith.constant dense<0.000000e+00> : vector<9x256xf32>
    %3 = tpu.matmul %2, %1, %cst {dimension_numbers = #tpu.dot_dimension_numbers<[1], [0], [0], [1], [0, 0, 1, 1], [], []>} : vector<9x6xf32>, vector<6x256xf32>, vector<9x256xf32> -> vector<9x256xf32>
    %c0_4 = arith.constant 0 : index
    %c0_5 = arith.constant 0 : index
    %4 = vector.load %arg3[%c0_4, %c0_5] : memref<9x1xf32, #tpu.memory_space<vmem>>, vector<9x1xf32>
    %5 = vector.broadcast %4 : vector<9x1xf32> to vector<9x256xf32>
    %6 = arith.addf %3, %5 : vector<9x256xf32>
    %7 = vector.extract_strided_slice %6 {offsets = [0, 0], sizes = [3, 256], strides = [1, 1]} : vector<9x256xf32> to vector<3x256xf32>
    %8 = vector.extract_strided_slice %6 {offsets = [3, 0], sizes = [3, 256], strides = [1, 1]} : vector<9x256xf32> to vector<3x256xf32>
    %9 = vector.extract_strided_slice %6 {offsets = [6, 0], sizes = [3, 256], strides = [1, 1]} : vector<9x256xf32> to vector<3x256xf32>
    %cst_6 = arith.constant 0.000000e+00 : f32
    %10 = vector.broadcast %cst_6 : f32 to vector<6x20x20xf32>
    %c0_7 = arith.constant 0 : index
    %c0_8 = arith.constant 0 : index
    %c0_9 = arith.constant 0 : index
    %11 = vector.load %arg8[%c0_7, %c0_8, %c0_9] : memref<6x20x20xf32, #tpu.memory_space<vmem>>, vector<6x20x20xf32>
    tpu.vector_store %arg8[%c0_7, %c0_8, %c0_9], %10 {strides = array<i32>} : memref<6x20x20xf32, #tpu.memory_space<vmem>>, vector<6x20x20xf32>,
    %12 = vector.extract_strided_slice %7 {offsets = [0, 0], sizes = [3, 64], strides = [1, 1]} : vector<3x256xf32> to vector<3x64xf32>
    %13 = vector.extract_strided_slice %8 {offsets = [0, 0], sizes = [3, 64], strides = [1, 1]} : vector<3x256xf32> to vector<3x64xf32>
    %14 = vector.extract_strided_slice %9 {offsets = [0, 0], sizes = [3, 64], strides = [1, 1]} : vector<3x256xf32> to vector<3x64xf32>
    %cst_10 = arith.constant dense<0.000000e+00> : vector<64x64xf32>
    %15 = tpu.matmul %12, %13, %cst_10 {dimension_numbers = #tpu.dot_dimension_numbers<[0], [0], [1], [1], [0, 1, 1, 1], [], []>} : vector<3x64xf32>, vector<3x64xf32>, vector<64x64xf32> -> vector<64x64xf32>
    %cst_11 = arith.constant dense<0xFF800000> : vector<64xf32>
    %16 = vector.multi_reduction <maximumf>, %15, %cst_11 [1] : vector<64x64xf32> to vector<64xf32>
    %17 = vector.shape_cast %16 : vector<64xf32> to vector<64x1xf32>
    %18 = vector.broadcast %17 : vector<64x1xf32> to vector<64x64xf32>
    %19 = arith.subf %15, %18 : vector<64x64xf32>
    %20 = math.exp %19 : vector<64x64xf32>
    %cst_12 = arith.constant dense<0.000000e+00> : vector<64xf32>
    %21 = vector.multi_reduction <add>, %20, %cst_12 [1] : vector<64x64xf32> to vector<64xf32>
    %22 = vector.shape_cast %21 : vector<64xf32> to vector<64x1xf32>
    %23 = vector.broadcast %22 : vector<64x1xf32> to vector<64x64xf32>
    %24 = arith.divf %20, %23 : vector<64x64xf32>
    %cst_13 = arith.constant dense<0.000000e+00> : vector<3x64xf32>
    %25 = tpu.matmul %14, %24, %cst_13 {dimension_numbers = #tpu.dot_dimension_numbers<[1], [1], [0], [0], [0, 0, 1, 0], [], []>} : vector<3x64xf32>, vector<64x64xf32>, vector<3x64xf32> -> vector<3x64xf32>
    %c0_14 = arith.constant 0 : index
    %c0_15 = arith.constant 0 : index
    %26 = vector.load %arg4[%c0_14, %c0_15] : memref<6x3xf32, #tpu.memory_space<vmem>>, vector<6x3xf32>
    %cst_16 = arith.constant dense<0.000000e+00> : vector<6x64xf32>
    %27 = tpu.matmul %26, %25, %cst_16 {dimension_numbers = #tpu.dot_dimension_numbers<[1], [0], [0], [1], [0, 0, 1, 1], [], []>} : vector<6x3xf32>, vector<3x64xf32>, vector<6x64xf32> -> vector<6x64xf32>
    %c0_17 = arith.constant 0 : index
    %c0_18 = arith.constant 0 : index
    %28 = vector.load %arg5[%c0_17, %c0_18] : memref<6x1xf32, #tpu.memory_space<vmem>>, vector<6x1xf32>
    %29 = vector.broadcast %28 : vector<6x1xf32> to vector<6x64xf32>
    %30 = arith.addf %27, %29 : vector<6x64xf32>
    %31 = vector.extract_strided_slice %1 {offsets = [0, 0], sizes = [6, 64], strides = [1, 1]} : vector<6x256xf32> to vector<6x64xf32>
    %32 = arith.addf %30, %31 : vector<6x64xf32>
    %33 = vector.extract_strided_slice %32 {offsets = [0, 0], sizes = [6, 16], strides = [1, 1]} : vector<6x64xf32> to vector<6x16xf32>
    %c0_19 = arith.constant 0 : index
    %c2 = arith.constant 2 : index
    %c2_20 = arith.constant 2 : index
    %34 = vector.load %arg8[%c0_19, %c2, %c2_20] : memref<6x20x20xf32, #tpu.memory_space<vmem>>, vector<6x1x16xf32>
    %35 = vector.shape_cast %34 : vector<6x1x16xf32> to vector<6x16xf32>
    %36 = vector.shape_cast %33 : vector<6x16xf32> to vector<6x1x16xf32>
    tpu.vector_store %arg8[%c0_19, %c2, %c2_20], %36 {strides = array<i32>} : memref<6x20x20xf32, #tpu.memory_space<vmem>>, vector<6x1x16xf32>,
    %37 = vector.extract_strided_slice %32 {offsets = [0, 16], sizes = [6, 16], strides = [1, 1]} : vector<6x64xf32> to vector<6x16xf32>
    %c0_21 = arith.constant 0 : index
    %c3 = arith.constant 3 : index
    %c2_22 = arith.constant 2 : index
    %38 = vector.load %arg8[%c0_21, %c3, %c2_22] : memref<6x20x20xf32, #tpu.memory_space<vmem>>, vector<6x1x16xf32>
    %39 = vector.shape_cast %38 : vector<6x1x16xf32> to vector<6x16xf32>
    %40 = vector.shape_cast %37 : vector<6x16xf32> to vector<6x1x16xf32>
    tpu.vector_store %arg8[%c0_21, %c3, %c2_22], %40 {strides = array<i32>} : memref<6x20x20xf32, #tpu.memory_space<vmem>>, vector<6x1x16xf32>,
    %41 = vector.extract_strided_slice %32 {offsets = [0, 32], sizes = [6, 16], strides = [1, 1]} : vector<6x64xf32> to vector<6x16xf32>
    %c0_23 = arith.constant 0 : index
    %c4 = arith.constant 4 : index
    %c2_24 = arith.constant 2 : index
    %42 = vector.load %arg8[%c0_23, %c4, %c2_24] : memref<6x20x20xf32, #tpu.memory_space<vmem>>, vector<6x1x16xf32>
    %43 = vector.shape_cast %42 : vector<6x1x16xf32> to vector<6x16xf32>
    %44 = vector.shape_cast %41 : vector<6x16xf32> to vector<6x1x16xf32>
    tpu.vector_store %arg8[%c0_23, %c4, %c2_24], %44 {strides = array<i32>} : memref<6x20x20xf32, #tpu.memory_space<vmem>>, vector<6x1x16xf32>,
    %45 = vector.extract_strided_slice %32 {offsets = [0, 48], sizes = [6, 16], strides = [1, 1]} : vector<6x64xf32> to vector<6x16xf32>
    %c0_25 = arith.constant 0 : index
    %c5 = arith.constant 5 : index
    %c2_26 = arith.constant 2 : index
    %46 = vector.load %arg8[%c0_25, %c5, %c2_26] : memref<6x20x20xf32, #tpu.memory_space<vmem>>, vector<6x1x16xf32>
    %47 = vector.shape_cast %46 : vector<6x1x16xf32> to vector<6x16xf32>
    %48 = vector.shape_cast %45 : vector<6x16xf32> to vector<6x1x16xf32>
    tpu.vector_store %arg8[%c0_25, %c5, %c2_26], %48 {strides = array<i32>} : memref<6x20x20xf32, #tpu.memory_space<vmem>>, vector<6x1x16xf32>,
    %49 = vector.extract_strided_slice %7 {offsets = [0, 64], sizes = [3, 64], strides = [1, 1]} : vector<3x256xf32> to vector<3x64xf32>
    %50 = vector.extract_strided_slice %8 {offsets = [0, 64], sizes = [3, 64], strides = [1, 1]} : vector<3x256xf32> to vector<3x64xf32>
    %51 = vector.extract_strided_slice %9 {offsets = [0, 64], sizes = [3, 64], strides = [1, 1]} : vector<3x256xf32> to vector<3x64xf32>
    %cst_27 = arith.constant dense<0.000000e+00> : vector<64x64xf32>
    %52 = tpu.matmul %49, %50, %cst_27 {dimension_numbers = #tpu.dot_dimension_numbers<[0], [0], [1], [1], [0, 1, 1, 1], [], []>} : vector<3x64xf32>, vector<3x64xf32>, vector<64x64xf32> -> vector<64x64xf32>
    %cst_28 = arith.constant dense<0xFF800000> : vector<64xf32>
    %53 = vector.multi_reduction <maximumf>, %52, %cst_28 [1] : vector<64x64xf32> to vector<64xf32>
    %54 = vector.shape_cast %53 : vector<64xf32> to vector<64x1xf32>
    %55 = vector.broadcast %54 : vector<64x1xf32> to vector<64x64xf32>
    %56 = arith.subf %52, %55 : vector<64x64xf32>
    %57 = math.exp %56 : vector<64x64xf32>
    %cst_29 = arith.constant dense<0.000000e+00> : vector<64xf32>
    %58 = vector.multi_reduction <add>, %57, %cst_29 [1] : vector<64x64xf32> to vector<64xf32>
    %59 = vector.shape_cast %58 : vector<64xf32> to vector<64x1xf32>
    %60 = vector.broadcast %59 : vector<64x1xf32> to vector<64x64xf32>
    %61 = arith.divf %57, %60 : vector<64x64xf32>
    %cst_30 = arith.constant dense<0.000000e+00> : vector<3x64xf32>
    %62 = tpu.matmul %51, %61, %cst_30 {dimension_numbers = #tpu.dot_dimension_numbers<[1], [1], [0], [0], [0, 0, 1, 0], [], []>} : vector<3x64xf32>, vector<64x64xf32>, vector<3x64xf32> -> vector<3x64xf32>
    %c0_31 = arith.constant 0 : index
    %c0_32 = arith.constant 0 : index
    %63 = vector.load %arg4[%c0_31, %c0_32] : memref<6x3xf32, #tpu.memory_space<vmem>>, vector<6x3xf32>
    %cst_33 = arith.constant dense<0.000000e+00> : vector<6x64xf32>
    %64 = tpu.matmul %63, %62, %cst_33 {dimension_numbers = #tpu.dot_dimension_numbers<[1], [0], [0], [1], [0, 0, 1, 1], [], []>} : vector<6x3xf32>, vector<3x64xf32>, vector<6x64xf32> -> vector<6x64xf32>
    %c0_34 = arith.constant 0 : index
    %c0_35 = arith.constant 0 : index
    %65 = vector.load %arg5[%c0_34, %c0_35] : memref<6x1xf32, #tpu.memory_space<vmem>>, vector<6x1xf32>
    %66 = vector.broadcast %65 : vector<6x1xf32> to vector<6x64xf32>
    %67 = arith.addf %64, %66 : vector<6x64xf32>
    %68 = vector.extract_strided_slice %1 {offsets = [0, 64], sizes = [6, 64], strides = [1, 1]} : vector<6x256xf32> to vector<6x64xf32>
    %69 = arith.addf %67, %68 : vector<6x64xf32>
    %70 = vector.extract_strided_slice %69 {offsets = [0, 0], sizes = [6, 16], strides = [1, 1]} : vector<6x64xf32> to vector<6x16xf32>
    %c0_36 = arith.constant 0 : index
    %c6 = arith.constant 6 : index
    %c2_37 = arith.constant 2 : index
    %71 = vector.load %arg8[%c0_36, %c6, %c2_37] : memref<6x20x20xf32, #tpu.memory_space<vmem>>, vector<6x1x16xf32>
    %72 = vector.shape_cast %71 : vector<6x1x16xf32> to vector<6x16xf32>
    %73 = vector.shape_cast %70 : vector<6x16xf32> to vector<6x1x16xf32>
    tpu.vector_store %arg8[%c0_36, %c6, %c2_37], %73 {strides = array<i32>} : memref<6x20x20xf32, #tpu.memory_space<vmem>>, vector<6x1x16xf32>,
    %74 = vector.extract_strided_slice %69 {offsets = [0, 16], sizes = [6, 16], strides = [1, 1]} : vector<6x64xf32> to vector<6x16xf32>
    %c0_38 = arith.constant 0 : index
    %c7 = arith.constant 7 : index
    %c2_39 = arith.constant 2 : index
    %75 = vector.load %arg8[%c0_38, %c7, %c2_39] : memref<6x20x20xf32, #tpu.memory_space<vmem>>, vector<6x1x16xf32>
    %76 = vector.shape_cast %75 : vector<6x1x16xf32> to vector<6x16xf32>
    %77 = vector.shape_cast %74 : vector<6x16xf32> to vector<6x1x16xf32>
    tpu.vector_store %arg8[%c0_38, %c7, %c2_39], %77 {strides = array<i32>} : memref<6x20x20xf32, #tpu.memory_space<vmem>>, vector<6x1x16xf32>,
    %78 = vector.extract_strided_slice %69 {offsets = [0, 32], sizes = [6, 16], strides = [1, 1]} : vector<6x64xf32> to vector<6x16xf32>
    %c0_40 = arith.constant 0 : index
    %c8 = arith.constant 8 : index
    %c2_41 = arith.constant 2 : index
    %79 = vector.load %arg8[%c0_40, %c8, %c2_41] : memref<6x20x20xf32, #tpu.memory_space<vmem>>, vector<6x1x16xf32>
    %80 = vector.shape_cast %79 : vector<6x1x16xf32> to vector<6x16xf32>
    %81 = vector.shape_cast %78 : vector<6x16xf32> to vector<6x1x16xf32>
    tpu.vector_store %arg8[%c0_40, %c8, %c2_41], %81 {strides = array<i32>} : memref<6x20x20xf32, #tpu.memory_space<vmem>>, vector<6x1x16xf32>,
    %82 = vector.extract_strided_slice %69 {offsets = [0, 48], sizes = [6, 16], strides = [1, 1]} : vector<6x64xf32> to vector<6x16xf32>
    %c0_42 = arith.constant 0 : index
    %c9 = arith.constant 9 : index
    %c2_43 = arith.constant 2 : index
    %83 = vector.load %arg8[%c0_42, %c9, %c2_43] : memref<6x20x20xf32, #tpu.memory_space<vmem>>, vector<6x1x16xf32>
    %84 = vector.shape_cast %83 : vector<6x1x16xf32> to vector<6x16xf32>
    %85 = vector.shape_cast %82 : vector<6x16xf32> to vector<6x1x16xf32>
    tpu.vector_store %arg8[%c0_42, %c9, %c2_43], %85 {strides = array<i32>} : memref<6x20x20xf32, #tpu.memory_space<vmem>>, vector<6x1x16xf32>,
    %86 = vector.extract_strided_slice %7 {offsets = [0, 128], sizes = [3, 64], strides = [1, 1]} : vector<3x256xf32> to vector<3x64xf32>
    %87 = vector.extract_strided_slice %8 {offsets = [0, 128], sizes = [3, 64], strides = [1, 1]} : vector<3x256xf32> to vector<3x64xf32>
    %88 = vector.extract_strided_slice %9 {offsets = [0, 128], sizes = [3, 64], strides = [1, 1]} : vector<3x256xf32> to vector<3x64xf32>
    %cst_44 = arith.constant dense<0.000000e+00> : vector<64x64xf32>
    %89 = tpu.matmul %86, %87, %cst_44 {dimension_numbers = #tpu.dot_dimension_numbers<[0], [0], [1], [1], [0, 1, 1, 1], [], []>} : vector<3x64xf32>, vector<3x64xf32>, vector<64x64xf32> -> vector<64x64xf32>
    %cst_45 = arith.constant dense<0xFF800000> : vector<64xf32>
    %90 = vector.multi_reduction <maximumf>, %89, %cst_45 [1] : vector<64x64xf32> to vector<64xf32>
    %91 = vector.shape_cast %90 : vector<64xf32> to vector<64x1xf32>
    %92 = vector.broadcast %91 : vector<64x1xf32> to vector<64x64xf32>
    %93 = arith.subf %89, %92 : vector<64x64xf32>
    %94 = math.exp %93 : vector<64x64xf32>
    %cst_46 = arith.constant dense<0.000000e+00> : vector<64xf32>
    %95 = vector.multi_reduction <add>, %94, %cst_46 [1] : vector<64x64xf32> to vector<64xf32>
    %96 = vector.shape_cast %95 : vector<64xf32> to vector<64x1xf32>
    %97 = vector.broadcast %96 : vector<64x1xf32> to vector<64x64xf32>
    %98 = arith.divf %94, %97 : vector<64x64xf32>
    %cst_47 = arith.constant dense<0.000000e+00> : vector<3x64xf32>
    %99 = tpu.matmul %88, %98, %cst_47 {dimension_numbers = #tpu.dot_dimension_numbers<[1], [1], [0], [0], [0, 0, 1, 0], [], []>} : vector<3x64xf32>, vector<64x64xf32>, vector<3x64xf32> -> vector<3x64xf32>
    %c0_48 = arith.constant 0 : index
    %c0_49 = arith.constant 0 : index
    %100 = vector.load %arg4[%c0_48, %c0_49] : memref<6x3xf32, #tpu.memory_space<vmem>>, vector<6x3xf32>
    %cst_50 = arith.constant dense<0.000000e+00> : vector<6x64xf32>
    %101 = tpu.matmul %100, %99, %cst_50 {dimension_numbers = #tpu.dot_dimension_numbers<[1], [0], [0], [1], [0, 0, 1, 1], [], []>} : vector<6x3xf32>, vector<3x64xf32>, vector<6x64xf32> -> vector<6x64xf32>
    %c0_51 = arith.constant 0 : index
    %c0_52 = arith.constant 0 : index
    %102 = vector.load %arg5[%c0_51, %c0_52] : memref<6x1xf32, #tpu.memory_space<vmem>>, vector<6x1xf32>
    %103 = vector.broadcast %102 : vector<6x1xf32> to vector<6x64xf32>
    %104 = arith.addf %101, %103 : vector<6x64xf32>
    %105 = vector.extract_strided_slice %1 {offsets = [0, 128], sizes = [6, 64], strides = [1, 1]} : vector<6x256xf32> to vector<6x64xf32>
    %106 = arith.addf %104, %105 : vector<6x64xf32>
    %107 = vector.extract_strided_slice %106 {offsets = [0, 0], sizes = [6, 16], strides = [1, 1]} : vector<6x64xf32> to vector<6x16xf32>
    %c0_53 = arith.constant 0 : index
    %c10 = arith.constant 10 : index
    %c2_54 = arith.constant 2 : index
    %108 = vector.load %arg8[%c0_53, %c10, %c2_54] : memref<6x20x20xf32, #tpu.memory_space<vmem>>, vector<6x1x16xf32>
    %109 = vector.shape_cast %108 : vector<6x1x16xf32> to vector<6x16xf32>
    %110 = vector.shape_cast %107 : vector<6x16xf32> to vector<6x1x16xf32>
    tpu.vector_store %arg8[%c0_53, %c10, %c2_54], %110 {strides = array<i32>} : memref<6x20x20xf32, #tpu.memory_space<vmem>>, vector<6x1x16xf32>,
    %111 = vector.extract_strided_slice %106 {offsets = [0, 16], sizes = [6, 16], strides = [1, 1]} : vector<6x64xf32> to vector<6x16xf32>
    %c0_55 = arith.constant 0 : index
    %c11 = arith.constant 11 : index
    %c2_56 = arith.constant 2 : index
    %112 = vector.load %arg8[%c0_55, %c11, %c2_56] : memref<6x20x20xf32, #tpu.memory_space<vmem>>, vector<6x1x16xf32>
    %113 = vector.shape_cast %112 : vector<6x1x16xf32> to vector<6x16xf32>
    %114 = vector.shape_cast %111 : vector<6x16xf32> to vector<6x1x16xf32>
    tpu.vector_store %arg8[%c0_55, %c11, %c2_56], %114 {strides = array<i32>} : memref<6x20x20xf32, #tpu.memory_space<vmem>>, vector<6x1x16xf32>,
    %115 = vector.extract_strided_slice %106 {offsets = [0, 32], sizes = [6, 16], strides = [1, 1]} : vector<6x64xf32> to vector<6x16xf32>
    %c0_57 = arith.constant 0 : index
    %c12 = arith.constant 12 : index
    %c2_58 = arith.constant 2 : index
    %116 = vector.load %arg8[%c0_57, %c12, %c2_58] : memref<6x20x20xf32, #tpu.memory_space<vmem>>, vector<6x1x16xf32>
    %117 = vector.shape_cast %116 : vector<6x1x16xf32> to vector<6x16xf32>
    %118 = vector.shape_cast %115 : vector<6x16xf32> to vector<6x1x16xf32>
    tpu.vector_store %arg8[%c0_57, %c12, %c2_58], %118 {strides = array<i32>} : memref<6x20x20xf32, #tpu.memory_space<vmem>>, vector<6x1x16xf32>,
    %119 = vector.extract_strided_slice %106 {offsets = [0, 48], sizes = [6, 16], strides = [1, 1]} : vector<6x64xf32> to vector<6x16xf32>
    %c0_59 = arith.constant 0 : index
    %c13 = arith.constant 13 : index
    %c2_60 = arith.constant 2 : index
    %120 = vector.load %arg8[%c0_59, %c13, %c2_60] : memref<6x20x20xf32, #tpu.memory_space<vmem>>, vector<6x1x16xf32>
    %121 = vector.shape_cast %120 : vector<6x1x16xf32> to vector<6x16xf32>
    %122 = vector.shape_cast %119 : vector<6x16xf32> to vector<6x1x16xf32>
    tpu.vector_store %arg8[%c0_59, %c13, %c2_60], %122 {strides = array<i32>} : memref<6x20x20xf32, #tpu.memory_space<vmem>>, vector<6x1x16xf32>,
    %123 = vector.extract_strided_slice %7 {offsets = [0, 192], sizes = [3, 64], strides = [1, 1]} : vector<3x256xf32> to vector<3x64xf32>
    %124 = vector.extract_strided_slice %8 {offsets = [0, 192], sizes = [3, 64], strides = [1, 1]} : vector<3x256xf32> to vector<3x64xf32>
    %125 = vector.extract_strided_slice %9 {offsets = [0, 192], sizes = [3, 64], strides = [1, 1]} : vector<3x256xf32> to vector<3x64xf32>
    %cst_61 = arith.constant dense<0.000000e+00> : vector<64x64xf32>
    %126 = tpu.matmul %123, %124, %cst_61 {dimension_numbers = #tpu.dot_dimension_numbers<[0], [0], [1], [1], [0, 1, 1, 1], [], []>} : vector<3x64xf32>, vector<3x64xf32>, vector<64x64xf32> -> vector<64x64xf32>
    %cst_62 = arith.constant dense<0xFF800000> : vector<64xf32>
    %127 = vector.multi_reduction <maximumf>, %126, %cst_62 [1] : vector<64x64xf32> to vector<64xf32>
    %128 = vector.shape_cast %127 : vector<64xf32> to vector<64x1xf32>
    %129 = vector.broadcast %128 : vector<64x1xf32> to vector<64x64xf32>
    %130 = arith.subf %126, %129 : vector<64x64xf32>
    %131 = math.exp %130 : vector<64x64xf32>
    %cst_63 = arith.constant dense<0.000000e+00> : vector<64xf32>
    %132 = vector.multi_reduction <add>, %131, %cst_63 [1] : vector<64x64xf32> to vector<64xf32>
    %133 = vector.shape_cast %132 : vector<64xf32> to vector<64x1xf32>
    %134 = vector.broadcast %133 : vector<64x1xf32> to vector<64x64xf32>
    %135 = arith.divf %131, %134 : vector<64x64xf32>
    %cst_64 = arith.constant dense<0.000000e+00> : vector<3x64xf32>
    %136 = tpu.matmul %125, %135, %cst_64 {dimension_numbers = #tpu.dot_dimension_numbers<[1], [1], [0], [0], [0, 0, 1, 0], [], []>} : vector<3x64xf32>, vector<64x64xf32>, vector<3x64xf32> -> vector<3x64xf32>
    %c0_65 = arith.constant 0 : index
    %c0_66 = arith.constant 0 : index
    %137 = vector.load %arg4[%c0_65, %c0_66] : memref<6x3xf32, #tpu.memory_space<vmem>>, vector<6x3xf32>
    %cst_67 = arith.constant dense<0.000000e+00> : vector<6x64xf32>
    %138 = tpu.matmul %137, %136, %cst_67 {dimension_numbers = #tpu.dot_dimension_numbers<[1], [0], [0], [1], [0, 0, 1, 1], [], []>} : vector<6x3xf32>, vector<3x64xf32>, vector<6x64xf32> -> vector<6x64xf32>
    %c0_68 = arith.constant 0 : index
    %c0_69 = arith.constant 0 : index
    %139 = vector.load %arg5[%c0_68, %c0_69] : memref<6x1xf32, #tpu.memory_space<vmem>>, vector<6x1xf32>
    %140 = vector.broadcast %139 : vector<6x1xf32> to vector<6x64xf32>
    %141 = arith.addf %138, %140 : vector<6x64xf32>
    %142 = vector.extract_strided_slice %1 {offsets = [0, 192], sizes = [6, 64], strides = [1, 1]} : vector<6x256xf32> to vector<6x64xf32>
    %143 = arith.addf %141, %142 : vector<6x64xf32>
    %144 = vector.extract_strided_slice %143 {offsets = [0, 0], sizes = [6, 16], strides = [1, 1]} : vector<6x64xf32> to vector<6x16xf32>
    %c0_70 = arith.constant 0 : index
    %c14 = arith.constant 14 : index
    %c2_71 = arith.constant 2 : index
    %145 = vector.load %arg8[%c0_70, %c14, %c2_71] : memref<6x20x20xf32, #tpu.memory_space<vmem>>, vector<6x1x16xf32>
    %146 = vector.shape_cast %145 : vector<6x1x16xf32> to vector<6x16xf32>
    %147 = vector.shape_cast %144 : vector<6x16xf32> to vector<6x1x16xf32>
    tpu.vector_store %arg8[%c0_70, %c14, %c2_71], %147 {strides = array<i32>} : memref<6x20x20xf32, #tpu.memory_space<vmem>>, vector<6x1x16xf32>,
    %148 = vector.extract_strided_slice %143 {offsets = [0, 16], sizes = [6, 16], strides = [1, 1]} : vector<6x64xf32> to vector<6x16xf32>
    %c0_72 = arith.constant 0 : index
    %c15 = arith.constant 15 : index
    %c2_73 = arith.constant 2 : index
    %149 = vector.load %arg8[%c0_72, %c15, %c2_73] : memref<6x20x20xf32, #tpu.memory_space<vmem>>, vector<6x1x16xf32>
    %150 = vector.shape_cast %149 : vector<6x1x16xf32> to vector<6x16xf32>
    %151 = vector.shape_cast %148 : vector<6x16xf32> to vector<6x1x16xf32>
    tpu.vector_store %arg8[%c0_72, %c15, %c2_73], %151 {strides = array<i32>} : memref<6x20x20xf32, #tpu.memory_space<vmem>>, vector<6x1x16xf32>,
    %152 = vector.extract_strided_slice %143 {offsets = [0, 32], sizes = [6, 16], strides = [1, 1]} : vector<6x64xf32> to vector<6x16xf32>
    %c0_74 = arith.constant 0 : index
    %c16 = arith.constant 16 : index
    %c2_75 = arith.constant 2 : index
    %153 = vector.load %arg8[%c0_74, %c16, %c2_75] : memref<6x20x20xf32, #tpu.memory_space<vmem>>, vector<6x1x16xf32>
    %154 = vector.shape_cast %153 : vector<6x1x16xf32> to vector<6x16xf32>
    %155 = vector.shape_cast %152 : vector<6x16xf32> to vector<6x1x16xf32>
    tpu.vector_store %arg8[%c0_74, %c16, %c2_75], %155 {strides = array<i32>} : memref<6x20x20xf32, #tpu.memory_space<vmem>>, vector<6x1x16xf32>,
    %156 = vector.extract_strided_slice %143 {offsets = [0, 48], sizes = [6, 16], strides = [1, 1]} : vector<6x64xf32> to vector<6x16xf32>
    %c0_76 = arith.constant 0 : index
    %c17 = arith.constant 17 : index
    %c2_77 = arith.constant 2 : index
    %157 = vector.load %arg8[%c0_76, %c17, %c2_77] : memref<6x20x20xf32, #tpu.memory_space<vmem>>, vector<6x1x16xf32>
    %158 = vector.shape_cast %157 : vector<6x1x16xf32> to vector<6x16xf32>
    %159 = vector.shape_cast %156 : vector<6x16xf32> to vector<6x1x16xf32>
    tpu.vector_store %arg8[%c0_76, %c17, %c2_77], %159 {strides = array<i32>} : memref<6x20x20xf32, #tpu.memory_space<vmem>>, vector<6x1x16xf32>,
    %160 = tpu.iota {dimensions = array<i32: 0>} : vector<18x18xi32>
    %161 = tpu.iota {dimensions = array<i32: 1>} : vector<18x18xi32>
    %c1_i32 = arith.constant 1 : i32
    %162 = vector.broadcast %c1_i32 : i32 to vector<18x18xi32>
    %163 = arith.cmpi sge, %160, %162 : vector<18x18xi32>
    %c16_i32 = arith.constant 16 : i32
    %164 = vector.broadcast %c16_i32 : i32 to vector<18x18xi32>
    %165 = arith.cmpi sle, %160, %164 : vector<18x18xi32>
    %166 = arith.andi %163, %165 : vector<18x18xi1>
    %c1_i32_78 = arith.constant 1 : i32
    %167 = vector.broadcast %c1_i32_78 : i32 to vector<18x18xi32>
    %168 = arith.cmpi sge, %161, %167 : vector<18x18xi32>
    %169 = arith.andi %166, %168 : vector<18x18xi1>
    %c16_i32_79 = arith.constant 16 : i32
    %170 = vector.broadcast %c16_i32_79 : i32 to vector<18x18xi32>
    %171 = arith.cmpi sle, %161, %170 : vector<18x18xi32>
    %172 = arith.andi %169, %171 : vector<18x18xi1>
    %173 = arith.extui %172 : vector<18x18xi1> to vector<18x18xi32>
    %174 = arith.sitofp %173 : vector<18x18xi32> to vector<18x18xf32>
    %c108 = arith.constant 108 : index
    %175 = memref.load %arg6[%c108] : memref<186xf32, #tpu.memory_space<smem>>
    %176 = vector.broadcast %175 : f32 to vector<18x18xf32>
    %c109 = arith.constant 109 : index
    %177 = memref.load %arg6[%c109] : memref<186xf32, #tpu.memory_space<smem>>
    %178 = vector.broadcast %177 : f32 to vector<18x18xf32>
    %c0_80 = arith.constant 0 : index
    %c0_81 = arith.constant 0 : index
    %c0_82 = arith.constant 0 : index
    %179 = vector.load %arg8[%c0_80, %c0_81, %c0_82] : memref<6x20x20xf32, #tpu.memory_space<vmem>>, vector<1x18x18xf32>
    %180 = vector.shape_cast %179 : vector<1x18x18xf32> to vector<18x18xf32>
    %c0_83 = arith.constant 0 : index
    %181 = memref.load %arg6[%c0_83] : memref<186xf32, #tpu.memory_space<smem>>
    %182 = vector.broadcast %181 : f32 to vector<18x18xf32>
    %183 = arith.mulf %180, %182 : vector<18x18xf32>
    %184 = arith.addf %176, %183 : vector<18x18xf32>
    %c1 = arith.constant 1 : index
    %185 = memref.load %arg6[%c1] : memref<186xf32, #tpu.memory_space<smem>>
    %186 = vector.broadcast %185 : f32 to vector<18x18xf32>
    %187 = arith.mulf %180, %186 : vector<18x18xf32>
    %188 = arith.addf %178, %187 : vector<18x18xf32>
    %c1_84 = arith.constant 1 : index
    %c0_85 = arith.constant 0 : index
    %c0_86 = arith.constant 0 : index
    %189 = vector.load %arg8[%c1_84, %c0_85, %c0_86] : memref<6x20x20xf32, #tpu.memory_space<vmem>>, vector<1x18x18xf32>
    %190 = vector.shape_cast %189 : vector<1x18x18xf32> to vector<18x18xf32>
    %c2_87 = arith.constant 2 : index
    %191 = memref.load %arg6[%c2_87] : memref<186xf32, #tpu.memory_space<smem>>
    %192 = vector.broadcast %191 : f32 to vector<18x18xf32>
    %193 = arith.mulf %190, %192 : vector<18x18xf32>
    %194 = arith.addf %184, %193 : vector<18x18xf32>
    %c3_88 = arith.constant 3 : index
    %195 = memref.load %arg6[%c3_88] : memref<186xf32, #tpu.memory_space<smem>>
    %196 = vector.broadcast %195 : f32 to vector<18x18xf32>
    %197 = arith.mulf %190, %196 : vector<18x18xf32>
    %198 = arith.addf %188, %197 : vector<18x18xf32>
    %c2_89 = arith.constant 2 : index
    %c0_90 = arith.constant 0 : index
    %c0_91 = arith.constant 0 : index
    %199 = vector.load %arg8[%c2_89, %c0_90, %c0_91] : memref<6x20x20xf32, #tpu.memory_space<vmem>>, vector<1x18x18xf32>
    %200 = vector.shape_cast %199 : vector<1x18x18xf32> to vector<18x18xf32>
    %c4_92 = arith.constant 4 : index
    %201 = memref.load %arg6[%c4_92] : memref<186xf32, #tpu.memory_space<smem>>
    %202 = vector.broadcast %201 : f32 to vector<18x18xf32>
    %203 = arith.mulf %200, %202 : vector<18x18xf32>
    %204 = arith.addf %194, %203 : vector<18x18xf32>
    %c5_93 = arith.constant 5 : index
    %205 = memref.load %arg6[%c5_93] : memref<186xf32, #tpu.memory_space<smem>>
    %206 = vector.broadcast %205 : f32 to vector<18x18xf32>
    %207 = arith.mulf %200, %206 : vector<18x18xf32>
    %208 = arith.addf %198, %207 : vector<18x18xf32>
    %c3_94 = arith.constant 3 : index
    %c0_95 = arith.constant 0 : index
    %c0_96 = arith.constant 0 : index
    %209 = vector.load %arg8[%c3_94, %c0_95, %c0_96] : memref<6x20x20xf32, #tpu.memory_space<vmem>>, vector<1x18x18xf32>
    %210 = vector.shape_cast %209 : vector<1x18x18xf32> to vector<18x18xf32>
    %c6_97 = arith.constant 6 : index
    %211 = memref.load %arg6[%c6_97] : memref<186xf32, #tpu.memory_space<smem>>
    %212 = vector.broadcast %211 : f32 to vector<18x18xf32>
    %213 = arith.mulf %210, %212 : vector<18x18xf32>
    %214 = arith.addf %204, %213 : vector<18x18xf32>
    %c7_98 = arith.constant 7 : index
    %215 = memref.load %arg6[%c7_98] : memref<186xf32, #tpu.memory_space<smem>>
    %216 = vector.broadcast %215 : f32 to vector<18x18xf32>
    %217 = arith.mulf %210, %216 : vector<18x18xf32>
    %218 = arith.addf %208, %217 : vector<18x18xf32>
    %c4_99 = arith.constant 4 : index
    %c0_100 = arith.constant 0 : index
    %c0_101 = arith.constant 0 : index
    %219 = vector.load %arg8[%c4_99, %c0_100, %c0_101] : memref<6x20x20xf32, #tpu.memory_space<vmem>>, vector<1x18x18xf32>
    %220 = vector.shape_cast %219 : vector<1x18x18xf32> to vector<18x18xf32>
    %c8_102 = arith.constant 8 : index
    %221 = memref.load %arg6[%c8_102] : memref<186xf32, #tpu.memory_space<smem>>
    %222 = vector.broadcast %221 : f32 to vector<18x18xf32>
    %223 = arith.mulf %220, %222 : vector<18x18xf32>
    %224 = arith.addf %214, %223 : vector<18x18xf32>
    %c9_103 = arith.constant 9 : index
    %225 = memref.load %arg6[%c9_103] : memref<186xf32, #tpu.memory_space<smem>>
    %226 = vector.broadcast %225 : f32 to vector<18x18xf32>
    %227 = arith.mulf %220, %226 : vector<18x18xf32>
    %228 = arith.addf %218, %227 : vector<18x18xf32>
    %c5_104 = arith.constant 5 : index
    %c0_105 = arith.constant 0 : index
    %c0_106 = arith.constant 0 : index
    %229 = vector.load %arg8[%c5_104, %c0_105, %c0_106] : memref<6x20x20xf32, #tpu.memory_space<vmem>>, vector<1x18x18xf32>
    %230 = vector.shape_cast %229 : vector<1x18x18xf32> to vector<18x18xf32>
    %c10_107 = arith.constant 10 : index
    %231 = memref.load %arg6[%c10_107] : memref<186xf32, #tpu.memory_space<smem>>
    %232 = vector.broadcast %231 : f32 to vector<18x18xf32>
    %233 = arith.mulf %230, %232 : vector<18x18xf32>
    %234 = arith.addf %224, %233 : vector<18x18xf32>
    %c11_108 = arith.constant 11 : index
    %235 = memref.load %arg6[%c11_108] : memref<186xf32, #tpu.memory_space<smem>>
    %236 = vector.broadcast %235 : f32 to vector<18x18xf32>
    %237 = arith.mulf %230, %236 : vector<18x18xf32>
    %238 = arith.addf %228, %237 : vector<18x18xf32>
    %c0_109 = arith.constant 0 : index
    %c0_110 = arith.constant 0 : index
    %c1_111 = arith.constant 1 : index
    %239 = vector.load %arg8[%c0_109, %c0_110, %c1_111] : memref<6x20x20xf32, #tpu.memory_space<vmem>>, vector<1x18x18xf32>
    %240 = vector.shape_cast %239 : vector<1x18x18xf32> to vector<18x18xf32>
    %c12_112 = arith.constant 12 : index
    %241 = memref.load %arg6[%c12_112] : memref<186xf32, #tpu.memory_space<smem>>
    %242 = vector.broadcast %241 : f32 to vector<18x18xf32>
    %243 = arith.mulf %240, %242 : vector<18x18xf32>
    %244 = arith.addf %234, %243 : vector<18x18xf32>
    %c13_113 = arith.constant 13 : index
    %245 = memref.load %arg6[%c13_113] : memref<186xf32, #tpu.memory_space<smem>>
    %246 = vector.broadcast %245 : f32 to vector<18x18xf32>
    %247 = arith.mulf %240, %246 : vector<18x18xf32>
    %248 = arith.addf %238, %247 : vector<18x18xf32>
    %c1_114 = arith.constant 1 : index
    %c0_115 = arith.constant 0 : index
    %c1_116 = arith.constant 1 : index
    %249 = vector.load %arg8[%c1_114, %c0_115, %c1_116] : memref<6x20x20xf32, #tpu.memory_space<vmem>>, vector<1x18x18xf32>
    %250 = vector.shape_cast %249 : vector<1x18x18xf32> to vector<18x18xf32>
    %c14_117 = arith.constant 14 : index
    %251 = memref.load %arg6[%c14_117] : memref<186xf32, #tpu.memory_space<smem>>
    %252 = vector.broadcast %251 : f32 to vector<18x18xf32>
    %253 = arith.mulf %250, %252 : vector<18x18xf32>
    %254 = arith.addf %244, %253 : vector<18x18xf32>
    %c15_118 = arith.constant 15 : index
    %255 = memref.load %arg6[%c15_118] : memref<186xf32, #tpu.memory_space<smem>>
    %256 = vector.broadcast %255 : f32 to vector<18x18xf32>
    %257 = arith.mulf %250, %256 : vector<18x18xf32>
    %258 = arith.addf %248, %257 : vector<18x18xf32>
    %c2_119 = arith.constant 2 : index
    %c0_120 = arith.constant 0 : index
    %c1_121 = arith.constant 1 : index
    %259 = vector.load %arg8[%c2_119, %c0_120, %c1_121] : memref<6x20x20xf32, #tpu.memory_space<vmem>>, vector<1x18x18xf32>
    %260 = vector.shape_cast %259 : vector<1x18x18xf32> to vector<18x18xf32>
    %c16_122 = arith.constant 16 : index
    %261 = memref.load %arg6[%c16_122] : memref<186xf32, #tpu.memory_space<smem>>
    %262 = vector.broadcast %261 : f32 to vector<18x18xf32>
    %263 = arith.mulf %260, %262 : vector<18x18xf32>
    %264 = arith.addf %254, %263 : vector<18x18xf32>
    %c17_123 = arith.constant 17 : index
    %265 = memref.load %arg6[%c17_123] : memref<186xf32, #tpu.memory_space<smem>>
    %266 = vector.broadcast %265 : f32 to vector<18x18xf32>
    %267 = arith.mulf %260, %266 : vector<18x18xf32>
    %268 = arith.addf %258, %267 : vector<18x18xf32>
    %c3_124 = arith.constant 3 : index
    %c0_125 = arith.constant 0 : index
    %c1_126 = arith.constant 1 : index
    %269 = vector.load %arg8[%c3_124, %c0_125, %c1_126] : memref<6x20x20xf32, #tpu.memory_space<vmem>>, vector<1x18x18xf32>
    %270 = vector.shape_cast %269 : vector<1x18x18xf32> to vector<18x18xf32>
    %c18 = arith.constant 18 : index
    %271 = memref.load %arg6[%c18] : memref<186xf32, #tpu.memory_space<smem>>
    %272 = vector.broadcast %271 : f32 to vector<18x18xf32>
    %273 = arith.mulf %270, %272 : vector<18x18xf32>
    %274 = arith.addf %264, %273 : vector<18x18xf32>
    %c19 = arith.constant 19 : index
    %275 = memref.load %arg6[%c19] : memref<186xf32, #tpu.memory_space<smem>>
    %276 = vector.broadcast %275 : f32 to vector<18x18xf32>
    %277 = arith.mulf %270, %276 : vector<18x18xf32>
    %278 = arith.addf %268, %277 : vector<18x18xf32>
    %c4_127 = arith.constant 4 : index
    %c0_128 = arith.constant 0 : index
    %c1_129 = arith.constant 1 : index
    %279 = vector.load %arg8[%c4_127, %c0_128, %c1_129] : memref<6x20x20xf32, #tpu.memory_space<vmem>>, vector<1x18x18xf32>
    %280 = vector.shape_cast %279 : vector<1x18x18xf32> to vector<18x18xf32>
    %c20 = arith.constant 20 : index
    %281 = memref.load %arg6[%c20] : memref<186xf32, #tpu.memory_space<smem>>
    %282 = vector.broadcast %281 : f32 to vector<18x18xf32>
    %283 = arith.mulf %280, %282 : vector<18x18xf32>
    %284 = arith.addf %274, %283 : vector<18x18xf32>
    %c21 = arith.constant 21 : index
    %285 = memref.load %arg6[%c21] : memref<186xf32, #tpu.memory_space<smem>>
    %286 = vector.broadcast %285 : f32 to vector<18x18xf32>
    %287 = arith.mulf %280, %286 : vector<18x18xf32>
    %288 = arith.addf %278, %287 : vector<18x18xf32>
    %c5_130 = arith.constant 5 : index
    %c0_131 = arith.constant 0 : index
    %c1_132 = arith.constant 1 : index
    %289 = vector.load %arg8[%c5_130, %c0_131, %c1_132] : memref<6x20x20xf32, #tpu.memory_space<vmem>>, vector<1x18x18xf32>
    %290 = vector.shape_cast %289 : vector<1x18x18xf32> to vector<18x18xf32>
    %c22 = arith.constant 22 : index
    %291 = memref.load %arg6[%c22] : memref<186xf32, #tpu.memory_space<smem>>
    %292 = vector.broadcast %291 : f32 to vector<18x18xf32>
    %293 = arith.mulf %290, %292 : vector<18x18xf32>
    %294 = arith.addf %284, %293 : vector<18x18xf32>
    %c23 = arith.constant 23 : index
    %295 = memref.load %arg6[%c23] : memref<186xf32, #tpu.memory_space<smem>>
    %296 = vector.broadcast %295 : f32 to vector<18x18xf32>
    %297 = arith.mulf %290, %296 : vector<18x18xf32>
    %298 = arith.addf %288, %297 : vector<18x18xf32>
    %c0_133 = arith.constant 0 : index
    %c0_134 = arith.constant 0 : index
    %c2_135 = arith.constant 2 : index
    %299 = vector.load %arg8[%c0_133, %c0_134, %c2_135] : memref<6x20x20xf32, #tpu.memory_space<vmem>>, vector<1x18x18xf32>
    %300 = vector.shape_cast %299 : vector<1x18x18xf32> to vector<18x18xf32>
    %c24 = arith.constant 24 : index
    %301 = memref.load %arg6[%c24] : memref<186xf32, #tpu.memory_space<smem>>
    %302 = vector.broadcast %301 : f32 to vector<18x18xf32>
    %303 = arith.mulf %300, %302 : vector<18x18xf32>
    %304 = arith.addf %294, %303 : vector<18x18xf32>
    %c25 = arith.constant 25 : index
    %305 = memref.load %arg6[%c25] : memref<186xf32, #tpu.memory_space<smem>>
    %306 = vector.broadcast %305 : f32 to vector<18x18xf32>
    %307 = arith.mulf %300, %306 : vector<18x18xf32>
    %308 = arith.addf %298, %307 : vector<18x18xf32>
    %c1_136 = arith.constant 1 : index
    %c0_137 = arith.constant 0 : index
    %c2_138 = arith.constant 2 : index
    %309 = vector.load %arg8[%c1_136, %c0_137, %c2_138] : memref<6x20x20xf32, #tpu.memory_space<vmem>>, vector<1x18x18xf32>
    %310 = vector.shape_cast %309 : vector<1x18x18xf32> to vector<18x18xf32>
    %c26 = arith.constant 26 : index
    %311 = memref.load %arg6[%c26] : memref<186xf32, #tpu.memory_space<smem>>
    %312 = vector.broadcast %311 : f32 to vector<18x18xf32>
    %313 = arith.mulf %310, %312 : vector<18x18xf32>
    %314 = arith.addf %304, %313 : vector<18x18xf32>
    %c27 = arith.constant 27 : index
    %315 = memref.load %arg6[%c27] : memref<186xf32, #tpu.memory_space<smem>>
    %316 = vector.broadcast %315 : f32 to vector<18x18xf32>
    %317 = arith.mulf %310, %316 : vector<18x18xf32>
    %318 = arith.addf %308, %317 : vector<18x18xf32>
    %c2_139 = arith.constant 2 : index
    %c0_140 = arith.constant 0 : index
    %c2_141 = arith.constant 2 : index
    %319 = vector.load %arg8[%c2_139, %c0_140, %c2_141] : memref<6x20x20xf32, #tpu.memory_space<vmem>>, vector<1x18x18xf32>
    %320 = vector.shape_cast %319 : vector<1x18x18xf32> to vector<18x18xf32>
    %c28 = arith.constant 28 : index
    %321 = memref.load %arg6[%c28] : memref<186xf32, #tpu.memory_space<smem>>
    %322 = vector.broadcast %321 : f32 to vector<18x18xf32>
    %323 = arith.mulf %320, %322 : vector<18x18xf32>
    %324 = arith.addf %314, %323 : vector<18x18xf32>
    %c29 = arith.constant 29 : index
    %325 = memref.load %arg6[%c29] : memref<186xf32, #tpu.memory_space<smem>>
    %326 = vector.broadcast %325 : f32 to vector<18x18xf32>
    %327 = arith.mulf %320, %326 : vector<18x18xf32>
    %328 = arith.addf %318, %327 : vector<18x18xf32>
    %c3_142 = arith.constant 3 : index
    %c0_143 = arith.constant 0 : index
    %c2_144 = arith.constant 2 : index
    %329 = vector.load %arg8[%c3_142, %c0_143, %c2_144] : memref<6x20x20xf32, #tpu.memory_space<vmem>>, vector<1x18x18xf32>
    %330 = vector.shape_cast %329 : vector<1x18x18xf32> to vector<18x18xf32>
    %c30 = arith.constant 30 : index
    %331 = memref.load %arg6[%c30] : memref<186xf32, #tpu.memory_space<smem>>
    %332 = vector.broadcast %331 : f32 to vector<18x18xf32>
    %333 = arith.mulf %330, %332 : vector<18x18xf32>
    %334 = arith.addf %324, %333 : vector<18x18xf32>
    %c31 = arith.constant 31 : index
    %335 = memref.load %arg6[%c31] : memref<186xf32, #tpu.memory_space<smem>>
    %336 = vector.broadcast %335 : f32 to vector<18x18xf32>
    %337 = arith.mulf %330, %336 : vector<18x18xf32>
    %338 = arith.addf %328, %337 : vector<18x18xf32>
    %c4_145 = arith.constant 4 : index
    %c0_146 = arith.constant 0 : index
    %c2_147 = arith.constant 2 : index
    %339 = vector.load %arg8[%c4_145, %c0_146, %c2_147] : memref<6x20x20xf32, #tpu.memory_space<vmem>>, vector<1x18x18xf32>
    %340 = vector.shape_cast %339 : vector<1x18x18xf32> to vector<18x18xf32>
    %c32 = arith.constant 32 : index
    %341 = memref.load %arg6[%c32] : memref<186xf32, #tpu.memory_space<smem>>
    %342 = vector.broadcast %341 : f32 to vector<18x18xf32>
    %343 = arith.mulf %340, %342 : vector<18x18xf32>
    %344 = arith.addf %334, %343 : vector<18x18xf32>
    %c33 = arith.constant 33 : index
    %345 = memref.load %arg6[%c33] : memref<186xf32, #tpu.memory_space<smem>>
    %346 = vector.broadcast %345 : f32 to vector<18x18xf32>
    %347 = arith.mulf %340, %346 : vector<18x18xf32>
    %348 = arith.addf %338, %347 : vector<18x18xf32>
    %c5_148 = arith.constant 5 : index
    %c0_149 = arith.constant 0 : index
    %c2_150 = arith.constant 2 : index
    %349 = vector.load %arg8[%c5_148, %c0_149, %c2_150] : memref<6x20x20xf32, #tpu.memory_space<vmem>>, vector<1x18x18xf32>
    %350 = vector.shape_cast %349 : vector<1x18x18xf32> to vector<18x18xf32>
    %c34 = arith.constant 34 : index
    %351 = memref.load %arg6[%c34] : memref<186xf32, #tpu.memory_space<smem>>
    %352 = vector.broadcast %351 : f32 to vector<18x18xf32>
    %353 = arith.mulf %350, %352 : vector<18x18xf32>
    %354 = arith.addf %344, %353 : vector<18x18xf32>
    %c35 = arith.constant 35 : index
    %355 = memref.load %arg6[%c35] : memref<186xf32, #tpu.memory_space<smem>>
    %356 = vector.broadcast %355 : f32 to vector<18x18xf32>
    %357 = arith.mulf %350, %356 : vector<18x18xf32>
    %358 = arith.addf %348, %357 : vector<18x18xf32>
    %c0_151 = arith.constant 0 : index
    %c1_152 = arith.constant 1 : index
    %c0_153 = arith.constant 0 : index
    %359 = vector.load %arg8[%c0_151, %c1_152, %c0_153] : memref<6x20x20xf32, #tpu.memory_space<vmem>>, vector<1x18x18xf32>
    %360 = vector.shape_cast %359 : vector<1x18x18xf32> to vector<18x18xf32>
    %c36 = arith.constant 36 : index
    %361 = memref.load %arg6[%c36] : memref<186xf32, #tpu.memory_space<smem>>
    %362 = vector.broadcast %361 : f32 to vector<18x18xf32>
    %363 = arith.mulf %360, %362 : vector<18x18xf32>
    %364 = arith.addf %354, %363 : vector<18x18xf32>
    %c37 = arith.constant 37 : index
    %365 = memref.load %arg6[%c37] : memref<186xf32, #tpu.memory_space<smem>>
    %366 = vector.broadcast %365 : f32 to vector<18x18xf32>
    %367 = arith.mulf %360, %366 : vector<18x18xf32>
    %368 = arith.addf %358, %367 : vector<18x18xf32>
    %c1_154 = arith.constant 1 : index
    %c1_155 = arith.constant 1 : index
    %c0_156 = arith.constant 0 : index
    %369 = vector.load %arg8[%c1_154, %c1_155, %c0_156] : memref<6x20x20xf32, #tpu.memory_space<vmem>>, vector<1x18x18xf32>
    %370 = vector.shape_cast %369 : vector<1x18x18xf32> to vector<18x18xf32>
    %c38 = arith.constant 38 : index
    %371 = memref.load %arg6[%c38] : memref<186xf32, #tpu.memory_space<smem>>
    %372 = vector.broadcast %371 : f32 to vector<18x18xf32>
    %373 = arith.mulf %370, %372 : vector<18x18xf32>
    %374 = arith.addf %364, %373 : vector<18x18xf32>
    %c39 = arith.constant 39 : index
    %375 = memref.load %arg6[%c39] : memref<186xf32, #tpu.memory_space<smem>>
    %376 = vector.broadcast %375 : f32 to vector<18x18xf32>
    %377 = arith.mulf %370, %376 : vector<18x18xf32>
    %378 = arith.addf %368, %377 : vector<18x18xf32>
    %c2_157 = arith.constant 2 : index
    %c1_158 = arith.constant 1 : index
    %c0_159 = arith.constant 0 : index
    %379 = vector.load %arg8[%c2_157, %c1_158, %c0_159] : memref<6x20x20xf32, #tpu.memory_space<vmem>>, vector<1x18x18xf32>
    %380 = vector.shape_cast %379 : vector<1x18x18xf32> to vector<18x18xf32>
    %c40 = arith.constant 40 : index
    %381 = memref.load %arg6[%c40] : memref<186xf32, #tpu.memory_space<smem>>
    %382 = vector.broadcast %381 : f32 to vector<18x18xf32>
    %383 = arith.mulf %380, %382 : vector<18x18xf32>
    %384 = arith.addf %374, %383 : vector<18x18xf32>
    %c41 = arith.constant 41 : index
    %385 = memref.load %arg6[%c41] : memref<186xf32, #tpu.memory_space<smem>>
    %386 = vector.broadcast %385 : f32 to vector<18x18xf32>
    %387 = arith.mulf %380, %386 : vector<18x18xf32>
    %388 = arith.addf %378, %387 : vector<18x18xf32>
    %c3_160 = arith.constant 3 : index
    %c1_161 = arith.constant 1 : index
    %c0_162 = arith.constant 0 : index
    %389 = vector.load %arg8[%c3_160, %c1_161, %c0_162] : memref<6x20x20xf32, #tpu.memory_space<vmem>>, vector<1x18x18xf32>
    %390 = vector.shape_cast %389 : vector<1x18x18xf32> to vector<18x18xf32>
    %c42 = arith.constant 42 : index
    %391 = memref.load %arg6[%c42] : memref<186xf32, #tpu.memory_space<smem>>
    %392 = vector.broadcast %391 : f32 to vector<18x18xf32>
    %393 = arith.mulf %390, %392 : vector<18x18xf32>
    %394 = arith.addf %384, %393 : vector<18x18xf32>
    %c43 = arith.constant 43 : index
    %395 = memref.load %arg6[%c43] : memref<186xf32, #tpu.memory_space<smem>>
    %396 = vector.broadcast %395 : f32 to vector<18x18xf32>
    %397 = arith.mulf %390, %396 : vector<18x18xf32>
    %398 = arith.addf %388, %397 : vector<18x18xf32>
    %c4_163 = arith.constant 4 : index
    %c1_164 = arith.constant 1 : index
    %c0_165 = arith.constant 0 : index
    %399 = vector.load %arg8[%c4_163, %c1_164, %c0_165] : memref<6x20x20xf32, #tpu.memory_space<vmem>>, vector<1x18x18xf32>
    %400 = vector.shape_cast %399 : vector<1x18x18xf32> to vector<18x18xf32>
    %c44 = arith.constant 44 : index
    %401 = memref.load %arg6[%c44] : memref<186xf32, #tpu.memory_space<smem>>
    %402 = vector.broadcast %401 : f32 to vector<18x18xf32>
    %403 = arith.mulf %400, %402 : vector<18x18xf32>
    %404 = arith.addf %394, %403 : vector<18x18xf32>
    %c45 = arith.constant 45 : index
    %405 = memref.load %arg6[%c45] : memref<186xf32, #tpu.memory_space<smem>>
    %406 = vector.broadcast %405 : f32 to vector<18x18xf32>
    %407 = arith.mulf %400, %406 : vector<18x18xf32>
    %408 = arith.addf %398, %407 : vector<18x18xf32>
    %c5_166 = arith.constant 5 : index
    %c1_167 = arith.constant 1 : index
    %c0_168 = arith.constant 0 : index
    %409 = vector.load %arg8[%c5_166, %c1_167, %c0_168] : memref<6x20x20xf32, #tpu.memory_space<vmem>>, vector<1x18x18xf32>
    %410 = vector.shape_cast %409 : vector<1x18x18xf32> to vector<18x18xf32>
    %c46 = arith.constant 46 : index
    %411 = memref.load %arg6[%c46] : memref<186xf32, #tpu.memory_space<smem>>
    %412 = vector.broadcast %411 : f32 to vector<18x18xf32>
    %413 = arith.mulf %410, %412 : vector<18x18xf32>
    %414 = arith.addf %404, %413 : vector<18x18xf32>
    %c47 = arith.constant 47 : index
    %415 = memref.load %arg6[%c47] : memref<186xf32, #tpu.memory_space<smem>>
    %416 = vector.broadcast %415 : f32 to vector<18x18xf32>
    %417 = arith.mulf %410, %416 : vector<18x18xf32>
    %418 = arith.addf %408, %417 : vector<18x18xf32>
    %c0_169 = arith.constant 0 : index
    %c1_170 = arith.constant 1 : index
    %c1_171 = arith.constant 1 : index
    %419 = vector.load %arg8[%c0_169, %c1_170, %c1_171] : memref<6x20x20xf32, #tpu.memory_space<vmem>>, vector<1x18x18xf32>
    %420 = vector.shape_cast %419 : vector<1x18x18xf32> to vector<18x18xf32>
    %c48 = arith.constant 48 : index
    %421 = memref.load %arg6[%c48] : memref<186xf32, #tpu.memory_space<smem>>
    %422 = vector.broadcast %421 : f32 to vector<18x18xf32>
    %423 = arith.mulf %420, %422 : vector<18x18xf32>
    %424 = arith.addf %414, %423 : vector<18x18xf32>
    %c49 = arith.constant 49 : index
    %425 = memref.load %arg6[%c49] : memref<186xf32, #tpu.memory_space<smem>>
    %426 = vector.broadcast %425 : f32 to vector<18x18xf32>
    %427 = arith.mulf %420, %426 : vector<18x18xf32>
    %428 = arith.addf %418, %427 : vector<18x18xf32>
    %c1_172 = arith.constant 1 : index
    %c1_173 = arith.constant 1 : index
    %c1_174 = arith.constant 1 : index
    %429 = vector.load %arg8[%c1_172, %c1_173, %c1_174] : memref<6x20x20xf32, #tpu.memory_space<vmem>>, vector<1x18x18xf32>
    %430 = vector.shape_cast %429 : vector<1x18x18xf32> to vector<18x18xf32>
    %c50 = arith.constant 50 : index
    %431 = memref.load %arg6[%c50] : memref<186xf32, #tpu.memory_space<smem>>
    %432 = vector.broadcast %431 : f32 to vector<18x18xf32>
    %433 = arith.mulf %430, %432 : vector<18x18xf32>
    %434 = arith.addf %424, %433 : vector<18x18xf32>
    %c51 = arith.constant 51 : index
    %435 = memref.load %arg6[%c51] : memref<186xf32, #tpu.memory_space<smem>>
    %436 = vector.broadcast %435 : f32 to vector<18x18xf32>
    %437 = arith.mulf %430, %436 : vector<18x18xf32>
    %438 = arith.addf %428, %437 : vector<18x18xf32>
    %c2_175 = arith.constant 2 : index
    %c1_176 = arith.constant 1 : index
    %c1_177 = arith.constant 1 : index
    %439 = vector.load %arg8[%c2_175, %c1_176, %c1_177] : memref<6x20x20xf32, #tpu.memory_space<vmem>>, vector<1x18x18xf32>
    %440 = vector.shape_cast %439 : vector<1x18x18xf32> to vector<18x18xf32>
    %c52 = arith.constant 52 : index
    %441 = memref.load %arg6[%c52] : memref<186xf32, #tpu.memory_space<smem>>
    %442 = vector.broadcast %441 : f32 to vector<18x18xf32>
    %443 = arith.mulf %440, %442 : vector<18x18xf32>
    %444 = arith.addf %434, %443 : vector<18x18xf32>
    %c53 = arith.constant 53 : index
    %445 = memref.load %arg6[%c53] : memref<186xf32, #tpu.memory_space<smem>>
    %446 = vector.broadcast %445 : f32 to vector<18x18xf32>
    %447 = arith.mulf %440, %446 : vector<18x18xf32>
    %448 = arith.addf %438, %447 : vector<18x18xf32>
    %c3_178 = arith.constant 3 : index
    %c1_179 = arith.constant 1 : index
    %c1_180 = arith.constant 1 : index
    %449 = vector.load %arg8[%c3_178, %c1_179, %c1_180] : memref<6x20x20xf32, #tpu.memory_space<vmem>>, vector<1x18x18xf32>
    %450 = vector.shape_cast %449 : vector<1x18x18xf32> to vector<18x18xf32>
    %c54 = arith.constant 54 : index
    %451 = memref.load %arg6[%c54] : memref<186xf32, #tpu.memory_space<smem>>
    %452 = vector.broadcast %451 : f32 to vector<18x18xf32>
    %453 = arith.mulf %450, %452 : vector<18x18xf32>
    %454 = arith.addf %444, %453 : vector<18x18xf32>
    %c55 = arith.constant 55 : index
    %455 = memref.load %arg6[%c55] : memref<186xf32, #tpu.memory_space<smem>>
    %456 = vector.broadcast %455 : f32 to vector<18x18xf32>
    %457 = arith.mulf %450, %456 : vector<18x18xf32>
    %458 = arith.addf %448, %457 : vector<18x18xf32>
    %c4_181 = arith.constant 4 : index
    %c1_182 = arith.constant 1 : index
    %c1_183 = arith.constant 1 : index
    %459 = vector.load %arg8[%c4_181, %c1_182, %c1_183] : memref<6x20x20xf32, #tpu.memory_space<vmem>>, vector<1x18x18xf32>
    %460 = vector.shape_cast %459 : vector<1x18x18xf32> to vector<18x18xf32>
    %c56 = arith.constant 56 : index
    %461 = memref.load %arg6[%c56] : memref<186xf32, #tpu.memory_space<smem>>
    %462 = vector.broadcast %461 : f32 to vector<18x18xf32>
    %463 = arith.mulf %460, %462 : vector<18x18xf32>
    %464 = arith.addf %454, %463 : vector<18x18xf32>
    %c57 = arith.constant 57 : index
    %465 = memref.load %arg6[%c57] : memref<186xf32, #tpu.memory_space<smem>>
    %466 = vector.broadcast %465 : f32 to vector<18x18xf32>
    %467 = arith.mulf %460, %466 : vector<18x18xf32>
    %468 = arith.addf %458, %467 : vector<18x18xf32>
    %c5_184 = arith.constant 5 : index
    %c1_185 = arith.constant 1 : index
    %c1_186 = arith.constant 1 : index
    %469 = vector.load %arg8[%c5_184, %c1_185, %c1_186] : memref<6x20x20xf32, #tpu.memory_space<vmem>>, vector<1x18x18xf32>
    %470 = vector.shape_cast %469 : vector<1x18x18xf32> to vector<18x18xf32>
    %c58 = arith.constant 58 : index
    %471 = memref.load %arg6[%c58] : memref<186xf32, #tpu.memory_space<smem>>
    %472 = vector.broadcast %471 : f32 to vector<18x18xf32>
    %473 = arith.mulf %470, %472 : vector<18x18xf32>
    %474 = arith.addf %464, %473 : vector<18x18xf32>
    %c59 = arith.constant 59 : index
    %475 = memref.load %arg6[%c59] : memref<186xf32, #tpu.memory_space<smem>>
    %476 = vector.broadcast %475 : f32 to vector<18x18xf32>
    %477 = arith.mulf %470, %476 : vector<18x18xf32>
    %478 = arith.addf %468, %477 : vector<18x18xf32>
    %c0_187 = arith.constant 0 : index
    %c1_188 = arith.constant 1 : index
    %c2_189 = arith.constant 2 : index
    %479 = vector.load %arg8[%c0_187, %c1_188, %c2_189] : memref<6x20x20xf32, #tpu.memory_space<vmem>>, vector<1x18x18xf32>
    %480 = vector.shape_cast %479 : vector<1x18x18xf32> to vector<18x18xf32>
    %c60 = arith.constant 60 : index
    %481 = memref.load %arg6[%c60] : memref<186xf32, #tpu.memory_space<smem>>
    %482 = vector.broadcast %481 : f32 to vector<18x18xf32>
    %483 = arith.mulf %480, %482 : vector<18x18xf32>
    %484 = arith.addf %474, %483 : vector<18x18xf32>
    %c61 = arith.constant 61 : index
    %485 = memref.load %arg6[%c61] : memref<186xf32, #tpu.memory_space<smem>>
    %486 = vector.broadcast %485 : f32 to vector<18x18xf32>
    %487 = arith.mulf %480, %486 : vector<18x18xf32>
    %488 = arith.addf %478, %487 : vector<18x18xf32>
    %c1_190 = arith.constant 1 : index
    %c1_191 = arith.constant 1 : index
    %c2_192 = arith.constant 2 : index
    %489 = vector.load %arg8[%c1_190, %c1_191, %c2_192] : memref<6x20x20xf32, #tpu.memory_space<vmem>>, vector<1x18x18xf32>
    %490 = vector.shape_cast %489 : vector<1x18x18xf32> to vector<18x18xf32>
    %c62 = arith.constant 62 : index
    %491 = memref.load %arg6[%c62] : memref<186xf32, #tpu.memory_space<smem>>
    %492 = vector.broadcast %491 : f32 to vector<18x18xf32>
    %493 = arith.mulf %490, %492 : vector<18x18xf32>
    %494 = arith.addf %484, %493 : vector<18x18xf32>
    %c63 = arith.constant 63 : index
    %495 = memref.load %arg6[%c63] : memref<186xf32, #tpu.memory_space<smem>>
    %496 = vector.broadcast %495 : f32 to vector<18x18xf32>
    %497 = arith.mulf %490, %496 : vector<18x18xf32>
    %498 = arith.addf %488, %497 : vector<18x18xf32>
    %c2_193 = arith.constant 2 : index
    %c1_194 = arith.constant 1 : index
    %c2_195 = arith.constant 2 : index
    %499 = vector.load %arg8[%c2_193, %c1_194, %c2_195] : memref<6x20x20xf32, #tpu.memory_space<vmem>>, vector<1x18x18xf32>
    %500 = vector.shape_cast %499 : vector<1x18x18xf32> to vector<18x18xf32>
    %c64 = arith.constant 64 : index
    %501 = memref.load %arg6[%c64] : memref<186xf32, #tpu.memory_space<smem>>
    %502 = vector.broadcast %501 : f32 to vector<18x18xf32>
    %503 = arith.mulf %500, %502 : vector<18x18xf32>
    %504 = arith.addf %494, %503 : vector<18x18xf32>
    %c65 = arith.constant 65 : index
    %505 = memref.load %arg6[%c65] : memref<186xf32, #tpu.memory_space<smem>>
    %506 = vector.broadcast %505 : f32 to vector<18x18xf32>
    %507 = arith.mulf %500, %506 : vector<18x18xf32>
    %508 = arith.addf %498, %507 : vector<18x18xf32>
    %c3_196 = arith.constant 3 : index
    %c1_197 = arith.constant 1 : index
    %c2_198 = arith.constant 2 : index
    %509 = vector.load %arg8[%c3_196, %c1_197, %c2_198] : memref<6x20x20xf32, #tpu.memory_space<vmem>>, vector<1x18x18xf32>
    %510 = vector.shape_cast %509 : vector<1x18x18xf32> to vector<18x18xf32>
    %c66 = arith.constant 66 : index
    %511 = memref.load %arg6[%c66] : memref<186xf32, #tpu.memory_space<smem>>
    %512 = vector.broadcast %511 : f32 to vector<18x18xf32>
    %513 = arith.mulf %510, %512 : vector<18x18xf32>
    %514 = arith.addf %504, %513 : vector<18x18xf32>
    %c67 = arith.constant 67 : index
    %515 = memref.load %arg6[%c67] : memref<186xf32, #tpu.memory_space<smem>>
    %516 = vector.broadcast %515 : f32 to vector<18x18xf32>
    %517 = arith.mulf %510, %516 : vector<18x18xf32>
    %518 = arith.addf %508, %517 : vector<18x18xf32>
    %c4_199 = arith.constant 4 : index
    %c1_200 = arith.constant 1 : index
    %c2_201 = arith.constant 2 : index
    %519 = vector.load %arg8[%c4_199, %c1_200, %c2_201] : memref<6x20x20xf32, #tpu.memory_space<vmem>>, vector<1x18x18xf32>
    %520 = vector.shape_cast %519 : vector<1x18x18xf32> to vector<18x18xf32>
    %c68 = arith.constant 68 : index
    %521 = memref.load %arg6[%c68] : memref<186xf32, #tpu.memory_space<smem>>
    %522 = vector.broadcast %521 : f32 to vector<18x18xf32>
    %523 = arith.mulf %520, %522 : vector<18x18xf32>
    %524 = arith.addf %514, %523 : vector<18x18xf32>
    %c69 = arith.constant 69 : index
    %525 = memref.load %arg6[%c69] : memref<186xf32, #tpu.memory_space<smem>>
    %526 = vector.broadcast %525 : f32 to vector<18x18xf32>
    %527 = arith.mulf %520, %526 : vector<18x18xf32>
    %528 = arith.addf %518, %527 : vector<18x18xf32>
    %c5_202 = arith.constant 5 : index
    %c1_203 = arith.constant 1 : index
    %c2_204 = arith.constant 2 : index
    %529 = vector.load %arg8[%c5_202, %c1_203, %c2_204] : memref<6x20x20xf32, #tpu.memory_space<vmem>>, vector<1x18x18xf32>
    %530 = vector.shape_cast %529 : vector<1x18x18xf32> to vector<18x18xf32>
    %c70 = arith.constant 70 : index
    %531 = memref.load %arg6[%c70] : memref<186xf32, #tpu.memory_space<smem>>
    %532 = vector.broadcast %531 : f32 to vector<18x18xf32>
    %533 = arith.mulf %530, %532 : vector<18x18xf32>
    %534 = arith.addf %524, %533 : vector<18x18xf32>
    %c71 = arith.constant 71 : index
    %535 = memref.load %arg6[%c71] : memref<186xf32, #tpu.memory_space<smem>>
    %536 = vector.broadcast %535 : f32 to vector<18x18xf32>
    %537 = arith.mulf %530, %536 : vector<18x18xf32>
    %538 = arith.addf %528, %537 : vector<18x18xf32>
    %c0_205 = arith.constant 0 : index
    %c2_206 = arith.constant 2 : index
    %c0_207 = arith.constant 0 : index
    %539 = vector.load %arg8[%c0_205, %c2_206, %c0_207] : memref<6x20x20xf32, #tpu.memory_space<vmem>>, vector<1x18x18xf32>
    %540 = vector.shape_cast %539 : vector<1x18x18xf32> to vector<18x18xf32>
    %c72 = arith.constant 72 : index
    %541 = memref.load %arg6[%c72] : memref<186xf32, #tpu.memory_space<smem>>
    %542 = vector.broadcast %541 : f32 to vector<18x18xf32>
    %543 = arith.mulf %540, %542 : vector<18x18xf32>
    %544 = arith.addf %534, %543 : vector<18x18xf32>
    %c73 = arith.constant 73 : index
    %545 = memref.load %arg6[%c73] : memref<186xf32, #tpu.memory_space<smem>>
    %546 = vector.broadcast %545 : f32 to vector<18x18xf32>
    %547 = arith.mulf %540, %546 : vector<18x18xf32>
    %548 = arith.addf %538, %547 : vector<18x18xf32>
    %c1_208 = arith.constant 1 : index
    %c2_209 = arith.constant 2 : index
    %c0_210 = arith.constant 0 : index
    %549 = vector.load %arg8[%c1_208, %c2_209, %c0_210] : memref<6x20x20xf32, #tpu.memory_space<vmem>>, vector<1x18x18xf32>
    %550 = vector.shape_cast %549 : vector<1x18x18xf32> to vector<18x18xf32>
    %c74 = arith.constant 74 : index
    %551 = memref.load %arg6[%c74] : memref<186xf32, #tpu.memory_space<smem>>
    %552 = vector.broadcast %551 : f32 to vector<18x18xf32>
    %553 = arith.mulf %550, %552 : vector<18x18xf32>
    %554 = arith.addf %544, %553 : vector<18x18xf32>
    %c75 = arith.constant 75 : index
    %555 = memref.load %arg6[%c75] : memref<186xf32, #tpu.memory_space<smem>>
    %556 = vector.broadcast %555 : f32 to vector<18x18xf32>
    %557 = arith.mulf %550, %556 : vector<18x18xf32>
    %558 = arith.addf %548, %557 : vector<18x18xf32>
    %c2_211 = arith.constant 2 : index
    %c2_212 = arith.constant 2 : index
    %c0_213 = arith.constant 0 : index
    %559 = vector.load %arg8[%c2_211, %c2_212, %c0_213] : memref<6x20x20xf32, #tpu.memory_space<vmem>>, vector<1x18x18xf32>
    %560 = vector.shape_cast %559 : vector<1x18x18xf32> to vector<18x18xf32>
    %c76 = arith.constant 76 : index
    %561 = memref.load %arg6[%c76] : memref<186xf32, #tpu.memory_space<smem>>
    %562 = vector.broadcast %561 : f32 to vector<18x18xf32>
    %563 = arith.mulf %560, %562 : vector<18x18xf32>
    %564 = arith.addf %554, %563 : vector<18x18xf32>
    %c77 = arith.constant 77 : index
    %565 = memref.load %arg6[%c77] : memref<186xf32, #tpu.memory_space<smem>>
    %566 = vector.broadcast %565 : f32 to vector<18x18xf32>
    %567 = arith.mulf %560, %566 : vector<18x18xf32>
    %568 = arith.addf %558, %567 : vector<18x18xf32>
    %c3_214 = arith.constant 3 : index
    %c2_215 = arith.constant 2 : index
    %c0_216 = arith.constant 0 : index
    %569 = vector.load %arg8[%c3_214, %c2_215, %c0_216] : memref<6x20x20xf32, #tpu.memory_space<vmem>>, vector<1x18x18xf32>
    %570 = vector.shape_cast %569 : vector<1x18x18xf32> to vector<18x18xf32>
    %c78 = arith.constant 78 : index
    %571 = memref.load %arg6[%c78] : memref<186xf32, #tpu.memory_space<smem>>
    %572 = vector.broadcast %571 : f32 to vector<18x18xf32>
    %573 = arith.mulf %570, %572 : vector<18x18xf32>
    %574 = arith.addf %564, %573 : vector<18x18xf32>
    %c79 = arith.constant 79 : index
    %575 = memref.load %arg6[%c79] : memref<186xf32, #tpu.memory_space<smem>>
    %576 = vector.broadcast %575 : f32 to vector<18x18xf32>
    %577 = arith.mulf %570, %576 : vector<18x18xf32>
    %578 = arith.addf %568, %577 : vector<18x18xf32>
    %c4_217 = arith.constant 4 : index
    %c2_218 = arith.constant 2 : index
    %c0_219 = arith.constant 0 : index
    %579 = vector.load %arg8[%c4_217, %c2_218, %c0_219] : memref<6x20x20xf32, #tpu.memory_space<vmem>>, vector<1x18x18xf32>
    %580 = vector.shape_cast %579 : vector<1x18x18xf32> to vector<18x18xf32>
    %c80 = arith.constant 80 : index
    %581 = memref.load %arg6[%c80] : memref<186xf32, #tpu.memory_space<smem>>
    %582 = vector.broadcast %581 : f32 to vector<18x18xf32>
    %583 = arith.mulf %580, %582 : vector<18x18xf32>
    %584 = arith.addf %574, %583 : vector<18x18xf32>
    %c81 = arith.constant 81 : index
    %585 = memref.load %arg6[%c81] : memref<186xf32, #tpu.memory_space<smem>>
    %586 = vector.broadcast %585 : f32 to vector<18x18xf32>
    %587 = arith.mulf %580, %586 : vector<18x18xf32>
    %588 = arith.addf %578, %587 : vector<18x18xf32>
    %c5_220 = arith.constant 5 : index
    %c2_221 = arith.constant 2 : index
    %c0_222 = arith.constant 0 : index
    %589 = vector.load %arg8[%c5_220, %c2_221, %c0_222] : memref<6x20x20xf32, #tpu.memory_space<vmem>>, vector<1x18x18xf32>
    %590 = vector.shape_cast %589 : vector<1x18x18xf32> to vector<18x18xf32>
    %c82 = arith.constant 82 : index
    %591 = memref.load %arg6[%c82] : memref<186xf32, #tpu.memory_space<smem>>
    %592 = vector.broadcast %591 : f32 to vector<18x18xf32>
    %593 = arith.mulf %590, %592 : vector<18x18xf32>
    %594 = arith.addf %584, %593 : vector<18x18xf32>
    %c83 = arith.constant 83 : index
    %595 = memref.load %arg6[%c83] : memref<186xf32, #tpu.memory_space<smem>>
    %596 = vector.broadcast %595 : f32 to vector<18x18xf32>
    %597 = arith.mulf %590, %596 : vector<18x18xf32>
    %598 = arith.addf %588, %597 : vector<18x18xf32>
    %c0_223 = arith.constant 0 : index
    %c2_224 = arith.constant 2 : index
    %c1_225 = arith.constant 1 : index
    %599 = vector.load %arg8[%c0_223, %c2_224, %c1_225] : memref<6x20x20xf32, #tpu.memory_space<vmem>>, vector<1x18x18xf32>
    %600 = vector.shape_cast %599 : vector<1x18x18xf32> to vector<18x18xf32>
    %c84 = arith.constant 84 : index
    %601 = memref.load %arg6[%c84] : memref<186xf32, #tpu.memory_space<smem>>
    %602 = vector.broadcast %601 : f32 to vector<18x18xf32>
    %603 = arith.mulf %600, %602 : vector<18x18xf32>
    %604 = arith.addf %594, %603 : vector<18x18xf32>
    %c85 = arith.constant 85 : index
    %605 = memref.load %arg6[%c85] : memref<186xf32, #tpu.memory_space<smem>>
    %606 = vector.broadcast %605 : f32 to vector<18x18xf32>
    %607 = arith.mulf %600, %606 : vector<18x18xf32>
    %608 = arith.addf %598, %607 : vector<18x18xf32>
    %c1_226 = arith.constant 1 : index
    %c2_227 = arith.constant 2 : index
    %c1_228 = arith.constant 1 : index
    %609 = vector.load %arg8[%c1_226, %c2_227, %c1_228] : memref<6x20x20xf32, #tpu.memory_space<vmem>>, vector<1x18x18xf32>
    %610 = vector.shape_cast %609 : vector<1x18x18xf32> to vector<18x18xf32>
    %c86 = arith.constant 86 : index
    %611 = memref.load %arg6[%c86] : memref<186xf32, #tpu.memory_space<smem>>
    %612 = vector.broadcast %611 : f32 to vector<18x18xf32>
    %613 = arith.mulf %610, %612 : vector<18x18xf32>
    %614 = arith.addf %604, %613 : vector<18x18xf32>
    %c87 = arith.constant 87 : index
    %615 = memref.load %arg6[%c87] : memref<186xf32, #tpu.memory_space<smem>>
    %616 = vector.broadcast %615 : f32 to vector<18x18xf32>
    %617 = arith.mulf %610, %616 : vector<18x18xf32>
    %618 = arith.addf %608, %617 : vector<18x18xf32>
    %c2_229 = arith.constant 2 : index
    %c2_230 = arith.constant 2 : index
    %c1_231 = arith.constant 1 : index
    %619 = vector.load %arg8[%c2_229, %c2_230, %c1_231] : memref<6x20x20xf32, #tpu.memory_space<vmem>>, vector<1x18x18xf32>
    %620 = vector.shape_cast %619 : vector<1x18x18xf32> to vector<18x18xf32>
    %c88 = arith.constant 88 : index
    %621 = memref.load %arg6[%c88] : memref<186xf32, #tpu.memory_space<smem>>
    %622 = vector.broadcast %621 : f32 to vector<18x18xf32>
    %623 = arith.mulf %620, %622 : vector<18x18xf32>
    %624 = arith.addf %614, %623 : vector<18x18xf32>
    %c89 = arith.constant 89 : index
    %625 = memref.load %arg6[%c89] : memref<186xf32, #tpu.memory_space<smem>>
    %626 = vector.broadcast %625 : f32 to vector<18x18xf32>
    %627 = arith.mulf %620, %626 : vector<18x18xf32>
    %628 = arith.addf %618, %627 : vector<18x18xf32>
    %c3_232 = arith.constant 3 : index
    %c2_233 = arith.constant 2 : index
    %c1_234 = arith.constant 1 : index
    %629 = vector.load %arg8[%c3_232, %c2_233, %c1_234] : memref<6x20x20xf32, #tpu.memory_space<vmem>>, vector<1x18x18xf32>
    %630 = vector.shape_cast %629 : vector<1x18x18xf32> to vector<18x18xf32>
    %c90 = arith.constant 90 : index
    %631 = memref.load %arg6[%c90] : memref<186xf32, #tpu.memory_space<smem>>
    %632 = vector.broadcast %631 : f32 to vector<18x18xf32>
    %633 = arith.mulf %630, %632 : vector<18x18xf32>
    %634 = arith.addf %624, %633 : vector<18x18xf32>
    %c91 = arith.constant 91 : index
    %635 = memref.load %arg6[%c91] : memref<186xf32, #tpu.memory_space<smem>>
    %636 = vector.broadcast %635 : f32 to vector<18x18xf32>
    %637 = arith.mulf %630, %636 : vector<18x18xf32>
    %638 = arith.addf %628, %637 : vector<18x18xf32>
    %c4_235 = arith.constant 4 : index
    %c2_236 = arith.constant 2 : index
    %c1_237 = arith.constant 1 : index
    %639 = vector.load %arg8[%c4_235, %c2_236, %c1_237] : memref<6x20x20xf32, #tpu.memory_space<vmem>>, vector<1x18x18xf32>
    %640 = vector.shape_cast %639 : vector<1x18x18xf32> to vector<18x18xf32>
    %c92 = arith.constant 92 : index
    %641 = memref.load %arg6[%c92] : memref<186xf32, #tpu.memory_space<smem>>
    %642 = vector.broadcast %641 : f32 to vector<18x18xf32>
    %643 = arith.mulf %640, %642 : vector<18x18xf32>
    %644 = arith.addf %634, %643 : vector<18x18xf32>
    %c93 = arith.constant 93 : index
    %645 = memref.load %arg6[%c93] : memref<186xf32, #tpu.memory_space<smem>>
    %646 = vector.broadcast %645 : f32 to vector<18x18xf32>
    %647 = arith.mulf %640, %646 : vector<18x18xf32>
    %648 = arith.addf %638, %647 : vector<18x18xf32>
    %c5_238 = arith.constant 5 : index
    %c2_239 = arith.constant 2 : index
    %c1_240 = arith.constant 1 : index
    %649 = vector.load %arg8[%c5_238, %c2_239, %c1_240] : memref<6x20x20xf32, #tpu.memory_space<vmem>>, vector<1x18x18xf32>
    %650 = vector.shape_cast %649 : vector<1x18x18xf32> to vector<18x18xf32>
    %c94 = arith.constant 94 : index
    %651 = memref.load %arg6[%c94] : memref<186xf32, #tpu.memory_space<smem>>
    %652 = vector.broadcast %651 : f32 to vector<18x18xf32>
    %653 = arith.mulf %650, %652 : vector<18x18xf32>
    %654 = arith.addf %644, %653 : vector<18x18xf32>
    %c95 = arith.constant 95 : index
    %655 = memref.load %arg6[%c95] : memref<186xf32, #tpu.memory_space<smem>>
    %656 = vector.broadcast %655 : f32 to vector<18x18xf32>
    %657 = arith.mulf %650, %656 : vector<18x18xf32>
    %658 = arith.addf %648, %657 : vector<18x18xf32>
    %c0_241 = arith.constant 0 : index
    %c2_242 = arith.constant 2 : index
    %c2_243 = arith.constant 2 : index
    %659 = vector.load %arg8[%c0_241, %c2_242, %c2_243] : memref<6x20x20xf32, #tpu.memory_space<vmem>>, vector<1x18x18xf32>
    %660 = vector.shape_cast %659 : vector<1x18x18xf32> to vector<18x18xf32>
    %c96 = arith.constant 96 : index
    %661 = memref.load %arg6[%c96] : memref<186xf32, #tpu.memory_space<smem>>
    %662 = vector.broadcast %661 : f32 to vector<18x18xf32>
    %663 = arith.mulf %660, %662 : vector<18x18xf32>
    %664 = arith.addf %654, %663 : vector<18x18xf32>
    %c97 = arith.constant 97 : index
    %665 = memref.load %arg6[%c97] : memref<186xf32, #tpu.memory_space<smem>>
    %666 = vector.broadcast %665 : f32 to vector<18x18xf32>
    %667 = arith.mulf %660, %666 : vector<18x18xf32>
    %668 = arith.addf %658, %667 : vector<18x18xf32>
    %c1_244 = arith.constant 1 : index
    %c2_245 = arith.constant 2 : index
    %c2_246 = arith.constant 2 : index
    %669 = vector.load %arg8[%c1_244, %c2_245, %c2_246] : memref<6x20x20xf32, #tpu.memory_space<vmem>>, vector<1x18x18xf32>
    %670 = vector.shape_cast %669 : vector<1x18x18xf32> to vector<18x18xf32>
    %c98 = arith.constant 98 : index
    %671 = memref.load %arg6[%c98] : memref<186xf32, #tpu.memory_space<smem>>
    %672 = vector.broadcast %671 : f32 to vector<18x18xf32>
    %673 = arith.mulf %670, %672 : vector<18x18xf32>
    %674 = arith.addf %664, %673 : vector<18x18xf32>
    %c99 = arith.constant 99 : index
    %675 = memref.load %arg6[%c99] : memref<186xf32, #tpu.memory_space<smem>>
    %676 = vector.broadcast %675 : f32 to vector<18x18xf32>
    %677 = arith.mulf %670, %676 : vector<18x18xf32>
    %678 = arith.addf %668, %677 : vector<18x18xf32>
    %c2_247 = arith.constant 2 : index
    %c2_248 = arith.constant 2 : index
    %c2_249 = arith.constant 2 : index
    %679 = vector.load %arg8[%c2_247, %c2_248, %c2_249] : memref<6x20x20xf32, #tpu.memory_space<vmem>>, vector<1x18x18xf32>
    %680 = vector.shape_cast %679 : vector<1x18x18xf32> to vector<18x18xf32>
    %c100 = arith.constant 100 : index
    %681 = memref.load %arg6[%c100] : memref<186xf32, #tpu.memory_space<smem>>
    %682 = vector.broadcast %681 : f32 to vector<18x18xf32>
    %683 = arith.mulf %680, %682 : vector<18x18xf32>
    %684 = arith.addf %674, %683 : vector<18x18xf32>
    %c101 = arith.constant 101 : index
    %685 = memref.load %arg6[%c101] : memref<186xf32, #tpu.memory_space<smem>>
    %686 = vector.broadcast %685 : f32 to vector<18x18xf32>
    %687 = arith.mulf %680, %686 : vector<18x18xf32>
    %688 = arith.addf %678, %687 : vector<18x18xf32>
    %c3_250 = arith.constant 3 : index
    %c2_251 = arith.constant 2 : index
    %c2_252 = arith.constant 2 : index
    %689 = vector.load %arg8[%c3_250, %c2_251, %c2_252] : memref<6x20x20xf32, #tpu.memory_space<vmem>>, vector<1x18x18xf32>
    %690 = vector.shape_cast %689 : vector<1x18x18xf32> to vector<18x18xf32>
    %c102 = arith.constant 102 : index
    %691 = memref.load %arg6[%c102] : memref<186xf32, #tpu.memory_space<smem>>
    %692 = vector.broadcast %691 : f32 to vector<18x18xf32>
    %693 = arith.mulf %690, %692 : vector<18x18xf32>
    %694 = arith.addf %684, %693 : vector<18x18xf32>
    %c103 = arith.constant 103 : index
    %695 = memref.load %arg6[%c103] : memref<186xf32, #tpu.memory_space<smem>>
    %696 = vector.broadcast %695 : f32 to vector<18x18xf32>
    %697 = arith.mulf %690, %696 : vector<18x18xf32>
    %698 = arith.addf %688, %697 : vector<18x18xf32>
    %c4_253 = arith.constant 4 : index
    %c2_254 = arith.constant 2 : index
    %c2_255 = arith.constant 2 : index
    %699 = vector.load %arg8[%c4_253, %c2_254, %c2_255] : memref<6x20x20xf32, #tpu.memory_space<vmem>>, vector<1x18x18xf32>
    %700 = vector.shape_cast %699 : vector<1x18x18xf32> to vector<18x18xf32>
    %c104 = arith.constant 104 : index
    %701 = memref.load %arg6[%c104] : memref<186xf32, #tpu.memory_space<smem>>
    %702 = vector.broadcast %701 : f32 to vector<18x18xf32>
    %703 = arith.mulf %700, %702 : vector<18x18xf32>
    %704 = arith.addf %694, %703 : vector<18x18xf32>
    %c105 = arith.constant 105 : index
    %705 = memref.load %arg6[%c105] : memref<186xf32, #tpu.memory_space<smem>>
    %706 = vector.broadcast %705 : f32 to vector<18x18xf32>
    %707 = arith.mulf %700, %706 : vector<18x18xf32>
    %708 = arith.addf %698, %707 : vector<18x18xf32>
    %c5_256 = arith.constant 5 : index
    %c2_257 = arith.constant 2 : index
    %c2_258 = arith.constant 2 : index
    %709 = vector.load %arg8[%c5_256, %c2_257, %c2_258] : memref<6x20x20xf32, #tpu.memory_space<vmem>>, vector<1x18x18xf32>
    %710 = vector.shape_cast %709 : vector<1x18x18xf32> to vector<18x18xf32>
    %c106 = arith.constant 106 : index
    %711 = memref.load %arg6[%c106] : memref<186xf32, #tpu.memory_space<smem>>
    %712 = vector.broadcast %711 : f32 to vector<18x18xf32>
    %713 = arith.mulf %710, %712 : vector<18x18xf32>
    %714 = arith.addf %704, %713 : vector<18x18xf32>
    %c107 = arith.constant 107 : index
    %715 = memref.load %arg6[%c107] : memref<186xf32, #tpu.memory_space<smem>>
    %716 = vector.broadcast %715 : f32 to vector<18x18xf32>
    %717 = arith.mulf %710, %716 : vector<18x18xf32>
    %718 = arith.addf %708, %717 : vector<18x18xf32>
    %719 = arith.mulf %714, %174 : vector<18x18xf32>
    %c0_259 = arith.constant 0 : index
    %c0_260 = arith.constant 0 : index
    %c0_261 = arith.constant 0 : index
    %720 = vector.load %arg9[%c0_259, %c0_260, %c0_261] : memref<2x18x18xf32, #tpu.memory_space<vmem>>, vector<1x18x18xf32>
    %721 = vector.shape_cast %720 : vector<1x18x18xf32> to vector<18x18xf32>
    %722 = vector.shape_cast %719 : vector<18x18xf32> to vector<1x18x18xf32>
    tpu.vector_store %arg9[%c0_259, %c0_260, %c0_261], %722 {strides = array<i32>} : memref<2x18x18xf32, #tpu.memory_space<vmem>>, vector<1x18x18xf32>,
    %723 = arith.mulf %718, %174 : vector<18x18xf32>
    %c1_262 = arith.constant 1 : index
    %c0_263 = arith.constant 0 : index
    %c0_264 = arith.constant 0 : index
    %724 = vector.load %arg9[%c1_262, %c0_263, %c0_264] : memref<2x18x18xf32, #tpu.memory_space<vmem>>, vector<1x18x18xf32>
    %725 = vector.shape_cast %724 : vector<1x18x18xf32> to vector<18x18xf32>
    %726 = vector.shape_cast %723 : vector<18x18xf32> to vector<1x18x18xf32>
    tpu.vector_store %arg9[%c1_262, %c0_263, %c0_264], %726 {strides = array<i32>} : memref<2x18x18xf32, #tpu.memory_space<vmem>>, vector<1x18x18xf32>,
    %c182 = arith.constant 182 : index
    %727 = memref.load %arg6[%c182] : memref<186xf32, #tpu.memory_space<smem>>
    %728 = vector.broadcast %727 : f32 to vector<16x16xf32>
    %c183 = arith.constant 183 : index
    %729 = memref.load %arg6[%c183] : memref<186xf32, #tpu.memory_space<smem>>
    %730 = vector.broadcast %729 : f32 to vector<16x16xf32>
    %c184 = arith.constant 184 : index
    %731 = memref.load %arg6[%c184] : memref<186xf32, #tpu.memory_space<smem>>
    %732 = vector.broadcast %731 : f32 to vector<16x16xf32>
    %c185 = arith.constant 185 : index
    %733 = memref.load %arg6[%c185] : memref<186xf32, #tpu.memory_space<smem>>
    %734 = vector.broadcast %733 : f32 to vector<16x16xf32>
    %c0_265 = arith.constant 0 : index
    %c0_266 = arith.constant 0 : index
    %c0_267 = arith.constant 0 : index
    %735 = vector.load %arg9[%c0_265, %c0_266, %c0_267] : memref<2x18x18xf32, #tpu.memory_space<vmem>>, vector<1x16x16xf32>
    %736 = vector.shape_cast %735 : vector<1x16x16xf32> to vector<16x16xf32>
    %c110 = arith.constant 110 : index
    %737 = memref.load %arg6[%c110] : memref<186xf32, #tpu.memory_space<smem>>
    %738 = vector.broadcast %737 : f32 to vector<16x16xf32>
    %739 = arith.mulf %736, %738 : vector<16x16xf32>
    %740 = arith.addf %728, %739 : vector<16x16xf32>
    %c111 = arith.constant 111 : index
    %741 = memref.load %arg6[%c111] : memref<186xf32, #tpu.memory_space<smem>>
    %742 = vector.broadcast %741 : f32 to vector<16x16xf32>
    %743 = arith.mulf %736, %742 : vector<16x16xf32>
    %744 = arith.addf %730, %743 : vector<16x16xf32>
    %c112 = arith.constant 112 : index
    %745 = memref.load %arg6[%c112] : memref<186xf32, #tpu.memory_space<smem>>
    %746 = vector.broadcast %745 : f32 to vector<16x16xf32>
    %747 = arith.mulf %736, %746 : vector<16x16xf32>
    %748 = arith.addf %732, %747 : vector<16x16xf32>
    %c113 = arith.constant 113 : index
    %749 = memref.load %arg6[%c113] : memref<186xf32, #tpu.memory_space<smem>>
    %750 = vector.broadcast %749 : f32 to vector<16x16xf32>
    %751 = arith.mulf %736, %750 : vector<16x16xf32>
    %752 = arith.addf %734, %751 : vector<16x16xf32>
    %c1_268 = arith.constant 1 : index
    %c0_269 = arith.constant 0 : index
    %c0_270 = arith.constant 0 : index
    %753 = vector.load %arg9[%c1_268, %c0_269, %c0_270] : memref<2x18x18xf32, #tpu.memory_space<vmem>>, vector<1x16x16xf32>
    %754 = vector.shape_cast %753 : vector<1x16x16xf32> to vector<16x16xf32>
    %c114 = arith.constant 114 : index
    %755 = memref.load %arg6[%c114] : memref<186xf32, #tpu.memory_space<smem>>
    %756 = vector.broadcast %755 : f32 to vector<16x16xf32>
    %757 = arith.mulf %754, %756 : vector<16x16xf32>
    %758 = arith.addf %740, %757 : vector<16x16xf32>
    %c115 = arith.constant 115 : index
    %759 = memref.load %arg6[%c115] : memref<186xf32, #tpu.memory_space<smem>>
    %760 = vector.broadcast %759 : f32 to vector<16x16xf32>
    %761 = arith.mulf %754, %760 : vector<16x16xf32>
    %762 = arith.addf %744, %761 : vector<16x16xf32>
    %c116 = arith.constant 116 : index
    %763 = memref.load %arg6[%c116] : memref<186xf32, #tpu.memory_space<smem>>
    %764 = vector.broadcast %763 : f32 to vector<16x16xf32>
    %765 = arith.mulf %754, %764 : vector<16x16xf32>
    %766 = arith.addf %748, %765 : vector<16x16xf32>
    %c117 = arith.constant 117 : index
    %767 = memref.load %arg6[%c117] : memref<186xf32, #tpu.memory_space<smem>>
    %768 = vector.broadcast %767 : f32 to vector<16x16xf32>
    %769 = arith.mulf %754, %768 : vector<16x16xf32>
    %770 = arith.addf %752, %769 : vector<16x16xf32>
    %c0_271 = arith.constant 0 : index
    %c0_272 = arith.constant 0 : index
    %c1_273 = arith.constant 1 : index
    %771 = vector.load %arg9[%c0_271, %c0_272, %c1_273] : memref<2x18x18xf32, #tpu.memory_space<vmem>>, vector<1x16x16xf32>
    %772 = vector.shape_cast %771 : vector<1x16x16xf32> to vector<16x16xf32>
    %c118 = arith.constant 118 : index
    %773 = memref.load %arg6[%c118] : memref<186xf32, #tpu.memory_space<smem>>
    %774 = vector.broadcast %773 : f32 to vector<16x16xf32>
    %775 = arith.mulf %772, %774 : vector<16x16xf32>
    %776 = arith.addf %758, %775 : vector<16x16xf32>
    %c119 = arith.constant 119 : index
    %777 = memref.load %arg6[%c119] : memref<186xf32, #tpu.memory_space<smem>>
    %778 = vector.broadcast %777 : f32 to vector<16x16xf32>
    %779 = arith.mulf %772, %778 : vector<16x16xf32>
    %780 = arith.addf %762, %779 : vector<16x16xf32>
    %c120 = arith.constant 120 : index
    %781 = memref.load %arg6[%c120] : memref<186xf32, #tpu.memory_space<smem>>
    %782 = vector.broadcast %781 : f32 to vector<16x16xf32>
    %783 = arith.mulf %772, %782 : vector<16x16xf32>
    %784 = arith.addf %766, %783 : vector<16x16xf32>
    %c121 = arith.constant 121 : index
    %785 = memref.load %arg6[%c121] : memref<186xf32, #tpu.memory_space<smem>>
    %786 = vector.broadcast %785 : f32 to vector<16x16xf32>
    %787 = arith.mulf %772, %786 : vector<16x16xf32>
    %788 = arith.addf %770, %787 : vector<16x16xf32>
    %c1_274 = arith.constant 1 : index
    %c0_275 = arith.constant 0 : index
    %c1_276 = arith.constant 1 : index
    %789 = vector.load %arg9[%c1_274, %c0_275, %c1_276] : memref<2x18x18xf32, #tpu.memory_space<vmem>>, vector<1x16x16xf32>
    %790 = vector.shape_cast %789 : vector<1x16x16xf32> to vector<16x16xf32>
    %c122 = arith.constant 122 : index
    %791 = memref.load %arg6[%c122] : memref<186xf32, #tpu.memory_space<smem>>
    %792 = vector.broadcast %791 : f32 to vector<16x16xf32>
    %793 = arith.mulf %790, %792 : vector<16x16xf32>
    %794 = arith.addf %776, %793 : vector<16x16xf32>
    %c123 = arith.constant 123 : index
    %795 = memref.load %arg6[%c123] : memref<186xf32, #tpu.memory_space<smem>>
    %796 = vector.broadcast %795 : f32 to vector<16x16xf32>
    %797 = arith.mulf %790, %796 : vector<16x16xf32>
    %798 = arith.addf %780, %797 : vector<16x16xf32>
    %c124 = arith.constant 124 : index
    %799 = memref.load %arg6[%c124] : memref<186xf32, #tpu.memory_space<smem>>
    %800 = vector.broadcast %799 : f32 to vector<16x16xf32>
    %801 = arith.mulf %790, %800 : vector<16x16xf32>
    %802 = arith.addf %784, %801 : vector<16x16xf32>
    %c125 = arith.constant 125 : index
    %803 = memref.load %arg6[%c125] : memref<186xf32, #tpu.memory_space<smem>>
    %804 = vector.broadcast %803 : f32 to vector<16x16xf32>
    %805 = arith.mulf %790, %804 : vector<16x16xf32>
    %806 = arith.addf %788, %805 : vector<16x16xf32>
    %c0_277 = arith.constant 0 : index
    %c0_278 = arith.constant 0 : index
    %c2_279 = arith.constant 2 : index
    %807 = vector.load %arg9[%c0_277, %c0_278, %c2_279] : memref<2x18x18xf32, #tpu.memory_space<vmem>>, vector<1x16x16xf32>
    %808 = vector.shape_cast %807 : vector<1x16x16xf32> to vector<16x16xf32>
    %c126 = arith.constant 126 : index
    %809 = memref.load %arg6[%c126] : memref<186xf32, #tpu.memory_space<smem>>
    %810 = vector.broadcast %809 : f32 to vector<16x16xf32>
    %811 = arith.mulf %808, %810 : vector<16x16xf32>
    %812 = arith.addf %794, %811 : vector<16x16xf32>
    %c127 = arith.constant 127 : index
    %813 = memref.load %arg6[%c127] : memref<186xf32, #tpu.memory_space<smem>>
    %814 = vector.broadcast %813 : f32 to vector<16x16xf32>
    %815 = arith.mulf %808, %814 : vector<16x16xf32>
    %816 = arith.addf %798, %815 : vector<16x16xf32>
    %c128 = arith.constant 128 : index
    %817 = memref.load %arg6[%c128] : memref<186xf32, #tpu.memory_space<smem>>
    %818 = vector.broadcast %817 : f32 to vector<16x16xf32>
    %819 = arith.mulf %808, %818 : vector<16x16xf32>
    %820 = arith.addf %802, %819 : vector<16x16xf32>
    %c129 = arith.constant 129 : index
    %821 = memref.load %arg6[%c129] : memref<186xf32, #tpu.memory_space<smem>>
    %822 = vector.broadcast %821 : f32 to vector<16x16xf32>
    %823 = arith.mulf %808, %822 : vector<16x16xf32>
    %824 = arith.addf %806, %823 : vector<16x16xf32>
    %c1_280 = arith.constant 1 : index
    %c0_281 = arith.constant 0 : index
    %c2_282 = arith.constant 2 : index
    %825 = vector.load %arg9[%c1_280, %c0_281, %c2_282] : memref<2x18x18xf32, #tpu.memory_space<vmem>>, vector<1x16x16xf32>
    %826 = vector.shape_cast %825 : vector<1x16x16xf32> to vector<16x16xf32>
    %c130 = arith.constant 130 : index
    %827 = memref.load %arg6[%c130] : memref<186xf32, #tpu.memory_space<smem>>
    %828 = vector.broadcast %827 : f32 to vector<16x16xf32>
    %829 = arith.mulf %826, %828 : vector<16x16xf32>
    %830 = arith.addf %812, %829 : vector<16x16xf32>
    %c131 = arith.constant 131 : index
    %831 = memref.load %arg6[%c131] : memref<186xf32, #tpu.memory_space<smem>>
    %832 = vector.broadcast %831 : f32 to vector<16x16xf32>
    %833 = arith.mulf %826, %832 : vector<16x16xf32>
    %834 = arith.addf %816, %833 : vector<16x16xf32>
    %c132 = arith.constant 132 : index
    %835 = memref.load %arg6[%c132] : memref<186xf32, #tpu.memory_space<smem>>
    %836 = vector.broadcast %835 : f32 to vector<16x16xf32>
    %837 = arith.mulf %826, %836 : vector<16x16xf32>
    %838 = arith.addf %820, %837 : vector<16x16xf32>
    %c133 = arith.constant 133 : index
    %839 = memref.load %arg6[%c133] : memref<186xf32, #tpu.memory_space<smem>>
    %840 = vector.broadcast %839 : f32 to vector<16x16xf32>
    %841 = arith.mulf %826, %840 : vector<16x16xf32>
    %842 = arith.addf %824, %841 : vector<16x16xf32>
    %c0_283 = arith.constant 0 : index
    %c1_284 = arith.constant 1 : index
    %c0_285 = arith.constant 0 : index
    %843 = vector.load %arg9[%c0_283, %c1_284, %c0_285] : memref<2x18x18xf32, #tpu.memory_space<vmem>>, vector<1x16x16xf32>
    %844 = vector.shape_cast %843 : vector<1x16x16xf32> to vector<16x16xf32>
    %c134 = arith.constant 134 : index
    %845 = memref.load %arg6[%c134] : memref<186xf32, #tpu.memory_space<smem>>
    %846 = vector.broadcast %845 : f32 to vector<16x16xf32>
    %847 = arith.mulf %844, %846 : vector<16x16xf32>
    %848 = arith.addf %830, %847 : vector<16x16xf32>
    %c135 = arith.constant 135 : index
    %849 = memref.load %arg6[%c135] : memref<186xf32, #tpu.memory_space<smem>>
    %850 = vector.broadcast %849 : f32 to vector<16x16xf32>
    %851 = arith.mulf %844, %850 : vector<16x16xf32>
    %852 = arith.addf %834, %851 : vector<16x16xf32>
    %c136 = arith.constant 136 : index
    %853 = memref.load %arg6[%c136] : memref<186xf32, #tpu.memory_space<smem>>
    %854 = vector.broadcast %853 : f32 to vector<16x16xf32>
    %855 = arith.mulf %844, %854 : vector<16x16xf32>
    %856 = arith.addf %838, %855 : vector<16x16xf32>
    %c137 = arith.constant 137 : index
    %857 = memref.load %arg6[%c137] : memref<186xf32, #tpu.memory_space<smem>>
    %858 = vector.broadcast %857 : f32 to vector<16x16xf32>
    %859 = arith.mulf %844, %858 : vector<16x16xf32>
    %860 = arith.addf %842, %859 : vector<16x16xf32>
    %c1_286 = arith.constant 1 : index
    %c1_287 = arith.constant 1 : index
    %c0_288 = arith.constant 0 : index
    %861 = vector.load %arg9[%c1_286, %c1_287, %c0_288] : memref<2x18x18xf32, #tpu.memory_space<vmem>>, vector<1x16x16xf32>
    %862 = vector.shape_cast %861 : vector<1x16x16xf32> to vector<16x16xf32>
    %c138 = arith.constant 138 : index
    %863 = memref.load %arg6[%c138] : memref<186xf32, #tpu.memory_space<smem>>
    %864 = vector.broadcast %863 : f32 to vector<16x16xf32>
    %865 = arith.mulf %862, %864 : vector<16x16xf32>
    %866 = arith.addf %848, %865 : vector<16x16xf32>
    %c139 = arith.constant 139 : index
    %867 = memref.load %arg6[%c139] : memref<186xf32, #tpu.memory_space<smem>>
    %868 = vector.broadcast %867 : f32 to vector<16x16xf32>
    %869 = arith.mulf %862, %868 : vector<16x16xf32>
    %870 = arith.addf %852, %869 : vector<16x16xf32>
    %c140 = arith.constant 140 : index
    %871 = memref.load %arg6[%c140] : memref<186xf32, #tpu.memory_space<smem>>
    %872 = vector.broadcast %871 : f32 to vector<16x16xf32>
    %873 = arith.mulf %862, %872 : vector<16x16xf32>
    %874 = arith.addf %856, %873 : vector<16x16xf32>
    %c141 = arith.constant 141 : index
    %875 = memref.load %arg6[%c141] : memref<186xf32, #tpu.memory_space<smem>>
    %876 = vector.broadcast %875 : f32 to vector<16x16xf32>
    %877 = arith.mulf %862, %876 : vector<16x16xf32>
    %878 = arith.addf %860, %877 : vector<16x16xf32>
    %c0_289 = arith.constant 0 : index
    %c1_290 = arith.constant 1 : index
    %c1_291 = arith.constant 1 : index
    %879 = vector.load %arg9[%c0_289, %c1_290, %c1_291] : memref<2x18x18xf32, #tpu.memory_space<vmem>>, vector<1x16x16xf32>
    %880 = vector.shape_cast %879 : vector<1x16x16xf32> to vector<16x16xf32>
    %c142 = arith.constant 142 : index
    %881 = memref.load %arg6[%c142] : memref<186xf32, #tpu.memory_space<smem>>
    %882 = vector.broadcast %881 : f32 to vector<16x16xf32>
    %883 = arith.mulf %880, %882 : vector<16x16xf32>
    %884 = arith.addf %866, %883 : vector<16x16xf32>
    %c143 = arith.constant 143 : index
    %885 = memref.load %arg6[%c143] : memref<186xf32, #tpu.memory_space<smem>>
    %886 = vector.broadcast %885 : f32 to vector<16x16xf32>
    %887 = arith.mulf %880, %886 : vector<16x16xf32>
    %888 = arith.addf %870, %887 : vector<16x16xf32>
    %c144 = arith.constant 144 : index
    %889 = memref.load %arg6[%c144] : memref<186xf32, #tpu.memory_space<smem>>
    %890 = vector.broadcast %889 : f32 to vector<16x16xf32>
    %891 = arith.mulf %880, %890 : vector<16x16xf32>
    %892 = arith.addf %874, %891 : vector<16x16xf32>
    %c145 = arith.constant 145 : index
    %893 = memref.load %arg6[%c145] : memref<186xf32, #tpu.memory_space<smem>>
    %894 = vector.broadcast %893 : f32 to vector<16x16xf32>
    %895 = arith.mulf %880, %894 : vector<16x16xf32>
    %896 = arith.addf %878, %895 : vector<16x16xf32>
    %c1_292 = arith.constant 1 : index
    %c1_293 = arith.constant 1 : index
    %c1_294 = arith.constant 1 : index
    %897 = vector.load %arg9[%c1_292, %c1_293, %c1_294] : memref<2x18x18xf32, #tpu.memory_space<vmem>>, vector<1x16x16xf32>
    %898 = vector.shape_cast %897 : vector<1x16x16xf32> to vector<16x16xf32>
    %c146 = arith.constant 146 : index
    %899 = memref.load %arg6[%c146] : memref<186xf32, #tpu.memory_space<smem>>
    %900 = vector.broadcast %899 : f32 to vector<16x16xf32>
    %901 = arith.mulf %898, %900 : vector<16x16xf32>
    %902 = arith.addf %884, %901 : vector<16x16xf32>
    %c147 = arith.constant 147 : index
    %903 = memref.load %arg6[%c147] : memref<186xf32, #tpu.memory_space<smem>>
    %904 = vector.broadcast %903 : f32 to vector<16x16xf32>
    %905 = arith.mulf %898, %904 : vector<16x16xf32>
    %906 = arith.addf %888, %905 : vector<16x16xf32>
    %c148 = arith.constant 148 : index
    %907 = memref.load %arg6[%c148] : memref<186xf32, #tpu.memory_space<smem>>
    %908 = vector.broadcast %907 : f32 to vector<16x16xf32>
    %909 = arith.mulf %898, %908 : vector<16x16xf32>
    %910 = arith.addf %892, %909 : vector<16x16xf32>
    %c149 = arith.constant 149 : index
    %911 = memref.load %arg6[%c149] : memref<186xf32, #tpu.memory_space<smem>>
    %912 = vector.broadcast %911 : f32 to vector<16x16xf32>
    %913 = arith.mulf %898, %912 : vector<16x16xf32>
    %914 = arith.addf %896, %913 : vector<16x16xf32>
    %c0_295 = arith.constant 0 : index
    %c1_296 = arith.constant 1 : index
    %c2_297 = arith.constant 2 : index
    %915 = vector.load %arg9[%c0_295, %c1_296, %c2_297] : memref<2x18x18xf32, #tpu.memory_space<vmem>>, vector<1x16x16xf32>
    %916 = vector.shape_cast %915 : vector<1x16x16xf32> to vector<16x16xf32>
    %c150 = arith.constant 150 : index
    %917 = memref.load %arg6[%c150] : memref<186xf32, #tpu.memory_space<smem>>
    %918 = vector.broadcast %917 : f32 to vector<16x16xf32>
    %919 = arith.mulf %916, %918 : vector<16x16xf32>
    %920 = arith.addf %902, %919 : vector<16x16xf32>
    %c151 = arith.constant 151 : index
    %921 = memref.load %arg6[%c151] : memref<186xf32, #tpu.memory_space<smem>>
    %922 = vector.broadcast %921 : f32 to vector<16x16xf32>
    %923 = arith.mulf %916, %922 : vector<16x16xf32>
    %924 = arith.addf %906, %923 : vector<16x16xf32>
    %c152 = arith.constant 152 : index
    %925 = memref.load %arg6[%c152] : memref<186xf32, #tpu.memory_space<smem>>
    %926 = vector.broadcast %925 : f32 to vector<16x16xf32>
    %927 = arith.mulf %916, %926 : vector<16x16xf32>
    %928 = arith.addf %910, %927 : vector<16x16xf32>
    %c153 = arith.constant 153 : index
    %929 = memref.load %arg6[%c153] : memref<186xf32, #tpu.memory_space<smem>>
    %930 = vector.broadcast %929 : f32 to vector<16x16xf32>
    %931 = arith.mulf %916, %930 : vector<16x16xf32>
    %932 = arith.addf %914, %931 : vector<16x16xf32>
    %c1_298 = arith.constant 1 : index
    %c1_299 = arith.constant 1 : index
    %c2_300 = arith.constant 2 : index
    %933 = vector.load %arg9[%c1_298, %c1_299, %c2_300] : memref<2x18x18xf32, #tpu.memory_space<vmem>>, vector<1x16x16xf32>
    %934 = vector.shape_cast %933 : vector<1x16x16xf32> to vector<16x16xf32>
    %c154 = arith.constant 154 : index
    %935 = memref.load %arg6[%c154] : memref<186xf32, #tpu.memory_space<smem>>
    %936 = vector.broadcast %935 : f32 to vector<16x16xf32>
    %937 = arith.mulf %934, %936 : vector<16x16xf32>
    %938 = arith.addf %920, %937 : vector<16x16xf32>
    %c155 = arith.constant 155 : index
    %939 = memref.load %arg6[%c155] : memref<186xf32, #tpu.memory_space<smem>>
    %940 = vector.broadcast %939 : f32 to vector<16x16xf32>
    %941 = arith.mulf %934, %940 : vector<16x16xf32>
    %942 = arith.addf %924, %941 : vector<16x16xf32>
    %c156 = arith.constant 156 : index
    %943 = memref.load %arg6[%c156] : memref<186xf32, #tpu.memory_space<smem>>
    %944 = vector.broadcast %943 : f32 to vector<16x16xf32>
    %945 = arith.mulf %934, %944 : vector<16x16xf32>
    %946 = arith.addf %928, %945 : vector<16x16xf32>
    %c157 = arith.constant 157 : index
    %947 = memref.load %arg6[%c157] : memref<186xf32, #tpu.memory_space<smem>>
    %948 = vector.broadcast %947 : f32 to vector<16x16xf32>
    %949 = arith.mulf %934, %948 : vector<16x16xf32>
    %950 = arith.addf %932, %949 : vector<16x16xf32>
    %c0_301 = arith.constant 0 : index
    %c2_302 = arith.constant 2 : index
    %c0_303 = arith.constant 0 : index
    %951 = vector.load %arg9[%c0_301, %c2_302, %c0_303] : memref<2x18x18xf32, #tpu.memory_space<vmem>>, vector<1x16x16xf32>
    %952 = vector.shape_cast %951 : vector<1x16x16xf32> to vector<16x16xf32>
    %c158 = arith.constant 158 : index
    %953 = memref.load %arg6[%c158] : memref<186xf32, #tpu.memory_space<smem>>
    %954 = vector.broadcast %953 : f32 to vector<16x16xf32>
    %955 = arith.mulf %952, %954 : vector<16x16xf32>
    %956 = arith.addf %938, %955 : vector<16x16xf32>
    %c159 = arith.constant 159 : index
    %957 = memref.load %arg6[%c159] : memref<186xf32, #tpu.memory_space<smem>>
    %958 = vector.broadcast %957 : f32 to vector<16x16xf32>
    %959 = arith.mulf %952, %958 : vector<16x16xf32>
    %960 = arith.addf %942, %959 : vector<16x16xf32>
    %c160 = arith.constant 160 : index
    %961 = memref.load %arg6[%c160] : memref<186xf32, #tpu.memory_space<smem>>
    %962 = vector.broadcast %961 : f32 to vector<16x16xf32>
    %963 = arith.mulf %952, %962 : vector<16x16xf32>
    %964 = arith.addf %946, %963 : vector<16x16xf32>
    %c161 = arith.constant 161 : index
    %965 = memref.load %arg6[%c161] : memref<186xf32, #tpu.memory_space<smem>>
    %966 = vector.broadcast %965 : f32 to vector<16x16xf32>
    %967 = arith.mulf %952, %966 : vector<16x16xf32>
    %968 = arith.addf %950, %967 : vector<16x16xf32>
    %c1_304 = arith.constant 1 : index
    %c2_305 = arith.constant 2 : index
    %c0_306 = arith.constant 0 : index
    %969 = vector.load %arg9[%c1_304, %c2_305, %c0_306] : memref<2x18x18xf32, #tpu.memory_space<vmem>>, vector<1x16x16xf32>
    %970 = vector.shape_cast %969 : vector<1x16x16xf32> to vector<16x16xf32>
    %c162 = arith.constant 162 : index
    %971 = memref.load %arg6[%c162] : memref<186xf32, #tpu.memory_space<smem>>
    %972 = vector.broadcast %971 : f32 to vector<16x16xf32>
    %973 = arith.mulf %970, %972 : vector<16x16xf32>
    %974 = arith.addf %956, %973 : vector<16x16xf32>
    %c163 = arith.constant 163 : index
    %975 = memref.load %arg6[%c163] : memref<186xf32, #tpu.memory_space<smem>>
    %976 = vector.broadcast %975 : f32 to vector<16x16xf32>
    %977 = arith.mulf %970, %976 : vector<16x16xf32>
    %978 = arith.addf %960, %977 : vector<16x16xf32>
    %c164 = arith.constant 164 : index
    %979 = memref.load %arg6[%c164] : memref<186xf32, #tpu.memory_space<smem>>
    %980 = vector.broadcast %979 : f32 to vector<16x16xf32>
    %981 = arith.mulf %970, %980 : vector<16x16xf32>
    %982 = arith.addf %964, %981 : vector<16x16xf32>
    %c165 = arith.constant 165 : index
    %983 = memref.load %arg6[%c165] : memref<186xf32, #tpu.memory_space<smem>>
    %984 = vector.broadcast %983 : f32 to vector<16x16xf32>
    %985 = arith.mulf %970, %984 : vector<16x16xf32>
    %986 = arith.addf %968, %985 : vector<16x16xf32>
    %c0_307 = arith.constant 0 : index
    %c2_308 = arith.constant 2 : index
    %c1_309 = arith.constant 1 : index
    %987 = vector.load %arg9[%c0_307, %c2_308, %c1_309] : memref<2x18x18xf32, #tpu.memory_space<vmem>>, vector<1x16x16xf32>
    %988 = vector.shape_cast %987 : vector<1x16x16xf32> to vector<16x16xf32>
    %c166 = arith.constant 166 : index
    %989 = memref.load %arg6[%c166] : memref<186xf32, #tpu.memory_space<smem>>
    %990 = vector.broadcast %989 : f32 to vector<16x16xf32>
    %991 = arith.mulf %988, %990 : vector<16x16xf32>
    %992 = arith.addf %974, %991 : vector<16x16xf32>
    %c167 = arith.constant 167 : index
    %993 = memref.load %arg6[%c167] : memref<186xf32, #tpu.memory_space<smem>>
    %994 = vector.broadcast %993 : f32 to vector<16x16xf32>
    %995 = arith.mulf %988, %994 : vector<16x16xf32>
    %996 = arith.addf %978, %995 : vector<16x16xf32>
    %c168 = arith.constant 168 : index
    %997 = memref.load %arg6[%c168] : memref<186xf32, #tpu.memory_space<smem>>
    %998 = vector.broadcast %997 : f32 to vector<16x16xf32>
    %999 = arith.mulf %988, %998 : vector<16x16xf32>
    %1000 = arith.addf %982, %999 : vector<16x16xf32>
    %c169 = arith.constant 169 : index
    %1001 = memref.load %arg6[%c169] : memref<186xf32, #tpu.memory_space<smem>>
    %1002 = vector.broadcast %1001 : f32 to vector<16x16xf32>
    %1003 = arith.mulf %988, %1002 : vector<16x16xf32>
    %1004 = arith.addf %986, %1003 : vector<16x16xf32>
    %c1_310 = arith.constant 1 : index
    %c2_311 = arith.constant 2 : index
    %c1_312 = arith.constant 1 : index
    %1005 = vector.load %arg9[%c1_310, %c2_311, %c1_312] : memref<2x18x18xf32, #tpu.memory_space<vmem>>, vector<1x16x16xf32>
    %1006 = vector.shape_cast %1005 : vector<1x16x16xf32> to vector<16x16xf32>
    %c170 = arith.constant 170 : index
    %1007 = memref.load %arg6[%c170] : memref<186xf32, #tpu.memory_space<smem>>
    %1008 = vector.broadcast %1007 : f32 to vector<16x16xf32>
    %1009 = arith.mulf %1006, %1008 : vector<16x16xf32>
    %1010 = arith.addf %992, %1009 : vector<16x16xf32>
    %c171 = arith.constant 171 : index
    %1011 = memref.load %arg6[%c171] : memref<186xf32, #tpu.memory_space<smem>>
    %1012 = vector.broadcast %1011 : f32 to vector<16x16xf32>
    %1013 = arith.mulf %1006, %1012 : vector<16x16xf32>
    %1014 = arith.addf %996, %1013 : vector<16x16xf32>
    %c172 = arith.constant 172 : index
    %1015 = memref.load %arg6[%c172] : memref<186xf32, #tpu.memory_space<smem>>
    %1016 = vector.broadcast %1015 : f32 to vector<16x16xf32>
    %1017 = arith.mulf %1006, %1016 : vector<16x16xf32>
    %1018 = arith.addf %1000, %1017 : vector<16x16xf32>
    %c173 = arith.constant 173 : index
    %1019 = memref.load %arg6[%c173] : memref<186xf32, #tpu.memory_space<smem>>
    %1020 = vector.broadcast %1019 : f32 to vector<16x16xf32>
    %1021 = arith.mulf %1006, %1020 : vector<16x16xf32>
    %1022 = arith.addf %1004, %1021 : vector<16x16xf32>
    %c0_313 = arith.constant 0 : index
    %c2_314 = arith.constant 2 : index
    %c2_315 = arith.constant 2 : index
    %1023 = vector.load %arg9[%c0_313, %c2_314, %c2_315] : memref<2x18x18xf32, #tpu.memory_space<vmem>>, vector<1x16x16xf32>
    %1024 = vector.shape_cast %1023 : vector<1x16x16xf32> to vector<16x16xf32>
    %c174 = arith.constant 174 : index
    %1025 = memref.load %arg6[%c174] : memref<186xf32, #tpu.memory_space<smem>>
    %1026 = vector.broadcast %1025 : f32 to vector<16x16xf32>
    %1027 = arith.mulf %1024, %1026 : vector<16x16xf32>
    %1028 = arith.addf %1010, %1027 : vector<16x16xf32>
    %c175 = arith.constant 175 : index
    %1029 = memref.load %arg6[%c175] : memref<186xf32, #tpu.memory_space<smem>>
    %1030 = vector.broadcast %1029 : f32 to vector<16x16xf32>
    %1031 = arith.mulf %1024, %1030 : vector<16x16xf32>
    %1032 = arith.addf %1014, %1031 : vector<16x16xf32>
    %c176 = arith.constant 176 : index
    %1033 = memref.load %arg6[%c176] : memref<186xf32, #tpu.memory_space<smem>>
    %1034 = vector.broadcast %1033 : f32 to vector<16x16xf32>
    %1035 = arith.mulf %1024, %1034 : vector<16x16xf32>
    %1036 = arith.addf %1018, %1035 : vector<16x16xf32>
    %c177 = arith.constant 177 : index
    %1037 = memref.load %arg6[%c177] : memref<186xf32, #tpu.memory_space<smem>>
    %1038 = vector.broadcast %1037 : f32 to vector<16x16xf32>
    %1039 = arith.mulf %1024, %1038 : vector<16x16xf32>
    %1040 = arith.addf %1022, %1039 : vector<16x16xf32>
    %c1_316 = arith.constant 1 : index
    %c2_317 = arith.constant 2 : index
    %c2_318 = arith.constant 2 : index
    %1041 = vector.load %arg9[%c1_316, %c2_317, %c2_318] : memref<2x18x18xf32, #tpu.memory_space<vmem>>, vector<1x16x16xf32>
    %1042 = vector.shape_cast %1041 : vector<1x16x16xf32> to vector<16x16xf32>
    %c178 = arith.constant 178 : index
    %1043 = memref.load %arg6[%c178] : memref<186xf32, #tpu.memory_space<smem>>
    %1044 = vector.broadcast %1043 : f32 to vector<16x16xf32>
    %1045 = arith.mulf %1042, %1044 : vector<16x16xf32>
    %1046 = arith.addf %1028, %1045 : vector<16x16xf32>
    %c179 = arith.constant 179 : index
    %1047 = memref.load %arg6[%c179] : memref<186xf32, #tpu.memory_space<smem>>
    %1048 = vector.broadcast %1047 : f32 to vector<16x16xf32>
    %1049 = arith.mulf %1042, %1048 : vector<16x16xf32>
    %1050 = arith.addf %1032, %1049 : vector<16x16xf32>
    %c180 = arith.constant 180 : index
    %1051 = memref.load %arg6[%c180] : memref<186xf32, #tpu.memory_space<smem>>
    %1052 = vector.broadcast %1051 : f32 to vector<16x16xf32>
    %1053 = arith.mulf %1042, %1052 : vector<16x16xf32>
    %1054 = arith.addf %1036, %1053 : vector<16x16xf32>
    %c181 = arith.constant 181 : index
    %1055 = memref.load %arg6[%c181] : memref<186xf32, #tpu.memory_space<smem>>
    %1056 = vector.broadcast %1055 : f32 to vector<16x16xf32>
    %1057 = arith.mulf %1042, %1056 : vector<16x16xf32>
    %1058 = arith.addf %1040, %1057 : vector<16x16xf32>
    %cst_319 = arith.constant dense<0.000000e+00> : vector<16xf32>
    %1059 = vector.multi_reduction <add>, %1046, %cst_319 [1] : vector<16x16xf32> to vector<16xf32>
    %1060 = vector.shape_cast %1059 : vector<16xf32> to vector<16x1xf32>
    %cst_320 = arith.constant dense<0.000000e+00> : vector<1xf32>
    %1061 = vector.multi_reduction <add>, %1060, %cst_320 [0] : vector<16x1xf32> to vector<1xf32>
    %1062 = vector.shape_cast %1061 : vector<1xf32> to vector<1x1xf32>
    %cst_321 = arith.constant 3.906250e-03 : f32
    %1063 = vector.broadcast %cst_321 : f32 to vector<1x1xf32>
    %1064 = arith.mulf %1062, %1063 : vector<1x1xf32>
    %1065 = vector.broadcast %1064 : vector<1x1xf32> to vector<16x16xf32>
    %1066 = arith.subf %1046, %1065 : vector<16x16xf32>
    %1067 = arith.mulf %1066, %1066 : vector<16x16xf32>
    %cst_322 = arith.constant dense<0.000000e+00> : vector<16xf32>
    %1068 = vector.multi_reduction <add>, %1067, %cst_322 [1] : vector<16x16xf32> to vector<16xf32>
    %1069 = vector.shape_cast %1068 : vector<16xf32> to vector<16x1xf32>
    %cst_323 = arith.constant dense<0.000000e+00> : vector<1xf32>
    %1070 = vector.multi_reduction <add>, %1069, %cst_323 [0] : vector<16x1xf32> to vector<1xf32>
    %1071 = vector.shape_cast %1070 : vector<1xf32> to vector<1x1xf32>
    %cst_324 = arith.constant 3.906250e-03 : f32
    %1072 = vector.broadcast %cst_324 : f32 to vector<1x1xf32>
    %1073 = arith.mulf %1071, %1072 : vector<1x1xf32>
    %cst_325 = arith.constant 9.99999974E-6 : f32
    %1074 = vector.broadcast %cst_325 : f32 to vector<1x1xf32>
    %1075 = arith.addf %1073, %1074 : vector<1x1xf32>
    %1076 = math.rsqrt %1075 : vector<1x1xf32>
    %1077 = vector.broadcast %1076 : vector<1x1xf32> to vector<16x16xf32>
    %1078 = arith.mulf %1066, %1077 : vector<16x16xf32>
    %c0_326 = arith.constant 0 : index
    %c0_327 = arith.constant 0 : index
    %c0_328 = arith.constant 0 : index
    %c0_329 = arith.constant 0 : index
    %1079 = vector.load %arg7[%c0_326, %c0_327, %c0_328, %c0_329] : memref<1x4x16x16xf32, #tpu.memory_space<vmem>>, vector<1x1x16x16xf32>
    %1080 = vector.shape_cast %1079 : vector<1x1x16x16xf32> to vector<16x16xf32>
    %1081 = vector.shape_cast %1078 : vector<16x16xf32> to vector<1x1x16x16xf32>
    tpu.vector_store %arg7[%c0_326, %c0_327, %c0_328, %c0_329], %1081 {strides = array<i32>} : memref<1x4x16x16xf32, #tpu.memory_space<vmem>>, vector<1x1x16x16xf32>,
    %cst_330 = arith.constant dense<0.000000e+00> : vector<16xf32>
    %1082 = vector.multi_reduction <add>, %1050, %cst_330 [1] : vector<16x16xf32> to vector<16xf32>
    %1083 = vector.shape_cast %1082 : vector<16xf32> to vector<16x1xf32>
    %cst_331 = arith.constant dense<0.000000e+00> : vector<1xf32>
    %1084 = vector.multi_reduction <add>, %1083, %cst_331 [0] : vector<16x1xf32> to vector<1xf32>
    %1085 = vector.shape_cast %1084 : vector<1xf32> to vector<1x1xf32>
    %cst_332 = arith.constant 3.906250e-03 : f32
    %1086 = vector.broadcast %cst_332 : f32 to vector<1x1xf32>
    %1087 = arith.mulf %1085, %1086 : vector<1x1xf32>
    %1088 = vector.broadcast %1087 : vector<1x1xf32> to vector<16x16xf32>
    %1089 = arith.subf %1050, %1088 : vector<16x16xf32>
    %1090 = arith.mulf %1089, %1089 : vector<16x16xf32>
    %cst_333 = arith.constant dense<0.000000e+00> : vector<16xf32>
    %1091 = vector.multi_reduction <add>, %1090, %cst_333 [1] : vector<16x16xf32> to vector<16xf32>
    %1092 = vector.shape_cast %1091 : vector<16xf32> to vector<16x1xf32>
    %cst_334 = arith.constant dense<0.000000e+00> : vector<1xf32>
    %1093 = vector.multi_reduction <add>, %1092, %cst_334 [0] : vector<16x1xf32> to vector<1xf32>
    %1094 = vector.shape_cast %1093 : vector<1xf32> to vector<1x1xf32>
    %cst_335 = arith.constant 3.906250e-03 : f32
    %1095 = vector.broadcast %cst_335 : f32 to vector<1x1xf32>
    %1096 = arith.mulf %1094, %1095 : vector<1x1xf32>
    %cst_336 = arith.constant 9.99999974E-6 : f32
    %1097 = vector.broadcast %cst_336 : f32 to vector<1x1xf32>
    %1098 = arith.addf %1096, %1097 : vector<1x1xf32>
    %1099 = math.rsqrt %1098 : vector<1x1xf32>
    %1100 = vector.broadcast %1099 : vector<1x1xf32> to vector<16x16xf32>
    %1101 = arith.mulf %1089, %1100 : vector<16x16xf32>
    %c0_337 = arith.constant 0 : index
    %c1_338 = arith.constant 1 : index
    %c0_339 = arith.constant 0 : index
    %c0_340 = arith.constant 0 : index
    %1102 = vector.load %arg7[%c0_337, %c1_338, %c0_339, %c0_340] : memref<1x4x16x16xf32, #tpu.memory_space<vmem>>, vector<1x1x16x16xf32>
    %1103 = vector.shape_cast %1102 : vector<1x1x16x16xf32> to vector<16x16xf32>
    %1104 = vector.shape_cast %1101 : vector<16x16xf32> to vector<1x1x16x16xf32>
    tpu.vector_store %arg7[%c0_337, %c1_338, %c0_339, %c0_340], %1104 {strides = array<i32>} : memref<1x4x16x16xf32, #tpu.memory_space<vmem>>, vector<1x1x16x16xf32>,
    %cst_341 = arith.constant dense<0.000000e+00> : vector<16xf32>
    %1105 = vector.multi_reduction <add>, %1054, %cst_341 [1] : vector<16x16xf32> to vector<16xf32>
    %1106 = vector.shape_cast %1105 : vector<16xf32> to vector<16x1xf32>
    %cst_342 = arith.constant dense<0.000000e+00> : vector<1xf32>
    %1107 = vector.multi_reduction <add>, %1106, %cst_342 [0] : vector<16x1xf32> to vector<1xf32>
    %1108 = vector.shape_cast %1107 : vector<1xf32> to vector<1x1xf32>
    %cst_343 = arith.constant 3.906250e-03 : f32
    %1109 = vector.broadcast %cst_343 : f32 to vector<1x1xf32>
    %1110 = arith.mulf %1108, %1109 : vector<1x1xf32>
    %1111 = vector.broadcast %1110 : vector<1x1xf32> to vector<16x16xf32>
    %1112 = arith.subf %1054, %1111 : vector<16x16xf32>
    %1113 = arith.mulf %1112, %1112 : vector<16x16xf32>
    %cst_344 = arith.constant dense<0.000000e+00> : vector<16xf32>
    %1114 = vector.multi_reduction <add>, %1113, %cst_344 [1] : vector<16x16xf32> to vector<16xf32>
    %1115 = vector.shape_cast %1114 : vector<16xf32> to vector<16x1xf32>
    %cst_345 = arith.constant dense<0.000000e+00> : vector<1xf32>
    %1116 = vector.multi_reduction <add>, %1115, %cst_345 [0] : vector<16x1xf32> to vector<1xf32>
    %1117 = vector.shape_cast %1116 : vector<1xf32> to vector<1x1xf32>
    %cst_346 = arith.constant 3.906250e-03 : f32
    %1118 = vector.broadcast %cst_346 : f32 to vector<1x1xf32>
    %1119 = arith.mulf %1117, %1118 : vector<1x1xf32>
    %cst_347 = arith.constant 9.99999974E-6 : f32
    %1120 = vector.broadcast %cst_347 : f32 to vector<1x1xf32>
    %1121 = arith.addf %1119, %1120 : vector<1x1xf32>
    %1122 = math.rsqrt %1121 : vector<1x1xf32>
    %1123 = vector.broadcast %1122 : vector<1x1xf32> to vector<16x16xf32>
    %1124 = arith.mulf %1112, %1123 : vector<16x16xf32>
    %c0_348 = arith.constant 0 : index
    %c2_349 = arith.constant 2 : index
    %c0_350 = arith.constant 0 : index
    %c0_351 = arith.constant 0 : index
    %1125 = vector.load %arg7[%c0_348, %c2_349, %c0_350, %c0_351] : memref<1x4x16x16xf32, #tpu.memory_space<vmem>>, vector<1x1x16x16xf32>
    %1126 = vector.shape_cast %1125 : vector<1x1x16x16xf32> to vector<16x16xf32>
    %1127 = vector.shape_cast %1124 : vector<16x16xf32> to vector<1x1x16x16xf32>
    tpu.vector_store %arg7[%c0_348, %c2_349, %c0_350, %c0_351], %1127 {strides = array<i32>} : memref<1x4x16x16xf32, #tpu.memory_space<vmem>>, vector<1x1x16x16xf32>,
    %cst_352 = arith.constant dense<0.000000e+00> : vector<16xf32>
    %1128 = vector.multi_reduction <add>, %1058, %cst_352 [1] : vector<16x16xf32> to vector<16xf32>
    %1129 = vector.shape_cast %1128 : vector<16xf32> to vector<16x1xf32>
    %cst_353 = arith.constant dense<0.000000e+00> : vector<1xf32>
    %1130 = vector.multi_reduction <add>, %1129, %cst_353 [0] : vector<16x1xf32> to vector<1xf32>
    %1131 = vector.shape_cast %1130 : vector<1xf32> to vector<1x1xf32>
    %cst_354 = arith.constant 3.906250e-03 : f32
    %1132 = vector.broadcast %cst_354 : f32 to vector<1x1xf32>
    %1133 = arith.mulf %1131, %1132 : vector<1x1xf32>
    %1134 = vector.broadcast %1133 : vector<1x1xf32> to vector<16x16xf32>
    %1135 = arith.subf %1058, %1134 : vector<16x16xf32>
    %1136 = arith.mulf %1135, %1135 : vector<16x16xf32>
    %cst_355 = arith.constant dense<0.000000e+00> : vector<16xf32>
    %1137 = vector.multi_reduction <add>, %1136, %cst_355 [1] : vector<16x16xf32> to vector<16xf32>
    %1138 = vector.shape_cast %1137 : vector<16xf32> to vector<16x1xf32>
    %cst_356 = arith.constant dense<0.000000e+00> : vector<1xf32>
    %1139 = vector.multi_reduction <add>, %1138, %cst_356 [0] : vector<16x1xf32> to vector<1xf32>
    %1140 = vector.shape_cast %1139 : vector<1xf32> to vector<1x1xf32>
    %cst_357 = arith.constant 3.906250e-03 : f32
    %1141 = vector.broadcast %cst_357 : f32 to vector<1x1xf32>
    %1142 = arith.mulf %1140, %1141 : vector<1x1xf32>
    %cst_358 = arith.constant 9.99999974E-6 : f32
    %1143 = vector.broadcast %cst_358 : f32 to vector<1x1xf32>
    %1144 = arith.addf %1142, %1143 : vector<1x1xf32>
    %1145 = math.rsqrt %1144 : vector<1x1xf32>
    %1146 = vector.broadcast %1145 : vector<1x1xf32> to vector<16x16xf32>
    %1147 = arith.mulf %1135, %1146 : vector<16x16xf32>
    %c0_359 = arith.constant 0 : index
    %c3_360 = arith.constant 3 : index
    %c0_361 = arith.constant 0 : index
    %c0_362 = arith.constant 0 : index
    %1148 = vector.load %arg7[%c0_359, %c3_360, %c0_361, %c0_362] : memref<1x4x16x16xf32, #tpu.memory_space<vmem>>, vector<1x1x16x16xf32>
    %1149 = vector.shape_cast %1148 : vector<1x1x16x16xf32> to vector<16x16xf32>
    %1150 = vector.shape_cast %1147 : vector<16x16xf32> to vector<1x1x16x16xf32>
    tpu.vector_store %arg7[%c0_359, %c3_360, %c0_361, %c0_362], %1150 {strides = array<i32>} : memref<1x4x16x16xf32, #tpu.memory_space<vmem>>, vector<1x1x16x16xf32>,
    return
  }
  func.func @transform_0(%arg0: i32) -> (i32, i32, i32) {
    %c0_i32 = arith.constant 0 : i32
    %c0_i32_0 = arith.constant 0 : i32
    %c0_i32_1 = arith.constant 0 : i32
    return %arg0, %c0_i32, %c0_i32_0 : i32, i32, i32
  }
  func.func @transform_1(%arg0: i32) -> (i32, i32) {
    %c0_i32 = arith.constant 0 : i32
    %c0_i32_0 = arith.constant 0 : i32
    %c0_i32_1 = arith.constant 0 : i32
    return %c0_i32, %c0_i32_0 : i32, i32
  }
  func.func @transform_2(%arg0: i32) -> (i32, i32) {
    %c0_i32 = arith.constant 0 : i32
    %c0_i32_0 = arith.constant 0 : i32
    %c0_i32_1 = arith.constant 0 : i32
    return %c0_i32, %c0_i32_0 : i32, i32
  }
  func.func @transform_3(%arg0: i32) -> (i32, i32) {
    %c0_i32 = arith.constant 0 : i32
    %c0_i32_0 = arith.constant 0 : i32
    %c0_i32_1 = arith.constant 0 : i32
    return %c0_i32, %c0_i32_0 : i32, i32
  }
  func.func @transform_4(%arg0: i32) -> (i32, i32) {
    %c0_i32 = arith.constant 0 : i32
    %c0_i32_0 = arith.constant 0 : i32
    %c0_i32_1 = arith.constant 0 : i32
    return %c0_i32, %c0_i32_0 : i32, i32
  }
  func.func @transform_5(%arg0: i32) -> i32 {
    %c0_i32 = arith.constant 0 : i32
    %c0_i32_0 = arith.constant 0 : i32
    return %c0_i32 : i32
  }
  func.func @transform_6(%arg0: i32) -> (i32, i32, i32, i32) {
    %c0_i32 = arith.constant 0 : i32
    %c0_i32_0 = arith.constant 0 : i32
    %c0_i32_1 = arith.constant 0 : i32
    %c0_i32_2 = arith.constant 0 : i32
    return %arg0, %c0_i32, %c0_i32_0, %c0_i32_1 : i32, i32, i32, i32
  }
}

</mosaic_0001>

<llo_original>
// kernel: r_forward.1
$region0: #{r_forward.1}
  #allocation0 [shape = 'u32[]', space=smem, size = 0x4, offset = 0x4, fixed_abs, tag = 'smem constant byte address 0x4 - core index']
  #allocation1 [shape = 'u32[72,128]{1,0:T(1,128)}', space=vmem, size = 0x9000, scoped, tag = 'internal scratch']
  #allocation2 [shape = 'f32[6,20,20]{2,1,0:T(8,128)}', space=vmem, size = 0x12000, scoped, tag = 'scratch operand']
  #allocation3 [shape = 'f32[2,18,18]{2,1,0:T(8,128)}', space=vmem, size = 0x6000, scoped, tag = 'scratch operand']
  %s0 = inlined_call_operand.vmem [shape: f32[2,6,256], index: 0, kind: input, shape index: {}]
  %s1 = inlined_call_operand.vmem [shape: f32[9,6], index: 1, kind: input, shape index: {}]
  %s2 = inlined_call_operand.vmem [shape: f32[9,1], index: 2, kind: input, shape index: {}]
  %s3 = inlined_call_operand.vmem [shape: f32[6,3], index: 3, kind: input, shape index: {}]
  %s4 = inlined_call_operand.vmem [shape: f32[6,1], index: 4, kind: input, shape index: {}]
  %s5 = inlined_call_operand.vmem [shape: f32[186], index: 5, kind: input, shape index: {}]
  %s6 = inlined_call_operand.hbm [shape: f32[2,4,16,16], index: 6, kind: output, shape index: {}]
  %s7 = sld [smem:[#allocation0]]
  $region61: #{r_forward.1} parent=0
    _
  %s9 = ssub.s32 1, %s7
  %s10 = scalar_select 0, %s9, %s7
  $region1: #{r_forward.1} parent=0
    #allocation4 [shape = 'u8[1024]{0}', space=smem, size = 0x400, scoped, tag = 'input window, operand 5, single buffered']
    #allocation5 [shape = 's32[2]{0}', space=sflag, size = 0x8, scoped, tag = 'scoped memory for r_forward.1']
    #allocation6 [shape = 's32[2]{0}', space=sflag, size = 0x8, scoped, tag = 'scoped memory for r_forward.1']
    #allocation7 [shape = 'u8[65536]{0}', space=vmem, size = 0x10000, scoped, tag = 'output window, operand 0']
    %11 = vsyncpa [#allocation6], 0
    %12 = vsyncpa [#allocation5], 0
    %s13 = scalar_lea.sflag [#allocation5], 1
    %14 = vsyncpa %s13, 0
    loop: start=0, step=1, limit=4
    $region2: #{r_forward.1} parent=1 // loop_pre_header
      _
    $region3: #{r_forward.1} parent=1 // loop_header
      %s16 = sphi 0, %s20
      %p17 = scmp.ge.s32.totalorder %s16, 4
      %s26 = sphi 0, %s28
      %s29 = sphi 0, %s26
      %s30 = sphi 0, %s29
      %s46 = sphi 0, %s30
      %s50 = sphi 0, %s50
      %s52 = sphi 0, %s50
      %s53 = sphi 0, %s52
      %s67 = sphi 0, %s53
      %s71 = sphi 0, %s71
      %s73 = sphi 0, %s71
      %s74 = sphi 0, %s73
      %s88 = sphi 0, %s74
      %s92 = sphi 0, %s92
      %s94 = sphi 0, %s92
      %s95 = sphi 0, %s94
      %s109 = sphi 0, %s95
      %s113 = sphi 0, %s113
      %s115 = sphi 0, %s113
      %s116 = sphi 0, %s115
      %s130 = sphi 0, %s116
      %s134 = sphi 0, %s134
      %s136 = sphi 0, %s134
      %s137 = sphi 0, %s136
      %s151 = sphi 0, %s137
      %s157 = sphi 0, %s159
      %s160 = sphi 0, %s157
      %s161 = sphi 0, %s160
      %s177 = sphi 0, %s161
    $region4: #{r_forward.1} parent=1 // loop_header_branch
      %19 = sbr.rel (%p17) target = $region8
    $region5: #{r_forward.1} parent=1 // loop_body
      %s21 = ssub.s32 %s16, 1
      %s22 = ssub.s32 %s16, 2
      %s23 = sadd.s32 %s16, 1
      %s24 = ssub.s32 %s16, %s23
      %p25 = scmp.eq.s32.totalorder %s24, 0
      %s27 = sadd.s32 %s26, 1
      %s28 = scalar_select %p25, %s26, %s27
      %p31 = pneg %p25
      %p32 = scmp.eq.s32.totalorder %s16, 1
      %p33 = por %p31, %p32
      %p34 = scmp.ne.s32.totalorder %s26, %s29
      %p35 = scmp.eq.s32.totalorder %s16, 0
      %p36 = por %p34, %p35
      %p37 = scmp.ne.s32.totalorder %s26, %s29
      %p38 = scmp.eq.s32.totalorder %s21, 1
      %p39 = por %p37, %p38
      %p40 = scmp.ne.s32.totalorder %s29, %s30
      %p41 = scmp.eq.s32.totalorder %s21, 0
      %p42 = por %p40, %p41
      %p43 = scmp.ne.s32.totalorder %s29, %s30
      %p44 = scmp.eq.s32.totalorder %s22, 1
      %p45 = por %p43, %p44
      %p47 = scmp.ne.s32.totalorder %s30, %s46
      %p48 = scmp.eq.s32.totalorder %s22, 0
      %p49 = por %p47, %p48
      %s51 = sadd.s32 %s50, 1
      %p54 = scmp.eq.s32.totalorder %s16, 1
      %p55 = scmp.ne.s32.totalorder %s50, %s52
      %p56 = scmp.eq.s32.totalorder %s16, 0
      %p57 = por %p55, %p56
      %p58 = scmp.ne.s32.totalorder %s50, %s52
      %p59 = scmp.eq.s32.totalorder %s21, 1
      %p60 = por %p58, %p59
      %p61 = scmp.ne.s32.totalorder %s52, %s53
      %p62 = scmp.eq.s32.totalorder %s21, 0
      %p63 = por %p61, %p62
      %p64 = scmp.ne.s32.totalorder %s52, %s53
      %p65 = scmp.eq.s32.totalorder %s22, 1
      %p66 = por %p64, %p65
      %p68 = scmp.ne.s32.totalorder %s53, %s67
      %p69 = scmp.eq.s32.totalorder %s22, 0
      %p70 = por %p68, %p69
      %s72 = sadd.s32 %s71, 1
      %p75 = scmp.eq.s32.totalorder %s16, 1
      %p76 = scmp.ne.s32.totalorder %s71, %s73
      %p77 = scmp.eq.s32.totalorder %s16, 0
      %p78 = por %p76, %p77
      %p79 = scmp.ne.s32.totalorder %s71, %s73
      %p80 = scmp.eq.s32.totalorder %s21, 1
      %p81 = por %p79, %p80
      %p82 = scmp.ne.s32.totalorder %s73, %s74
      %p83 = scmp.eq.s32.totalorder %s21, 0
      %p84 = por %p82, %p83
      %p85 = scmp.ne.s32.totalorder %s73, %s74
      %p86 = scmp.eq.s32.totalorder %s22, 1
      %p87 = por %p85, %p86
      %p89 = scmp.ne.s32.totalorder %s74, %s88
      %p90 = scmp.eq.s32.totalorder %s22, 0
      %p91 = por %p89, %p90
      %s93 = sadd.s32 %s92, 1
      %p96 = scmp.eq.s32.totalorder %s16, 1
      %p97 = scmp.ne.s32.totalorder %s92, %s94
      %p98 = scmp.eq.s32.totalorder %s16, 0
      %p99 = por %p97, %p98
      %p100 = scmp.ne.s32.totalorder %s92, %s94
      %p101 = scmp.eq.s32.totalorder %s21, 1
      %p102 = por %p100, %p101
      %p103 = scmp.ne.s32.totalorder %s94, %s95
      %p104 = scmp.eq.s32.totalorder %s21, 0
      %p105 = por %p103, %p104
      %p106 = scmp.ne.s32.totalorder %s94, %s95
      %p107 = scmp.eq.s32.totalorder %s22, 1
      %p108 = por %p106, %p107
      %p110 = scmp.ne.s32.totalorder %s95, %s109
      %p111 = scmp.eq.s32.totalorder %s22, 0
      %p112 = por %p110, %p111
      %s114 = sadd.s32 %s113, 1
      %p117 = scmp.eq.s32.totalorder %s16, 1
      %p118 = scmp.ne.s32.totalorder %s113, %s115
      %p119 = scmp.eq.s32.totalorder %s16, 0
      %p120 = por %p118, %p119
      %p121 = scmp.ne.s32.totalorder %s113, %s115
      %p122 = scmp.eq.s32.totalorder %s21, 1
      %p123 = por %p121, %p122
      %p124 = scmp.ne.s32.totalorder %s115, %s116
      %p125 = scmp.eq.s32.totalorder %s21, 0
      %p126 = por %p124, %p125
      %p127 = scmp.ne.s32.totalorder %s115, %s116
      %p128 = scmp.eq.s32.totalorder %s22, 1
      %p129 = por %p127, %p128
      %p131 = scmp.ne.s32.totalorder %s116, %s130
      %p132 = scmp.eq.s32.totalorder %s22, 0
      %p133 = por %p131, %p132
      %s135 = sadd.s32 %s134, 1
      %p138 = scmp.eq.s32.totalorder %s16, 1
      %p139 = scmp.ne.s32.totalorder %s134, %s136
      %p140 = scmp.eq.s32.totalorder %s16, 0
      %p141 = por %p139, %p140
      %p142 = scmp.ne.s32.totalorder %s134, %s136
      %p143 = scmp.eq.s32.totalorder %s21, 1
      %p144 = por %p142, %p143
      %p145 = scmp.ne.s32.totalorder %s136, %s137
      %p146 = scmp.eq.s32.totalorder %s21, 0
      %p147 = por %p145, %p146
      %p148 = scmp.ne.s32.totalorder %s136, %s137
      %p149 = scmp.eq.s32.totalorder %s22, 1
      %p150 = por %p148, %p149
      %p152 = scmp.ne.s32.totalorder %s137, %s151
      %p153 = scmp.eq.s32.totalorder %s22, 0
      %p154 = por %p152, %p153
      %s155 = ssub.s32 %s16, %s23
      %p156 = scmp.eq.s32.totalorder %s155, 0
      %s158 = sadd.s32 %s157, 1
      %s159 = scalar_select %p156, %s157, %s158
      %p162 = pneg %p156
      %p163 = scmp.eq.s32.totalorder %s16, 1
      %p164 = por %p162, %p163
      %p165 = scmp.ne.s32.totalorder %s157, %s160
      %p166 = scmp.eq.s32.totalorder %s16, 0
      %p167 = por %p165, %p166
      %p168 = scmp.ne.s32.totalorder %s157, %s160
      %p169 = scmp.eq.s32.totalorder %s21, 1
      %p170 = por %p168, %p169
      %p171 = scmp.ne.s32.totalorder %s160, %s161
      %p172 = scmp.eq.s32.totalorder %s21, 0
      %p173 = por %p171, %p172
      %p174 = scmp.ne.s32.totalorder %s160, %s161
      %p175 = scmp.eq.s32.totalorder %s22, 1
      %p176 = por %p174, %p175
      %p178 = scmp.ne.s32.totalorder %s161, %s177
      %p179 = scmp.eq.s32.totalorder %s22, 0
      %p180 = por %p178, %p179
      %p181 = scmp.le.s32.totalorder 1, %s16
      %p182 = scmp.lt.s32.totalorder %s16, 3
      %p183 = pnand %p181, %p182
      %p184 = pneg %p183
      // Predicated region
      $region9: #{r_forward.1} parent=5 // pred_check
        _
      $region10: #{r_forward.1} parent=5 // pred_check_branch
        %186 = sbr.rel (%p183) target = $region12
      $region11: #{r_forward.1} parent=5 // pred_region
        %s187 = ssub.s32 %s16, 1
        // Predicated region
        $region13: #{r_forward.1} parent=11 // pred_check
          %p188 = pneg %p63
        $region14: #{r_forward.1} parent=11 // pred_check_branch
          %190 = sbr.rel (%p188) target = $region16
        $region15: #{r_forward.1} parent=11 // pred_region
          _
        $region16: #{r_forward.1} parent=11 // pred_fallthru
          _
        // Predicated region
        $region17: #{r_forward.1} parent=11 // pred_check
          %p191 = pneg %p84
        $region18: #{r_forward.1} parent=11 // pred_check_branch
          %193 = sbr.rel (%p191) target = $region20
        $region19: #{r_forward.1} parent=11 // pred_region
          _
        $region20: #{r_forward.1} parent=11 // pred_fallthru
          _
        // Predicated region
        $region21: #{r_forward.1} parent=11 // pred_check
          %p194 = pneg %p105
        $region22: #{r_forward.1} parent=11 // pred_check_branch
          %196 = sbr.rel (%p194) target = $region24
        $region23: #{r_forward.1} parent=11 // pred_region
          _
        $region24: #{r_forward.1} parent=11 // pred_fallthru
          _
        // Predicated region
        $region25: #{r_forward.1} parent=11 // pred_check
          %p197 = pneg %p126
        $region26: #{r_forward.1} parent=11 // pred_check_branch
          %199 = sbr.rel (%p197) target = $region28
        $region27: #{r_forward.1} parent=11 // pred_region
          _
        $region28: #{r_forward.1} parent=11 // pred_fallthru
          _
        // Predicated region
        $region29: #{r_forward.1} parent=11 // pred_check
          %p200 = pneg %p147
        $region30: #{r_forward.1} parent=11 // pred_check_branch
          %202 = sbr.rel (%p200) target = $region32
        $region31: #{r_forward.1} parent=11 // pred_region
          %204 = vsyncadd [#allocation6], 0
          %s206 = sshll.u32 %s5, 4
          %s207 = int_to_ptr.vmem [resolvable:$true] %s206
          %209 = dma.vmem_to_smem %s207, 32, [#allocation4], [#allocation6]
        $region32: #{r_forward.1} parent=11 // pred_fallthru
          _
      $region12: #{r_forward.1} parent=5 // pred_fallthru
        _
      %p210 = scmp.lt.s32.totalorder %s16, 2
      // Predicated region
      $region33: #{r_forward.1} parent=5 // pred_check
        %p211 = pneg %p210
      $region34: #{r_forward.1} parent=5 // pred_check_branch
        %213 = sbr.rel (%p211) target = $region36
      $region35: #{r_forward.1} parent=5 // pred_region
        // Predicated region
        $region37: #{r_forward.1} parent=35 // pred_check
          %p214 = pneg %p36
        $region38: #{r_forward.1} parent=35 // pred_check_branch
          %216 = sbr.rel (%p214) target = $region40
        $region39: #{r_forward.1} parent=35 // pred_region
          %p217 = scmp.lt.s32.totalorder %s16, 1
          %s218 = scalar_select %p217, %s16, 1
          %s219 = smul.addr %s218, 2
          %s220 = smul.addr %s219, 8
          %s221 = scalar_lea.vmem %s0, %s220
        $region40: #{r_forward.1} parent=35 // pred_fallthru
          _
      $region36: #{r_forward.1} parent=5 // pred_fallthru
        _
      %p222 = scmp.le.s32.totalorder 1, %s16
      %p223 = scmp.lt.s32.totalorder %s16, 3
      %p224 = pnand %p222, %p223
      %p225 = pneg %p224
      // Predicated region
      $region41: #{r_forward.1} parent=5 // pred_check
        _
      $region42: #{r_forward.1} parent=5 // pred_check_branch
        %227 = sbr.rel (%p224) target = $region44
      $region43: #{r_forward.1} parent=5 // pred_region
        %s228 = ssub.s32 %s16, 1
        // Predicated region
        $region45: #{r_forward.1} parent=43 // pred_check
          %p229 = pneg %p147
        $region46: #{r_forward.1} parent=43 // pred_check_branch
          %231 = sbr.rel (%p229) target = $region48
        $region47: #{r_forward.1} parent=43 // pred_region
          %233 = dma.done [#allocation6], 32
        $region48: #{r_forward.1} parent=43 // pred_fallthru
          _
        %234 = sfence
        %p235 = scmp.lt.s32.totalorder %s21, 1
        %s236 = scalar_select %p235, %s21, 1
        %s237 = smul.addr %s236, 2
        %s238 = smul.addr %s237, 8
        %s239 = scalar_lea.vmem %s0, %s238
        %p240 = pneg %p42
        %p241 = pneg %p39
        %p242 = pneg %p63
        %p243 = pneg %p60
        %p244 = pneg %p84
        %p245 = pneg %p81
        %p246 = pneg %p105
        %p247 = pneg %p102
        %p248 = pneg %p126
        %p249 = pneg %p123
        %p250 = pneg %p147
        %p251 = pneg %p144
        %p252 = pneg %p173
        %p253 = pneg %p170
        %s254 = sand.u32 %s160, 1
        %s255 = scalar_lea.sflag [#allocation5], %s254
        %s256 = sand.u32 %s160, 1
        %s257 = smul.addr %s256, 64
        %s258 = scalar_lea.vmem [#allocation7], %s257
        %p259 = scmp.lt.s32.totalorder %s21, 1
        %s260 = scalar_select %p259, %s21, 1
        %s261 = smul.addr %s260, 2
        %s262 = smul.addr %s261, 8
        %s263 = scalar_lea.vmem %s0, %s262
        %v264 = vld [vmem:[%s263] sm:$0x3f]
        %v265 = vld [vmem:[%s263 + $0x8] sm:$0x3f]
        %v266 = vld [vmem:[%s1] sm:$0xff]
        %v267 = vld [vmem:[%s1 + $0x8] sm:$0x1]
        %v268 = vld [vmem:[%s2] sm:$0xff]
        %v269 = vld [vmem:[%s2 + $0x8] sm:$0x1]
        %271 = vset.pattern.permute.xlu0 0
        %272 = vperm.xlu0 %271, %v268
        %v273 = vpop.permute.xlu0 %272
        %276 = vset.pattern.permute.xlu0 0
        %277 = vperm.xlu0 %276, %v269
        %v278 = vpop.permute.xlu0 %277
        %vm280 = vcmask 48128
        %v282 = vsel %vm280, %v266, 0
        %v285 = vsel %vm280, %v267, 0
        %vm287 = vcmask 1045504
        %v289 = vsel %vm287, %v264, 0
        %v292 = vsel %vm287, %v265, 0
        %294 = vmatpush.msra.mxu0 0.0
        %295 = vmatpush.msra.mxu0 0.0
        %296 = vmatpush.msra.mxu0 0.0
        %297 = vmatpush.msra.mxu0 0.0
        %298 = vmatpush.msra.mxu0 0.0
        %299 = vmatpush.msra.mxu0 0.0
        %300 = vmatpush.msra.mxu0 0.0
        %301 = vmatpush.msra.mxu0 0.0
        %302 = vmatpush.msra.mxu0 0.0
        %303 = vmatpush.msra.mxu0 0.0
        %304 = vmatpush.msra.mxu0 0.0
        %305 = vmatpush.msra.mxu0 0.0
        %306 = vmatpush.msra.mxu0 0.0
        %307 = vmatpush.msra.mxu0 0.0
        %308 = vmatpush.msra.mxu0 0.0
        %309 = vmatpush.msra.mxu0 %v289
        %310 = vmatmul.f32.gmra.mxu0 %v282
        %v311 = vpop.f32.mrf.mxu0
        %v312 = vadd.f32 %v273, %v311
        %313 = vmatmul.f32.gmra.mxu0 %v285
        %v314 = vpop.f32.mrf.mxu0
        %v315 = vadd.f32 %v278, %v314
        %316 = vdwg.mxu0
        %317 = vmatpush.msra.mxu0 0.0
        %318 = vmatpush.msra.mxu0 0.0
        %319 = vmatpush.msra.mxu0 0.0
        %320 = vmatpush.msra.mxu0 0.0
        %321 = vmatpush.msra.mxu0 0.0
        %322 = vmatpush.msra.mxu0 0.0
        %323 = vmatpush.msra.mxu0 0.0
        %324 = vmatpush.msra.mxu0 0.0
        %325 = vmatpush.msra.mxu0 0.0
        %326 = vmatpush.msra.mxu0 0.0
        %327 = vmatpush.msra.mxu0 0.0
        %328 = vmatpush.msra.mxu0 0.0
        %329 = vmatpush.msra.mxu0 0.0
        %330 = vmatpush.msra.mxu0 0.0
        %331 = vmatpush.msra.mxu0 0.0
        %332 = vmatpush.msra.mxu0 %v292
        %333 = vmatmul.f32.gmra.mxu0 %v282
        %v334 = vpop.f32.mrf.mxu0
        %v335 = vadd.f32 %v273, %v334
        %336 = vmatmul.f32.gmra.mxu0 %v285
        %v337 = vpop.f32.mrf.mxu0
        %v338 = vadd.f32 %v278, %v337
        %339 = vdwg.mxu0
        %vm340 = vcmask 162816
        %341 = vst.msk [vmem:[#allocation2] sm:$0xff] %vm340, 0.0
        %342 = vst.msk [vmem:[#allocation2 + $0x8] sm:$0xff] %vm340, 0.0
        %vm343 = vcmask 158720
        %344 = vst.msk [vmem:[#allocation2 + $0x10] sm:$0xf] %vm343, 0.0
        %345 = vst.msk [vmem:[#allocation2 + $0x18] sm:$0xff] %vm340, 0.0
        %346 = vst.msk [vmem:[#allocation2 + $0x20] sm:$0xff] %vm340, 0.0
        %347 = vst.msk [vmem:[#allocation2 + $0x28] sm:$0xf] %vm343, 0.0
        %348 = vst.msk [vmem:[#allocation2 + $0x30] sm:$0xff] %vm340, 0.0
        %349 = vst.msk [vmem:[#allocation2 + $0x38] sm:$0xff] %vm340, 0.0
        %350 = vst.msk [vmem:[#allocation2 + $0x40] sm:$0xf] %vm343, 0.0
        %351 = vst.msk [vmem:[#allocation2 + $0x48] sm:$0xff] %vm340, 0.0
        %352 = vst.msk [vmem:[#allocation2 + $0x50] sm:$0xff] %vm340, 0.0
        %353 = vst.msk [vmem:[#allocation2 + $0x58] sm:$0xf] %vm343, 0.0
        %354 = vst.msk [vmem:[#allocation2 + $0x60] sm:$0xff] %vm340, 0.0
        %355 = vst.msk [vmem:[#allocation2 + $0x68] sm:$0xff] %vm340, 0.0
        %356 = vst.msk [vmem:[#allocation2 + $0x70] sm:$0xf] %vm343, 0.0
        %357 = vst.msk [vmem:[#allocation2 + $0x78] sm:$0xff] %vm340, 0.0
        %358 = vst.msk [vmem:[#allocation2 + $0x80] sm:$0xff] %vm340, 0.0
        %359 = vst.msk [vmem:[#allocation2 + $0x88] sm:$0xf] %vm343, 0.0
        %360 = vxpose.xlu0.b32.start [1/16] %v312, 128
        %361 = vxpose.xlu0.b32.cont [2/16] 0.0, 128
        %362 = vxpose.xlu0.b32.cont [3/16] 0.0, 128
        %363 = vxpose.xlu0.b32.cont [4/16] 0.0, 128
        %364 = vxpose.xlu0.b32.cont [5/16] 0.0, 128
        %365 = vxpose.xlu0.b32.cont [6/16] 0.0, 128
        %366 = vxpose.xlu0.b32.cont [7/16] 0.0, 128
        %367 = vxpose.xlu0.b32.cont [8/16] 0.0, 128
        %368 = vxpose.xlu0.b32.cont [9/16] 0.0, 128
        %369 = vxpose.xlu0.b32.cont [10/16] 0.0, 128
        %370 = vxpose.xlu0.b32.cont [11/16] 0.0, 128
        %371 = vxpose.xlu0.b32.cont [12/16] 0.0, 128
        %372 = vxpose.xlu0.b32.cont [13/16] 0.0, 128
        %373 = vxpose.xlu0.b32.cont [14/16] 0.0, 128
        %374 = vxpose.xlu0.b32.cont [15/16] 0.0, 128
        %375 = vxpose.xlu0.b32.end [16/16] 0.0, 128
        %v376 = vpop.trf.xlu0
        %v377 = vpop.trf.xlu0
        %v378 = vpop.trf.xlu0
        %v379 = vpop.trf.xlu0
        %v380 = vpop.trf.xlu0
        %v381 = vpop.trf.xlu0
        %v382 = vpop.trf.xlu0
        %v383 = vpop.trf.xlu0
        %v384 = vpop.trf.xlu0
        %v385 = vpop.trf.xlu0
        %v386 = vpop.trf.xlu0
        %v387 = vpop.trf.xlu0
        %v388 = vpop.trf.xlu0
        %v389 = vpop.trf.xlu0
        %v390 = vpop.trf.xlu0
        %v391 = vpop.trf.xlu0
        %v393 = vrot.slane %v312, 3
        %vm394 = vcmask 23552
        %v396 = vsel %vm394, %v376, 0
        %v399 = vsel %vm394, %v377, 0
        %v402 = vsel %vm394, %v378, 0
        %v405 = vsel %vm394, %v379, 0
        %v408 = vsel %vm394, %v380, 0
        %v411 = vsel %vm394, %v381, 0
        %v414 = vsel %vm394, %v382, 0
        %v417 = vsel %vm394, %v383, 0
        %vm419 = vcmask 1042432
        %v420 = vsel %vm419, %v393, 0
        %422 = vmatpush.msra.mxu0 0.0
        %423 = vmatpush.msra.mxu0 0.0
        %424 = vmatpush.msra.mxu0 0.0
        %425 = vmatpush.msra.mxu0 0.0
        %426 = vmatpush.msra.mxu0 0.0
        %427 = vmatpush.msra.mxu0 0.0
        %428 = vmatpush.msra.mxu0 0.0
        %429 = vmatpush.msra.mxu0 0.0
        %430 = vmatpush.msra.mxu0 0.0
        %431 = vmatpush.msra.mxu0 0.0
        %432 = vmatpush.msra.mxu0 0.0
        %433 = vmatpush.msra.mxu0 0.0
        %434 = vmatpush.msra.mxu0 0.0
        %435 = vmatpush.msra.mxu0 0.0
        %436 = vmatpush.msra.mxu0 0.0
        %437 = vmatpush.msra.mxu0 %v420
        %438 = vmatmul.f32.gmra.mxu0 %v396
        %v439 = vpop.f32.mrf.mxu0
        %v440 = vadd.f32 0.0, %v439
        %441 = vmatmul.f32.gmra.mxu0 %v399
        %v442 = vpop.f32.mrf.mxu0
        %v443 = vadd.f32 0.0, %v442
        %444 = vmatmul.f32.gmra.mxu0 %v402
        %v445 = vpop.f32.mrf.mxu0
        %v446 = vadd.f32 0.0, %v445
        %447 = vmatmul.f32.gmra.mxu0 %v405
        %v448 = vpop.f32.mrf.mxu0
        %v449 = vadd.f32 0.0, %v448
        %450 = vmatmul.f32.gmra.mxu0 %v408
        %v451 = vpop.f32.mrf.mxu0
        %v452 = vadd.f32 0.0, %v451
        %453 = vmatmul.f32.gmra.mxu0 %v411
        %v454 = vpop.f32.mrf.mxu0
        %v455 = vadd.f32 0.0, %v454
        %456 = vmatmul.f32.gmra.mxu0 %v414
        %v457 = vpop.f32.mrf.mxu0
        %v458 = vadd.f32 0.0, %v457
        %459 = vmatmul.f32.gmra.mxu0 %v417
        %v460 = vpop.f32.mrf.mxu0
        %v461 = vadd.f32 0.0, %v460
        %462 = vdwg.mxu0
        %vm463 = vcmask 523264
        %v464 = vsel %vm463, %v440, -inf
        %465 = vmax.xlane.f32.xlu0 %v464
        %v466 = vpop.xlane.xlu0 %465
        %v467 = vsel %vm463, %v443, -inf
        %468 = vmax.xlane.f32.xlu0 %v467
        %v469 = vpop.xlane.xlu0 %468
        %v470 = vsel %vm463, %v446, -inf
        %471 = vmax.xlane.f32.xlu0 %v470
        %v472 = vpop.xlane.xlu0 %471
        %v473 = vsel %vm463, %v449, -inf
        %474 = vmax.xlane.f32.xlu0 %v473
        %v475 = vpop.xlane.xlu0 %474
        %v476 = vsel %vm463, %v452, -inf
        %477 = vmax.xlane.f32.xlu0 %v476
        %v478 = vpop.xlane.xlu0 %477
        %v479 = vsel %vm463, %v455, -inf
        %480 = vmax.xlane.f32.xlu0 %v479
        %v481 = vpop.xlane.xlu0 %480
        %v482 = vsel %vm463, %v458, -inf
        %483 = vmax.xlane.f32.xlu0 %v482
        %v484 = vpop.xlane.xlu0 %483
        %v485 = vsel %vm463, %v461, -inf
        %486 = vmax.xlane.f32.xlu0 %v485
        %v487 = vpop.xlane.xlu0 %486
        %v488 = vsub.f32 %v440, %v466
        %v489 = vsub.f32 %v443, %v469
        %v490 = vsub.f32 %v446, %v472
        %v491 = vsub.f32 %v449, %v475
        %v492 = vsub.f32 %v452, %v478
        %v493 = vsub.f32 %v455, %v481
        %v494 = vsub.f32 %v458, %v484
        %v495 = vsub.f32 %v461, %v487
        %v496 = vmul.f32 %v488, 1.442695
        %v497 = vpow.pop %v496
        %v498 = vmul.f32 %v489, 1.442695
        %v499 = vpow.pop %v498
        %v500 = vmul.f32 %v490, 1.442695
        %v501 = vpow.pop %v500
        %v502 = vmul.f32 %v491, 1.442695
        %v503 = vpow.pop %v502
        %v504 = vmul.f32 %v492, 1.442695
        %v505 = vpow.pop %v504
        %v506 = vmul.f32 %v493, 1.442695
        %v507 = vpow.pop %v506
        %v508 = vmul.f32 %v494, 1.442695
        %v509 = vpow.pop %v508
        %v510 = vmul.f32 %v495, 1.442695
        %v511 = vpow.pop %v510
        %v512 = vsel %vm463, %v497, 0.0
        %513 = vadd.xlane.f32.xlu0 %v512
        %v514 = vpop.xlane.xlu0 %513
        %v515 = vsel %vm463, %v499, 0.0
        %516 = vadd.xlane.f32.xlu0 %v515
        %v517 = vpop.xlane.xlu0 %516
        %v518 = vsel %vm463, %v501, 0.0
        %519 = vadd.xlane.f32.xlu0 %v518
        %v520 = vpop.xlane.xlu0 %519
        %v521 = vsel %vm463, %v503, 0.0
        %522 = vadd.xlane.f32.xlu0 %v521
        %v523 = vpop.xlane.xlu0 %522
        %v524 = vsel %vm463, %v505, 0.0
        %525 = vadd.xlane.f32.xlu0 %v524
        %v526 = vpop.xlane.xlu0 %525
        %v527 = vsel %vm463, %v507, 0.0
        %528 = vadd.xlane.f32.xlu0 %v527
        %v529 = vpop.xlane.xlu0 %528
        %v530 = vsel %vm463, %v509, 0.0
        %531 = vadd.xlane.f32.xlu0 %v530
        %v532 = vpop.xlane.xlu0 %531
        %v533 = vsel %vm463, %v511, 0.0
        %534 = vadd.xlane.f32.xlu0 %v533
        %v535 = vpop.xlane.xlu0 %534
        %v536 = vrcp.pop %v514
        %v537 = vmul.f32 %v514, %v536
        %v538 = vsub.f32 1.0, %v537
        %v539 = vmul.f32 %v536, %v538
        %v540 = vadd.f32 %v536, %v539
        %vm541 = vweird.f32 %v514
        %vm542 = vweird.f32 %v536
        %vm543 = vmor %vm541, %vm542
        %v544 = vsel %vm543, %v536, %v540
        %v545 = vand.u32 2147483647, %v514
        %vm546 = vcmp.eq.f32.partialorder %v545, 8.507059e+37
        %v547 = vand.u32 %v514, 2147483648
        %v548 = vor.u32 1.1754944e-38, %v547
        %v549 = vsel %vm546, %v548, %v544
        %v550 = vmul.f32 %v497, %v549
        %v551 = vrcp.pop %v517
        %v552 = vmul.f32 %v517, %v551
        %v553 = vsub.f32 1.0, %v552
        %v554 = vmul.f32 %v551, %v553
        %v555 = vadd.f32 %v551, %v554
        %vm556 = vweird.f32 %v517
        %vm557 = vweird.f32 %v551
        %vm558 = vmor %vm556, %vm557
        %v559 = vsel %vm558, %v551, %v555
        %v560 = vand.u32 2147483647, %v517
        %vm561 = vcmp.eq.f32.partialorder %v560, 8.507059e+37
        %v562 = vand.u32 %v517, 2147483648
        %v563 = vor.u32 1.1754944e-38, %v562
        %v564 = vsel %vm561, %v563, %v559
        %v565 = vmul.f32 %v499, %v564
        %v566 = vrcp.pop %v520
        %v567 = vmul.f32 %v520, %v566
        %v568 = vsub.f32 1.0, %v567
        %v569 = vmul.f32 %v566, %v568
        %v570 = vadd.f32 %v566, %v569
        %vm571 = vweird.f32 %v520
        %vm572 = vweird.f32 %v566
        %vm573 = vmor %vm571, %vm572
        %v574 = vsel %vm573, %v566, %v570
        %v575 = vand.u32 2147483647, %v520
        %vm576 = vcmp.eq.f32.partialorder %v575, 8.507059e+37
        %v577 = vand.u32 %v520, 2147483648
        %v578 = vor.u32 1.1754944e-38, %v577
        %v579 = vsel %vm576, %v578, %v574
        %v580 = vmul.f32 %v501, %v579
        %v581 = vrcp.pop %v523
        %v582 = vmul.f32 %v523, %v581
        %v583 = vsub.f32 1.0, %v582
        %v584 = vmul.f32 %v581, %v583
        %v585 = vadd.f32 %v581, %v584
        %vm586 = vweird.f32 %v523
        %vm587 = vweird.f32 %v581
        %vm588 = vmor %vm586, %vm587
        %v589 = vsel %vm588, %v581, %v585
        %v590 = vand.u32 2147483647, %v523
        %vm591 = vcmp.eq.f32.partialorder %v590, 8.507059e+37
        %v592 = vand.u32 %v523, 2147483648
        %v593 = vor.u32 1.1754944e-38, %v592
        %v594 = vsel %vm591, %v593, %v589
        %v595 = vmul.f32 %v503, %v594
        %v596 = vrcp.pop %v526
        %v597 = vmul.f32 %v526, %v596
        %v598 = vsub.f32 1.0, %v597
        %v599 = vmul.f32 %v596, %v598
        %v600 = vadd.f32 %v596, %v599
        %vm601 = vweird.f32 %v526
        %vm602 = vweird.f32 %v596
        %vm603 = vmor %vm601, %vm602
        %v604 = vsel %vm603, %v596, %v600
        %v605 = vand.u32 2147483647, %v526
        %vm606 = vcmp.eq.f32.partialorder %v605, 8.507059e+37
        %v607 = vand.u32 %v526, 2147483648
        %v608 = vor.u32 1.1754944e-38, %v607
        %v609 = vsel %vm606, %v608, %v604
        %v610 = vmul.f32 %v505, %v609
        %v611 = vrcp.pop %v529
        %v612 = vmul.f32 %v529, %v611
        %v613 = vsub.f32 1.0, %v612
        %v614 = vmul.f32 %v611, %v613
        %v615 = vadd.f32 %v611, %v614
        %vm616 = vweird.f32 %v529
        %vm617 = vweird.f32 %v611
        %vm618 = vmor %vm616, %vm617
        %v619 = vsel %vm618, %v611, %v615
        %v620 = vand.u32 2147483647, %v529
        %vm621 = vcmp.eq.f32.partialorder %v620, 8.507059e+37
        %v622 = vand.u32 %v529, 2147483648
        %v623 = vor.u32 1.1754944e-38, %v622
        %v624 = vsel %vm621, %v623, %v619
        %v625 = vmul.f32 %v507, %v624
        %v626 = vrcp.pop %v532
        %v627 = vmul.f32 %v532, %v626
        %v628 = vsub.f32 1.0, %v627
        %v629 = vmul.f32 %v626, %v628
        %v630 = vadd.f32 %v626, %v629
        %vm631 = vweird.f32 %v532
        %vm632 = vweird.f32 %v626
        %vm633 = vmor %vm631, %vm632
        %v634 = vsel %vm633, %v626, %v630
        %v635 = vand.u32 2147483647, %v532
        %vm636 = vcmp.eq.f32.partialorder %v635, 8.507059e+37
        %v637 = vand.u32 %v532, 2147483648
        %v638 = vor.u32 1.1754944e-38, %v637
        %v639 = vsel %vm636, %v638, %v634
        %v640 = vmul.f32 %v509, %v639
        %v641 = vrcp.pop %v535
        %v642 = vmul.f32 %v535, %v641
        %v643 = vsub.f32 1.0, %v642
        %v644 = vmul.f32 %v641, %v643
        %v645 = vadd.f32 %v641, %v644
        %vm646 = vweird.f32 %v535
        %vm647 = vweird.f32 %v641
        %vm648 = vmor %vm646, %vm647
        %v649 = vsel %vm648, %v641, %v645
        %v650 = vand.u32 2147483647, %v535
        %vm651 = vcmp.eq.f32.partialorder %v650, 8.507059e+37
        %v652 = vand.u32 %v535, 2147483648
        %v653 = vor.u32 1.1754944e-38, %v652
        %v654 = vsel %vm651, %v653, %v649
        %v655 = vmul.f32 %v511, %v654
        %vm657 = vcmask 1041408
        %v658 = vrot.slane %v312, 6
        %v659 = vrot.slane %v315, 6
        %v660 = vsel %vm657, %v658, %v659
        %v661 = vsel %vm463, %v660, 0
        %v664 = vsel %vm463, %v550, 0
        %v667 = vsel %vm463, %v565, 0
        %v670 = vsel %vm463, %v580, 0
        %v673 = vsel %vm463, %v595, 0
        %v676 = vsel %vm463, %v610, 0
        %v679 = vsel %vm463, %v625, 0
        %v682 = vsel %vm463, %v640, 0
        %v685 = vsel %vm463, %v655, 0
        %687 = vmatpush.xpose.msra.mxu0 0.0
        %688 = vmatpush.xpose.msra.mxu0 0.0
        %689 = vmatpush.xpose.msra.mxu0 0.0
        %690 = vmatpush.xpose.msra.mxu0 0.0
        %691 = vmatpush.xpose.msra.mxu0 0.0
        %692 = vmatpush.xpose.msra.mxu0 0.0
        %693 = vmatpush.xpose.msra.mxu0 0.0
        %694 = vmatpush.xpose.msra.mxu0 0.0
        %695 = vmatpush.xpose.msra.mxu0 %v685
        %696 = vmatpush.xpose.msra.mxu0 %v682
        %697 = vmatpush.xpose.msra.mxu0 %v679
        %698 = vmatpush.xpose.msra.mxu0 %v676
        %699 = vmatpush.xpose.msra.mxu0 %v673
        %700 = vmatpush.xpose.msra.mxu0 %v670
        %701 = vmatpush.xpose.msra.mxu0 %v667
        %702 = vmatpush.xpose.msra.mxu0 %v664
        %703 = vmatmul.f32.gmra.mxu0 %v661
        %v704 = vpop.f32.mrf.mxu0
        %v705 = vadd.f32 0.0, %v704
        %706 = vdwg.mxu0
        %v707 = vld [vmem:[%s3] sm:$0x3f]
        %v708 = vld [vmem:[%s4] sm:$0x3f]
        %710 = vset.pattern.permute.xlu0 0
        %711 = vperm.xlu0 %710, %v708
        %v712 = vpop.permute.xlu0 %711
        %v715 = vsel %vm394, %v707, 0
        %v718 = vsel %vm419, %v705, 0
        %720 = vmatpush.msra.mxu0 0.0
        %721 = vmatpush.msra.mxu0 0.0
        %722 = vmatpush.msra.mxu0 0.0
        %723 = vmatpush.msra.mxu0 0.0
        %724 = vmatpush.msra.mxu0 0.0
        %725 = vmatpush.msra.mxu0 0.0
        %726 = vmatpush.msra.mxu0 0.0
        %727 = vmatpush.msra.mxu0 0.0
        %728 = vmatpush.msra.mxu0 0.0
        %729 = vmatpush.msra.mxu0 0.0
        %730 = vmatpush.msra.mxu0 0.0
        %731 = vmatpush.msra.mxu0 0.0
        %732 = vmatpush.msra.mxu0 0.0
        %733 = vmatpush.msra.mxu0 0.0
        %734 = vmatpush.msra.mxu0 0.0
        %735 = vmatpush.msra.mxu0 %v718
        %736 = vmatmul.f32.gmra.mxu0 %v715
        %v737 = vpop.f32.mrf.mxu0
        %v738 = vadd.f32 %v712, %v737
        %739 = vdwg.mxu0
        %v740 = vadd.f32 %v738, %v264
        %v742 = vrot.slane %v740, 1
        %v743 = vrot.slane %v740, 2
        %v744 = vrot.slane %v740, 3
        %v745 = vrot.slane %v740, 4
        %v746 = vrot.slane %v740, 5
        %v747 = vperm.slane %v740, 0
        %v748 = vperm.slane %v742, 0
        %v749 = vperm.slane %v743, 0
        %v750 = vperm.slane %v744, 0
        %v751 = vperm.slane %v745, 0
        %v752 = vperm.slane %v746, 0
        %753 = vrot.lane.b32.xlu0 %v747, 2
        %v754 = vpop.permute.xlu0 %753
        %755 = vrot.lane.b32.xlu0 %v748, 2
        %v756 = vpop.permute.xlu0 %755
        %757 = vrot.lane.b32.xlu0 %v749, 2
        %v758 = vpop.permute.xlu0 %757
        %759 = vrot.lane.b32.xlu0 %v750, 2
        %v760 = vpop.permute.xlu0 %759
        %761 = vrot.lane.b32.xlu0 %v751, 2
        %v762 = vpop.permute.xlu0 %761
        %763 = vrot.lane.b32.xlu0 %v752, 2
        %v764 = vpop.permute.xlu0 %763
        %vm771 = vcmask 139280
        %772 = vst.msk [vmem:[#allocation2 + $0x2] sm:$0x1] %vm771, %v754
        %773 = vst.msk [vmem:[#allocation2 + $0x1a] sm:$0x1] %vm771, %v756
        %774 = vst.msk [vmem:[#allocation2 + $0x32] sm:$0x1] %vm771, %v758
        %775 = vst.msk [vmem:[#allocation2 + $0x4a] sm:$0x1] %vm771, %v760
        %776 = vst.msk [vmem:[#allocation2 + $0x62] sm:$0x1] %vm771, %v762
        %777 = vst.msk [vmem:[#allocation2 + $0x7a] sm:$0x1] %vm771, %v764
        %778 = vrot.lane.b32.xlu0 %v747, 114
        %v779 = vpop.permute.xlu0 %778
        %780 = vrot.lane.b32.xlu0 %v748, 114
        %v781 = vpop.permute.xlu0 %780
        %782 = vrot.lane.b32.xlu0 %v749, 114
        %v783 = vpop.permute.xlu0 %782
        %784 = vrot.lane.b32.xlu0 %v750, 114
        %v785 = vpop.permute.xlu0 %784
        %786 = vrot.lane.b32.xlu0 %v751, 114
        %v787 = vpop.permute.xlu0 %786
        %788 = vrot.lane.b32.xlu0 %v752, 114
        %v789 = vpop.permute.xlu0 %788
        %796 = vst.msk [vmem:[#allocation2 + $0x3] sm:$0x1] %vm771, %v779
        %797 = vst.msk [vmem:[#allocation2 + $0x1b] sm:$0x1] %vm771, %v781
        %798 = vst.msk [vmem:[#allocation2 + $0x33] sm:$0x1] %vm771, %v783
        %799 = vst.msk [vmem:[#allocation2 + $0x4b] sm:$0x1] %vm771, %v785
        %800 = vst.msk [vmem:[#allocation2 + $0x63] sm:$0x1] %vm771, %v787
        %801 = vst.msk [vmem:[#allocation2 + $0x7b] sm:$0x1] %vm771, %v789
        %802 = vrot.lane.b32.xlu0 %v747, 98
        %v803 = vpop.permute.xlu0 %802
        %804 = vrot.lane.b32.xlu0 %v748, 98
        %v805 = vpop.permute.xlu0 %804
        %806 = vrot.lane.b32.xlu0 %v749, 98
        %v807 = vpop.permute.xlu0 %806
        %808 = vrot.lane.b32.xlu0 %v750, 98
        %v809 = vpop.permute.xlu0 %808
        %810 = vrot.lane.b32.xlu0 %v751, 98
        %v811 = vpop.permute.xlu0 %810
        %812 = vrot.lane.b32.xlu0 %v752, 98
        %v813 = vpop.permute.xlu0 %812
        %820 = vst.msk [vmem:[#allocation2 + $0x4] sm:$0x1] %vm771, %v803
        %821 = vst.msk [vmem:[#allocation2 + $0x1c] sm:$0x1] %vm771, %v805
        %822 = vst.msk [vmem:[#allocation2 + $0x34] sm:$0x1] %vm771, %v807
        %823 = vst.msk [vmem:[#allocation2 + $0x4c] sm:$0x1] %vm771, %v809
        %824 = vst.msk [vmem:[#allocation2 + $0x64] sm:$0x1] %vm771, %v811
        %825 = vst.msk [vmem:[#allocation2 + $0x7c] sm:$0x1] %vm771, %v813
        %826 = vrot.lane.b32.xlu0 %v747, 82
        %v827 = vpop.permute.xlu0 %826
        %828 = vrot.lane.b32.xlu0 %v748, 82
        %v829 = vpop.permute.xlu0 %828
        %830 = vrot.lane.b32.xlu0 %v749, 82
        %v831 = vpop.permute.xlu0 %830
        %832 = vrot.lane.b32.xlu0 %v750, 82
        %v833 = vpop.permute.xlu0 %832
        %834 = vrot.lane.b32.xlu0 %v751, 82
        %v835 = vpop.permute.xlu0 %834
        %836 = vrot.lane.b32.xlu0 %v752, 82
        %v837 = vpop.permute.xlu0 %836
        %844 = vst.msk [vmem:[#allocation2 + $0x5] sm:$0x1] %vm771, %v827
        %845 = vst.msk [vmem:[#allocation2 + $0x1d] sm:$0x1] %vm771, %v829
        %846 = vst.msk [vmem:[#allocation2 + $0x35] sm:$0x1] %vm771, %v831
        %847 = vst.msk [vmem:[#allocation2 + $0x4d] sm:$0x1] %vm771, %v833
        %848 = vst.msk [vmem:[#allocation2 + $0x65] sm:$0x1] %vm771, %v835
        %849 = vst.msk [vmem:[#allocation2 + $0x7d] sm:$0x1] %vm771, %v837
        %850 = vrot.lane.b32.xlu0 %v312, 64
        %v851 = vpop.permute.xlu0 %850
        %853 = vxpose.xlu0.b32.start [1/16] %v851, 128
        %854 = vxpose.xlu0.b32.cont [2/16] 0.0, 128
        %855 = vxpose.xlu0.b32.cont [3/16] 0.0, 128
        %856 = vxpose.xlu0.b32.cont [4/16] 0.0, 128
        %857 = vxpose.xlu0.b32.cont [5/16] 0.0, 128
        %858 = vxpose.xlu0.b32.cont [6/16] 0.0, 128
        %859 = vxpose.xlu0.b32.cont [7/16] 0.0, 128
        %860 = vxpose.xlu0.b32.cont [8/16] 0.0, 128
        %861 = vxpose.xlu0.b32.cont [9/16] 0.0, 128
        %862 = vxpose.xlu0.b32.cont [10/16] 0.0, 128
        %863 = vxpose.xlu0.b32.cont [11/16] 0.0, 128
        %864 = vxpose.xlu0.b32.cont [12/16] 0.0, 128
        %865 = vxpose.xlu0.b32.cont [13/16] 0.0, 128
        %866 = vxpose.xlu0.b32.cont [14/16] 0.0, 128
        %867 = vxpose.xlu0.b32.cont [15/16] 0.0, 128
        %868 = vxpose.xlu0.b32.end [16/16] 0.0, 128
        %v869 = vpop.trf.xlu0
        %v870 = vpop.trf.xlu0
        %v871 = vpop.trf.xlu0
        %v872 = vpop.trf.xlu0
        %v873 = vpop.trf.xlu0
        %v874 = vpop.trf.xlu0
        %v875 = vpop.trf.xlu0
        %v876 = vpop.trf.xlu0
        %v877 = vpop.trf.xlu0
        %v878 = vpop.trf.xlu0
        %v879 = vpop.trf.xlu0
        %v880 = vpop.trf.xlu0
        %v881 = vpop.trf.xlu0
        %v882 = vpop.trf.xlu0
        %v883 = vpop.trf.xlu0
        %v884 = vpop.trf.xlu0
        %885 = vrot.lane.b32.xlu0 %v393, 64
        %v886 = vpop.permute.xlu0 %885
        %v888 = vsel %vm394, %v869, 0
        %v891 = vsel %vm394, %v870, 0
        %v894 = vsel %vm394, %v871, 0
        %v897 = vsel %vm394, %v872, 0
        %v900 = vsel %vm394, %v873, 0
        %v903 = vsel %vm394, %v874, 0
        %v906 = vsel %vm394, %v875, 0
        %v909 = vsel %vm394, %v876, 0
        %v911 = vsel %vm419, %v886, 0
        %913 = vmatpush.msra.mxu0 0.0
        %914 = vmatpush.msra.mxu0 0.0
        %915 = vmatpush.msra.mxu0 0.0
        %916 = vmatpush.msra.mxu0 0.0
        %917 = vmatpush.msra.mxu0 0.0
        %918 = vmatpush.msra.mxu0 0.0
        %919 = vmatpush.msra.mxu0 0.0
        %920 = vmatpush.msra.mxu0 0.0
        %921 = vmatpush.msra.mxu0 0.0
        %922 = vmatpush.msra.mxu0 0.0
        %923 = vmatpush.msra.mxu0 0.0
        %924 = vmatpush.msra.mxu0 0.0
        %925 = vmatpush.msra.mxu0 0.0
        %926 = vmatpush.msra.mxu0 0.0
        %927 = vmatpush.msra.mxu0 0.0
        %928 = vmatpush.msra.mxu0 %v911
        %929 = vmatmul.f32.gmra.mxu0 %v888
        %v930 = vpop.f32.mrf.mxu0
        %v931 = vadd.f32 0.0, %v930
        %932 = vmatmul.f32.gmra.mxu0 %v891
        %v933 = vpop.f32.mrf.mxu0
        %v934 = vadd.f32 0.0, %v933
        %935 = vmatmul.f32.gmra.mxu0 %v894
        %v936 = vpop.f32.mrf.mxu0
        %v937 = vadd.f32 0.0, %v936
        %938 = vmatmul.f32.gmra.mxu0 %v897
        %v939 = vpop.f32.mrf.mxu0
        %v940 = vadd.f32 0.0, %v939
        %941 = vmatmul.f32.gmra.mxu0 %v900
        %v942 = vpop.f32.mrf.mxu0
        %v943 = vadd.f32 0.0, %v942
        %944 = vmatmul.f32.gmra.mxu0 %v903
        %v945 = vpop.f32.mrf.mxu0
        %v946 = vadd.f32 0.0, %v945
        %947 = vmatmul.f32.gmra.mxu0 %v906
        %v948 = vpop.f32.mrf.mxu0
        %v949 = vadd.f32 0.0, %v948
        %950 = vmatmul.f32.gmra.mxu0 %v909
        %v951 = vpop.f32.mrf.mxu0
        %v952 = vadd.f32 0.0, %v951
        %953 = vdwg.mxu0
        %v954 = vsel %vm463, %v931, -inf
        %955 = vmax.xlane.f32.xlu0 %v954
        %v956 = vpop.xlane.xlu0 %955
        %v957 = vsel %vm463, %v934, -inf
        %958 = vmax.xlane.f32.xlu0 %v957
        %v959 = vpop.xlane.xlu0 %958
        %v960 = vsel %vm463, %v937, -inf
        %961 = vmax.xlane.f32.xlu0 %v960
        %v962 = vpop.xlane.xlu0 %961
        %v963 = vsel %vm463, %v940, -inf
        %964 = vmax.xlane.f32.xlu0 %v963
        %v965 = vpop.xlane.xlu0 %964
        %v966 = vsel %vm463, %v943, -inf
        %967 = vmax.xlane.f32.xlu0 %v966
        %v968 = vpop.xlane.xlu0 %967
        %v969 = vsel %vm463, %v946, -inf
        %970 = vmax.xlane.f32.xlu0 %v969
        %v971 = vpop.xlane.xlu0 %970
        %v972 = vsel %vm463, %v949, -inf
        %973 = vmax.xlane.f32.xlu0 %v972
        %v974 = vpop.xlane.xlu0 %973
        %v975 = vsel %vm463, %v952, -inf
        %976 = vmax.xlane.f32.xlu0 %v975
        %v977 = vpop.xlane.xlu0 %976
        %v978 = vsub.f32 %v931, %v956
        %v979 = vsub.f32 %v934, %v959
        %v980 = vsub.f32 %v937, %v962
        %v981 = vsub.f32 %v940, %v965
        %v982 = vsub.f32 %v943, %v968
        %v983 = vsub.f32 %v946, %v971
        %v984 = vsub.f32 %v949, %v974
        %v985 = vsub.f32 %v952, %v977
        %v986 = vmul.f32 %v978, 1.442695
        %v987 = vpow.pop %v986
        %v988 = vmul.f32 %v979, 1.442695
        %v989 = vpow.pop %v988
        %v990 = vmul.f32 %v980, 1.442695
        %v991 = vpow.pop %v990
        %v992 = vmul.f32 %v981, 1.442695
        %v993 = vpow.pop %v992
        %v994 = vmul.f32 %v982, 1.442695
        %v995 = vpow.pop %v994
        %v996 = vmul.f32 %v983, 1.442695
        %v997 = vpow.pop %v996
        %v998 = vmul.f32 %v984, 1.442695
        %v999 = vpow.pop %v998
        %v1000 = vmul.f32 %v985, 1.442695
        %v1001 = vpow.pop %v1000
        %v1002 = vsel %vm463, %v987, 0.0
        %1003 = vadd.xlane.f32.xlu0 %v1002
        %v1004 = vpop.xlane.xlu0 %1003
        %v1005 = vsel %vm463, %v989, 0.0
        %1006 = vadd.xlane.f32.xlu0 %v1005
        %v1007 = vpop.xlane.xlu0 %1006
        %v1008 = vsel %vm463, %v991, 0.0
        %1009 = vadd.xlane.f32.xlu0 %v1008
        %v1010 = vpop.xlane.xlu0 %1009
        %v1011 = vsel %vm463, %v993, 0.0
        %1012 = vadd.xlane.f32.xlu0 %v1011
        %v1013 = vpop.xlane.xlu0 %1012
        %v1014 = vsel %vm463, %v995, 0.0
        %1015 = vadd.xlane.f32.xlu0 %v1014
        %v1016 = vpop.xlane.xlu0 %1015
        %v1017 = vsel %vm463, %v997, 0.0
        %1018 = vadd.xlane.f32.xlu0 %v1017
        %v1019 = vpop.xlane.xlu0 %1018
        %v1020 = vsel %vm463, %v999, 0.0
        %1021 = vadd.xlane.f32.xlu0 %v1020
        %v1022 = vpop.xlane.xlu0 %1021
        %v1023 = vsel %vm463, %v1001, 0.0
        %1024 = vadd.xlane.f32.xlu0 %v1023
        %v1025 = vpop.xlane.xlu0 %1024
        %v1026 = vrcp.pop %v1004
        %v1027 = vmul.f32 %v1004, %v1026
        %v1028 = vsub.f32 1.0, %v1027
        %v1029 = vmul.f32 %v1026, %v1028
        %v1030 = vadd.f32 %v1026, %v1029
        %vm1031 = vweird.f32 %v1004
        %vm1032 = vweird.f32 %v1026
        %vm1033 = vmor %vm1031, %vm1032
        %v1034 = vsel %vm1033, %v1026, %v1030
        %v1035 = vand.u32 2147483647, %v1004
        %vm1036 = vcmp.eq.f32.partialorder %v1035, 8.507059e+37
        %v1037 = vand.u32 %v1004, 2147483648
        %v1038 = vor.u32 1.1754944e-38, %v1037
        %v1039 = vsel %vm1036, %v1038, %v1034
        %v1040 = vmul.f32 %v987, %v1039
        %v1041 = vrcp.pop %v1007
        %v1042 = vmul.f32 %v1007, %v1041
        %v1043 = vsub.f32 1.0, %v1042
        %v1044 = vmul.f32 %v1041, %v1043
        %v1045 = vadd.f32 %v1041, %v1044
        %vm1046 = vweird.f32 %v1007
        %vm1047 = vweird.f32 %v1041
        %vm1048 = vmor %vm1046, %vm1047
        %v1049 = vsel %vm1048, %v1041, %v1045
        %v1050 = vand.u32 2147483647, %v1007
        %vm1051 = vcmp.eq.f32.partialorder %v1050, 8.507059e+37
        %v1052 = vand.u32 %v1007, 2147483648
        %v1053 = vor.u32 1.1754944e-38, %v1052
        %v1054 = vsel %vm1051, %v1053, %v1049
        %v1055 = vmul.f32 %v989, %v1054
        %v1056 = vrcp.pop %v1010
        %v1057 = vmul.f32 %v1010, %v1056
        %v1058 = vsub.f32 1.0, %v1057
        %v1059 = vmul.f32 %v1056, %v1058
        %v1060 = vadd.f32 %v1056, %v1059
        %vm1061 = vweird.f32 %v1010
        %vm1062 = vweird.f32 %v1056
        %vm1063 = vmor %vm1061, %vm1062
        %v1064 = vsel %vm1063, %v1056, %v1060
        %v1065 = vand.u32 2147483647, %v1010
        %vm1066 = vcmp.eq.f32.partialorder %v1065, 8.507059e+37
        %v1067 = vand.u32 %v1010, 2147483648
        %v1068 = vor.u32 1.1754944e-38, %v1067
        %v1069 = vsel %vm1066, %v1068, %v1064
        %v1070 = vmul.f32 %v991, %v1069
        %v1071 = vrcp.pop %v1013
        %v1072 = vmul.f32 %v1013, %v1071
        %v1073 = vsub.f32 1.0, %v1072
        %v1074 = vmul.f32 %v1071, %v1073
        %v1075 = vadd.f32 %v1071, %v1074
        %vm1076 = vweird.f32 %v1013
        %vm1077 = vweird.f32 %v1071
        %vm1078 = vmor %vm1076, %vm1077
        %v1079 = vsel %vm1078, %v1071, %v1075
        %v1080 = vand.u32 2147483647, %v1013
        %vm1081 = vcmp.eq.f32.partialorder %v1080, 8.507059e+37
        %v1082 = vand.u32 %v1013, 2147483648
        %v1083 = vor.u32 1.1754944e-38, %v1082
        %v1084 = vsel %vm1081, %v1083, %v1079
        %v1085 = vmul.f32 %v993, %v1084
        %v1086 = vrcp.pop %v1016
        %v1087 = vmul.f32 %v1016, %v1086
        %v1088 = vsub.f32 1.0, %v1087
        %v1089 = vmul.f32 %v1086, %v1088
        %v1090 = vadd.f32 %v1086, %v1089
        %vm1091 = vweird.f32 %v1016
        %vm1092 = vweird.f32 %v1086
        %vm1093 = vmor %vm1091, %vm1092
        %v1094 = vsel %vm1093, %v1086, %v1090
        %v1095 = vand.u32 2147483647, %v1016
        %vm1096 = vcmp.eq.f32.partialorder %v1095, 8.507059e+37
        %v1097 = vand.u32 %v1016, 2147483648
        %v1098 = vor.u32 1.1754944e-38, %v1097
        %v1099 = vsel %vm1096, %v1098, %v1094
        %v1100 = vmul.f32 %v995, %v1099
        %v1101 = vrcp.pop %v1019
        %v1102 = vmul.f32 %v1019, %v1101
        %v1103 = vsub.f32 1.0, %v1102
        %v1104 = vmul.f32 %v1101, %v1103
        %v1105 = vadd.f32 %v1101, %v1104
        %vm1106 = vweird.f32 %v1019
        %vm1107 = vweird.f32 %v1101
        %vm1108 = vmor %vm1106, %vm1107
        %v1109 = vsel %vm1108, %v1101, %v1105
        %v1110 = vand.u32 2147483647, %v1019
        %vm1111 = vcmp.eq.f32.partialorder %v1110, 8.507059e+37
        %v1112 = vand.u32 %v1019, 2147483648
        %v1113 = vor.u32 1.1754944e-38, %v1112
        %v1114 = vsel %vm1111, %v1113, %v1109
        %v1115 = vmul.f32 %v997, %v1114
        %v1116 = vrcp.pop %v1022
        %v1117 = vmul.f32 %v1022, %v1116
        %v1118 = vsub.f32 1.0, %v1117
        %v1119 = vmul.f32 %v1116, %v1118
        %v1120 = vadd.f32 %v1116, %v1119
        %vm1121 = vweird.f32 %v1022
        %vm1122 = vweird.f32 %v1116
        %vm1123 = vmor %vm1121, %vm1122
        %v1124 = vsel %vm1123, %v1116, %v1120
        %v1125 = vand.u32 2147483647, %v1022
        %vm1126 = vcmp.eq.f32.partialorder %v1125, 8.507059e+37
        %v1127 = vand.u32 %v1022, 2147483648
        %v1128 = vor.u32 1.1754944e-38, %v1127
        %v1129 = vsel %vm1126, %v1128, %v1124
        %v1130 = vmul.f32 %v999, %v1129
        %v1131 = vrcp.pop %v1025
        %v1132 = vmul.f32 %v1025, %v1131
        %v1133 = vsub.f32 1.0, %v1132
        %v1134 = vmul.f32 %v1131, %v1133
        %v1135 = vadd.f32 %v1131, %v1134
        %vm1136 = vweird.f32 %v1025
        %vm1137 = vweird.f32 %v1131
        %vm1138 = vmor %vm1136, %vm1137
        %v1139 = vsel %vm1138, %v1131, %v1135
        %v1140 = vand.u32 2147483647, %v1025
        %vm1141 = vcmp.eq.f32.partialorder %v1140, 8.507059e+37
        %v1142 = vand.u32 %v1025, 2147483648
        %v1143 = vor.u32 1.1754944e-38, %v1142
        %v1144 = vsel %vm1141, %v1143, %v1139
        %v1145 = vmul.f32 %v1001, %v1144
        %1146 = vrot.lane.b32.xlu0 %v660, 64
        %v1147 = vpop.permute.xlu0 %1146
        %v1148 = vsel %vm463, %v1147, 0
        %v1151 = vsel %vm463, %v1040, 0
        %v1154 = vsel %vm463, %v1055, 0
        %v1157 = vsel %vm463, %v1070, 0
        %v1160 = vsel %vm463, %v1085, 0
        %v1163 = vsel %vm463, %v1100, 0
        %v1166 = vsel %vm463, %v1115, 0
        %v1169 = vsel %vm463, %v1130, 0
        %v1172 = vsel %vm463, %v1145, 0
        %1174 = vmatpush.xpose.msra.mxu0 0.0
        %1175 = vmatpush.xpose.msra.mxu0 0.0
        %1176 = vmatpush.xpose.msra.mxu0 0.0
        %1177 = vmatpush.xpose.msra.mxu0 0.0
        %1178 = vmatpush.xpose.msra.mxu0 0.0
        %1179 = vmatpush.xpose.msra.mxu0 0.0
        %1180 = vmatpush.xpose.msra.mxu0 0.0
        %1181 = vmatpush.xpose.msra.mxu0 0.0
        %1182 = vmatpush.xpose.msra.mxu0 %v1172
        %1183 = vmatpush.xpose.msra.mxu0 %v1169
        %1184 = vmatpush.xpose.msra.mxu0 %v1166
        %1185 = vmatpush.xpose.msra.mxu0 %v1163
        %1186 = vmatpush.xpose.msra.mxu0 %v1160
        %1187 = vmatpush.xpose.msra.mxu0 %v1157
        %1188 = vmatpush.xpose.msra.mxu0 %v1154
        %1189 = vmatpush.xpose.msra.mxu0 %v1151
        %1190 = vmatmul.f32.gmra.mxu0 %v1148
        %v1191 = vpop.f32.mrf.mxu0
        %v1192 = vadd.f32 0.0, %v1191
        %1193 = vdwg.mxu0
        %v1194 = vld [vmem:[%s3] sm:$0x3f]
        %v1195 = vld [vmem:[%s4] sm:$0x3f]
        %1197 = vset.pattern.permute.xlu0 0
        %1198 = vperm.xlu0 %1197, %v1195
        %v1199 = vpop.permute.xlu0 %1198
        %v1202 = vsel %vm394, %v1194, 0
        %v1205 = vsel %vm419, %v1192, 0
        %1207 = vmatpush.msra.mxu0 0.0
        %1208 = vmatpush.msra.mxu0 0.0
        %1209 = vmatpush.msra.mxu0 0.0
        %1210 = vmatpush.msra.mxu0 0.0
        %1211 = vmatpush.msra.mxu0 0.0
        %1212 = vmatpush.msra.mxu0 0.0
        %1213 = vmatpush.msra.mxu0 0.0
        %1214 = vmatpush.msra.mxu0 0.0
        %1215 = vmatpush.msra.mxu0 0.0
        %1216 = vmatpush.msra.mxu0 0.0
        %1217 = vmatpush.msra.mxu0 0.0
        %1218 = vmatpush.msra.mxu0 0.0
        %1219 = vmatpush.msra.mxu0 0.0
        %1220 = vmatpush.msra.mxu0 0.0
        %1221 = vmatpush.msra.mxu0 0.0
        %1222 = vmatpush.msra.mxu0 %v1205
        %1223 = vmatmul.f32.gmra.mxu0 %v1202
        %v1224 = vpop.f32.mrf.mxu0
        %v1225 = vadd.f32 %v1199, %v1224
        %1226 = vdwg.mxu0
        %1227 = vrot.lane.b32.xlu0 %v264, 64
        %v1228 = vpop.permute.xlu0 %1227
        %v1230 = vadd.f32 %v1225, %v1228
        %v1232 = vrot.slane %v1230, 1
        %v1233 = vrot.slane %v1230, 2
        %v1234 = vrot.slane %v1230, 3
        %v1235 = vrot.slane %v1230, 4
        %v1236 = vrot.slane %v1230, 5
        %v1237 = vperm.slane %v1230, 0
        %v1238 = vperm.slane %v1232, 0
        %v1239 = vperm.slane %v1233, 0
        %v1240 = vperm.slane %v1234, 0
        %v1241 = vperm.slane %v1235, 0
        %v1242 = vperm.slane %v1236, 0
        %1243 = vrot.lane.b32.xlu0 %v1237, 2
        %v1244 = vpop.permute.xlu0 %1243
        %1245 = vrot.lane.b32.xlu0 %v1238, 2
        %v1246 = vpop.permute.xlu0 %1245
        %1247 = vrot.lane.b32.xlu0 %v1239, 2
        %v1248 = vpop.permute.xlu0 %1247
        %1249 = vrot.lane.b32.xlu0 %v1240, 2
        %v1250 = vpop.permute.xlu0 %1249
        %1251 = vrot.lane.b32.xlu0 %v1241, 2
        %v1252 = vpop.permute.xlu0 %1251
        %1253 = vrot.lane.b32.xlu0 %v1242, 2
        %v1254 = vpop.permute.xlu0 %1253
        %1261 = vst.msk [vmem:[#allocation2 + $0x6] sm:$0x1] %vm771, %v1244
        %1262 = vst.msk [vmem:[#allocation2 + $0x1e] sm:$0x1] %vm771, %v1246
        %1263 = vst.msk [vmem:[#allocation2 + $0x36] sm:$0x1] %vm771, %v1248
        %1264 = vst.msk [vmem:[#allocation2 + $0x4e] sm:$0x1] %vm771, %v1250
        %1265 = vst.msk [vmem:[#allocation2 + $0x66] sm:$0x1] %vm771, %v1252
        %1266 = vst.msk [vmem:[#allocation2 + $0x7e] sm:$0x1] %vm771, %v1254
        %1267 = vrot.lane.b32.xlu0 %v1237, 114
        %v1268 = vpop.permute.xlu0 %1267
        %1269 = vrot.lane.b32.xlu0 %v1238, 114
        %v1270 = vpop.permute.xlu0 %1269
        %1271 = vrot.lane.b32.xlu0 %v1239, 114
        %v1272 = vpop.permute.xlu0 %1271
        %1273 = vrot.lane.b32.xlu0 %v1240, 114
        %v1274 = vpop.permute.xlu0 %1273
        %1275 = vrot.lane.b32.xlu0 %v1241, 114
        %v1276 = vpop.permute.xlu0 %1275
        %1277 = vrot.lane.b32.xlu0 %v1242, 114
        %v1278 = vpop.permute.xlu0 %1277
        %1285 = vst.msk [vmem:[#allocation2 + $0x7] sm:$0x1] %vm771, %v1268
        %1286 = vst.msk [vmem:[#allocation2 + $0x1f] sm:$0x1] %vm771, %v1270
        %1287 = vst.msk [vmem:[#allocation2 + $0x37] sm:$0x1] %vm771, %v1272
        %1288 = vst.msk [vmem:[#allocation2 + $0x4f] sm:$0x1] %vm771, %v1274
        %1289 = vst.msk [vmem:[#allocation2 + $0x67] sm:$0x1] %vm771, %v1276
        %1290 = vst.msk [vmem:[#allocation2 + $0x7f] sm:$0x1] %vm771, %v1278
        %1291 = vrot.lane.b32.xlu0 %v1237, 98
        %v1292 = vpop.permute.xlu0 %1291
        %1293 = vrot.lane.b32.xlu0 %v1238, 98
        %v1294 = vpop.permute.xlu0 %1293
        %1295 = vrot.lane.b32.xlu0 %v1239, 98
        %v1296 = vpop.permute.xlu0 %1295
        %1297 = vrot.lane.b32.xlu0 %v1240, 98
        %v1298 = vpop.permute.xlu0 %1297
        %1299 = vrot.lane.b32.xlu0 %v1241, 98
        %v1300 = vpop.permute.xlu0 %1299
        %1301 = vrot.lane.b32.xlu0 %v1242, 98
        %v1302 = vpop.permute.xlu0 %1301
        %1309 = vst.msk [vmem:[#allocation2 + $0x8] sm:$0x1] %vm771, %v1292
        %1310 = vst.msk [vmem:[#allocation2 + $0x20] sm:$0x1] %vm771, %v1294
        %1311 = vst.msk [vmem:[#allocation2 + $0x38] sm:$0x1] %vm771, %v1296
        %1312 = vst.msk [vmem:[#allocation2 + $0x50] sm:$0x1] %vm771, %v1298
        %1313 = vst.msk [vmem:[#allocation2 + $0x68] sm:$0x1] %vm771, %v1300
        %1314 = vst.msk [vmem:[#allocation2 + $0x80] sm:$0x1] %vm771, %v1302
        %1315 = vrot.lane.b32.xlu0 %v1237, 82
        %v1316 = vpop.permute.xlu0 %1315
        %1317 = vrot.lane.b32.xlu0 %v1238, 82
        %v1318 = vpop.permute.xlu0 %1317
        %1319 = vrot.lane.b32.xlu0 %v1239, 82
        %v1320 = vpop.permute.xlu0 %1319
        %1321 = vrot.lane.b32.xlu0 %v1240, 82
        %v1322 = vpop.permute.xlu0 %1321
        %1323 = vrot.lane.b32.xlu0 %v1241, 82
        %v1324 = vpop.permute.xlu0 %1323
        %1325 = vrot.lane.b32.xlu0 %v1242, 82
        %v1326 = vpop.permute.xlu0 %1325
        %1333 = vst.msk [vmem:[#allocation2 + $0x9] sm:$0x1] %vm771, %v1316
        %1334 = vst.msk [vmem:[#allocation2 + $0x21] sm:$0x1] %vm771, %v1318
        %1335 = vst.msk [vmem:[#allocation2 + $0x39] sm:$0x1] %vm771, %v1320
        %1336 = vst.msk [vmem:[#allocation2 + $0x51] sm:$0x1] %vm771, %v1322
        %1337 = vst.msk [vmem:[#allocation2 + $0x69] sm:$0x1] %vm771, %v1324
        %1338 = vst.msk [vmem:[#allocation2 + $0x81] sm:$0x1] %vm771, %v1326
        %1339 = vxpose.xlu0.b32.start [1/16] %v335, 128
        %1340 = vxpose.xlu0.b32.cont [2/16] 0.0, 128
        %1341 = vxpose.xlu0.b32.cont [3/16] 0.0, 128
        %1342 = vxpose.xlu0.b32.cont [4/16] 0.0, 128
        %1343 = vxpose.xlu0.b32.cont [5/16] 0.0, 128
        %1344 = vxpose.xlu0.b32.cont [6/16] 0.0, 128
        %1345 = vxpose.xlu0.b32.cont [7/16] 0.0, 128
        %1346 = vxpose.xlu0.b32.cont [8/16] 0.0, 128
        %1347 = vxpose.xlu0.b32.cont [9/16] 0.0, 128
        %1348 = vxpose.xlu0.b32.cont [10/16] 0.0, 128
        %1349 = vxpose.xlu0.b32.cont [11/16] 0.0, 128
        %1350 = vxpose.xlu0.b32.cont [12/16] 0.0, 128
        %1351 = vxpose.xlu0.b32.cont [13/16] 0.0, 128
        %1352 = vxpose.xlu0.b32.cont [14/16] 0.0, 128
        %1353 = vxpose.xlu0.b32.cont [15/16] 0.0, 128
        %1354 = vxpose.xlu0.b32.end [16/16] 0.0, 128
        %v1355 = vpop.trf.xlu0
        %v1356 = vpop.trf.xlu0
        %v1357 = vpop.trf.xlu0
        %v1358 = vpop.trf.xlu0
        %v1359 = vpop.trf.xlu0
        %v1360 = vpop.trf.xlu0
        %v1361 = vpop.trf.xlu0
        %v1362 = vpop.trf.xlu0
        %v1363 = vpop.trf.xlu0
        %v1364 = vpop.trf.xlu0
        %v1365 = vpop.trf.xlu0
        %v1366 = vpop.trf.xlu0
        %v1367 = vpop.trf.xlu0
        %v1368 = vpop.trf.xlu0
        %v1369 = vpop.trf.xlu0
        %v1370 = vpop.trf.xlu0
        %v1372 = vrot.slane %v335, 3
        %v1374 = vsel %vm394, %v1355, 0
        %v1377 = vsel %vm394, %v1356, 0
        %v1380 = vsel %vm394, %v1357, 0
        %v1383 = vsel %vm394, %v1358, 0
        %v1386 = vsel %vm394, %v1359, 0
        %v1389 = vsel %vm394, %v1360, 0
        %v1392 = vsel %vm394, %v1361, 0
        %v1395 = vsel %vm394, %v1362, 0
        %v1397 = vsel %vm419, %v1372, 0
        %1399 = vmatpush.msra.mxu0 0.0
        %1400 = vmatpush.msra.mxu0 0.0
        %1401 = vmatpush.msra.mxu0 0.0
        %1402 = vmatpush.msra.mxu0 0.0
        %1403 = vmatpush.msra.mxu0 0.0
        %1404 = vmatpush.msra.mxu0 0.0
        %1405 = vmatpush.msra.mxu0 0.0
        %1406 = vmatpush.msra.mxu0 0.0
        %1407 = vmatpush.msra.mxu0 0.0
        %1408 = vmatpush.msra.mxu0 0.0
        %1409 = vmatpush.msra.mxu0 0.0
        %1410 = vmatpush.msra.mxu0 0.0
        %1411 = vmatpush.msra.mxu0 0.0
        %1412 = vmatpush.msra.mxu0 0.0
        %1413 = vmatpush.msra.mxu0 0.0
        %1414 = vmatpush.msra.mxu0 %v1397
        %1415 = vmatmul.f32.gmra.mxu0 %v1374
        %v1416 = vpop.f32.mrf.mxu0
        %v1417 = vadd.f32 0.0, %v1416
        %1418 = vmatmul.f32.gmra.mxu0 %v1377
        %v1419 = vpop.f32.mrf.mxu0
        %v1420 = vadd.f32 0.0, %v1419
        %1421 = vmatmul.f32.gmra.mxu0 %v1380
        %v1422 = vpop.f32.mrf.mxu0
        %v1423 = vadd.f32 0.0, %v1422
        %1424 = vmatmul.f32.gmra.mxu0 %v1383
        %v1425 = vpop.f32.mrf.mxu0
        %v1426 = vadd.f32 0.0, %v1425
        %1427 = vmatmul.f32.gmra.mxu0 %v1386
        %v1428 = vpop.f32.mrf.mxu0
        %v1429 = vadd.f32 0.0, %v1428
        %1430 = vmatmul.f32.gmra.mxu0 %v1389
        %v1431 = vpop.f32.mrf.mxu0
        %v1432 = vadd.f32 0.0, %v1431
        %1433 = vmatmul.f32.gmra.mxu0 %v1392
        %v1434 = vpop.f32.mrf.mxu0
        %v1435 = vadd.f32 0.0, %v1434
        %1436 = vmatmul.f32.gmra.mxu0 %v1395
        %v1437 = vpop.f32.mrf.mxu0
        %v1438 = vadd.f32 0.0, %v1437
        %1439 = vdwg.mxu0
        %v1440 = vsel %vm463, %v1417, -inf
        %1441 = vmax.xlane.f32.xlu0 %v1440
        %v1442 = vpop.xlane.xlu0 %1441
        %v1443 = vsel %vm463, %v1420, -inf
        %1444 = vmax.xlane.f32.xlu0 %v1443
        %v1445 = vpop.xlane.xlu0 %1444
        %v1446 = vsel %vm463, %v1423, -inf
        %1447 = vmax.xlane.f32.xlu0 %v1446
        %v1448 = vpop.xlane.xlu0 %1447
        %v1449 = vsel %vm463, %v1426, -inf
        %1450 = vmax.xlane.f32.xlu0 %v1449
        %v1451 = vpop.xlane.xlu0 %1450
        %v1452 = vsel %vm463, %v1429, -inf
        %1453 = vmax.xlane.f32.xlu0 %v1452
        %v1454 = vpop.xlane.xlu0 %1453
        %v1455 = vsel %vm463, %v1432, -inf
        %1456 = vmax.xlane.f32.xlu0 %v1455
        %v1457 = vpop.xlane.xlu0 %1456
        %v1458 = vsel %vm463, %v1435, -inf
        %1459 = vmax.xlane.f32.xlu0 %v1458
        %v1460 = vpop.xlane.xlu0 %1459
        %v1461 = vsel %vm463, %v1438, -inf
        %1462 = vmax.xlane.f32.xlu0 %v1461
        %v1463 = vpop.xlane.xlu0 %1462
        %v1464 = vsub.f32 %v1417, %v1442
        %v1465 = vsub.f32 %v1420, %v1445
        %v1466 = vsub.f32 %v1423, %v1448
        %v1467 = vsub.f32 %v1426, %v1451
        %v1468 = vsub.f32 %v1429, %v1454
        %v1469 = vsub.f32 %v1432, %v1457
        %v1470 = vsub.f32 %v1435, %v1460
        %v1471 = vsub.f32 %v1438, %v1463
        %v1472 = vmul.f32 %v1464, 1.442695
        %v1473 = vpow.pop %v1472
        %v1474 = vmul.f32 %v1465, 1.442695
        %v1475 = vpow.pop %v1474
        %v1476 = vmul.f32 %v1466, 1.442695
        %v1477 = vpow.pop %v1476
        %v1478 = vmul.f32 %v1467, 1.442695
        %v1479 = vpow.pop %v1478
        %v1480 = vmul.f32 %v1468, 1.442695
        %v1481 = vpow.pop %v1480
        %v1482 = vmul.f32 %v1469, 1.442695
        %v1483 = vpow.pop %v1482
        %v1484 = vmul.f32 %v1470, 1.442695
        %v1485 = vpow.pop %v1484
        %v1486 = vmul.f32 %v1471, 1.442695
        %v1487 = vpow.pop %v1486
        %v1488 = vsel %vm463, %v1473, 0.0
        %1489 = vadd.xlane.f32.xlu0 %v1488
        %v1490 = vpop.xlane.xlu0 %1489
        %v1491 = vsel %vm463, %v1475, 0.0
        %1492 = vadd.xlane.f32.xlu0 %v1491
        %v1493 = vpop.xlane.xlu0 %1492
        %v1494 = vsel %vm463, %v1477, 0.0
        %1495 = vadd.xlane.f32.xlu0 %v1494
        %v1496 = vpop.xlane.xlu0 %1495
        %v1497 = vsel %vm463, %v1479, 0.0
        %1498 = vadd.xlane.f32.xlu0 %v1497
        %v1499 = vpop.xlane.xlu0 %1498
        %v1500 = vsel %vm463, %v1481, 0.0
        %1501 = vadd.xlane.f32.xlu0 %v1500
        %v1502 = vpop.xlane.xlu0 %1501
        %v1503 = vsel %vm463, %v1483, 0.0
        %1504 = vadd.xlane.f32.xlu0 %v1503
        %v1505 = vpop.xlane.xlu0 %1504
        %v1506 = vsel %vm463, %v1485, 0.0
        %1507 = vadd.xlane.f32.xlu0 %v1506
        %v1508 = vpop.xlane.xlu0 %1507
        %v1509 = vsel %vm463, %v1487, 0.0
        %1510 = vadd.xlane.f32.xlu0 %v1509
        %v1511 = vpop.xlane.xlu0 %1510
        %v1512 = vrcp.pop %v1490
        %v1513 = vmul.f32 %v1490, %v1512
        %v1514 = vsub.f32 1.0, %v1513
        %v1515 = vmul.f32 %v1512, %v1514
        %v1516 = vadd.f32 %v1512, %v1515
        %vm1517 = vweird.f32 %v1490
        %vm1518 = vweird.f32 %v1512
        %vm1519 = vmor %vm1517, %vm1518
        %v1520 = vsel %vm1519, %v1512, %v1516
        %v1521 = vand.u32 2147483647, %v1490
        %vm1522 = vcmp.eq.f32.partialorder %v1521, 8.507059e+37
        %v1523 = vand.u32 %v1490, 2147483648
        %v1524 = vor.u32 1.1754944e-38, %v1523
        %v1525 = vsel %vm1522, %v1524, %v1520
        %v1526 = vmul.f32 %v1473, %v1525
        %v1527 = vrcp.pop %v1493
        %v1528 = vmul.f32 %v1493, %v1527
        %v1529 = vsub.f32 1.0, %v1528
        %v1530 = vmul.f32 %v1527, %v1529
        %v1531 = vadd.f32 %v1527, %v1530
        %vm1532 = vweird.f32 %v1493
        %vm1533 = vweird.f32 %v1527
        %vm1534 = vmor %vm1532, %vm1533
        %v1535 = vsel %vm1534, %v1527, %v1531
        %v1536 = vand.u32 2147483647, %v1493
        %vm1537 = vcmp.eq.f32.partialorder %v1536, 8.507059e+37
        %v1538 = vand.u32 %v1493, 2147483648
        %v1539 = vor.u32 1.1754944e-38, %v1538
        %v1540 = vsel %vm1537, %v1539, %v1535
        %v1541 = vmul.f32 %v1475, %v1540
        %v1542 = vrcp.pop %v1496
        %v1543 = vmul.f32 %v1496, %v1542
        %v1544 = vsub.f32 1.0, %v1543
        %v1545 = vmul.f32 %v1542, %v1544
        %v1546 = vadd.f32 %v1542, %v1545
        %vm1547 = vweird.f32 %v1496
        %vm1548 = vweird.f32 %v1542
        %vm1549 = vmor %vm1547, %vm1548
        %v1550 = vsel %vm1549, %v1542, %v1546
        %v1551 = vand.u32 2147483647, %v1496
        %vm1552 = vcmp.eq.f32.partialorder %v1551, 8.507059e+37
        %v1553 = vand.u32 %v1496, 2147483648
        %v1554 = vor.u32 1.1754944e-38, %v1553
        %v1555 = vsel %vm1552, %v1554, %v1550
        %v1556 = vmul.f32 %v1477, %v1555
        %v1557 = vrcp.pop %v1499
        %v1558 = vmul.f32 %v1499, %v1557
        %v1559 = vsub.f32 1.0, %v1558
        %v1560 = vmul.f32 %v1557, %v1559
        %v1561 = vadd.f32 %v1557, %v1560
        %vm1562 = vweird.f32 %v1499
        %vm1563 = vweird.f32 %v1557
        %vm1564 = vmor %vm1562, %vm1563
        %v1565 = vsel %vm1564, %v1557, %v1561
        %v1566 = vand.u32 2147483647, %v1499
        %vm1567 = vcmp.eq.f32.partialorder %v1566, 8.507059e+37
        %v1568 = vand.u32 %v1499, 2147483648
        %v1569 = vor.u32 1.1754944e-38, %v1568
        %v1570 = vsel %vm1567, %v1569, %v1565
        %v1571 = vmul.f32 %v1479, %v1570
        %v1572 = vrcp.pop %v1502
        %v1573 = vmul.f32 %v1502, %v1572
        %v1574 = vsub.f32 1.0, %v1573
        %v1575 = vmul.f32 %v1572, %v1574
        %v1576 = vadd.f32 %v1572, %v1575
        %vm1577 = vweird.f32 %v1502
        %vm1578 = vweird.f32 %v1572
        %vm1579 = vmor %vm1577, %vm1578
        %v1580 = vsel %vm1579, %v1572, %v1576
        %v1581 = vand.u32 2147483647, %v1502
        %vm1582 = vcmp.eq.f32.partialorder %v1581, 8.507059e+37
        %v1583 = vand.u32 %v1502, 2147483648
        %v1584 = vor.u32 1.1754944e-38, %v1583
        %v1585 = vsel %vm1582, %v1584, %v1580
        %v1586 = vmul.f32 %v1481, %v1585
        %v1587 = vrcp.pop %v1505
        %v1588 = vmul.f32 %v1505, %v1587
        %v1589 = vsub.f32 1.0, %v1588
        %v1590 = vmul.f32 %v1587, %v1589
        %v1591 = vadd.f32 %v1587, %v1590
        %vm1592 = vweird.f32 %v1505
        %vm1593 = vweird.f32 %v1587
        %vm1594 = vmor %vm1592, %vm1593
        %v1595 = vsel %vm1594, %v1587, %v1591
        %v1596 = vand.u32 2147483647, %v1505
        %vm1597 = vcmp.eq.f32.partialorder %v1596, 8.507059e+37
        %v1598 = vand.u32 %v1505, 2147483648
        %v1599 = vor.u32 1.1754944e-38, %v1598
        %v1600 = vsel %vm1597, %v1599, %v1595
        %v1601 = vmul.f32 %v1483, %v1600
        %v1602 = vrcp.pop %v1508
        %v1603 = vmul.f32 %v1508, %v1602
        %v1604 = vsub.f32 1.0, %v1603
        %v1605 = vmul.f32 %v1602, %v1604
        %v1606 = vadd.f32 %v1602, %v1605
        %vm1607 = vweird.f32 %v1508
        %vm1608 = vweird.f32 %v1602
        %vm1609 = vmor %vm1607, %vm1608
        %v1610 = vsel %vm1609, %v1602, %v1606
        %v1611 = vand.u32 2147483647, %v1508
        %vm1612 = vcmp.eq.f32.partialorder %v1611, 8.507059e+37
        %v1613 = vand.u32 %v1508, 2147483648
        %v1614 = vor.u32 1.1754944e-38, %v1613
        %v1615 = vsel %vm1612, %v1614, %v1610
        %v1616 = vmul.f32 %v1485, %v1615
        %v1617 = vrcp.pop %v1511
        %v1618 = vmul.f32 %v1511, %v1617
        %v1619 = vsub.f32 1.0, %v1618
        %v1620 = vmul.f32 %v1617, %v1619
        %v1621 = vadd.f32 %v1617, %v1620
        %vm1622 = vweird.f32 %v1511
        %vm1623 = vweird.f32 %v1617
        %vm1624 = vmor %vm1622, %vm1623
        %v1625 = vsel %vm1624, %v1617, %v1621
        %v1626 = vand.u32 2147483647, %v1511
        %vm1627 = vcmp.eq.f32.partialorder %v1626, 8.507059e+37
        %v1628 = vand.u32 %v1511, 2147483648
        %v1629 = vor.u32 1.1754944e-38, %v1628
        %v1630 = vsel %vm1627, %v1629, %v1625
        %v1631 = vmul.f32 %v1487, %v1630
        %v1633 = vrot.slane %v335, 6
        %v1634 = vrot.slane %v338, 6
        %v1635 = vsel %vm657, %v1633, %v1634
        %v1636 = vsel %vm463, %v1635, 0
        %v1639 = vsel %vm463, %v1526, 0
        %v1642 = vsel %vm463, %v1541, 0
        %v1645 = vsel %vm463, %v1556, 0
        %v1648 = vsel %vm463, %v1571, 0
        %v1651 = vsel %vm463, %v1586, 0
        %v1654 = vsel %vm463, %v1601, 0
        %v1657 = vsel %vm463, %v1616, 0
        %v1660 = vsel %vm463, %v1631, 0
        %1662 = vmatpush.xpose.msra.mxu0 0.0
        %1663 = vmatpush.xpose.msra.mxu0 0.0
        %1664 = vmatpush.xpose.msra.mxu0 0.0
        %1665 = vmatpush.xpose.msra.mxu0 0.0
        %1666 = vmatpush.xpose.msra.mxu0 0.0
        %1667 = vmatpush.xpose.msra.mxu0 0.0
        %1668 = vmatpush.xpose.msra.mxu0 0.0
        %1669 = vmatpush.xpose.msra.mxu0 0.0
        %1670 = vmatpush.xpose.msra.mxu0 %v1660
        %1671 = vmatpush.xpose.msra.mxu0 %v1657
        %1672 = vmatpush.xpose.msra.mxu0 %v1654
        %1673 = vmatpush.xpose.msra.mxu0 %v1651
        %1674 = vmatpush.xpose.msra.mxu0 %v1648
        %1675 = vmatpush.xpose.msra.mxu0 %v1645
        %1676 = vmatpush.xpose.msra.mxu0 %v1642
        %1677 = vmatpush.xpose.msra.mxu0 %v1639
        %1678 = vmatmul.f32.gmra.mxu0 %v1636
        %v1679 = vpop.f32.mrf.mxu0
        %v1680 = vadd.f32 0.0, %v1679
        %1681 = vdwg.mxu0
        %v1682 = vld [vmem:[%s3] sm:$0x3f]
        %v1683 = vld [vmem:[%s4] sm:$0x3f]
        %1685 = vset.pattern.permute.xlu0 0
        %1686 = vperm.xlu0 %1685, %v1683
        %v1687 = vpop.permute.xlu0 %1686
        %v1690 = vsel %vm394, %v1682, 0
        %v1693 = vsel %vm419, %v1680, 0
        %1695 = vmatpush.msra.mxu0 0.0
        %1696 = vmatpush.msra.mxu0 0.0
        %1697 = vmatpush.msra.mxu0 0.0
        %1698 = vmatpush.msra.mxu0 0.0
        %1699 = vmatpush.msra.mxu0 0.0
        %1700 = vmatpush.msra.mxu0 0.0
        %1701 = vmatpush.msra.mxu0 0.0
        %1702 = vmatpush.msra.mxu0 0.0
        %1703 = vmatpush.msra.mxu0 0.0
        %1704 = vmatpush.msra.mxu0 0.0
        %1705 = vmatpush.msra.mxu0 0.0
        %1706 = vmatpush.msra.mxu0 0.0
        %1707 = vmatpush.msra.mxu0 0.0
        %1708 = vmatpush.msra.mxu0 0.0
        %1709 = vmatpush.msra.mxu0 0.0
        %1710 = vmatpush.msra.mxu0 %v1693
        %1711 = vmatmul.f32.gmra.mxu0 %v1690
        %v1712 = vpop.f32.mrf.mxu0
        %v1713 = vadd.f32 %v1687, %v1712
        %1714 = vdwg.mxu0
        %v1715 = vadd.f32 %v1713, %v265
        %v1717 = vrot.slane %v1715, 1
        %v1718 = vrot.slane %v1715, 2
        %v1719 = vrot.slane %v1715, 3
        %v1720 = vrot.slane %v1715, 4
        %v1721 = vrot.slane %v1715, 5
        %v1722 = vperm.slane %v1715, 0
        %v1723 = vperm.slane %v1717, 0
        %v1724 = vperm.slane %v1718, 0
        %v1725 = vperm.slane %v1719, 0
        %v1726 = vperm.slane %v1720, 0
        %v1727 = vperm.slane %v1721, 0
        %1728 = vrot.lane.b32.xlu0 %v1722, 2
        %v1729 = vpop.permute.xlu0 %1728
        %1730 = vrot.lane.b32.xlu0 %v1723, 2
        %v1731 = vpop.permute.xlu0 %1730
        %1732 = vrot.lane.b32.xlu0 %v1724, 2
        %v1733 = vpop.permute.xlu0 %1732
        %1734 = vrot.lane.b32.xlu0 %v1725, 2
        %v1735 = vpop.permute.xlu0 %1734
        %1736 = vrot.lane.b32.xlu0 %v1726, 2
        %v1737 = vpop.permute.xlu0 %1736
        %1738 = vrot.lane.b32.xlu0 %v1727, 2
        %v1739 = vpop.permute.xlu0 %1738
        %1746 = vst.msk [vmem:[#allocation2 + $0xa] sm:$0x1] %vm771, %v1729
        %1747 = vst.msk [vmem:[#allocation2 + $0x22] sm:$0x1] %vm771, %v1731
        %1748 = vst.msk [vmem:[#allocation2 + $0x3a] sm:$0x1] %vm771, %v1733
        %1749 = vst.msk [vmem:[#allocation2 + $0x52] sm:$0x1] %vm771, %v1735
        %1750 = vst.msk [vmem:[#allocation2 + $0x6a] sm:$0x1] %vm771, %v1737
        %1751 = vst.msk [vmem:[#allocation2 + $0x82] sm:$0x1] %vm771, %v1739
        %1752 = vrot.lane.b32.xlu0 %v1722, 114
        %v1753 = vpop.permute.xlu0 %1752
        %1754 = vrot.lane.b32.xlu0 %v1723, 114
        %v1755 = vpop.permute.xlu0 %1754
        %1756 = vrot.lane.b32.xlu0 %v1724, 114
        %v1757 = vpop.permute.xlu0 %1756
        %1758 = vrot.lane.b32.xlu0 %v1725, 114
        %v1759 = vpop.permute.xlu0 %1758
        %1760 = vrot.lane.b32.xlu0 %v1726, 114
        %v1761 = vpop.permute.xlu0 %1760
        %1762 = vrot.lane.b32.xlu0 %v1727, 114
        %v1763 = vpop.permute.xlu0 %1762
        %1770 = vst.msk [vmem:[#allocation2 + $0xb] sm:$0x1] %vm771, %v1753
        %1771 = vst.msk [vmem:[#allocation2 + $0x23] sm:$0x1] %vm771, %v1755
        %1772 = vst.msk [vmem:[#allocation2 + $0x3b] sm:$0x1] %vm771, %v1757
        %1773 = vst.msk [vmem:[#allocation2 + $0x53] sm:$0x1] %vm771, %v1759
        %1774 = vst.msk [vmem:[#allocation2 + $0x6b] sm:$0x1] %vm771, %v1761
        %1775 = vst.msk [vmem:[#allocation2 + $0x83] sm:$0x1] %vm771, %v1763
        %1776 = vrot.lane.b32.xlu0 %v1722, 98
        %v1777 = vpop.permute.xlu0 %1776
        %1778 = vrot.lane.b32.xlu0 %v1723, 98
        %v1779 = vpop.permute.xlu0 %1778
        %1780 = vrot.lane.b32.xlu0 %v1724, 98
        %v1781 = vpop.permute.xlu0 %1780
        %1782 = vrot.lane.b32.xlu0 %v1725, 98
        %v1783 = vpop.permute.xlu0 %1782
        %1784 = vrot.lane.b32.xlu0 %v1726, 98
        %v1785 = vpop.permute.xlu0 %1784
        %1786 = vrot.lane.b32.xlu0 %v1727, 98
        %v1787 = vpop.permute.xlu0 %1786
        %1794 = vst.msk [vmem:[#allocation2 + $0xc] sm:$0x1] %vm771, %v1777
        %1795 = vst.msk [vmem:[#allocation2 + $0x24] sm:$0x1] %vm771, %v1779
        %1796 = vst.msk [vmem:[#allocation2 + $0x3c] sm:$0x1] %vm771, %v1781
        %1797 = vst.msk [vmem:[#allocation2 + $0x54] sm:$0x1] %vm771, %v1783
        %1798 = vst.msk [vmem:[#allocation2 + $0x6c] sm:$0x1] %vm771, %v1785
        %1799 = vst.msk [vmem:[#allocation2 + $0x84] sm:$0x1] %vm771, %v1787
        %1800 = vrot.lane.b32.xlu0 %v1722, 82
        %v1801 = vpop.permute.xlu0 %1800
        %1802 = vrot.lane.b32.xlu0 %v1723, 82
        %v1803 = vpop.permute.xlu0 %1802
        %1804 = vrot.lane.b32.xlu0 %v1724, 82
        %v1805 = vpop.permute.xlu0 %1804
        %1806 = vrot.lane.b32.xlu0 %v1725, 82
        %v1807 = vpop.permute.xlu0 %1806
        %1808 = vrot.lane.b32.xlu0 %v1726, 82
        %v1809 = vpop.permute.xlu0 %1808
        %1810 = vrot.lane.b32.xlu0 %v1727, 82
        %v1811 = vpop.permute.xlu0 %1810
        %1818 = vst.msk [vmem:[#allocation2 + $0xd] sm:$0x1] %vm771, %v1801
        %1819 = vst.msk [vmem:[#allocation2 + $0x25] sm:$0x1] %vm771, %v1803
        %1820 = vst.msk [vmem:[#allocation2 + $0x3d] sm:$0x1] %vm771, %v1805
        %1821 = vst.msk [vmem:[#allocation2 + $0x55] sm:$0x1] %vm771, %v1807
        %1822 = vst.msk [vmem:[#allocation2 + $0x6d] sm:$0x1] %vm771, %v1809
        %1823 = vst.msk [vmem:[#allocation2 + $0x85] sm:$0x1] %vm771, %v1811
        %1824 = vrot.lane.b32.xlu0 %v335, 64
        %v1825 = vpop.permute.xlu0 %1824
        %1827 = vxpose.xlu0.b32.start [1/16] %v1825, 128
        %1828 = vxpose.xlu0.b32.cont [2/16] 0.0, 128
        %1829 = vxpose.xlu0.b32.cont [3/16] 0.0, 128
        %1830 = vxpose.xlu0.b32.cont [4/16] 0.0, 128
        %1831 = vxpose.xlu0.b32.cont [5/16] 0.0, 128
        %1832 = vxpose.xlu0.b32.cont [6/16] 0.0, 128
        %1833 = vxpose.xlu0.b32.cont [7/16] 0.0, 128
        %1834 = vxpose.xlu0.b32.cont [8/16] 0.0, 128
        %1835 = vxpose.xlu0.b32.cont [9/16] 0.0, 128
        %1836 = vxpose.xlu0.b32.cont [10/16] 0.0, 128
        %1837 = vxpose.xlu0.b32.cont [11/16] 0.0, 128
        %1838 = vxpose.xlu0.b32.cont [12/16] 0.0, 128
        %1839 = vxpose.xlu0.b32.cont [13/16] 0.0, 128
        %1840 = vxpose.xlu0.b32.cont [14/16] 0.0, 128
        %1841 = vxpose.xlu0.b32.cont [15/16] 0.0, 128
        %1842 = vxpose.xlu0.b32.end [16/16] 0.0, 128
        %v1843 = vpop.trf.xlu0
        %v1844 = vpop.trf.xlu0
        %v1845 = vpop.trf.xlu0
        %v1846 = vpop.trf.xlu0
        %v1847 = vpop.trf.xlu0
        %v1848 = vpop.trf.xlu0
        %v1849 = vpop.trf.xlu0
        %v1850 = vpop.trf.xlu0
        %v1851 = vpop.trf.xlu0
        %v1852 = vpop.trf.xlu0
        %v1853 = vpop.trf.xlu0
        %v1854 = vpop.trf.xlu0
        %v1855 = vpop.trf.xlu0
        %v1856 = vpop.trf.xlu0
        %v1857 = vpop.trf.xlu0
        %v1858 = vpop.trf.xlu0
        %1859 = vrot.lane.b32.xlu0 %v1372, 64
        %v1860 = vpop.permute.xlu0 %1859
        %v1862 = vsel %vm394, %v1843, 0
        %v1865 = vsel %vm394, %v1844, 0
        %v1868 = vsel %vm394, %v1845, 0
        %v1871 = vsel %vm394, %v1846, 0
        %v1874 = vsel %vm394, %v1847, 0
        %v1877 = vsel %vm394, %v1848, 0
        %v1880 = vsel %vm394, %v1849, 0
        %v1883 = vsel %vm394, %v1850, 0
        %v1885 = vsel %vm419, %v1860, 0
        %1887 = vmatpush.msra.mxu0 0.0
        %1888 = vmatpush.msra.mxu0 0.0
        %1889 = vmatpush.msra.mxu0 0.0
        %1890 = vmatpush.msra.mxu0 0.0
        %1891 = vmatpush.msra.mxu0 0.0
        %1892 = vmatpush.msra.mxu0 0.0
        %1893 = vmatpush.msra.mxu0 0.0
        %1894 = vmatpush.msra.mxu0 0.0
        %1895 = vmatpush.msra.mxu0 0.0
        %1896 = vmatpush.msra.mxu0 0.0
        %1897 = vmatpush.msra.mxu0 0.0
        %1898 = vmatpush.msra.mxu0 0.0
        %1899 = vmatpush.msra.mxu0 0.0
        %1900 = vmatpush.msra.mxu0 0.0
        %1901 = vmatpush.msra.mxu0 0.0
        %1902 = vmatpush.msra.mxu0 %v1885
        %1903 = vmatmul.f32.gmra.mxu0 %v1862
        %v1904 = vpop.f32.mrf.mxu0
        %v1905 = vadd.f32 0.0, %v1904
        %1906 = vmatmul.f32.gmra.mxu0 %v1865
        %v1907 = vpop.f32.mrf.mxu0
        %v1908 = vadd.f32 0.0, %v1907
        %1909 = vmatmul.f32.gmra.mxu0 %v1868
        %v1910 = vpop.f32.mrf.mxu0
        %v1911 = vadd.f32 0.0, %v1910
        %1912 = vmatmul.f32.gmra.mxu0 %v1871
        %v1913 = vpop.f32.mrf.mxu0
        %v1914 = vadd.f32 0.0, %v1913
        %1915 = vmatmul.f32.gmra.mxu0 %v1874
        %v1916 = vpop.f32.mrf.mxu0
        %v1917 = vadd.f32 0.0, %v1916
        %1918 = vmatmul.f32.gmra.mxu0 %v1877
        %v1919 = vpop.f32.mrf.mxu0
        %v1920 = vadd.f32 0.0, %v1919
        %1921 = vmatmul.f32.gmra.mxu0 %v1880
        %v1922 = vpop.f32.mrf.mxu0
        %v1923 = vadd.f32 0.0, %v1922
        %1924 = vmatmul.f32.gmra.mxu0 %v1883
        %v1925 = vpop.f32.mrf.mxu0
        %v1926 = vadd.f32 0.0, %v1925
        %1927 = vdwg.mxu0
        %v1928 = vsel %vm463, %v1905, -inf
        %1929 = vmax.xlane.f32.xlu0 %v1928
        %v1930 = vpop.xlane.xlu0 %1929
        %v1931 = vsel %vm463, %v1908, -inf
        %1932 = vmax.xlane.f32.xlu0 %v1931
        %v1933 = vpop.xlane.xlu0 %1932
        %v1934 = vsel %vm463, %v1911, -inf
        %1935 = vmax.xlane.f32.xlu0 %v1934
        %v1936 = vpop.xlane.xlu0 %1935
        %v1937 = vsel %vm463, %v1914, -inf
        %1938 = vmax.xlane.f32.xlu0 %v1937
        %v1939 = vpop.xlane.xlu0 %1938
        %v1940 = vsel %vm463, %v1917, -inf
        %1941 = vmax.xlane.f32.xlu0 %v1940
        %v1942 = vpop.xlane.xlu0 %1941
        %v1943 = vsel %vm463, %v1920, -inf
        %1944 = vmax.xlane.f32.xlu0 %v1943
        %v1945 = vpop.xlane.xlu0 %1944
        %v1946 = vsel %vm463, %v1923, -inf
        %1947 = vmax.xlane.f32.xlu0 %v1946
        %v1948 = vpop.xlane.xlu0 %1947
        %v1949 = vsel %vm463, %v1926, -inf
        %1950 = vmax.xlane.f32.xlu0 %v1949
        %v1951 = vpop.xlane.xlu0 %1950
        %v1952 = vsub.f32 %v1905, %v1930
        %v1953 = vsub.f32 %v1908, %v1933
        %v1954 = vsub.f32 %v1911, %v1936
        %v1955 = vsub.f32 %v1914, %v1939
        %v1956 = vsub.f32 %v1917, %v1942
        %v1957 = vsub.f32 %v1920, %v1945
        %v1958 = vsub.f32 %v1923, %v1948
        %v1959 = vsub.f32 %v1926, %v1951
        %v1960 = vmul.f32 %v1952, 1.442695
        %v1961 = vpow.pop %v1960
        %v1962 = vmul.f32 %v1953, 1.442695
        %v1963 = vpow.pop %v1962
        %v1964 = vmul.f32 %v1954, 1.442695
        %v1965 = vpow.pop %v1964
        %v1966 = vmul.f32 %v1955, 1.442695
        %v1967 = vpow.pop %v1966
        %v1968 = vmul.f32 %v1956, 1.442695
        %v1969 = vpow.pop %v1968
        %v1970 = vmul.f32 %v1957, 1.442695
        %v1971 = vpow.pop %v1970
        %v1972 = vmul.f32 %v1958, 1.442695
        %v1973 = vpow.pop %v1972
        %v1974 = vmul.f32 %v1959, 1.442695
        %v1975 = vpow.pop %v1974
        %v1976 = vsel %vm463, %v1961, 0.0
        %1977 = vadd.xlane.f32.xlu0 %v1976
        %v1978 = vpop.xlane.xlu0 %1977
        %v1979 = vsel %vm463, %v1963, 0.0
        %1980 = vadd.xlane.f32.xlu0 %v1979
        %v1981 = vpop.xlane.xlu0 %1980
        %v1982 = vsel %vm463, %v1965, 0.0
        %1983 = vadd.xlane.f32.xlu0 %v1982
        %v1984 = vpop.xlane.xlu0 %1983
        %v1985 = vsel %vm463, %v1967, 0.0
        %1986 = vadd.xlane.f32.xlu0 %v1985
        %v1987 = vpop.xlane.xlu0 %1986
        %v1988 = vsel %vm463, %v1969, 0.0
        %1989 = vadd.xlane.f32.xlu0 %v1988
        %v1990 = vpop.xlane.xlu0 %1989
        %v1991 = vsel %vm463, %v1971, 0.0
        %1992 = vadd.xlane.f32.xlu0 %v1991
        %v1993 = vpop.xlane.xlu0 %1992
        %v1994 = vsel %vm463, %v1973, 0.0
        %1995 = vadd.xlane.f32.xlu0 %v1994
        %v1996 = vpop.xlane.xlu0 %1995
        %v1997 = vsel %vm463, %v1975, 0.0
        %1998 = vadd.xlane.f32.xlu0 %v1997
        %v1999 = vpop.xlane.xlu0 %1998
        %v2000 = vrcp.pop %v1978
        %v2001 = vmul.f32 %v1978, %v2000
        %v2002 = vsub.f32 1.0, %v2001
        %v2003 = vmul.f32 %v2000, %v2002
        %v2004 = vadd.f32 %v2000, %v2003
        %vm2005 = vweird.f32 %v1978
        %vm2006 = vweird.f32 %v2000
        %vm2007 = vmor %vm2005, %vm2006
        %v2008 = vsel %vm2007, %v2000, %v2004
        %v2009 = vand.u32 2147483647, %v1978
        %vm2010 = vcmp.eq.f32.partialorder %v2009, 8.507059e+37
        %v2011 = vand.u32 %v1978, 2147483648
        %v2012 = vor.u32 1.1754944e-38, %v2011
        %v2013 = vsel %vm2010, %v2012, %v2008
        %v2014 = vmul.f32 %v1961, %v2013
        %v2015 = vrcp.pop %v1981
        %v2016 = vmul.f32 %v1981, %v2015
        %v2017 = vsub.f32 1.0, %v2016
        %v2018 = vmul.f32 %v2015, %v2017
        %v2019 = vadd.f32 %v2015, %v2018
        %vm2020 = vweird.f32 %v1981
        %vm2021 = vweird.f32 %v2015
        %vm2022 = vmor %vm2020, %vm2021
        %v2023 = vsel %vm2022, %v2015, %v2019
        %v2024 = vand.u32 2147483647, %v1981
        %vm2025 = vcmp.eq.f32.partialorder %v2024, 8.507059e+37
        %v2026 = vand.u32 %v1981, 2147483648
        %v2027 = vor.u32 1.1754944e-38, %v2026
        %v2028 = vsel %vm2025, %v2027, %v2023
        %v2029 = vmul.f32 %v1963, %v2028
        %v2030 = vrcp.pop %v1984
        %v2031 = vmul.f32 %v1984, %v2030
        %v2032 = vsub.f32 1.0, %v2031
        %v2033 = vmul.f32 %v2030, %v2032
        %v2034 = vadd.f32 %v2030, %v2033
        %vm2035 = vweird.f32 %v1984
        %vm2036 = vweird.f32 %v2030
        %vm2037 = vmor %vm2035, %vm2036
        %v2038 = vsel %vm2037, %v2030, %v2034
        %v2039 = vand.u32 2147483647, %v1984
        %vm2040 = vcmp.eq.f32.partialorder %v2039, 8.507059e+37
        %v2041 = vand.u32 %v1984, 2147483648
        %v2042 = vor.u32 1.1754944e-38, %v2041
        %v2043 = vsel %vm2040, %v2042, %v2038
        %v2044 = vmul.f32 %v1965, %v2043
        %v2045 = vrcp.pop %v1987
        %v2046 = vmul.f32 %v1987, %v2045
        %v2047 = vsub.f32 1.0, %v2046
        %v2048 = vmul.f32 %v2045, %v2047
        %v2049 = vadd.f32 %v2045, %v2048
        %vm2050 = vweird.f32 %v1987
        %vm2051 = vweird.f32 %v2045
        %vm2052 = vmor %vm2050, %vm2051
        %v2053 = vsel %vm2052, %v2045, %v2049
        %v2054 = vand.u32 2147483647, %v1987
        %vm2055 = vcmp.eq.f32.partialorder %v2054, 8.507059e+37
        %v2056 = vand.u32 %v1987, 2147483648
        %v2057 = vor.u32 1.1754944e-38, %v2056
        %v2058 = vsel %vm2055, %v2057, %v2053
        %v2059 = vmul.f32 %v1967, %v2058
        %v2060 = vrcp.pop %v1990
        %v2061 = vmul.f32 %v1990, %v2060
        %v2062 = vsub.f32 1.0, %v2061
        %v2063 = vmul.f32 %v2060, %v2062
        %v2064 = vadd.f32 %v2060, %v2063
        %vm2065 = vweird.f32 %v1990
        %vm2066 = vweird.f32 %v2060
        %vm2067 = vmor %vm2065, %vm2066
        %v2068 = vsel %vm2067, %v2060, %v2064
        %v2069 = vand.u32 2147483647, %v1990
        %vm2070 = vcmp.eq.f32.partialorder %v2069, 8.507059e+37
        %v2071 = vand.u32 %v1990, 2147483648
        %v2072 = vor.u32 1.1754944e-38, %v2071
        %v2073 = vsel %vm2070, %v2072, %v2068
        %v2074 = vmul.f32 %v1969, %v2073
        %v2075 = vrcp.pop %v1993
        %v2076 = vmul.f32 %v1993, %v2075
        %v2077 = vsub.f32 1.0, %v2076
        %v2078 = vmul.f32 %v2075, %v2077
        %v2079 = vadd.f32 %v2075, %v2078
        %vm2080 = vweird.f32 %v1993
        %vm2081 = vweird.f32 %v2075
        %vm2082 = vmor %vm2080, %vm2081
        %v2083 = vsel %vm2082, %v2075, %v2079
        %v2084 = vand.u32 2147483647, %v1993
        %vm2085 = vcmp.eq.f32.partialorder %v2084, 8.507059e+37
        %v2086 = vand.u32 %v1993, 2147483648
        %v2087 = vor.u32 1.1754944e-38, %v2086
        %v2088 = vsel %vm2085, %v2087, %v2083
        %v2089 = vmul.f32 %v1971, %v2088
        %v2090 = vrcp.pop %v1996
        %v2091 = vmul.f32 %v1996, %v2090
        %v2092 = vsub.f32 1.0, %v2091
        %v2093 = vmul.f32 %v2090, %v2092
        %v2094 = vadd.f32 %v2090, %v2093
        %vm2095 = vweird.f32 %v1996
        %vm2096 = vweird.f32 %v2090
        %vm2097 = vmor %vm2095, %vm2096
        %v2098 = vsel %vm2097, %v2090, %v2094
        %v2099 = vand.u32 2147483647, %v1996
        %vm2100 = vcmp.eq.f32.partialorder %v2099, 8.507059e+37
        %v2101 = vand.u32 %v1996, 2147483648
        %v2102 = vor.u32 1.1754944e-38, %v2101
        %v2103 = vsel %vm2100, %v2102, %v2098
        %v2104 = vmul.f32 %v1973, %v2103
        %v2105 = vrcp.pop %v1999
        %v2106 = vmul.f32 %v1999, %v2105
        %v2107 = vsub.f32 1.0, %v2106
        %v2108 = vmul.f32 %v2105, %v2107
        %v2109 = vadd.f32 %v2105, %v2108
        %vm2110 = vweird.f32 %v1999
        %vm2111 = vweird.f32 %v2105
        %vm2112 = vmor %vm2110, %vm2111
        %v2113 = vsel %vm2112, %v2105, %v2109
        %v2114 = vand.u32 2147483647, %v1999
        %vm2115 = vcmp.eq.f32.partialorder %v2114, 8.507059e+37
        %v2116 = vand.u32 %v1999, 2147483648
        %v2117 = vor.u32 1.1754944e-38, %v2116
        %v2118 = vsel %vm2115, %v2117, %v2113
        %v2119 = vmul.f32 %v1975, %v2118
        %2120 = vrot.lane.b32.xlu0 %v1635, 64
        %v2121 = vpop.permute.xlu0 %2120
        %v2122 = vsel %vm463, %v2121, 0
        %v2125 = vsel %vm463, %v2014, 0
        %v2128 = vsel %vm463, %v2029, 0
        %v2131 = vsel %vm463, %v2044, 0
        %v2134 = vsel %vm463, %v2059, 0
        %v2137 = vsel %vm463, %v2074, 0
        %v2140 = vsel %vm463, %v2089, 0
        %v2143 = vsel %vm463, %v2104, 0
        %v2146 = vsel %vm463, %v2119, 0
        %2148 = vmatpush.xpose.msra.mxu0 0.0
        %2149 = vmatpush.xpose.msra.mxu0 0.0
        %2150 = vmatpush.xpose.msra.mxu0 0.0
        %2151 = vmatpush.xpose.msra.mxu0 0.0
        %2152 = vmatpush.xpose.msra.mxu0 0.0
        %2153 = vmatpush.xpose.msra.mxu0 0.0
        %2154 = vmatpush.xpose.msra.mxu0 0.0
        %2155 = vmatpush.xpose.msra.mxu0 0.0
        %2156 = vmatpush.xpose.msra.mxu0 %v2146
        %2157 = vmatpush.xpose.msra.mxu0 %v2143
        %2158 = vmatpush.xpose.msra.mxu0 %v2140
        %2159 = vmatpush.xpose.msra.mxu0 %v2137
        %2160 = vmatpush.xpose.msra.mxu0 %v2134
        %2161 = vmatpush.xpose.msra.mxu0 %v2131
        %2162 = vmatpush.xpose.msra.mxu0 %v2128
        %2163 = vmatpush.xpose.msra.mxu0 %v2125
        %2164 = vmatmul.f32.gmra.mxu0 %v2122
        %v2165 = vpop.f32.mrf.mxu0
        %v2166 = vadd.f32 0.0, %v2165
        %2167 = vdwg.mxu0
        %v2168 = vld [vmem:[%s3] sm:$0x3f]
        %v2169 = vld [vmem:[%s4] sm:$0x3f]
        %2171 = vset.pattern.permute.xlu0 0
        %2172 = vperm.xlu0 %2171, %v2169
        %v2173 = vpop.permute.xlu0 %2172
        %v2176 = vsel %vm394, %v2168, 0
        %v2179 = vsel %vm419, %v2166, 0
        %2181 = vmatpush.msra.mxu0 0.0
        %2182 = vmatpush.msra.mxu0 0.0
        %2183 = vmatpush.msra.mxu0 0.0
        %2184 = vmatpush.msra.mxu0 0.0
        %2185 = vmatpush.msra.mxu0 0.0
        %2186 = vmatpush.msra.mxu0 0.0
        %2187 = vmatpush.msra.mxu0 0.0
        %2188 = vmatpush.msra.mxu0 0.0
        %2189 = vmatpush.msra.mxu0 0.0
        %2190 = vmatpush.msra.mxu0 0.0
        %2191 = vmatpush.msra.mxu0 0.0
        %2192 = vmatpush.msra.mxu0 0.0
        %2193 = vmatpush.msra.mxu0 0.0
        %2194 = vmatpush.msra.mxu0 0.0
        %2195 = vmatpush.msra.mxu0 0.0
        %2196 = vmatpush.msra.mxu0 %v2179
        %2197 = vmatmul.f32.gmra.mxu0 %v2176
        %v2198 = vpop.f32.mrf.mxu0
        %v2199 = vadd.f32 %v2173, %v2198
        %2200 = vdwg.mxu0
        %2201 = vrot.lane.b32.xlu0 %v265, 64
        %v2202 = vpop.permute.xlu0 %2201
        %v2204 = vadd.f32 %v2199, %v2202
        %v2206 = vrot.slane %v2204, 1
        %v2207 = vrot.slane %v2204, 2
        %v2208 = vrot.slane %v2204, 3
        %v2209 = vrot.slane %v2204, 4
        %v2210 = vrot.slane %v2204, 5
        %v2211 = vperm.slane %v2204, 0
        %v2212 = vperm.slane %v2206, 0
        %v2213 = vperm.slane %v2207, 0
        %v2214 = vperm.slane %v2208, 0
        %v2215 = vperm.slane %v2209, 0
        %v2216 = vperm.slane %v2210, 0
        %2217 = vrot.lane.b32.xlu0 %v2211, 2
        %v2218 = vpop.permute.xlu0 %2217
        %2219 = vrot.lane.b32.xlu0 %v2212, 2
        %v2220 = vpop.permute.xlu0 %2219
        %2221 = vrot.lane.b32.xlu0 %v2213, 2
        %v2222 = vpop.permute.xlu0 %2221
        %2223 = vrot.lane.b32.xlu0 %v2214, 2
        %v2224 = vpop.permute.xlu0 %2223
        %2225 = vrot.lane.b32.xlu0 %v2215, 2
        %v2226 = vpop.permute.xlu0 %2225
        %2227 = vrot.lane.b32.xlu0 %v2216, 2
        %v2228 = vpop.permute.xlu0 %2227
        %2235 = vst.msk [vmem:[#allocation2 + $0xe] sm:$0x1] %vm771, %v2218
        %2236 = vst.msk [vmem:[#allocation2 + $0x26] sm:$0x1] %vm771, %v2220
        %2237 = vst.msk [vmem:[#allocation2 + $0x3e] sm:$0x1] %vm771, %v2222
        %2238 = vst.msk [vmem:[#allocation2 + $0x56] sm:$0x1] %vm771, %v2224
        %2239 = vst.msk [vmem:[#allocation2 + $0x6e] sm:$0x1] %vm771, %v2226
        %2240 = vst.msk [vmem:[#allocation2 + $0x86] sm:$0x1] %vm771, %v2228
        %2241 = vrot.lane.b32.xlu0 %v2211, 114
        %v2242 = vpop.permute.xlu0 %2241
        %2243 = vrot.lane.b32.xlu0 %v2212, 114
        %v2244 = vpop.permute.xlu0 %2243
        %2245 = vrot.lane.b32.xlu0 %v2213, 114
        %v2246 = vpop.permute.xlu0 %2245
        %2247 = vrot.lane.b32.xlu0 %v2214, 114
        %v2248 = vpop.permute.xlu0 %2247
        %2249 = vrot.lane.b32.xlu0 %v2215, 114
        %v2250 = vpop.permute.xlu0 %2249
        %2251 = vrot.lane.b32.xlu0 %v2216, 114
        %v2252 = vpop.permute.xlu0 %2251
        %2259 = vst.msk [vmem:[#allocation2 + $0xf] sm:$0x1] %vm771, %v2242
        %2260 = vst.msk [vmem:[#allocation2 + $0x27] sm:$0x1] %vm771, %v2244
        %2261 = vst.msk [vmem:[#allocation2 + $0x3f] sm:$0x1] %vm771, %v2246
        %2262 = vst.msk [vmem:[#allocation2 + $0x57] sm:$0x1] %vm771, %v2248
        %2263 = vst.msk [vmem:[#allocation2 + $0x6f] sm:$0x1] %vm771, %v2250
        %2264 = vst.msk [vmem:[#allocation2 + $0x87] sm:$0x1] %vm771, %v2252
        %2265 = vrot.lane.b32.xlu0 %v2211, 98
        %v2266 = vpop.permute.xlu0 %2265
        %2267 = vrot.lane.b32.xlu0 %v2212, 98
        %v2268 = vpop.permute.xlu0 %2267
        %2269 = vrot.lane.b32.xlu0 %v2213, 98
        %v2270 = vpop.permute.xlu0 %2269
        %2271 = vrot.lane.b32.xlu0 %v2214, 98
        %v2272 = vpop.permute.xlu0 %2271
        %2273 = vrot.lane.b32.xlu0 %v2215, 98
        %v2274 = vpop.permute.xlu0 %2273
        %2275 = vrot.lane.b32.xlu0 %v2216, 98
        %v2276 = vpop.permute.xlu0 %2275
        %2283 = vst.msk [vmem:[#allocation2 + $0x10] sm:$0x1] %vm771, %v2266
        %2284 = vst.msk [vmem:[#allocation2 + $0x28] sm:$0x1] %vm771, %v2268
        %2285 = vst.msk [vmem:[#allocation2 + $0x40] sm:$0x1] %vm771, %v2270
        %2286 = vst.msk [vmem:[#allocation2 + $0x58] sm:$0x1] %vm771, %v2272
        %2287 = vst.msk [vmem:[#allocation2 + $0x70] sm:$0x1] %vm771, %v2274
        %2288 = vst.msk [vmem:[#allocation2 + $0x88] sm:$0x1] %vm771, %v2276
        %2289 = vrot.lane.b32.xlu0 %v2211, 82
        %v2290 = vpop.permute.xlu0 %2289
        %2291 = vrot.lane.b32.xlu0 %v2212, 82
        %v2292 = vpop.permute.xlu0 %2291
        %2293 = vrot.lane.b32.xlu0 %v2213, 82
        %v2294 = vpop.permute.xlu0 %2293
        %2295 = vrot.lane.b32.xlu0 %v2214, 82
        %v2296 = vpop.permute.xlu0 %2295
        %2297 = vrot.lane.b32.xlu0 %v2215, 82
        %v2298 = vpop.permute.xlu0 %2297
        %2299 = vrot.lane.b32.xlu0 %v2216, 82
        %v2300 = vpop.permute.xlu0 %2299
        %2307 = vst.msk [vmem:[#allocation2 + $0x11] sm:$0x1] %vm771, %v2290
        %2308 = vst.msk [vmem:[#allocation2 + $0x29] sm:$0x1] %vm771, %v2292
        %2309 = vst.msk [vmem:[#allocation2 + $0x41] sm:$0x1] %vm771, %v2294
        %2310 = vst.msk [vmem:[#allocation2 + $0x59] sm:$0x1] %vm771, %v2296
        %2311 = vst.msk [vmem:[#allocation2 + $0x71] sm:$0x1] %vm771, %v2298
        %2312 = vst.msk [vmem:[#allocation2 + $0x89] sm:$0x1] %vm771, %v2300
        %v2313 = vlaneseq
        %v2314 = vshrl.u32 %v2313, 7
        %v2315 = vadd.s32 %v2314, 8
        %v2316 = vadd.s32 %v2314, 16
        %v2317 = vlaneseq
        %v2318 = vand.u32 %v2317, 127
        %vm2319 = vcmp.ge.s32.totalorder %v2314, 1
        %vm2320 = vcmp.ge.s32.totalorder %v2315, 1
        %vm2321 = vcmp.ge.s32.totalorder %v2316, 1
        %vm2322 = vcmp.le.s32.totalorder %v2314, 16
        %vm2323 = vcmp.le.s32.totalorder %v2315, 16
        %vm2324 = vcmp.le.s32.totalorder %v2316, 16
        %vm2325 = vmand %vm2319, %vm2322
        %vm2326 = vmand %vm2320, %vm2323
        %vm2327 = vmand %vm2321, %vm2324
        %vm2328 = vcmp.ge.s32.totalorder %v2318, 1
        %vm2329 = vmand %vm2325, %vm2328
        %vm2330 = vmand %vm2326, %vm2328
        %vm2331 = vmand %vm2327, %vm2328
        %vm2332 = vcmp.le.s32.totalorder %v2318, 16
        %vm2333 = vmand %vm2329, %vm2332
        %vm2334 = vmand %vm2330, %vm2332
        %vm2335 = vmand %vm2331, %vm2332
        %v2336 = vsel %vm2333, 1, 0
        %v2337 = vsel %vm2334, 1, 0
        %v2338 = vsel %vm2335, 1, 0
        %v2339 = vcvt.s32.f32 %v2336
        %v2340 = vcvt.s32.f32 %v2337
        %v2341 = vcvt.s32.f32 %v2338
        %s2342 = sld [smem:[#allocation4 + $0x6c]]
        %v2343 = vstv %s2342
        %s2344 = sld [smem:[#allocation4 + $0x6d]]
        %v2345 = vstv %s2344
        %v2346 = vld [vmem:[#allocation2] sm:$0xff]
        %v2347 = vld [vmem:[#allocation2 + $0x8] sm:$0xff]
        %v2348 = vld [vmem:[#allocation2 + $0x10] sm:$0x3]
        %s2349 = sld [smem:[#allocation4]]
        %v2350 = vstv %s2349
        %v2351 = vmul.f32 %v2346, %v2350
        %v2352 = vmul.f32 %v2347, %v2350
        %v2353 = vmul.f32 %v2348, %v2350
        %v2354 = vadd.f32 %v2343, %v2351
        %v2355 = vadd.f32 %v2343, %v2352
        %v2356 = vadd.f32 %v2343, %v2353
        %s2357 = sld [smem:[#allocation4 + $0x1]]
        %v2358 = vstv %s2357
        %v2359 = vmul.f32 %v2346, %v2358
        %v2360 = vmul.f32 %v2347, %v2358
        %v2361 = vmul.f32 %v2348, %v2358
        %v2362 = vadd.f32 %v2345, %v2359
        %v2363 = vadd.f32 %v2345, %v2360
        %v2364 = vadd.f32 %v2345, %v2361
        %s2365 = scalar_lea.vmem [#allocation2], 24
        %v2366 = vld [vmem:[%s2365] sm:$0xff]
        %v2367 = vld [vmem:[%s2365 + $0x8] sm:$0xff]
        %v2368 = vld [vmem:[%s2365 + $0x10] sm:$0x3]
        %s2369 = sld [smem:[#allocation4 + $0x2]]
        %v2370 = vstv %s2369
        %v2371 = vmul.f32 %v2366, %v2370
        %v2372 = vmul.f32 %v2367, %v2370
        %v2373 = vmul.f32 %v2368, %v2370
        %v2374 = vadd.f32 %v2354, %v2371
        %v2375 = vadd.f32 %v2355, %v2372
        %v2376 = vadd.f32 %v2356, %v2373
        %s2377 = sld [smem:[#allocation4 + $0x3]]
        %v2378 = vstv %s2377
        %v2379 = vmul.f32 %v2366, %v2378
        %v2380 = vmul.f32 %v2367, %v2378
        %v2381 = vmul.f32 %v2368, %v2378
        %v2382 = vadd.f32 %v2362, %v2379
        %v2383 = vadd.f32 %v2363, %v2380
        %v2384 = vadd.f32 %v2364, %v2381
        %s2385 = scalar_lea.vmem [#allocation2], 48
        %v2386 = vld [vmem:[%s2385] sm:$0xff]
        %v2387 = vld [vmem:[%s2385 + $0x8] sm:$0xff]
        %v2388 = vld [vmem:[%s2385 + $0x10] sm:$0x3]
        %s2389 = sld [smem:[#allocation4 + $0x4]]
        %v2390 = vstv %s2389
        %v2391 = vmul.f32 %v2386, %v2390
        %v2392 = vmul.f32 %v2387, %v2390
        %v2393 = vmul.f32 %v2388, %v2390
        %v2394 = vadd.f32 %v2374, %v2391
        %v2395 = vadd.f32 %v2375, %v2392
        %v2396 = vadd.f32 %v2376, %v2393
        %s2397 = sld [smem:[#allocation4 + $0x5]]
        %v2398 = vstv %s2397
        %v2399 = vmul.f32 %v2386, %v2398
        %v2400 = vmul.f32 %v2387, %v2398
        %v2401 = vmul.f32 %v2388, %v2398
        %v2402 = vadd.f32 %v2382, %v2399
        %v2403 = vadd.f32 %v2383, %v2400
        %v2404 = vadd.f32 %v2384, %v2401
        %s2405 = scalar_lea.vmem [#allocation2], 72
        %v2406 = vld [vmem:[%s2405] sm:$0xff]
        %v2407 = vld [vmem:[%s2405 + $0x8] sm:$0xff]
        %v2408 = vld [vmem:[%s2405 + $0x10] sm:$0x3]
        %s2409 = sld [smem:[#allocation4 + $0x6]]
        %v2410 = vstv %s2409
        %v2411 = vmul.f32 %v2406, %v2410
        %v2412 = vmul.f32 %v2407, %v2410
        %v2413 = vmul.f32 %v2408, %v2410
        %v2414 = vadd.f32 %v2394, %v2411
        %v2415 = vadd.f32 %v2395, %v2412
        %v2416 = vadd.f32 %v2396, %v2413
        %s2417 = sld [smem:[#allocation4 + $0x7]]
        %v2418 = vstv %s2417
        %v2419 = vmul.f32 %v2406, %v2418
        %v2420 = vmul.f32 %v2407, %v2418
        %v2421 = vmul.f32 %v2408, %v2418
        %v2422 = vadd.f32 %v2402, %v2419
        %v2423 = vadd.f32 %v2403, %v2420
        %v2424 = vadd.f32 %v2404, %v2421
        %s2425 = scalar_lea.vmem [#allocation2], 96
        %v2426 = vld [vmem:[%s2425] sm:$0xff]
        %v2427 = vld [vmem:[%s2425 + $0x8] sm:$0xff]
        %v2428 = vld [vmem:[%s2425 + $0x10] sm:$0x3]
        %s2429 = sld [smem:[#allocation4 + $0x8]]
        %v2430 = vstv %s2429
        %v2431 = vmul.f32 %v2426, %v2430
        %v2432 = vmul.f32 %v2427, %v2430
        %v2433 = vmul.f32 %v2428, %v2430
        %v2434 = vadd.f32 %v2414, %v2431
        %v2435 = vadd.f32 %v2415, %v2432
        %v2436 = vadd.f32 %v2416, %v2433
        %s2437 = sld [smem:[#allocation4 + $0x9]]
        %v2438 = vstv %s2437
        %v2439 = vmul.f32 %v2426, %v2438
        %v2440 = vmul.f32 %v2427, %v2438
        %v2441 = vmul.f32 %v2428, %v2438
        %v2442 = vadd.f32 %v2422, %v2439
        %v2443 = vadd.f32 %v2423, %v2440
        %v2444 = vadd.f32 %v2424, %v2441
        %s2445 = scalar_lea.vmem [#allocation2], 120
        %v2446 = vld [vmem:[%s2445] sm:$0xff]
        %v2447 = vld [vmem:[%s2445 + $0x8] sm:$0xff]
        %v2448 = vld [vmem:[%s2445 + $0x10] sm:$0x3]
        %s2449 = sld [smem:[#allocation4 + $0xa]]
        %v2450 = vstv %s2449
        %v2451 = vmul.f32 %v2446, %v2450
        %v2452 = vmul.f32 %v2447, %v2450
        %v2453 = vmul.f32 %v2448, %v2450
        %v2454 = vadd.f32 %v2434, %v2451
        %v2455 = vadd.f32 %v2435, %v2452
        %v2456 = vadd.f32 %v2436, %v2453
        %s2457 = sld [smem:[#allocation4 + $0xb]]
        %v2458 = vstv %s2457
        %v2459 = vmul.f32 %v2446, %v2458
        %v2460 = vmul.f32 %v2447, %v2458
        %v2461 = vmul.f32 %v2448, %v2458
        %v2462 = vadd.f32 %v2442, %v2459
        %v2463 = vadd.f32 %v2443, %v2460
        %v2464 = vadd.f32 %v2444, %v2461
        %s2465 = sld [smem:[#allocation4 + $0xc]]
        %v2466 = vstv %s2465
        %v2467 = vmul.f32 %v2346, %v2466
        %v2468 = vmul.f32 %v2347, %v2466
        %v2469 = vmul.f32 %v2348, %v2466
        %2473 = vrot.lane.b32.xlu0 %v2467, 127
        %v2474 = vpop.permute.xlu0 %2473
        %2475 = vrot.lane.b32.xlu0 %v2468, 127
        %v2476 = vpop.permute.xlu0 %2475
        %2477 = vrot.lane.b32.xlu0 %v2469, 127
        %v2478 = vpop.permute.xlu0 %2477
        %v2482 = vadd.f32 %v2454, %v2474
        %v2483 = vadd.f32 %v2455, %v2476
        %v2484 = vadd.f32 %v2456, %v2478
        %s2485 = sld [smem:[#allocation4 + $0xd]]
        %v2486 = vstv %s2485
        %v2487 = vmul.f32 %v2346, %v2486
        %v2488 = vmul.f32 %v2347, %v2486
        %v2489 = vmul.f32 %v2348, %v2486
        %2493 = vrot.lane.b32.xlu0 %v2487, 127
        %v2494 = vpop.permute.xlu0 %2493
        %2495 = vrot.lane.b32.xlu0 %v2488, 127
        %v2496 = vpop.permute.xlu0 %2495
        %2497 = vrot.lane.b32.xlu0 %v2489, 127
        %v2498 = vpop.permute.xlu0 %2497
        %v2502 = vadd.f32 %v2462, %v2494
        %v2503 = vadd.f32 %v2463, %v2496
        %v2504 = vadd.f32 %v2464, %v2498
        %s2505 = sld [smem:[#allocation4 + $0xe]]
        %v2506 = vstv %s2505
        %v2507 = vmul.f32 %v2366, %v2506
        %v2508 = vmul.f32 %v2367, %v2506
        %v2509 = vmul.f32 %v2368, %v2506
        %2513 = vrot.lane.b32.xlu0 %v2507, 127
        %v2514 = vpop.permute.xlu0 %2513
        %2515 = vrot.lane.b32.xlu0 %v2508, 127
        %v2516 = vpop.permute.xlu0 %2515
        %2517 = vrot.lane.b32.xlu0 %v2509, 127
        %v2518 = vpop.permute.xlu0 %2517
        %v2522 = vadd.f32 %v2482, %v2514
        %v2523 = vadd.f32 %v2483, %v2516
        %v2524 = vadd.f32 %v2484, %v2518
        %s2525 = sld [smem:[#allocation4 + $0xf]]
        %v2526 = vstv %s2525
        %v2527 = vmul.f32 %v2366, %v2526
        %v2528 = vmul.f32 %v2367, %v2526
        %v2529 = vmul.f32 %v2368, %v2526
        %2533 = vrot.lane.b32.xlu0 %v2527, 127
        %v2534 = vpop.permute.xlu0 %2533
        %2535 = vrot.lane.b32.xlu0 %v2528, 127
        %v2536 = vpop.permute.xlu0 %2535
        %2537 = vrot.lane.b32.xlu0 %v2529, 127
        %v2538 = vpop.permute.xlu0 %2537
        %v2542 = vadd.f32 %v2502, %v2534
        %v2543 = vadd.f32 %v2503, %v2536
        %v2544 = vadd.f32 %v2504, %v2538
        %s2545 = sld [smem:[#allocation4 + $0x10]]
        %v2546 = vstv %s2545
        %v2547 = vmul.f32 %v2386, %v2546
        %v2548 = vmul.f32 %v2387, %v2546
        %v2549 = vmul.f32 %v2388, %v2546
        %2553 = vrot.lane.b32.xlu0 %v2547, 127
        %v2554 = vpop.permute.xlu0 %2553
        %2555 = vrot.lane.b32.xlu0 %v2548, 127
        %v2556 = vpop.permute.xlu0 %2555
        %2557 = vrot.lane.b32.xlu0 %v2549, 127
        %v2558 = vpop.permute.xlu0 %2557
        %v2562 = vadd.f32 %v2522, %v2554
        %v2563 = vadd.f32 %v2523, %v2556
        %v2564 = vadd.f32 %v2524, %v2558
        %s2565 = sld [smem:[#allocation4 + $0x11]]
        %v2566 = vstv %s2565
        %v2567 = vmul.f32 %v2386, %v2566
        %v2568 = vmul.f32 %v2387, %v2566
        %v2569 = vmul.f32 %v2388, %v2566
        %2573 = vrot.lane.b32.xlu0 %v2567, 127
        %v2574 = vpop.permute.xlu0 %2573
        %2575 = vrot.lane.b32.xlu0 %v2568, 127
        %v2576 = vpop.permute.xlu0 %2575
        %2577 = vrot.lane.b32.xlu0 %v2569, 127
        %v2578 = vpop.permute.xlu0 %2577
        %v2582 = vadd.f32 %v2542, %v2574
        %v2583 = vadd.f32 %v2543, %v2576
        %v2584 = vadd.f32 %v2544, %v2578
        %s2585 = sld [smem:[#allocation4 + $0x12]]
        %v2586 = vstv %s2585
        %v2587 = vmul.f32 %v2406, %v2586
        %v2588 = vmul.f32 %v2407, %v2586
        %v2589 = vmul.f32 %v2408, %v2586
        %2593 = vrot.lane.b32.xlu0 %v2587, 127
        %v2594 = vpop.permute.xlu0 %2593
        %2595 = vrot.lane.b32.xlu0 %v2588, 127
        %v2596 = vpop.permute.xlu0 %2595
        %2597 = vrot.lane.b32.xlu0 %v2589, 127
        %v2598 = vpop.permute.xlu0 %2597
        %v2602 = vadd.f32 %v2562, %v2594
        %v2603 = vadd.f32 %v2563, %v2596
        %v2604 = vadd.f32 %v2564, %v2598
        %s2605 = sld [smem:[#allocation4 + $0x13]]
        %v2606 = vstv %s2605
        %v2607 = vmul.f32 %v2406, %v2606
        %v2608 = vmul.f32 %v2407, %v2606
        %v2609 = vmul.f32 %v2408, %v2606
        %2613 = vrot.lane.b32.xlu0 %v2607, 127
        %v2614 = vpop.permute.xlu0 %2613
        %2615 = vrot.lane.b32.xlu0 %v2608, 127
        %v2616 = vpop.permute.xlu0 %2615
        %2617 = vrot.lane.b32.xlu0 %v2609, 127
        %v2618 = vpop.permute.xlu0 %2617
        %v2622 = vadd.f32 %v2582, %v2614
        %v2623 = vadd.f32 %v2583, %v2616
        %v2624 = vadd.f32 %v2584, %v2618
        %s2625 = sld [smem:[#allocation4 + $0x14]]
        %v2626 = vstv %s2625
        %v2627 = vmul.f32 %v2426, %v2626
        %v2628 = vmul.f32 %v2427, %v2626
        %v2629 = vmul.f32 %v2428, %v2626
        %2633 = vrot.lane.b32.xlu0 %v2627, 127
        %v2634 = vpop.permute.xlu0 %2633
        %2635 = vrot.lane.b32.xlu0 %v2628, 127
        %v2636 = vpop.permute.xlu0 %2635
        %2637 = vrot.lane.b32.xlu0 %v2629, 127
        %v2638 = vpop.permute.xlu0 %2637
        %v2642 = vadd.f32 %v2602, %v2634
        %v2643 = vadd.f32 %v2603, %v2636
        %v2644 = vadd.f32 %v2604, %v2638
        %s2645 = sld [smem:[#allocation4 + $0x15]]
        %v2646 = vstv %s2645
        %v2647 = vmul.f32 %v2426, %v2646
        %v2648 = vmul.f32 %v2427, %v2646
        %v2649 = vmul.f32 %v2428, %v2646
        %2653 = vrot.lane.b32.xlu0 %v2647, 127
        %v2654 = vpop.permute.xlu0 %2653
        %2655 = vrot.lane.b32.xlu0 %v2648, 127
        %v2656 = vpop.permute.xlu0 %2655
        %2657 = vrot.lane.b32.xlu0 %v2649, 127
        %v2658 = vpop.permute.xlu0 %2657
        %v2662 = vadd.f32 %v2622, %v2654
        %v2663 = vadd.f32 %v2623, %v2656
        %v2664 = vadd.f32 %v2624, %v2658
        %s2665 = sld [smem:[#allocation4 + $0x16]]
        %v2666 = vstv %s2665
        %v2667 = vmul.f32 %v2446, %v2666
        %v2668 = vmul.f32 %v2447, %v2666
        %v2669 = vmul.f32 %v2448, %v2666
        %2673 = vrot.lane.b32.xlu0 %v2667, 127
        %v2674 = vpop.permute.xlu0 %2673
        %2675 = vrot.lane.b32.xlu0 %v2668, 127
        %v2676 = vpop.permute.xlu0 %2675
        %2677 = vrot.lane.b32.xlu0 %v2669, 127
        %v2678 = vpop.permute.xlu0 %2677
        %v2682 = vadd.f32 %v2642, %v2674
        %v2683 = vadd.f32 %v2643, %v2676
        %v2684 = vadd.f32 %v2644, %v2678
        %s2685 = sld [smem:[#allocation4 + $0x17]]
        %v2686 = vstv %s2685
        %v2687 = vmul.f32 %v2446, %v2686
        %v2688 = vmul.f32 %v2447, %v2686
        %v2689 = vmul.f32 %v2448, %v2686
        %2693 = vrot.lane.b32.xlu0 %v2687, 127
        %v2694 = vpop.permute.xlu0 %2693
        %2695 = vrot.lane.b32.xlu0 %v2688, 127
        %v2696 = vpop.permute.xlu0 %2695
        %2697 = vrot.lane.b32.xlu0 %v2689, 127
        %v2698 = vpop.permute.xlu0 %2697
        %v2702 = vadd.f32 %v2662, %v2694
        %v2703 = vadd.f32 %v2663, %v2696
        %v2704 = vadd.f32 %v2664, %v2698
        %s2705 = sld [smem:[#allocation4 + $0x18]]
        %v2706 = vstv %s2705
        %v2707 = vmul.f32 %v2346, %v2706
        %v2708 = vmul.f32 %v2347, %v2706
        %v2709 = vmul.f32 %v2348, %v2706
        %2713 = vrot.lane.b32.xlu0 %v2707, 126
        %v2714 = vpop.permute.xlu0 %2713
        %2715 = vrot.lane.b32.xlu0 %v2708, 126
        %v2716 = vpop.permute.xlu0 %2715
        %2717 = vrot.lane.b32.xlu0 %v2709, 126
        %v2718 = vpop.permute.xlu0 %2717
        %v2722 = vadd.f32 %v2682, %v2714
        %v2723 = vadd.f32 %v2683, %v2716
        %v2724 = vadd.f32 %v2684, %v2718
        %s2725 = sld [smem:[#allocation4 + $0x19]]
        %v2726 = vstv %s2725
        %v2727 = vmul.f32 %v2346, %v2726
        %v2728 = vmul.f32 %v2347, %v2726
        %v2729 = vmul.f32 %v2348, %v2726
        %2733 = vrot.lane.b32.xlu0 %v2727, 126
        %v2734 = vpop.permute.xlu0 %2733
        %2735 = vrot.lane.b32.xlu0 %v2728, 126
        %v2736 = vpop.permute.xlu0 %2735
        %2737 = vrot.lane.b32.xlu0 %v2729, 126
        %v2738 = vpop.permute.xlu0 %2737
        %v2742 = vadd.f32 %v2702, %v2734
        %v2743 = vadd.f32 %v2703, %v2736
        %v2744 = vadd.f32 %v2704, %v2738
        %s2745 = sld [smem:[#allocation4 + $0x1a]]
        %v2746 = vstv %s2745
        %v2747 = vmul.f32 %v2366, %v2746
        %v2748 = vmul.f32 %v2367, %v2746
        %v2749 = vmul.f32 %v2368, %v2746
        %2753 = vrot.lane.b32.xlu0 %v2747, 126
        %v2754 = vpop.permute.xlu0 %2753
        %2755 = vrot.lane.b32.xlu0 %v2748, 126
        %v2756 = vpop.permute.xlu0 %2755
        %2757 = vrot.lane.b32.xlu0 %v2749, 126
        %v2758 = vpop.permute.xlu0 %2757
        %v2762 = vadd.f32 %v2722, %v2754
        %v2763 = vadd.f32 %v2723, %v2756
        %v2764 = vadd.f32 %v2724, %v2758
        %s2765 = sld [smem:[#allocation4 + $0x1b]]
        %v2766 = vstv %s2765
        %v2767 = vmul.f32 %v2366, %v2766
        %v2768 = vmul.f32 %v2367, %v2766
        %v2769 = vmul.f32 %v2368, %v2766
        %2773 = vrot.lane.b32.xlu0 %v2767, 126
        %v2774 = vpop.permute.xlu0 %2773
        %2775 = vrot.lane.b32.xlu0 %v2768, 126
        %v2776 = vpop.permute.xlu0 %2775
        %2777 = vrot.lane.b32.xlu0 %v2769, 126
        %v2778 = vpop.permute.xlu0 %2777
        %v2782 = vadd.f32 %v2742, %v2774
        %v2783 = vadd.f32 %v2743, %v2776
        %v2784 = vadd.f32 %v2744, %v2778
        %s2785 = sld [smem:[#allocation4 + $0x1c]]
        %v2786 = vstv %s2785
        %v2787 = vmul.f32 %v2386, %v2786
        %v2788 = vmul.f32 %v2387, %v2786
        %v2789 = vmul.f32 %v2388, %v2786
        %2793 = vrot.lane.b32.xlu0 %v2787, 126
        %v2794 = vpop.permute.xlu0 %2793
        %2795 = vrot.lane.b32.xlu0 %v2788, 126
        %v2796 = vpop.permute.xlu0 %2795
        %2797 = vrot.lane.b32.xlu0 %v2789, 126
        %v2798 = vpop.permute.xlu0 %2797
        %v2802 = vadd.f32 %v2762, %v2794
        %v2803 = vadd.f32 %v2763, %v2796
        %v2804 = vadd.f32 %v2764, %v2798
        %s2805 = sld [smem:[#allocation4 + $0x1d]]
        %v2806 = vstv %s2805
        %v2807 = vmul.f32 %v2386, %v2806
        %v2808 = vmul.f32 %v2387, %v2806
        %v2809 = vmul.f32 %v2388, %v2806
        %2813 = vrot.lane.b32.xlu0 %v2807, 126
        %v2814 = vpop.permute.xlu0 %2813
        %2815 = vrot.lane.b32.xlu0 %v2808, 126
        %v2816 = vpop.permute.xlu0 %2815
        %2817 = vrot.lane.b32.xlu0 %v2809, 126
        %v2818 = vpop.permute.xlu0 %2817
        %v2822 = vadd.f32 %v2782, %v2814
        %v2823 = vadd.f32 %v2783, %v2816
        %v2824 = vadd.f32 %v2784, %v2818
        %s2825 = sld [smem:[#allocation4 + $0x1e]]
        %v2826 = vstv %s2825
        %v2827 = vmul.f32 %v2406, %v2826
        %v2828 = vmul.f32 %v2407, %v2826
        %v2829 = vmul.f32 %v2408, %v2826
        %2833 = vrot.lane.b32.xlu0 %v2827, 126
        %v2834 = vpop.permute.xlu0 %2833
        %2835 = vrot.lane.b32.xlu0 %v2828, 126
        %v2836 = vpop.permute.xlu0 %2835
        %2837 = vrot.lane.b32.xlu0 %v2829, 126
        %v2838 = vpop.permute.xlu0 %2837
        %v2842 = vadd.f32 %v2802, %v2834
        %v2843 = vadd.f32 %v2803, %v2836
        %v2844 = vadd.f32 %v2804, %v2838
        %s2845 = sld [smem:[#allocation4 + $0x1f]]
        %v2846 = vstv %s2845
        %v2847 = vmul.f32 %v2406, %v2846
        %v2848 = vmul.f32 %v2407, %v2846
        %v2849 = vmul.f32 %v2408, %v2846
        %2853 = vrot.lane.b32.xlu0 %v2847, 126
        %v2854 = vpop.permute.xlu0 %2853
        %2855 = vrot.lane.b32.xlu0 %v2848, 126
        %v2856 = vpop.permute.xlu0 %2855
        %2857 = vrot.lane.b32.xlu0 %v2849, 126
        %v2858 = vpop.permute.xlu0 %2857
        %v2862 = vadd.f32 %v2822, %v2854
        %v2863 = vadd.f32 %v2823, %v2856
        %v2864 = vadd.f32 %v2824, %v2858
        %s2865 = sld [smem:[#allocation4 + $0x20]]
        %v2866 = vstv %s2865
        %v2867 = vmul.f32 %v2426, %v2866
        %v2868 = vmul.f32 %v2427, %v2866
        %v2869 = vmul.f32 %v2428, %v2866
        %2873 = vrot.lane.b32.xlu0 %v2867, 126
        %v2874 = vpop.permute.xlu0 %2873
        %2875 = vrot.lane.b32.xlu0 %v2868, 126
        %v2876 = vpop.permute.xlu0 %2875
        %2877 = vrot.lane.b32.xlu0 %v2869, 126
        %v2878 = vpop.permute.xlu0 %2877
        %v2882 = vadd.f32 %v2842, %v2874
        %v2883 = vadd.f32 %v2843, %v2876
        %v2884 = vadd.f32 %v2844, %v2878
        %s2885 = sld [smem:[#allocation4 + $0x21]]
        %v2886 = vstv %s2885
        %v2887 = vmul.f32 %v2426, %v2886
        %v2888 = vmul.f32 %v2427, %v2886
        %v2889 = vmul.f32 %v2428, %v2886
        %2893 = vrot.lane.b32.xlu0 %v2887, 126
        %v2894 = vpop.permute.xlu0 %2893
        %2895 = vrot.lane.b32.xlu0 %v2888, 126
        %v2896 = vpop.permute.xlu0 %2895
        %2897 = vrot.lane.b32.xlu0 %v2889, 126
        %v2898 = vpop.permute.xlu0 %2897
        %v2902 = vadd.f32 %v2862, %v2894
        %v2903 = vadd.f32 %v2863, %v2896
        %v2904 = vadd.f32 %v2864, %v2898
        %s2905 = sld [smem:[#allocation4 + $0x22]]
        %v2906 = vstv %s2905
        %v2907 = vmul.f32 %v2446, %v2906
        %v2908 = vmul.f32 %v2447, %v2906
        %v2909 = vmul.f32 %v2448, %v2906
        %2913 = vrot.lane.b32.xlu0 %v2907, 126
        %v2914 = vpop.permute.xlu0 %2913
        %2915 = vrot.lane.b32.xlu0 %v2908, 126
        %v2916 = vpop.permute.xlu0 %2915
        %2917 = vrot.lane.b32.xlu0 %v2909, 126
        %v2918 = vpop.permute.xlu0 %2917
        %v2922 = vadd.f32 %v2882, %v2914
        %v2923 = vadd.f32 %v2883, %v2916
        %v2924 = vadd.f32 %v2884, %v2918
        %s2925 = sld [smem:[#allocation4 + $0x23]]
        %v2926 = vstv %s2925
        %v2927 = vmul.f32 %v2446, %v2926
        %v2928 = vmul.f32 %v2447, %v2926
        %v2929 = vmul.f32 %v2448, %v2926
        %2933 = vrot.lane.b32.xlu0 %v2927, 126
        %v2934 = vpop.permute.xlu0 %2933
        %2935 = vrot.lane.b32.xlu0 %v2928, 126
        %v2936 = vpop.permute.xlu0 %2935
        %2937 = vrot.lane.b32.xlu0 %v2929, 126
        %v2938 = vpop.permute.xlu0 %2937
        %v2942 = vadd.f32 %v2902, %v2934
        %v2943 = vadd.f32 %v2903, %v2936
        %v2944 = vadd.f32 %v2904, %v2938
        %v2945 = vld [vmem:[#allocation2 + $0x1] sm:$0xff]
        %v2946 = vld [vmem:[#allocation2 + $0x9] sm:$0xff]
        %v2947 = vld [vmem:[#allocation2 + $0x11] sm:$0x3]
        %s2948 = sld [smem:[#allocation4 + $0x24]]
        %v2949 = vstv %s2948
        %v2950 = vmul.f32 %v2945, %v2949
        %v2951 = vmul.f32 %v2946, %v2949
        %v2952 = vmul.f32 %v2947, %v2949
        %v2953 = vadd.f32 %v2922, %v2950
        %v2954 = vadd.f32 %v2923, %v2951
        %v2955 = vadd.f32 %v2924, %v2952
        %s2956 = sld [smem:[#allocation4 + $0x25]]
        %v2957 = vstv %s2956
        %v2958 = vmul.f32 %v2945, %v2957
        %v2959 = vmul.f32 %v2946, %v2957
        %v2960 = vmul.f32 %v2947, %v2957
        %v2961 = vadd.f32 %v2942, %v2958
        %v2962 = vadd.f32 %v2943, %v2959
        %v2963 = vadd.f32 %v2944, %v2960
        %v2964 = vld [vmem:[%s2365 + $0x1] sm:$0xff]
        %v2965 = vld [vmem:[%s2365 + $0x9] sm:$0xff]
        %v2966 = vld [vmem:[%s2365 + $0x11] sm:$0x3]
        %s2967 = sld [smem:[#allocation4 + $0x26]]
        %v2968 = vstv %s2967
        %v2969 = vmul.f32 %v2964, %v2968
        %v2970 = vmul.f32 %v2965, %v2968
        %v2971 = vmul.f32 %v2966, %v2968
        %v2972 = vadd.f32 %v2953, %v2969
        %v2973 = vadd.f32 %v2954, %v2970
        %v2974 = vadd.f32 %v2955, %v2971
        %s2975 = sld [smem:[#allocation4 + $0x27]]
        %v2976 = vstv %s2975
        %v2977 = vmul.f32 %v2964, %v2976
        %v2978 = vmul.f32 %v2965, %v2976
        %v2979 = vmul.f32 %v2966, %v2976
        %v2980 = vadd.f32 %v2961, %v2977
        %v2981 = vadd.f32 %v2962, %v2978
        %v2982 = vadd.f32 %v2963, %v2979
        %v2983 = vld [vmem:[%s2385 + $0x1] sm:$0xff]
        %v2984 = vld [vmem:[%s2385 + $0x9] sm:$0xff]
        %v2985 = vld [vmem:[%s2385 + $0x11] sm:$0x3]
        %s2986 = sld [smem:[#allocation4 + $0x28]]
        %v2987 = vstv %s2986
        %v2988 = vmul.f32 %v2983, %v2987
        %v2989 = vmul.f32 %v2984, %v2987
        %v2990 = vmul.f32 %v2985, %v2987
        %v2991 = vadd.f32 %v2972, %v2988
        %v2992 = vadd.f32 %v2973, %v2989
        %v2993 = vadd.f32 %v2974, %v2990
        %s2994 = sld [smem:[#allocation4 + $0x29]]
        %v2995 = vstv %s2994
        %v2996 = vmul.f32 %v2983, %v2995
        %v2997 = vmul.f32 %v2984, %v2995
        %v2998 = vmul.f32 %v2985, %v2995
        %v2999 = vadd.f32 %v2980, %v2996
        %v3000 = vadd.f32 %v2981, %v2997
        %v3001 = vadd.f32 %v2982, %v2998
        %v3002 = vld [vmem:[%s2405 + $0x1] sm:$0xff]
        %v3003 = vld [vmem:[%s2405 + $0x9] sm:$0xff]
        %v3004 = vld [vmem:[%s2405 + $0x11] sm:$0x3]
        %s3005 = sld [smem:[#allocation4 + $0x2a]]
        %v3006 = vstv %s3005
        %v3007 = vmul.f32 %v3002, %v3006
        %v3008 = vmul.f32 %v3003, %v3006
        %v3009 = vmul.f32 %v3004, %v3006
        %v3010 = vadd.f32 %v2991, %v3007
        %v3011 = vadd.f32 %v2992, %v3008
        %v3012 = vadd.f32 %v2993, %v3009
        %s3013 = sld [smem:[#allocation4 + $0x2b]]
        %v3014 = vstv %s3013
        %v3015 = vmul.f32 %v3002, %v3014
        %v3016 = vmul.f32 %v3003, %v3014
        %v3017 = vmul.f32 %v3004, %v3014
        %v3018 = vadd.f32 %v2999, %v3015
        %v3019 = vadd.f32 %v3000, %v3016
        %v3020 = vadd.f32 %v3001, %v3017
        %v3021 = vld [vmem:[%s2425 + $0x1] sm:$0xff]
        %v3022 = vld [vmem:[%s2425 + $0x9] sm:$0xff]
        %v3023 = vld [vmem:[%s2425 + $0x11] sm:$0x3]
        %s3024 = sld [smem:[#allocation4 + $0x2c]]
        %v3025 = vstv %s3024
        %v3026 = vmul.f32 %v3021, %v3025
        %v3027 = vmul.f32 %v3022, %v3025
        %v3028 = vmul.f32 %v3023, %v3025
        %v3029 = vadd.f32 %v3010, %v3026
        %v3030 = vadd.f32 %v3011, %v3027
        %v3031 = vadd.f32 %v3012, %v3028
        %s3032 = sld [smem:[#allocation4 + $0x2d]]
        %v3033 = vstv %s3032
        %v3034 = vmul.f32 %v3021, %v3033
        %v3035 = vmul.f32 %v3022, %v3033
        %v3036 = vmul.f32 %v3023, %v3033
        %v3037 = vadd.f32 %v3018, %v3034
        %v3038 = vadd.f32 %v3019, %v3035
        %v3039 = vadd.f32 %v3020, %v3036
        %v3040 = vld [vmem:[%s2445 + $0x1] sm:$0xff]
        %v3041 = vld [vmem:[%s2445 + $0x9] sm:$0xff]
        %v3042 = vld [vmem:[%s2445 + $0x11] sm:$0x3]
        %s3043 = sld [smem:[#allocation4 + $0x2e]]
        %v3044 = vstv %s3043
        %v3045 = vmul.f32 %v3040, %v3044
        %v3046 = vmul.f32 %v3041, %v3044
        %v3047 = vmul.f32 %v3042, %v3044
        %v3048 = vadd.f32 %v3029, %v3045
        %v3049 = vadd.f32 %v3030, %v3046
        %v3050 = vadd.f32 %v3031, %v3047
        %s3051 = sld [smem:[#allocation4 + $0x2f]]
        %v3052 = vstv %s3051
        %v3053 = vmul.f32 %v3040, %v3052
        %v3054 = vmul.f32 %v3041, %v3052
        %v3055 = vmul.f32 %v3042, %v3052
        %v3056 = vadd.f32 %v3037, %v3053
        %v3057 = vadd.f32 %v3038, %v3054
        %v3058 = vadd.f32 %v3039, %v3055
        %s3059 = sld [smem:[#allocation4 + $0x30]]
        %v3060 = vstv %s3059
        %v3061 = vmul.f32 %v2945, %v3060
        %v3062 = vmul.f32 %v2946, %v3060
        %v3063 = vmul.f32 %v2947, %v3060
        %3067 = vrot.lane.b32.xlu0 %v3061, 127
        %v3068 = vpop.permute.xlu0 %3067
        %3069 = vrot.lane.b32.xlu0 %v3062, 127
        %v3070 = vpop.permute.xlu0 %3069
        %3071 = vrot.lane.b32.xlu0 %v3063, 127
        %v3072 = vpop.permute.xlu0 %3071
        %v3076 = vadd.f32 %v3048, %v3068
        %v3077 = vadd.f32 %v3049, %v3070
        %v3078 = vadd.f32 %v3050, %v3072
        %s3079 = sld [smem:[#allocation4 + $0x31]]
        %v3080 = vstv %s3079
        %v3081 = vmul.f32 %v2945, %v3080
        %v3082 = vmul.f32 %v2946, %v3080
        %v3083 = vmul.f32 %v2947, %v3080
        %3087 = vrot.lane.b32.xlu0 %v3081, 127
        %v3088 = vpop.permute.xlu0 %3087
        %3089 = vrot.lane.b32.xlu0 %v3082, 127
        %v3090 = vpop.permute.xlu0 %3089
        %3091 = vrot.lane.b32.xlu0 %v3083, 127
        %v3092 = vpop.permute.xlu0 %3091
        %v3096 = vadd.f32 %v3056, %v3088
        %v3097 = vadd.f32 %v3057, %v3090
        %v3098 = vadd.f32 %v3058, %v3092
        %s3099 = sld [smem:[#allocation4 + $0x32]]
        %v3100 = vstv %s3099
        %v3101 = vmul.f32 %v2964, %v3100
        %v3102 = vmul.f32 %v2965, %v3100
        %v3103 = vmul.f32 %v2966, %v3100
        %3107 = vrot.lane.b32.xlu0 %v3101, 127
        %v3108 = vpop.permute.xlu0 %3107
        %3109 = vrot.lane.b32.xlu0 %v3102, 127
        %v3110 = vpop.permute.xlu0 %3109
        %3111 = vrot.lane.b32.xlu0 %v3103, 127
        %v3112 = vpop.permute.xlu0 %3111
        %v3116 = vadd.f32 %v3076, %v3108
        %v3117 = vadd.f32 %v3077, %v3110
        %v3118 = vadd.f32 %v3078, %v3112
        %s3119 = sld [smem:[#allocation4 + $0x33]]
        %v3120 = vstv %s3119
        %v3121 = vmul.f32 %v2964, %v3120
        %v3122 = vmul.f32 %v2965, %v3120
        %v3123 = vmul.f32 %v2966, %v3120
        %3127 = vrot.lane.b32.xlu0 %v3121, 127
        %v3128 = vpop.permute.xlu0 %3127
        %3129 = vrot.lane.b32.xlu0 %v3122, 127
        %v3130 = vpop.permute.xlu0 %3129
        %3131 = vrot.lane.b32.xlu0 %v3123, 127
        %v3132 = vpop.permute.xlu0 %3131
        %v3136 = vadd.f32 %v3096, %v3128
        %v3137 = vadd.f32 %v3097, %v3130
        %v3138 = vadd.f32 %v3098, %v3132
        %s3139 = sld [smem:[#allocation4 + $0x34]]
        %v3140 = vstv %s3139
        %v3141 = vmul.f32 %v2983, %v3140
        %v3142 = vmul.f32 %v2984, %v3140
        %v3143 = vmul.f32 %v2985, %v3140
        %3147 = vrot.lane.b32.xlu0 %v3141, 127
        %v3148 = vpop.permute.xlu0 %3147
        %3149 = vrot.lane.b32.xlu0 %v3142, 127
        %v3150 = vpop.permute.xlu0 %3149
        %3151 = vrot.lane.b32.xlu0 %v3143, 127
        %v3152 = vpop.permute.xlu0 %3151
        %v3156 = vadd.f32 %v3116, %v3148
        %v3157 = vadd.f32 %v3117, %v3150
        %v3158 = vadd.f32 %v3118, %v3152
        %s3159 = sld [smem:[#allocation4 + $0x35]]
        %v3160 = vstv %s3159
        %v3161 = vmul.f32 %v2983, %v3160
        %v3162 = vmul.f32 %v2984, %v3160
        %v3163 = vmul.f32 %v2985, %v3160
        %3167 = vrot.lane.b32.xlu0 %v3161, 127
        %v3168 = vpop.permute.xlu0 %3167
        %3169 = vrot.lane.b32.xlu0 %v3162, 127
        %v3170 = vpop.permute.xlu0 %3169
        %3171 = vrot.lane.b32.xlu0 %v3163, 127
        %v3172 = vpop.permute.xlu0 %3171
        %v3176 = vadd.f32 %v3136, %v3168
        %v3177 = vadd.f32 %v3137, %v3170
        %v3178 = vadd.f32 %v3138, %v3172
        %s3179 = sld [smem:[#allocation4 + $0x36]]
        %v3180 = vstv %s3179
        %v3181 = vmul.f32 %v3002, %v3180
        %v3182 = vmul.f32 %v3003, %v3180
        %v3183 = vmul.f32 %v3004, %v3180
        %3187 = vrot.lane.b32.xlu0 %v3181, 127
        %v3188 = vpop.permute.xlu0 %3187
        %3189 = vrot.lane.b32.xlu0 %v3182, 127
        %v3190 = vpop.permute.xlu0 %3189
        %3191 = vrot.lane.b32.xlu0 %v3183, 127
        %v3192 = vpop.permute.xlu0 %3191
        %v3196 = vadd.f32 %v3156, %v3188
        %v3197 = vadd.f32 %v3157, %v3190
        %v3198 = vadd.f32 %v3158, %v3192
        %s3199 = sld [smem:[#allocation4 + $0x37]]
        %v3200 = vstv %s3199
        %v3201 = vmul.f32 %v3002, %v3200
        %v3202 = vmul.f32 %v3003, %v3200
        %v3203 = vmul.f32 %v3004, %v3200
        %3207 = vrot.lane.b32.xlu0 %v3201, 127
        %v3208 = vpop.permute.xlu0 %3207
        %3209 = vrot.lane.b32.xlu0 %v3202, 127
        %v3210 = vpop.permute.xlu0 %3209
        %3211 = vrot.lane.b32.xlu0 %v3203, 127
        %v3212 = vpop.permute.xlu0 %3211
        %v3216 = vadd.f32 %v3176, %v3208
        %v3217 = vadd.f32 %v3177, %v3210
        %v3218 = vadd.f32 %v3178, %v3212
        %s3219 = sld [smem:[#allocation4 + $0x38]]
        %v3220 = vstv %s3219
        %v3221 = vmul.f32 %v3021, %v3220
        %v3222 = vmul.f32 %v3022, %v3220
        %v3223 = vmul.f32 %v3023, %v3220
        %3227 = vrot.lane.b32.xlu0 %v3221, 127
        %v3228 = vpop.permute.xlu0 %3227
        %3229 = vrot.lane.b32.xlu0 %v3222, 127
        %v3230 = vpop.permute.xlu0 %3229
        %3231 = vrot.lane.b32.xlu0 %v3223, 127
        %v3232 = vpop.permute.xlu0 %3231
        %v3236 = vadd.f32 %v3196, %v3228
        %v3237 = vadd.f32 %v3197, %v3230
        %v3238 = vadd.f32 %v3198, %v3232
        %s3239 = sld [smem:[#allocation4 + $0x39]]
        %v3240 = vstv %s3239
        %v3241 = vmul.f32 %v3021, %v3240
        %v3242 = vmul.f32 %v3022, %v3240
        %v3243 = vmul.f32 %v3023, %v3240
        %3247 = vrot.lane.b32.xlu0 %v3241, 127
        %v3248 = vpop.permute.xlu0 %3247
        %3249 = vrot.lane.b32.xlu0 %v3242, 127
        %v3250 = vpop.permute.xlu0 %3249
        %3251 = vrot.lane.b32.xlu0 %v3243, 127
        %v3252 = vpop.permute.xlu0 %3251
        %v3256 = vadd.f32 %v3216, %v3248
        %v3257 = vadd.f32 %v3217, %v3250
        %v3258 = vadd.f32 %v3218, %v3252
        %s3259 = sld [smem:[#allocation4 + $0x3a]]
        %v3260 = vstv %s3259
        %v3261 = vmul.f32 %v3040, %v3260
        %v3262 = vmul.f32 %v3041, %v3260
        %v3263 = vmul.f32 %v3042, %v3260
        %3267 = vrot.lane.b32.xlu0 %v3261, 127
        %v3268 = vpop.permute.xlu0 %3267
        %3269 = vrot.lane.b32.xlu0 %v3262, 127
        %v3270 = vpop.permute.xlu0 %3269
        %3271 = vrot.lane.b32.xlu0 %v3263, 127
        %v3272 = vpop.permute.xlu0 %3271
        %v3276 = vadd.f32 %v3236, %v3268
        %v3277 = vadd.f32 %v3237, %v3270
        %v3278 = vadd.f32 %v3238, %v3272
        %s3279 = sld [smem:[#allocation4 + $0x3b]]
        %v3280 = vstv %s3279
        %v3281 = vmul.f32 %v3040, %v3280
        %v3282 = vmul.f32 %v3041, %v3280
        %v3283 = vmul.f32 %v3042, %v3280
        %3287 = vrot.lane.b32.xlu0 %v3281, 127
        %v3288 = vpop.permute.xlu0 %3287
        %3289 = vrot.lane.b32.xlu0 %v3282, 127
        %v3290 = vpop.permute.xlu0 %3289
        %3291 = vrot.lane.b32.xlu0 %v3283, 127
        %v3292 = vpop.permute.xlu0 %3291
        %v3296 = vadd.f32 %v3256, %v3288
        %v3297 = vadd.f32 %v3257, %v3290
        %v3298 = vadd.f32 %v3258, %v3292
        %s3299 = sld [smem:[#allocation4 + $0x3c]]
        %v3300 = vstv %s3299
        %v3301 = vmul.f32 %v2945, %v3300
        %v3302 = vmul.f32 %v2946, %v3300
        %v3303 = vmul.f32 %v2947, %v3300
        %3307 = vrot.lane.b32.xlu0 %v3301, 126
        %v3308 = vpop.permute.xlu0 %3307
        %3309 = vrot.lane.b32.xlu0 %v3302, 126
        %v3310 = vpop.permute.xlu0 %3309
        %3311 = vrot.lane.b32.xlu0 %v3303, 126
        %v3312 = vpop.permute.xlu0 %3311
        %v3316 = vadd.f32 %v3276, %v3308
        %v3317 = vadd.f32 %v3277, %v3310
        %v3318 = vadd.f32 %v3278, %v3312
        %s3319 = sld [smem:[#allocation4 + $0x3d]]
        %v3320 = vstv %s3319
        %v3321 = vmul.f32 %v2945, %v3320
        %v3322 = vmul.f32 %v2946, %v3320
        %v3323 = vmul.f32 %v2947, %v3320
        %3327 = vrot.lane.b32.xlu0 %v3321, 126
        %v3328 = vpop.permute.xlu0 %3327
        %3329 = vrot.lane.b32.xlu0 %v3322, 126
        %v3330 = vpop.permute.xlu0 %3329
        %3331 = vrot.lane.b32.xlu0 %v3323, 126
        %v3332 = vpop.permute.xlu0 %3331
        %v3336 = vadd.f32 %v3296, %v3328
        %v3337 = vadd.f32 %v3297, %v3330
        %v3338 = vadd.f32 %v3298, %v3332
        %s3339 = sld [smem:[#allocation4 + $0x3e]]
        %v3340 = vstv %s3339
        %v3341 = vmul.f32 %v2964, %v3340
        %v3342 = vmul.f32 %v2965, %v3340
        %v3343 = vmul.f32 %v2966, %v3340
        %3347 = vrot.lane.b32.xlu0 %v3341, 126
        %v3348 = vpop.permute.xlu0 %3347
        %3349 = vrot.lane.b32.xlu0 %v3342, 126
        %v3350 = vpop.permute.xlu0 %3349
        %3351 = vrot.lane.b32.xlu0 %v3343, 126
        %v3352 = vpop.permute.xlu0 %3351
        %v3356 = vadd.f32 %v3316, %v3348
        %v3357 = vadd.f32 %v3317, %v3350
        %v3358 = vadd.f32 %v3318, %v3352
        %s3359 = sld [smem:[#allocation4 + $0x3f]]
        %v3360 = vstv %s3359
        %v3361 = vmul.f32 %v2964, %v3360
        %v3362 = vmul.f32 %v2965, %v3360
        %v3363 = vmul.f32 %v2966, %v3360
        %3367 = vrot.lane.b32.xlu0 %v3361, 126
        %v3368 = vpop.permute.xlu0 %3367
        %3369 = vrot.lane.b32.xlu0 %v3362, 126
        %v3370 = vpop.permute.xlu0 %3369
        %3371 = vrot.lane.b32.xlu0 %v3363, 126
        %v3372 = vpop.permute.xlu0 %3371
        %v3376 = vadd.f32 %v3336, %v3368
        %v3377 = vadd.f32 %v3337, %v3370
        %v3378 = vadd.f32 %v3338, %v3372
        %s3379 = sld [smem:[#allocation4 + $0x40]]
        %v3380 = vstv %s3379
        %v3381 = vmul.f32 %v2983, %v3380
        %v3382 = vmul.f32 %v2984, %v3380
        %v3383 = vmul.f32 %v2985, %v3380
        %3387 = vrot.lane.b32.xlu0 %v3381, 126
        %v3388 = vpop.permute.xlu0 %3387
        %3389 = vrot.lane.b32.xlu0 %v3382, 126
        %v3390 = vpop.permute.xlu0 %3389
        %3391 = vrot.lane.b32.xlu0 %v3383, 126
        %v3392 = vpop.permute.xlu0 %3391
        %v3396 = vadd.f32 %v3356, %v3388
        %v3397 = vadd.f32 %v3357, %v3390
        %v3398 = vadd.f32 %v3358, %v3392
        %s3399 = sld [smem:[#allocation4 + $0x41]]
        %v3400 = vstv %s3399
        %v3401 = vmul.f32 %v2983, %v3400
        %v3402 = vmul.f32 %v2984, %v3400
        %v3403 = vmul.f32 %v2985, %v3400
        %3407 = vrot.lane.b32.xlu0 %v3401, 126
        %v3408 = vpop.permute.xlu0 %3407
        %3409 = vrot.lane.b32.xlu0 %v3402, 126
        %v3410 = vpop.permute.xlu0 %3409
        %3411 = vrot.lane.b32.xlu0 %v3403, 126
        %v3412 = vpop.permute.xlu0 %3411
        %v3416 = vadd.f32 %v3376, %v3408
        %v3417 = vadd.f32 %v3377, %v3410
        %v3418 = vadd.f32 %v3378, %v3412
        %s3419 = sld [smem:[#allocation4 + $0x42]]
        %v3420 = vstv %s3419
        %v3421 = vmul.f32 %v3002, %v3420
        %v3422 = vmul.f32 %v3003, %v3420
        %v3423 = vmul.f32 %v3004, %v3420
        %3427 = vrot.lane.b32.xlu0 %v3421, 126
        %v3428 = vpop.permute.xlu0 %3427
        %3429 = vrot.lane.b32.xlu0 %v3422, 126
        %v3430 = vpop.permute.xlu0 %3429
        %3431 = vrot.lane.b32.xlu0 %v3423, 126
        %v3432 = vpop.permute.xlu0 %3431
        %v3436 = vadd.f32 %v3396, %v3428
        %v3437 = vadd.f32 %v3397, %v3430
        %v3438 = vadd.f32 %v3398, %v3432
        %s3439 = sld [smem:[#allocation4 + $0x43]]
        %v3440 = vstv %s3439
        %v3441 = vmul.f32 %v3002, %v3440
        %v3442 = vmul.f32 %v3003, %v3440
        %v3443 = vmul.f32 %v3004, %v3440
        %3447 = vrot.lane.b32.xlu0 %v3441, 126
        %v3448 = vpop.permute.xlu0 %3447
        %3449 = vrot.lane.b32.xlu0 %v3442, 126
        %v3450 = vpop.permute.xlu0 %3449
        %3451 = vrot.lane.b32.xlu0 %v3443, 126
        %v3452 = vpop.permute.xlu0 %3451
        %v3456 = vadd.f32 %v3416, %v3448
        %v3457 = vadd.f32 %v3417, %v3450
        %v3458 = vadd.f32 %v3418, %v3452
        %s3459 = sld [smem:[#allocation4 + $0x44]]
        %v3460 = vstv %s3459
        %v3461 = vmul.f32 %v3021, %v3460
        %v3462 = vmul.f32 %v3022, %v3460
        %v3463 = vmul.f32 %v3023, %v3460
        %3467 = vrot.lane.b32.xlu0 %v3461, 126
        %v3468 = vpop.permute.xlu0 %3467
        %3469 = vrot.lane.b32.xlu0 %v3462, 126
        %v3470 = vpop.permute.xlu0 %3469
        %3471 = vrot.lane.b32.xlu0 %v3463, 126
        %v3472 = vpop.permute.xlu0 %3471
        %v3476 = vadd.f32 %v3436, %v3468
        %v3477 = vadd.f32 %v3437, %v3470
        %v3478 = vadd.f32 %v3438, %v3472
        %s3479 = sld [smem:[#allocation4 + $0x45]]
        %v3480 = vstv %s3479
        %v3481 = vmul.f32 %v3021, %v3480
        %v3482 = vmul.f32 %v3022, %v3480
        %v3483 = vmul.f32 %v3023, %v3480
        %3487 = vrot.lane.b32.xlu0 %v3481, 126
        %v3488 = vpop.permute.xlu0 %3487
        %3489 = vrot.lane.b32.xlu0 %v3482, 126
        %v3490 = vpop.permute.xlu0 %3489
        %3491 = vrot.lane.b32.xlu0 %v3483, 126
        %v3492 = vpop.permute.xlu0 %3491
        %v3496 = vadd.f32 %v3456, %v3488
        %v3497 = vadd.f32 %v3457, %v3490
        %v3498 = vadd.f32 %v3458, %v3492
        %s3499 = sld [smem:[#allocation4 + $0x46]]
        %v3500 = vstv %s3499
        %v3501 = vmul.f32 %v3040, %v3500
        %v3502 = vmul.f32 %v3041, %v3500
        %v3503 = vmul.f32 %v3042, %v3500
        %3507 = vrot.lane.b32.xlu0 %v3501, 126
        %v3508 = vpop.permute.xlu0 %3507
        %3509 = vrot.lane.b32.xlu0 %v3502, 126
        %v3510 = vpop.permute.xlu0 %3509
        %3511 = vrot.lane.b32.xlu0 %v3503, 126
        %v3512 = vpop.permute.xlu0 %3511
        %v3516 = vadd.f32 %v3476, %v3508
        %v3517 = vadd.f32 %v3477, %v3510
        %v3518 = vadd.f32 %v3478, %v3512
        %s3519 = sld [smem:[#allocation4 + $0x47]]
        %v3520 = vstv %s3519
        %v3521 = vmul.f32 %v3040, %v3520
        %v3522 = vmul.f32 %v3041, %v3520
        %v3523 = vmul.f32 %v3042, %v3520
        %3527 = vrot.lane.b32.xlu0 %v3521, 126
        %v3528 = vpop.permute.xlu0 %3527
        %3529 = vrot.lane.b32.xlu0 %v3522, 126
        %v3530 = vpop.permute.xlu0 %3529
        %3531 = vrot.lane.b32.xlu0 %v3523, 126
        %v3532 = vpop.permute.xlu0 %3531
        %v3536 = vadd.f32 %v3496, %v3528
        %v3537 = vadd.f32 %v3497, %v3530
        %v3538 = vadd.f32 %v3498, %v3532
        %v3539 = vld [vmem:[#allocation2 + $0x2] sm:$0xff]
        %v3540 = vld [vmem:[#allocation2 + $0xa] sm:$0xff]
        %v3541 = vld [vmem:[#allocation2 + $0x12] sm:$0x3]
        %s3542 = sld [smem:[#allocation4 + $0x48]]
        %v3543 = vstv %s3542
        %v3544 = vmul.f32 %v3539, %v3543
        %v3545 = vmul.f32 %v3540, %v3543
        %v3546 = vmul.f32 %v3541, %v3543
        %v3547 = vadd.f32 %v3516, %v3544
        %v3548 = vadd.f32 %v3517, %v3545
        %v3549 = vadd.f32 %v3518, %v3546
        %s3550 = sld [smem:[#allocation4 + $0x49]]
        %v3551 = vstv %s3550
        %v3552 = vmul.f32 %v3539, %v3551
        %v3553 = vmul.f32 %v3540, %v3551
        %v3554 = vmul.f32 %v3541, %v3551
        %v3555 = vadd.f32 %v3536, %v3552
        %v3556 = vadd.f32 %v3537, %v3553
        %v3557 = vadd.f32 %v3538, %v3554
        %v3558 = vld [vmem:[%s2365 + $0x2] sm:$0xff]
        %v3559 = vld [vmem:[%s2365 + $0xa] sm:$0xff]
        %v3560 = vld [vmem:[%s2365 + $0x12] sm:$0x3]
        %s3561 = sld [smem:[#allocation4 + $0x4a]]
        %v3562 = vstv %s3561
        %v3563 = vmul.f32 %v3558, %v3562
        %v3564 = vmul.f32 %v3559, %v3562
        %v3565 = vmul.f32 %v3560, %v3562
        %v3566 = vadd.f32 %v3547, %v3563
        %v3567 = vadd.f32 %v3548, %v3564
        %v3568 = vadd.f32 %v3549, %v3565
        %s3569 = sld [smem:[#allocation4 + $0x4b]]
        %v3570 = vstv %s3569
        %v3571 = vmul.f32 %v3558, %v3570
        %v3572 = vmul.f32 %v3559, %v3570
        %v3573 = vmul.f32 %v3560, %v3570
        %v3574 = vadd.f32 %v3555, %v3571
        %v3575 = vadd.f32 %v3556, %v3572
        %v3576 = vadd.f32 %v3557, %v3573
        %v3577 = vld [vmem:[%s2385 + $0x2] sm:$0xff]
        %v3578 = vld [vmem:[%s2385 + $0xa] sm:$0xff]
        %v3579 = vld [vmem:[%s2385 + $0x12] sm:$0x3]
        %s3580 = sld [smem:[#allocation4 + $0x4c]]
        %v3581 = vstv %s3580
        %v3582 = vmul.f32 %v3577, %v3581
        %v3583 = vmul.f32 %v3578, %v3581
        %v3584 = vmul.f32 %v3579, %v3581
        %v3585 = vadd.f32 %v3566, %v3582
        %v3586 = vadd.f32 %v3567, %v3583
        %v3587 = vadd.f32 %v3568, %v3584
        %s3588 = sld [smem:[#allocation4 + $0x4d]]
        %v3589 = vstv %s3588
        %v3590 = vmul.f32 %v3577, %v3589
        %v3591 = vmul.f32 %v3578, %v3589
        %v3592 = vmul.f32 %v3579, %v3589
        %v3593 = vadd.f32 %v3574, %v3590
        %v3594 = vadd.f32 %v3575, %v3591
        %v3595 = vadd.f32 %v3576, %v3592
        %v3596 = vld [vmem:[%s2405 + $0x2] sm:$0xff]
        %v3597 = vld [vmem:[%s2405 + $0xa] sm:$0xff]
        %v3598 = vld [vmem:[%s2405 + $0x12] sm:$0x3]
        %s3599 = sld [smem:[#allocation4 + $0x4e]]
        %v3600 = vstv %s3599
        %v3601 = vmul.f32 %v3596, %v3600
        %v3602 = vmul.f32 %v3597, %v3600
        %v3603 = vmul.f32 %v3598, %v3600
        %v3604 = vadd.f32 %v3585, %v3601
        %v3605 = vadd.f32 %v3586, %v3602
        %v3606 = vadd.f32 %v3587, %v3603
        %s3607 = sld [smem:[#allocation4 + $0x4f]]
        %v3608 = vstv %s3607
        %v3609 = vmul.f32 %v3596, %v3608
        %v3610 = vmul.f32 %v3597, %v3608
        %v3611 = vmul.f32 %v3598, %v3608
        %v3612 = vadd.f32 %v3593, %v3609
        %v3613 = vadd.f32 %v3594, %v3610
        %v3614 = vadd.f32 %v3595, %v3611
        %v3615 = vld [vmem:[%s2425 + $0x2] sm:$0xff]
        %v3616 = vld [vmem:[%s2425 + $0xa] sm:$0xff]
        %v3617 = vld [vmem:[%s2425 + $0x12] sm:$0x3]
        %s3618 = sld [smem:[#allocation4 + $0x50]]
        %v3619 = vstv %s3618
        %v3620 = vmul.f32 %v3615, %v3619
        %v3621 = vmul.f32 %v3616, %v3619
        %v3622 = vmul.f32 %v3617, %v3619
        %v3623 = vadd.f32 %v3604, %v3620
        %v3624 = vadd.f32 %v3605, %v3621
        %v3625 = vadd.f32 %v3606, %v3622
        %s3626 = sld [smem:[#allocation4 + $0x51]]
        %v3627 = vstv %s3626
        %v3628 = vmul.f32 %v3615, %v3627
        %v3629 = vmul.f32 %v3616, %v3627
        %v3630 = vmul.f32 %v3617, %v3627
        %v3631 = vadd.f32 %v3612, %v3628
        %v3632 = vadd.f32 %v3613, %v3629
        %v3633 = vadd.f32 %v3614, %v3630
        %v3634 = vld [vmem:[%s2445 + $0x2] sm:$0xff]
        %v3635 = vld [vmem:[%s2445 + $0xa] sm:$0xff]
        %v3636 = vld [vmem:[%s2445 + $0x12] sm:$0x3]
        %s3637 = sld [smem:[#allocation4 + $0x52]]
        %v3638 = vstv %s3637
        %v3639 = vmul.f32 %v3634, %v3638
        %v3640 = vmul.f32 %v3635, %v3638
        %v3641 = vmul.f32 %v3636, %v3638
        %v3642 = vadd.f32 %v3623, %v3639
        %v3643 = vadd.f32 %v3624, %v3640
        %v3644 = vadd.f32 %v3625, %v3641
        %s3645 = sld [smem:[#allocation4 + $0x53]]
        %v3646 = vstv %s3645
        %v3647 = vmul.f32 %v3634, %v3646
        %v3648 = vmul.f32 %v3635, %v3646
        %v3649 = vmul.f32 %v3636, %v3646
        %v3650 = vadd.f32 %v3631, %v3647
        %v3651 = vadd.f32 %v3632, %v3648
        %v3652 = vadd.f32 %v3633, %v3649
        %s3653 = sld [smem:[#allocation4 + $0x54]]
        %v3654 = vstv %s3653
        %v3655 = vmul.f32 %v3539, %v3654
        %v3656 = vmul.f32 %v3540, %v3654
        %v3657 = vmul.f32 %v3541, %v3654
        %3661 = vrot.lane.b32.xlu0 %v3655, 127
        %v3662 = vpop.permute.xlu0 %3661
        %3663 = vrot.lane.b32.xlu0 %v3656, 127
        %v3664 = vpop.permute.xlu0 %3663
        %3665 = vrot.lane.b32.xlu0 %v3657, 127
        %v3666 = vpop.permute.xlu0 %3665
        %v3670 = vadd.f32 %v3642, %v3662
        %v3671 = vadd.f32 %v3643, %v3664
        %v3672 = vadd.f32 %v3644, %v3666
        %s3673 = sld [smem:[#allocation4 + $0x55]]
        %v3674 = vstv %s3673
        %v3675 = vmul.f32 %v3539, %v3674
        %v3676 = vmul.f32 %v3540, %v3674
        %v3677 = vmul.f32 %v3541, %v3674
        %3681 = vrot.lane.b32.xlu0 %v3675, 127
        %v3682 = vpop.permute.xlu0 %3681
        %3683 = vrot.lane.b32.xlu0 %v3676, 127
        %v3684 = vpop.permute.xlu0 %3683
        %3685 = vrot.lane.b32.xlu0 %v3677, 127
        %v3686 = vpop.permute.xlu0 %3685
        %v3690 = vadd.f32 %v3650, %v3682
        %v3691 = vadd.f32 %v3651, %v3684
        %v3692 = vadd.f32 %v3652, %v3686
        %s3693 = sld [smem:[#allocation4 + $0x56]]
        %v3694 = vstv %s3693
        %v3695 = vmul.f32 %v3558, %v3694
        %v3696 = vmul.f32 %v3559, %v3694
        %v3697 = vmul.f32 %v3560, %v3694
        %3701 = vrot.lane.b32.xlu0 %v3695, 127
        %v3702 = vpop.permute.xlu0 %3701
        %3703 = vrot.lane.b32.xlu0 %v3696, 127
        %v3704 = vpop.permute.xlu0 %3703
        %3705 = vrot.lane.b32.xlu0 %v3697, 127
        %v3706 = vpop.permute.xlu0 %3705
        %v3710 = vadd.f32 %v3670, %v3702
        %v3711 = vadd.f32 %v3671, %v3704
        %v3712 = vadd.f32 %v3672, %v3706
        %s3713 = sld [smem:[#allocation4 + $0x57]]
        %v3714 = vstv %s3713
        %v3715 = vmul.f32 %v3558, %v3714
        %v3716 = vmul.f32 %v3559, %v3714
        %v3717 = vmul.f32 %v3560, %v3714
        %3721 = vrot.lane.b32.xlu0 %v3715, 127
        %v3722 = vpop.permute.xlu0 %3721
        %3723 = vrot.lane.b32.xlu0 %v3716, 127
        %v3724 = vpop.permute.xlu0 %3723
        %3725 = vrot.lane.b32.xlu0 %v3717, 127
        %v3726 = vpop.permute.xlu0 %3725
        %v3730 = vadd.f32 %v3690, %v3722
        %v3731 = vadd.f32 %v3691, %v3724
        %v3732 = vadd.f32 %v3692, %v3726
        %s3733 = sld [smem:[#allocation4 + $0x58]]
        %v3734 = vstv %s3733
        %v3735 = vmul.f32 %v3577, %v3734
        %v3736 = vmul.f32 %v3578, %v3734
        %v3737 = vmul.f32 %v3579, %v3734
        %3741 = vrot.lane.b32.xlu0 %v3735, 127
        %v3742 = vpop.permute.xlu0 %3741
        %3743 = vrot.lane.b32.xlu0 %v3736, 127
        %v3744 = vpop.permute.xlu0 %3743
        %3745 = vrot.lane.b32.xlu0 %v3737, 127
        %v3746 = vpop.permute.xlu0 %3745
        %v3750 = vadd.f32 %v3710, %v3742
        %v3751 = vadd.f32 %v3711, %v3744
        %v3752 = vadd.f32 %v3712, %v3746
        %s3753 = sld [smem:[#allocation4 + $0x59]]
        %v3754 = vstv %s3753
        %v3755 = vmul.f32 %v3577, %v3754
        %v3756 = vmul.f32 %v3578, %v3754
        %v3757 = vmul.f32 %v3579, %v3754
        %3761 = vrot.lane.b32.xlu0 %v3755, 127
        %v3762 = vpop.permute.xlu0 %3761
        %3763 = vrot.lane.b32.xlu0 %v3756, 127
        %v3764 = vpop.permute.xlu0 %3763
        %3765 = vrot.lane.b32.xlu0 %v3757, 127
        %v3766 = vpop.permute.xlu0 %3765
        %v3770 = vadd.f32 %v3730, %v3762
        %v3771 = vadd.f32 %v3731, %v3764
        %v3772 = vadd.f32 %v3732, %v3766
        %s3773 = sld [smem:[#allocation4 + $0x5a]]
        %v3774 = vstv %s3773
        %v3775 = vmul.f32 %v3596, %v3774
        %v3776 = vmul.f32 %v3597, %v3774
        %v3777 = vmul.f32 %v3598, %v3774
        %3781 = vrot.lane.b32.xlu0 %v3775, 127
        %v3782 = vpop.permute.xlu0 %3781
        %3783 = vrot.lane.b32.xlu0 %v3776, 127
        %v3784 = vpop.permute.xlu0 %3783
        %3785 = vrot.lane.b32.xlu0 %v3777, 127
        %v3786 = vpop.permute.xlu0 %3785
        %v3790 = vadd.f32 %v3750, %v3782
        %v3791 = vadd.f32 %v3751, %v3784
        %v3792 = vadd.f32 %v3752, %v3786
        %s3793 = sld [smem:[#allocation4 + $0x5b]]
        %v3794 = vstv %s3793
        %v3795 = vmul.f32 %v3596, %v3794
        %v3796 = vmul.f32 %v3597, %v3794
        %v3797 = vmul.f32 %v3598, %v3794
        %3801 = vrot.lane.b32.xlu0 %v3795, 127
        %v3802 = vpop.permute.xlu0 %3801
        %3803 = vrot.lane.b32.xlu0 %v3796, 127
        %v3804 = vpop.permute.xlu0 %3803
        %3805 = vrot.lane.b32.xlu0 %v3797, 127
        %v3806 = vpop.permute.xlu0 %3805
        %v3810 = vadd.f32 %v3770, %v3802
        %v3811 = vadd.f32 %v3771, %v3804
        %v3812 = vadd.f32 %v3772, %v3806
        %s3813 = sld [smem:[#allocation4 + $0x5c]]
        %v3814 = vstv %s3813
        %v3815 = vmul.f32 %v3615, %v3814
        %v3816 = vmul.f32 %v3616, %v3814
        %v3817 = vmul.f32 %v3617, %v3814
        %3821 = vrot.lane.b32.xlu0 %v3815, 127
        %v3822 = vpop.permute.xlu0 %3821
        %3823 = vrot.lane.b32.xlu0 %v3816, 127
        %v3824 = vpop.permute.xlu0 %3823
        %3825 = vrot.lane.b32.xlu0 %v3817, 127
        %v3826 = vpop.permute.xlu0 %3825
        %v3830 = vadd.f32 %v3790, %v3822
        %v3831 = vadd.f32 %v3791, %v3824
        %v3832 = vadd.f32 %v3792, %v3826
        %s3833 = sld [smem:[#allocation4 + $0x5d]]
        %v3834 = vstv %s3833
        %v3835 = vmul.f32 %v3615, %v3834
        %v3836 = vmul.f32 %v3616, %v3834
        %v3837 = vmul.f32 %v3617, %v3834
        %3841 = vrot.lane.b32.xlu0 %v3835, 127
        %v3842 = vpop.permute.xlu0 %3841
        %3843 = vrot.lane.b32.xlu0 %v3836, 127
        %v3844 = vpop.permute.xlu0 %3843
        %3845 = vrot.lane.b32.xlu0 %v3837, 127
        %v3846 = vpop.permute.xlu0 %3845
        %v3850 = vadd.f32 %v3810, %v3842
        %v3851 = vadd.f32 %v3811, %v3844
        %v3852 = vadd.f32 %v3812, %v3846
        %s3853 = sld [smem:[#allocation4 + $0x5e]]
        %v3854 = vstv %s3853
        %v3855 = vmul.f32 %v3634, %v3854
        %v3856 = vmul.f32 %v3635, %v3854
        %v3857 = vmul.f32 %v3636, %v3854
        %3861 = vrot.lane.b32.xlu0 %v3855, 127
        %v3862 = vpop.permute.xlu0 %3861
        %3863 = vrot.lane.b32.xlu0 %v3856, 127
        %v3864 = vpop.permute.xlu0 %3863
        %3865 = vrot.lane.b32.xlu0 %v3857, 127
        %v3866 = vpop.permute.xlu0 %3865
        %v3870 = vadd.f32 %v3830, %v3862
        %v3871 = vadd.f32 %v3831, %v3864
        %v3872 = vadd.f32 %v3832, %v3866
        %s3873 = sld [smem:[#allocation4 + $0x5f]]
        %v3874 = vstv %s3873
        %v3875 = vmul.f32 %v3634, %v3874
        %v3876 = vmul.f32 %v3635, %v3874
        %v3877 = vmul.f32 %v3636, %v3874
        %3881 = vrot.lane.b32.xlu0 %v3875, 127
        %v3882 = vpop.permute.xlu0 %3881
        %3883 = vrot.lane.b32.xlu0 %v3876, 127
        %v3884 = vpop.permute.xlu0 %3883
        %3885 = vrot.lane.b32.xlu0 %v3877, 127
        %v3886 = vpop.permute.xlu0 %3885
        %v3890 = vadd.f32 %v3850, %v3882
        %v3891 = vadd.f32 %v3851, %v3884
        %v3892 = vadd.f32 %v3852, %v3886
        %s3893 = sld [smem:[#allocation4 + $0x60]]
        %v3894 = vstv %s3893
        %v3895 = vmul.f32 %v3539, %v3894
        %v3896 = vmul.f32 %v3540, %v3894
        %v3897 = vmul.f32 %v3541, %v3894
        %3901 = vrot.lane.b32.xlu0 %v3895, 126
        %v3902 = vpop.permute.xlu0 %3901
        %3903 = vrot.lane.b32.xlu0 %v3896, 126
        %v3904 = vpop.permute.xlu0 %3903
        %3905 = vrot.lane.b32.xlu0 %v3897, 126
        %v3906 = vpop.permute.xlu0 %3905
        %v3910 = vadd.f32 %v3870, %v3902
        %v3911 = vadd.f32 %v3871, %v3904
        %v3912 = vadd.f32 %v3872, %v3906
        %s3913 = sld [smem:[#allocation4 + $0x61]]
        %v3914 = vstv %s3913
        %v3915 = vmul.f32 %v3539, %v3914
        %v3916 = vmul.f32 %v3540, %v3914
        %v3917 = vmul.f32 %v3541, %v3914
        %3921 = vrot.lane.b32.xlu0 %v3915, 126
        %v3922 = vpop.permute.xlu0 %3921
        %3923 = vrot.lane.b32.xlu0 %v3916, 126
        %v3924 = vpop.permute.xlu0 %3923
        %3925 = vrot.lane.b32.xlu0 %v3917, 126
        %v3926 = vpop.permute.xlu0 %3925
        %v3930 = vadd.f32 %v3890, %v3922
        %v3931 = vadd.f32 %v3891, %v3924
        %v3932 = vadd.f32 %v3892, %v3926
        %s3933 = sld [smem:[#allocation4 + $0x62]]
        %v3934 = vstv %s3933
        %v3935 = vmul.f32 %v3558, %v3934
        %v3936 = vmul.f32 %v3559, %v3934
        %v3937 = vmul.f32 %v3560, %v3934
        %3941 = vrot.lane.b32.xlu0 %v3935, 126
        %v3942 = vpop.permute.xlu0 %3941
        %3943 = vrot.lane.b32.xlu0 %v3936, 126
        %v3944 = vpop.permute.xlu0 %3943
        %3945 = vrot.lane.b32.xlu0 %v3937, 126
        %v3946 = vpop.permute.xlu0 %3945
        %v3950 = vadd.f32 %v3910, %v3942
        %v3951 = vadd.f32 %v3911, %v3944
        %v3952 = vadd.f32 %v3912, %v3946
        %s3953 = sld [smem:[#allocation4 + $0x63]]
        %v3954 = vstv %s3953
        %v3955 = vmul.f32 %v3558, %v3954
        %v3956 = vmul.f32 %v3559, %v3954
        %v3957 = vmul.f32 %v3560, %v3954
        %3961 = vrot.lane.b32.xlu0 %v3955, 126
        %v3962 = vpop.permute.xlu0 %3961
        %3963 = vrot.lane.b32.xlu0 %v3956, 126
        %v3964 = vpop.permute.xlu0 %3963
        %3965 = vrot.lane.b32.xlu0 %v3957, 126
        %v3966 = vpop.permute.xlu0 %3965
        %v3970 = vadd.f32 %v3930, %v3962
        %v3971 = vadd.f32 %v3931, %v3964
        %v3972 = vadd.f32 %v3932, %v3966
        %s3973 = sld [smem:[#allocation4 + $0x64]]
        %v3974 = vstv %s3973
        %v3975 = vmul.f32 %v3577, %v3974
        %v3976 = vmul.f32 %v3578, %v3974
        %v3977 = vmul.f32 %v3579, %v3974
        %3981 = vrot.lane.b32.xlu0 %v3975, 126
        %v3982 = vpop.permute.xlu0 %3981
        %3983 = vrot.lane.b32.xlu0 %v3976, 126
        %v3984 = vpop.permute.xlu0 %3983
        %3985 = vrot.lane.b32.xlu0 %v3977, 126
        %v3986 = vpop.permute.xlu0 %3985
        %v3990 = vadd.f32 %v3950, %v3982
        %v3991 = vadd.f32 %v3951, %v3984
        %v3992 = vadd.f32 %v3952, %v3986
        %s3993 = sld [smem:[#allocation4 + $0x65]]
        %v3994 = vstv %s3993
        %v3995 = vmul.f32 %v3577, %v3994
        %v3996 = vmul.f32 %v3578, %v3994
        %v3997 = vmul.f32 %v3579, %v3994
        %4001 = vrot.lane.b32.xlu0 %v3995, 126
        %v4002 = vpop.permute.xlu0 %4001
        %4003 = vrot.lane.b32.xlu0 %v3996, 126
        %v4004 = vpop.permute.xlu0 %4003
        %4005 = vrot.lane.b32.xlu0 %v3997, 126
        %v4006 = vpop.permute.xlu0 %4005
        %v4010 = vadd.f32 %v3970, %v4002
        %v4011 = vadd.f32 %v3971, %v4004
        %v4012 = vadd.f32 %v3972, %v4006
        %s4013 = sld [smem:[#allocation4 + $0x66]]
        %v4014 = vstv %s4013
        %v4015 = vmul.f32 %v3596, %v4014
        %v4016 = vmul.f32 %v3597, %v4014
        %v4017 = vmul.f32 %v3598, %v4014
        %4021 = vrot.lane.b32.xlu0 %v4015, 126
        %v4022 = vpop.permute.xlu0 %4021
        %4023 = vrot.lane.b32.xlu0 %v4016, 126
        %v4024 = vpop.permute.xlu0 %4023
        %4025 = vrot.lane.b32.xlu0 %v4017, 126
        %v4026 = vpop.permute.xlu0 %4025
        %v4030 = vadd.f32 %v3990, %v4022
        %v4031 = vadd.f32 %v3991, %v4024
        %v4032 = vadd.f32 %v3992, %v4026
        %s4033 = sld [smem:[#allocation4 + $0x67]]
        %v4034 = vstv %s4033
        %v4035 = vmul.f32 %v3596, %v4034
        %v4036 = vmul.f32 %v3597, %v4034
        %v4037 = vmul.f32 %v3598, %v4034
        %4041 = vrot.lane.b32.xlu0 %v4035, 126
        %v4042 = vpop.permute.xlu0 %4041
        %4043 = vrot.lane.b32.xlu0 %v4036, 126
        %v4044 = vpop.permute.xlu0 %4043
        %4045 = vrot.lane.b32.xlu0 %v4037, 126
        %v4046 = vpop.permute.xlu0 %4045
        %v4050 = vadd.f32 %v4010, %v4042
        %v4051 = vadd.f32 %v4011, %v4044
        %v4052 = vadd.f32 %v4012, %v4046
        %s4053 = sld [smem:[#allocation4 + $0x68]]
        %v4054 = vstv %s4053
        %v4055 = vmul.f32 %v3615, %v4054
        %v4056 = vmul.f32 %v3616, %v4054
        %v4057 = vmul.f32 %v3617, %v4054
        %4061 = vrot.lane.b32.xlu0 %v4055, 126
        %v4062 = vpop.permute.xlu0 %4061
        %4063 = vrot.lane.b32.xlu0 %v4056, 126
        %v4064 = vpop.permute.xlu0 %4063
        %4065 = vrot.lane.b32.xlu0 %v4057, 126
        %v4066 = vpop.permute.xlu0 %4065
        %v4070 = vadd.f32 %v4030, %v4062
        %v4071 = vadd.f32 %v4031, %v4064
        %v4072 = vadd.f32 %v4032, %v4066
        %s4073 = sld [smem:[#allocation4 + $0x69]]
        %v4074 = vstv %s4073
        %v4075 = vmul.f32 %v3615, %v4074
        %v4076 = vmul.f32 %v3616, %v4074
        %v4077 = vmul.f32 %v3617, %v4074
        %4081 = vrot.lane.b32.xlu0 %v4075, 126
        %v4082 = vpop.permute.xlu0 %4081
        %4083 = vrot.lane.b32.xlu0 %v4076, 126
        %v4084 = vpop.permute.xlu0 %4083
        %4085 = vrot.lane.b32.xlu0 %v4077, 126
        %v4086 = vpop.permute.xlu0 %4085
        %v4090 = vadd.f32 %v4050, %v4082
        %v4091 = vadd.f32 %v4051, %v4084
        %v4092 = vadd.f32 %v4052, %v4086
        %s4093 = sld [smem:[#allocation4 + $0x6a]]
        %v4094 = vstv %s4093
        %v4095 = vmul.f32 %v3634, %v4094
        %v4096 = vmul.f32 %v3635, %v4094
        %v4097 = vmul.f32 %v3636, %v4094
        %4101 = vrot.lane.b32.xlu0 %v4095, 126
        %v4102 = vpop.permute.xlu0 %4101
        %4103 = vrot.lane.b32.xlu0 %v4096, 126
        %v4104 = vpop.permute.xlu0 %4103
        %4105 = vrot.lane.b32.xlu0 %v4097, 126
        %v4106 = vpop.permute.xlu0 %4105
        %v4110 = vadd.f32 %v4070, %v4102
        %v4111 = vadd.f32 %v4071, %v4104
        %v4112 = vadd.f32 %v4072, %v4106
        %s4113 = sld [smem:[#allocation4 + $0x6b]]
        %v4114 = vstv %s4113
        %v4115 = vmul.f32 %v3634, %v4114
        %v4116 = vmul.f32 %v3635, %v4114
        %v4117 = vmul.f32 %v3636, %v4114
        %4121 = vrot.lane.b32.xlu0 %v4115, 126
        %v4122 = vpop.permute.xlu0 %4121
        %4123 = vrot.lane.b32.xlu0 %v4116, 126
        %v4124 = vpop.permute.xlu0 %4123
        %4125 = vrot.lane.b32.xlu0 %v4117, 126
        %v4126 = vpop.permute.xlu0 %4125
        %v4130 = vadd.f32 %v4090, %v4122
        %v4131 = vadd.f32 %v4091, %v4124
        %v4132 = vadd.f32 %v4092, %v4126
        %v4133 = vmul.f32 %v4110, %v2339
        %v4134 = vmul.f32 %v4111, %v2340
        %v4135 = vmul.f32 %v4112, %v2341
        %vm4136 = vcmask 146432
        %4137 = vst.msk [vmem:[#allocation3] sm:$0xff] %vm4136, %v4133
        %4138 = vst.msk [vmem:[#allocation3 + $0x8] sm:$0xff] %vm4136, %v4134
        %vm4139 = vcmask 140288
        %4140 = vst.msk [vmem:[#allocation3 + $0x10] sm:$0x3] %vm4139, %v4135
        %v4141 = vmul.f32 %v4130, %v2339
        %v4142 = vmul.f32 %v4131, %v2340
        %v4143 = vmul.f32 %v4132, %v2341
        %s4144 = scalar_lea.vmem [#allocation3], 24
        %4145 = vst.msk [vmem:[%s4144] sm:$0xff] %vm4136, %v4141
        %4146 = vst.msk [vmem:[%s4144 + $0x8] sm:$0xff] %vm4136, %v4142
        %4147 = vst.msk [vmem:[%s4144 + $0x10] sm:$0x3] %vm4139, %v4143
        %s4148 = sld [smem:[#allocation4 + $0xb6]]
        %v4149 = vstv %s4148
        %s4150 = sld [smem:[#allocation4 + $0xb7]]
        %v4151 = vstv %s4150
        %s4152 = sld [smem:[#allocation4 + $0xb8]]
        %v4153 = vstv %s4152
        %s4154 = sld [smem:[#allocation4 + $0xb9]]
        %v4155 = vstv %s4154
        %v4156 = vld [vmem:[#allocation3] sm:$0xff]
        %v4157 = vld [vmem:[#allocation3 + $0x8] sm:$0xff]
        %s4158 = sld [smem:[#allocation4 + $0x6e]]
        %v4159 = vstv %s4158
        %v4160 = vmul.f32 %v4156, %v4159
        %v4161 = vmul.f32 %v4157, %v4159
        %v4162 = vadd.f32 %v4149, %v4160
        %v4163 = vadd.f32 %v4149, %v4161
        %s4164 = sld [smem:[#allocation4 + $0x6f]]
        %v4165 = vstv %s4164
        %v4166 = vmul.f32 %v4156, %v4165
        %v4167 = vmul.f32 %v4157, %v4165
        %v4168 = vadd.f32 %v4151, %v4166
        %v4169 = vadd.f32 %v4151, %v4167
        %s4170 = sld [smem:[#allocation4 + $0x70]]
        %v4171 = vstv %s4170
        %v4172 = vmul.f32 %v4156, %v4171
        %v4173 = vmul.f32 %v4157, %v4171
        %v4174 = vadd.f32 %v4153, %v4172
        %v4175 = vadd.f32 %v4153, %v4173
        %s4176 = sld [smem:[#allocation4 + $0x71]]
        %v4177 = vstv %s4176
        %v4178 = vmul.f32 %v4156, %v4177
        %v4179 = vmul.f32 %v4157, %v4177
        %v4180 = vadd.f32 %v4155, %v4178
        %v4181 = vadd.f32 %v4155, %v4179
        %v4182 = vld [vmem:[%s4144] sm:$0xff]
        %v4183 = vld [vmem:[%s4144 + $0x8] sm:$0xff]
        %s4184 = sld [smem:[#allocation4 + $0x72]]
        %v4185 = vstv %s4184
        %v4186 = vmul.f32 %v4182, %v4185
        %v4187 = vmul.f32 %v4183, %v4185
        %v4188 = vadd.f32 %v4162, %v4186
        %v4189 = vadd.f32 %v4163, %v4187
        %s4190 = sld [smem:[#allocation4 + $0x73]]
        %v4191 = vstv %s4190
        %v4192 = vmul.f32 %v4182, %v4191
        %v4193 = vmul.f32 %v4183, %v4191
        %v4194 = vadd.f32 %v4168, %v4192
        %v4195 = vadd.f32 %v4169, %v4193
        %s4196 = sld [smem:[#allocation4 + $0x74]]
        %v4197 = vstv %s4196
        %v4198 = vmul.f32 %v4182, %v4197
        %v4199 = vmul.f32 %v4183, %v4197
        %v4200 = vadd.f32 %v4174, %v4198
        %v4201 = vadd.f32 %v4175, %v4199
        %s4202 = sld [smem:[#allocation4 + $0x75]]
        %v4203 = vstv %s4202
        %v4204 = vmul.f32 %v4182, %v4203
        %v4205 = vmul.f32 %v4183, %v4203
        %v4206 = vadd.f32 %v4180, %v4204
        %v4207 = vadd.f32 %v4181, %v4205
        %s4208 = sld [smem:[#allocation4 + $0x76]]
        %v4209 = vstv %s4208
        %v4210 = vmul.f32 %v4156, %v4209
        %v4211 = vmul.f32 %v4157, %v4209
        %4214 = vrot.lane.b32.xlu0 %v4210, 127
        %v4215 = vpop.permute.xlu0 %4214
        %4216 = vrot.lane.b32.xlu0 %v4211, 127
        %v4217 = vpop.permute.xlu0 %4216
        %v4220 = vadd.f32 %v4188, %v4215
        %v4221 = vadd.f32 %v4189, %v4217
        %s4222 = sld [smem:[#allocation4 + $0x77]]
        %v4223 = vstv %s4222
        %v4224 = vmul.f32 %v4156, %v4223
        %v4225 = vmul.f32 %v4157, %v4223
        %4228 = vrot.lane.b32.xlu0 %v4224, 127
        %v4229 = vpop.permute.xlu0 %4228
        %4230 = vrot.lane.b32.xlu0 %v4225, 127
        %v4231 = vpop.permute.xlu0 %4230
        %v4234 = vadd.f32 %v4194, %v4229
        %v4235 = vadd.f32 %v4195, %v4231
        %s4236 = sld [smem:[#allocation4 + $0x78]]
        %v4237 = vstv %s4236
        %v4238 = vmul.f32 %v4156, %v4237
        %v4239 = vmul.f32 %v4157, %v4237
        %4242 = vrot.lane.b32.xlu0 %v4238, 127
        %v4243 = vpop.permute.xlu0 %4242
        %4244 = vrot.lane.b32.xlu0 %v4239, 127
        %v4245 = vpop.permute.xlu0 %4244
        %v4248 = vadd.f32 %v4200, %v4243
        %v4249 = vadd.f32 %v4201, %v4245
        %s4250 = sld [smem:[#allocation4 + $0x79]]
        %v4251 = vstv %s4250
        %v4252 = vmul.f32 %v4156, %v4251
        %v4253 = vmul.f32 %v4157, %v4251
        %4256 = vrot.lane.b32.xlu0 %v4252, 127
        %v4257 = vpop.permute.xlu0 %4256
        %4258 = vrot.lane.b32.xlu0 %v4253, 127
        %v4259 = vpop.permute.xlu0 %4258
        %v4262 = vadd.f32 %v4206, %v4257
        %v4263 = vadd.f32 %v4207, %v4259
        %s4264 = sld [smem:[#allocation4 + $0x7a]]
        %v4265 = vstv %s4264
        %v4266 = vmul.f32 %v4182, %v4265
        %v4267 = vmul.f32 %v4183, %v4265
        %4270 = vrot.lane.b32.xlu0 %v4266, 127
        %v4271 = vpop.permute.xlu0 %4270
        %4272 = vrot.lane.b32.xlu0 %v4267, 127
        %v4273 = vpop.permute.xlu0 %4272
        %v4276 = vadd.f32 %v4220, %v4271
        %v4277 = vadd.f32 %v4221, %v4273
        %s4278 = sld [smem:[#allocation4 + $0x7b]]
        %v4279 = vstv %s4278
        %v4280 = vmul.f32 %v4182, %v4279
        %v4281 = vmul.f32 %v4183, %v4279
        %4284 = vrot.lane.b32.xlu0 %v4280, 127
        %v4285 = vpop.permute.xlu0 %4284
        %4286 = vrot.lane.b32.xlu0 %v4281, 127
        %v4287 = vpop.permute.xlu0 %4286
        %v4290 = vadd.f32 %v4234, %v4285
        %v4291 = vadd.f32 %v4235, %v4287
        %s4292 = sld [smem:[#allocation4 + $0x7c]]
        %v4293 = vstv %s4292
        %v4294 = vmul.f32 %v4182, %v4293
        %v4295 = vmul.f32 %v4183, %v4293
        %4298 = vrot.lane.b32.xlu0 %v4294, 127
        %v4299 = vpop.permute.xlu0 %4298
        %4300 = vrot.lane.b32.xlu0 %v4295, 127
        %v4301 = vpop.permute.xlu0 %4300
        %v4304 = vadd.f32 %v4248, %v4299
        %v4305 = vadd.f32 %v4249, %v4301
        %s4306 = sld [smem:[#allocation4 + $0x7d]]
        %v4307 = vstv %s4306
        %v4308 = vmul.f32 %v4182, %v4307
        %v4309 = vmul.f32 %v4183, %v4307
        %4312 = vrot.lane.b32.xlu0 %v4308, 127
        %v4313 = vpop.permute.xlu0 %4312
        %4314 = vrot.lane.b32.xlu0 %v4309, 127
        %v4315 = vpop.permute.xlu0 %4314
        %v4318 = vadd.f32 %v4262, %v4313
        %v4319 = vadd.f32 %v4263, %v4315
        %s4320 = sld [smem:[#allocation4 + $0x7e]]
        %v4321 = vstv %s4320
        %v4322 = vmul.f32 %v4156, %v4321
        %v4323 = vmul.f32 %v4157, %v4321
        %4326 = vrot.lane.b32.xlu0 %v4322, 126
        %v4327 = vpop.permute.xlu0 %4326
        %4328 = vrot.lane.b32.xlu0 %v4323, 126
        %v4329 = vpop.permute.xlu0 %4328
        %v4332 = vadd.f32 %v4276, %v4327
        %v4333 = vadd.f32 %v4277, %v4329
        %s4334 = sld [smem:[#allocation4 + $0x7f]]
        %v4335 = vstv %s4334
        %v4336 = vmul.f32 %v4156, %v4335
        %v4337 = vmul.f32 %v4157, %v4335
        %4340 = vrot.lane.b32.xlu0 %v4336, 126
        %v4341 = vpop.permute.xlu0 %4340
        %4342 = vrot.lane.b32.xlu0 %v4337, 126
        %v4343 = vpop.permute.xlu0 %4342
        %v4346 = vadd.f32 %v4290, %v4341
        %v4347 = vadd.f32 %v4291, %v4343
        %s4348 = sld [smem:[#allocation4 + $0x80]]
        %v4349 = vstv %s4348
        %v4350 = vmul.f32 %v4156, %v4349
        %v4351 = vmul.f32 %v4157, %v4349
        %4354 = vrot.lane.b32.xlu0 %v4350, 126
        %v4355 = vpop.permute.xlu0 %4354
        %4356 = vrot.lane.b32.xlu0 %v4351, 126
        %v4357 = vpop.permute.xlu0 %4356
        %v4360 = vadd.f32 %v4304, %v4355
        %v4361 = vadd.f32 %v4305, %v4357
        %s4362 = sld [smem:[#allocation4 + $0x81]]
        %v4363 = vstv %s4362
        %v4364 = vmul.f32 %v4156, %v4363
        %v4365 = vmul.f32 %v4157, %v4363
        %4368 = vrot.lane.b32.xlu0 %v4364, 126
        %v4369 = vpop.permute.xlu0 %4368
        %4370 = vrot.lane.b32.xlu0 %v4365, 126
        %v4371 = vpop.permute.xlu0 %4370
        %v4374 = vadd.f32 %v4318, %v4369
        %v4375 = vadd.f32 %v4319, %v4371
        %s4376 = sld [smem:[#allocation4 + $0x82]]
        %v4377 = vstv %s4376
        %v4378 = vmul.f32 %v4182, %v4377
        %v4379 = vmul.f32 %v4183, %v4377
        %4382 = vrot.lane.b32.xlu0 %v4378, 126
        %v4383 = vpop.permute.xlu0 %4382
        %4384 = vrot.lane.b32.xlu0 %v4379, 126
        %v4385 = vpop.permute.xlu0 %4384
        %v4388 = vadd.f32 %v4332, %v4383
        %v4389 = vadd.f32 %v4333, %v4385
        %s4390 = sld [smem:[#allocation4 + $0x83]]
        %v4391 = vstv %s4390
        %v4392 = vmul.f32 %v4182, %v4391
        %v4393 = vmul.f32 %v4183, %v4391
        %4396 = vrot.lane.b32.xlu0 %v4392, 126
        %v4397 = vpop.permute.xlu0 %4396
        %4398 = vrot.lane.b32.xlu0 %v4393, 126
        %v4399 = vpop.permute.xlu0 %4398
        %v4402 = vadd.f32 %v4346, %v4397
        %v4403 = vadd.f32 %v4347, %v4399
        %s4404 = sld [smem:[#allocation4 + $0x84]]
        %v4405 = vstv %s4404
        %v4406 = vmul.f32 %v4182, %v4405
        %v4407 = vmul.f32 %v4183, %v4405
        %4410 = vrot.lane.b32.xlu0 %v4406, 126
        %v4411 = vpop.permute.xlu0 %4410
        %4412 = vrot.lane.b32.xlu0 %v4407, 126
        %v4413 = vpop.permute.xlu0 %4412
        %v4416 = vadd.f32 %v4360, %v4411
        %v4417 = vadd.f32 %v4361, %v4413
        %s4418 = sld [smem:[#allocation4 + $0x85]]
        %v4419 = vstv %s4418
        %v4420 = vmul.f32 %v4182, %v4419
        %v4421 = vmul.f32 %v4183, %v4419
        %4424 = vrot.lane.b32.xlu0 %v4420, 126
        %v4425 = vpop.permute.xlu0 %4424
        %4426 = vrot.lane.b32.xlu0 %v4421, 126
        %v4427 = vpop.permute.xlu0 %4426
        %v4430 = vadd.f32 %v4374, %v4425
        %v4431 = vadd.f32 %v4375, %v4427
        %v4432 = vld [vmem:[#allocation3 + $0x1] sm:$0xff]
        %v4433 = vld [vmem:[#allocation3 + $0x9] sm:$0xff]
        %s4434 = sld [smem:[#allocation4 + $0x86]]
        %v4435 = vstv %s4434
        %v4436 = vmul.f32 %v4432, %v4435
        %v4437 = vmul.f32 %v4433, %v4435
        %v4438 = vadd.f32 %v4388, %v4436
        %v4439 = vadd.f32 %v4389, %v4437
        %s4440 = sld [smem:[#allocation4 + $0x87]]
        %v4441 = vstv %s4440
        %v4442 = vmul.f32 %v4432, %v4441
        %v4443 = vmul.f32 %v4433, %v4441
        %v4444 = vadd.f32 %v4402, %v4442
        %v4445 = vadd.f32 %v4403, %v4443
        %s4446 = sld [smem:[#allocation4 + $0x88]]
        %v4447 = vstv %s4446
        %v4448 = vmul.f32 %v4432, %v4447
        %v4449 = vmul.f32 %v4433, %v4447
        %v4450 = vadd.f32 %v4416, %v4448
        %v4451 = vadd.f32 %v4417, %v4449
        %s4452 = sld [smem:[#allocation4 + $0x89]]
        %v4453 = vstv %s4452
        %v4454 = vmul.f32 %v4432, %v4453
        %v4455 = vmul.f32 %v4433, %v4453
        %v4456 = vadd.f32 %v4430, %v4454
        %v4457 = vadd.f32 %v4431, %v4455
        %v4458 = vld [vmem:[%s4144 + $0x1] sm:$0xff]
        %v4459 = vld [vmem:[%s4144 + $0x9] sm:$0xff]
        %s4460 = sld [smem:[#allocation4 + $0x8a]]
        %v4461 = vstv %s4460
        %v4462 = vmul.f32 %v4458, %v4461
        %v4463 = vmul.f32 %v4459, %v4461
        %v4464 = vadd.f32 %v4438, %v4462
        %v4465 = vadd.f32 %v4439, %v4463
        %s4466 = sld [smem:[#allocation4 + $0x8b]]
        %v4467 = vstv %s4466
        %v4468 = vmul.f32 %v4458, %v4467
        %v4469 = vmul.f32 %v4459, %v4467
        %v4470 = vadd.f32 %v4444, %v4468
        %v4471 = vadd.f32 %v4445, %v4469
        %s4472 = sld [smem:[#allocation4 + $0x8c]]
        %v4473 = vstv %s4472
        %v4474 = vmul.f32 %v4458, %v4473
        %v4475 = vmul.f32 %v4459, %v4473
        %v4476 = vadd.f32 %v4450, %v4474
        %v4477 = vadd.f32 %v4451, %v4475
        %s4478 = sld [smem:[#allocation4 + $0x8d]]
        %v4479 = vstv %s4478
        %v4480 = vmul.f32 %v4458, %v4479
        %v4481 = vmul.f32 %v4459, %v4479
        %v4482 = vadd.f32 %v4456, %v4480
        %v4483 = vadd.f32 %v4457, %v4481
        %s4484 = sld [smem:[#allocation4 + $0x8e]]
        %v4485 = vstv %s4484
        %v4486 = vmul.f32 %v4432, %v4485
        %v4487 = vmul.f32 %v4433, %v4485
        %4490 = vrot.lane.b32.xlu0 %v4486, 127
        %v4491 = vpop.permute.xlu0 %4490
        %4492 = vrot.lane.b32.xlu0 %v4487, 127
        %v4493 = vpop.permute.xlu0 %4492
        %v4496 = vadd.f32 %v4464, %v4491
        %v4497 = vadd.f32 %v4465, %v4493
        %s4498 = sld [smem:[#allocation4 + $0x8f]]
        %v4499 = vstv %s4498
        %v4500 = vmul.f32 %v4432, %v4499
        %v4501 = vmul.f32 %v4433, %v4499
        %4504 = vrot.lane.b32.xlu0 %v4500, 127
        %v4505 = vpop.permute.xlu0 %4504
        %4506 = vrot.lane.b32.xlu0 %v4501, 127
        %v4507 = vpop.permute.xlu0 %4506
        %v4510 = vadd.f32 %v4470, %v4505
        %v4511 = vadd.f32 %v4471, %v4507
        %s4512 = sld [smem:[#allocation4 + $0x90]]
        %v4513 = vstv %s4512
        %v4514 = vmul.f32 %v4432, %v4513
        %v4515 = vmul.f32 %v4433, %v4513
        %4518 = vrot.lane.b32.xlu0 %v4514, 127
        %v4519 = vpop.permute.xlu0 %4518
        %4520 = vrot.lane.b32.xlu0 %v4515, 127
        %v4521 = vpop.permute.xlu0 %4520
        %v4524 = vadd.f32 %v4476, %v4519
        %v4525 = vadd.f32 %v4477, %v4521
        %s4526 = sld [smem:[#allocation4 + $0x91]]
        %v4527 = vstv %s4526
        %v4528 = vmul.f32 %v4432, %v4527
        %v4529 = vmul.f32 %v4433, %v4527
        %4532 = vrot.lane.b32.xlu0 %v4528, 127
        %v4533 = vpop.permute.xlu0 %4532
        %4534 = vrot.lane.b32.xlu0 %v4529, 127
        %v4535 = vpop.permute.xlu0 %4534
        %v4538 = vadd.f32 %v4482, %v4533
        %v4539 = vadd.f32 %v4483, %v4535
        %s4540 = sld [smem:[#allocation4 + $0x92]]
        %v4541 = vstv %s4540
        %v4542 = vmul.f32 %v4458, %v4541
        %v4543 = vmul.f32 %v4459, %v4541
        %4546 = vrot.lane.b32.xlu0 %v4542, 127
        %v4547 = vpop.permute.xlu0 %4546
        %4548 = vrot.lane.b32.xlu0 %v4543, 127
        %v4549 = vpop.permute.xlu0 %4548
        %v4552 = vadd.f32 %v4496, %v4547
        %v4553 = vadd.f32 %v4497, %v4549
        %s4554 = sld [smem:[#allocation4 + $0x93]]
        %v4555 = vstv %s4554
        %v4556 = vmul.f32 %v4458, %v4555
        %v4557 = vmul.f32 %v4459, %v4555
        %4560 = vrot.lane.b32.xlu0 %v4556, 127
        %v4561 = vpop.permute.xlu0 %4560
        %4562 = vrot.lane.b32.xlu0 %v4557, 127
        %v4563 = vpop.permute.xlu0 %4562
        %v4566 = vadd.f32 %v4510, %v4561
        %v4567 = vadd.f32 %v4511, %v4563
        %s4568 = sld [smem:[#allocation4 + $0x94]]
        %v4569 = vstv %s4568
        %v4570 = vmul.f32 %v4458, %v4569
        %v4571 = vmul.f32 %v4459, %v4569
        %4574 = vrot.lane.b32.xlu0 %v4570, 127
        %v4575 = vpop.permute.xlu0 %4574
        %4576 = vrot.lane.b32.xlu0 %v4571, 127
        %v4577 = vpop.permute.xlu0 %4576
        %v4580 = vadd.f32 %v4524, %v4575
        %v4581 = vadd.f32 %v4525, %v4577
        %s4582 = sld [smem:[#allocation4 + $0x95]]
        %v4583 = vstv %s4582
        %v4584 = vmul.f32 %v4458, %v4583
        %v4585 = vmul.f32 %v4459, %v4583
        %4588 = vrot.lane.b32.xlu0 %v4584, 127
        %v4589 = vpop.permute.xlu0 %4588
        %4590 = vrot.lane.b32.xlu0 %v4585, 127
        %v4591 = vpop.permute.xlu0 %4590
        %v4594 = vadd.f32 %v4538, %v4589
        %v4595 = vadd.f32 %v4539, %v4591
        %s4596 = sld [smem:[#allocation4 + $0x96]]
        %v4597 = vstv %s4596
        %v4598 = vmul.f32 %v4432, %v4597
        %v4599 = vmul.f32 %v4433, %v4597
        %4602 = vrot.lane.b32.xlu0 %v4598, 126
        %v4603 = vpop.permute.xlu0 %4602
        %4604 = vrot.lane.b32.xlu0 %v4599, 126
        %v4605 = vpop.permute.xlu0 %4604
        %v4608 = vadd.f32 %v4552, %v4603
        %v4609 = vadd.f32 %v4553, %v4605
        %s4610 = sld [smem:[#allocation4 + $0x97]]
        %v4611 = vstv %s4610
        %v4612 = vmul.f32 %v4432, %v4611
        %v4613 = vmul.f32 %v4433, %v4611
        %4616 = vrot.lane.b32.xlu0 %v4612, 126
        %v4617 = vpop.permute.xlu0 %4616
        %4618 = vrot.lane.b32.xlu0 %v4613, 126
        %v4619 = vpop.permute.xlu0 %4618
        %v4622 = vadd.f32 %v4566, %v4617
        %v4623 = vadd.f32 %v4567, %v4619
        %s4624 = sld [smem:[#allocation4 + $0x98]]
        %v4625 = vstv %s4624
        %v4626 = vmul.f32 %v4432, %v4625
        %v4627 = vmul.f32 %v4433, %v4625
        %4630 = vrot.lane.b32.xlu0 %v4626, 126
        %v4631 = vpop.permute.xlu0 %4630
        %4632 = vrot.lane.b32.xlu0 %v4627, 126
        %v4633 = vpop.permute.xlu0 %4632
        %v4636 = vadd.f32 %v4580, %v4631
        %v4637 = vadd.f32 %v4581, %v4633
        %s4638 = sld [smem:[#allocation4 + $0x99]]
        %v4639 = vstv %s4638
        %v4640 = vmul.f32 %v4432, %v4639
        %v4641 = vmul.f32 %v4433, %v4639
        %4644 = vrot.lane.b32.xlu0 %v4640, 126
        %v4645 = vpop.permute.xlu0 %4644
        %4646 = vrot.lane.b32.xlu0 %v4641, 126
        %v4647 = vpop.permute.xlu0 %4646
        %v4650 = vadd.f32 %v4594, %v4645
        %v4651 = vadd.f32 %v4595, %v4647
        %s4652 = sld [smem:[#allocation4 + $0x9a]]
        %v4653 = vstv %s4652
        %v4654 = vmul.f32 %v4458, %v4653
        %v4655 = vmul.f32 %v4459, %v4653
        %4658 = vrot.lane.b32.xlu0 %v4654, 126
        %v4659 = vpop.permute.xlu0 %4658
        %4660 = vrot.lane.b32.xlu0 %v4655, 126
        %v4661 = vpop.permute.xlu0 %4660
        %v4664 = vadd.f32 %v4608, %v4659
        %v4665 = vadd.f32 %v4609, %v4661
        %s4666 = sld [smem:[#allocation4 + $0x9b]]
        %v4667 = vstv %s4666
        %v4668 = vmul.f32 %v4458, %v4667
        %v4669 = vmul.f32 %v4459, %v4667
        %4672 = vrot.lane.b32.xlu0 %v4668, 126
        %v4673 = vpop.permute.xlu0 %4672
        %4674 = vrot.lane.b32.xlu0 %v4669, 126
        %v4675 = vpop.permute.xlu0 %4674
        %v4678 = vadd.f32 %v4622, %v4673
        %v4679 = vadd.f32 %v4623, %v4675
        %s4680 = sld [smem:[#allocation4 + $0x9c]]
        %v4681 = vstv %s4680
        %v4682 = vmul.f32 %v4458, %v4681
        %v4683 = vmul.f32 %v4459, %v4681
        %4686 = vrot.lane.b32.xlu0 %v4682, 126
        %v4687 = vpop.permute.xlu0 %4686
        %4688 = vrot.lane.b32.xlu0 %v4683, 126
        %v4689 = vpop.permute.xlu0 %4688
        %v4692 = vadd.f32 %v4636, %v4687
        %v4693 = vadd.f32 %v4637, %v4689
        %s4694 = sld [smem:[#allocation4 + $0x9d]]
        %v4695 = vstv %s4694
        %v4696 = vmul.f32 %v4458, %v4695
        %v4697 = vmul.f32 %v4459, %v4695
        %4700 = vrot.lane.b32.xlu0 %v4696, 126
        %v4701 = vpop.permute.xlu0 %4700
        %4702 = vrot.lane.b32.xlu0 %v4697, 126
        %v4703 = vpop.permute.xlu0 %4702
        %v4706 = vadd.f32 %v4650, %v4701
        %v4707 = vadd.f32 %v4651, %v4703
        %v4708 = vld [vmem:[#allocation3 + $0x2] sm:$0xff]
        %v4709 = vld [vmem:[#allocation3 + $0xa] sm:$0xff]
        %s4710 = sld [smem:[#allocation4 + $0x9e]]
        %v4711 = vstv %s4710
        %v4712 = vmul.f32 %v4708, %v4711
        %v4713 = vmul.f32 %v4709, %v4711
        %v4714 = vadd.f32 %v4664, %v4712
        %v4715 = vadd.f32 %v4665, %v4713
        %s4716 = sld [smem:[#allocation4 + $0x9f]]
        %v4717 = vstv %s4716
        %v4718 = vmul.f32 %v4708, %v4717
        %v4719 = vmul.f32 %v4709, %v4717
        %v4720 = vadd.f32 %v4678, %v4718
        %v4721 = vadd.f32 %v4679, %v4719
        %s4722 = sld [smem:[#allocation4 + $0xa0]]
        %v4723 = vstv %s4722
        %v4724 = vmul.f32 %v4708, %v4723
        %v4725 = vmul.f32 %v4709, %v4723
        %v4726 = vadd.f32 %v4692, %v4724
        %v4727 = vadd.f32 %v4693, %v4725
        %s4728 = sld [smem:[#allocation4 + $0xa1]]
        %v4729 = vstv %s4728
        %v4730 = vmul.f32 %v4708, %v4729
        %v4731 = vmul.f32 %v4709, %v4729
        %v4732 = vadd.f32 %v4706, %v4730
        %v4733 = vadd.f32 %v4707, %v4731
        %v4734 = vld [vmem:[%s4144 + $0x2] sm:$0xff]
        %v4735 = vld [vmem:[%s4144 + $0xa] sm:$0xff]
        %s4736 = sld [smem:[#allocation4 + $0xa2]]
        %v4737 = vstv %s4736
        %v4738 = vmul.f32 %v4734, %v4737
        %v4739 = vmul.f32 %v4735, %v4737
        %v4740 = vadd.f32 %v4714, %v4738
        %v4741 = vadd.f32 %v4715, %v4739
        %s4742 = sld [smem:[#allocation4 + $0xa3]]
        %v4743 = vstv %s4742
        %v4744 = vmul.f32 %v4734, %v4743
        %v4745 = vmul.f32 %v4735, %v4743
        %v4746 = vadd.f32 %v4720, %v4744
        %v4747 = vadd.f32 %v4721, %v4745
        %s4748 = sld [smem:[#allocation4 + $0xa4]]
        %v4749 = vstv %s4748
        %v4750 = vmul.f32 %v4734, %v4749
        %v4751 = vmul.f32 %v4735, %v4749
        %v4752 = vadd.f32 %v4726, %v4750
        %v4753 = vadd.f32 %v4727, %v4751
        %s4754 = sld [smem:[#allocation4 + $0xa5]]
        %v4755 = vstv %s4754
        %v4756 = vmul.f32 %v4734, %v4755
        %v4757 = vmul.f32 %v4735, %v4755
        %v4758 = vadd.f32 %v4732, %v4756
        %v4759 = vadd.f32 %v4733, %v4757
        %s4760 = sld [smem:[#allocation4 + $0xa6]]
        %v4761 = vstv %s4760
        %v4762 = vmul.f32 %v4708, %v4761
        %v4763 = vmul.f32 %v4709, %v4761
        %4766 = vrot.lane.b32.xlu0 %v4762, 127
        %v4767 = vpop.permute.xlu0 %4766
        %4768 = vrot.lane.b32.xlu0 %v4763, 127
        %v4769 = vpop.permute.xlu0 %4768
        %v4772 = vadd.f32 %v4740, %v4767
        %v4773 = vadd.f32 %v4741, %v4769
        %s4774 = sld [smem:[#allocation4 + $0xa7]]
        %v4775 = vstv %s4774
        %v4776 = vmul.f32 %v4708, %v4775
        %v4777 = vmul.f32 %v4709, %v4775
        %4780 = vrot.lane.b32.xlu0 %v4776, 127
        %v4781 = vpop.permute.xlu0 %4780
        %4782 = vrot.lane.b32.xlu0 %v4777, 127
        %v4783 = vpop.permute.xlu0 %4782
        %v4786 = vadd.f32 %v4746, %v4781
        %v4787 = vadd.f32 %v4747, %v4783
        %s4788 = sld [smem:[#allocation4 + $0xa8]]
        %v4789 = vstv %s4788
        %v4790 = vmul.f32 %v4708, %v4789
        %v4791 = vmul.f32 %v4709, %v4789
        %4794 = vrot.lane.b32.xlu0 %v4790, 127
        %v4795 = vpop.permute.xlu0 %4794
        %4796 = vrot.lane.b32.xlu0 %v4791, 127
        %v4797 = vpop.permute.xlu0 %4796
        %v4800 = vadd.f32 %v4752, %v4795
        %v4801 = vadd.f32 %v4753, %v4797
        %s4802 = sld [smem:[#allocation4 + $0xa9]]
        %v4803 = vstv %s4802
        %v4804 = vmul.f32 %v4708, %v4803
        %v4805 = vmul.f32 %v4709, %v4803
        %4808 = vrot.lane.b32.xlu0 %v4804, 127
        %v4809 = vpop.permute.xlu0 %4808
        %4810 = vrot.lane.b32.xlu0 %v4805, 127
        %v4811 = vpop.permute.xlu0 %4810
        %v4814 = vadd.f32 %v4758, %v4809
        %v4815 = vadd.f32 %v4759, %v4811
        %s4816 = sld [smem:[#allocation4 + $0xaa]]
        %v4817 = vstv %s4816
        %v4818 = vmul.f32 %v4734, %v4817
        %v4819 = vmul.f32 %v4735, %v4817
        %4822 = vrot.lane.b32.xlu0 %v4818, 127
        %v4823 = vpop.permute.xlu0 %4822
        %4824 = vrot.lane.b32.xlu0 %v4819, 127
        %v4825 = vpop.permute.xlu0 %4824
        %v4828 = vadd.f32 %v4772, %v4823
        %v4829 = vadd.f32 %v4773, %v4825
        %s4830 = sld [smem:[#allocation4 + $0xab]]
        %v4831 = vstv %s4830
        %v4832 = vmul.f32 %v4734, %v4831
        %v4833 = vmul.f32 %v4735, %v4831
        %4836 = vrot.lane.b32.xlu0 %v4832, 127
        %v4837 = vpop.permute.xlu0 %4836
        %4838 = vrot.lane.b32.xlu0 %v4833, 127
        %v4839 = vpop.permute.xlu0 %4838
        %v4842 = vadd.f32 %v4786, %v4837
        %v4843 = vadd.f32 %v4787, %v4839
        %s4844 = sld [smem:[#allocation4 + $0xac]]
        %v4845 = vstv %s4844
        %v4846 = vmul.f32 %v4734, %v4845
        %v4847 = vmul.f32 %v4735, %v4845
        %4850 = vrot.lane.b32.xlu0 %v4846, 127
        %v4851 = vpop.permute.xlu0 %4850
        %4852 = vrot.lane.b32.xlu0 %v4847, 127
        %v4853 = vpop.permute.xlu0 %4852
        %v4856 = vadd.f32 %v4800, %v4851
        %v4857 = vadd.f32 %v4801, %v4853
        %s4858 = sld [smem:[#allocation4 + $0xad]]
        %v4859 = vstv %s4858
        %v4860 = vmul.f32 %v4734, %v4859
        %v4861 = vmul.f32 %v4735, %v4859
        %4864 = vrot.lane.b32.xlu0 %v4860, 127
        %v4865 = vpop.permute.xlu0 %4864
        %4866 = vrot.lane.b32.xlu0 %v4861, 127
        %v4867 = vpop.permute.xlu0 %4866
        %v4870 = vadd.f32 %v4814, %v4865
        %v4871 = vadd.f32 %v4815, %v4867
        %s4872 = sld [smem:[#allocation4 + $0xae]]
        %v4873 = vstv %s4872
        %v4874 = vmul.f32 %v4708, %v4873
        %v4875 = vmul.f32 %v4709, %v4873
        %4878 = vrot.lane.b32.xlu0 %v4874, 126
        %v4879 = vpop.permute.xlu0 %4878
        %4880 = vrot.lane.b32.xlu0 %v4875, 126
        %v4881 = vpop.permute.xlu0 %4880
        %v4884 = vadd.f32 %v4828, %v4879
        %v4885 = vadd.f32 %v4829, %v4881
        %s4886 = sld [smem:[#allocation4 + $0xaf]]
        %v4887 = vstv %s4886
        %v4888 = vmul.f32 %v4708, %v4887
        %v4889 = vmul.f32 %v4709, %v4887
        %4892 = vrot.lane.b32.xlu0 %v4888, 126
        %v4893 = vpop.permute.xlu0 %4892
        %4894 = vrot.lane.b32.xlu0 %v4889, 126
        %v4895 = vpop.permute.xlu0 %4894
        %v4898 = vadd.f32 %v4842, %v4893
        %v4899 = vadd.f32 %v4843, %v4895
        %s4900 = sld [smem:[#allocation4 + $0xb0]]
        %v4901 = vstv %s4900
        %v4902 = vmul.f32 %v4708, %v4901
        %v4903 = vmul.f32 %v4709, %v4901
        %4906 = vrot.lane.b32.xlu0 %v4902, 126
        %v4907 = vpop.permute.xlu0 %4906
        %4908 = vrot.lane.b32.xlu0 %v4903, 126
        %v4909 = vpop.permute.xlu0 %4908
        %v4912 = vadd.f32 %v4856, %v4907
        %v4913 = vadd.f32 %v4857, %v4909
        %s4914 = sld [smem:[#allocation4 + $0xb1]]
        %v4915 = vstv %s4914
        %v4916 = vmul.f32 %v4708, %v4915
        %v4917 = vmul.f32 %v4709, %v4915
        %4920 = vrot.lane.b32.xlu0 %v4916, 126
        %v4921 = vpop.permute.xlu0 %4920
        %4922 = vrot.lane.b32.xlu0 %v4917, 126
        %v4923 = vpop.permute.xlu0 %4922
        %v4926 = vadd.f32 %v4870, %v4921
        %v4927 = vadd.f32 %v4871, %v4923
        %s4928 = sld [smem:[#allocation4 + $0xb2]]
        %v4929 = vstv %s4928
        %v4930 = vmul.f32 %v4734, %v4929
        %v4931 = vmul.f32 %v4735, %v4929
        %4934 = vrot.lane.b32.xlu0 %v4930, 126
        %v4935 = vpop.permute.xlu0 %4934
        %4936 = vrot.lane.b32.xlu0 %v4931, 126
        %v4937 = vpop.permute.xlu0 %4936
        %v4940 = vadd.f32 %v4884, %v4935
        %v4941 = vadd.f32 %v4885, %v4937
        %s4942 = sld [smem:[#allocation4 + $0xb3]]
        %v4943 = vstv %s4942
        %v4944 = vmul.f32 %v4734, %v4943
        %v4945 = vmul.f32 %v4735, %v4943
        %4948 = vrot.lane.b32.xlu0 %v4944, 126
        %v4949 = vpop.permute.xlu0 %4948
        %4950 = vrot.lane.b32.xlu0 %v4945, 126
        %v4951 = vpop.permute.xlu0 %4950
        %v4954 = vadd.f32 %v4898, %v4949
        %v4955 = vadd.f32 %v4899, %v4951
        %s4956 = sld [smem:[#allocation4 + $0xb4]]
        %v4957 = vstv %s4956
        %v4958 = vmul.f32 %v4734, %v4957
        %v4959 = vmul.f32 %v4735, %v4957
        %4962 = vrot.lane.b32.xlu0 %v4958, 126
        %v4963 = vpop.permute.xlu0 %4962
        %4964 = vrot.lane.b32.xlu0 %v4959, 126
        %v4965 = vpop.permute.xlu0 %4964
        %v4968 = vadd.f32 %v4912, %v4963
        %v4969 = vadd.f32 %v4913, %v4965
        %s4970 = sld [smem:[#allocation4 + $0xb5]]
        %v4971 = vstv %s4970
        %v4972 = vmul.f32 %v4734, %v4971
        %v4973 = vmul.f32 %v4735, %v4971
        %4976 = vrot.lane.b32.xlu0 %v4972, 126
        %v4977 = vpop.permute.xlu0 %4976
        %4978 = vrot.lane.b32.xlu0 %v4973, 126
        %v4979 = vpop.permute.xlu0 %4978
        %v4982 = vadd.f32 %v4926, %v4977
        %v4983 = vadd.f32 %v4927, %v4979
        %vm4984 = vcmask 130048
        %v4985 = vsel %vm4984, %v4940, 0.0
        %4986 = vadd.xlane.f32.xlu0 %v4985
        %v4987 = vpop.xlane.xlu0 %4986
        %v4988 = vsel %vm4984, %v4941, 0.0
        %4989 = vadd.xlane.f32.xlu0 %v4988
        %v4990 = vpop.xlane.xlu0 %4989
        %v4991 = vadd.f32 %v4987, %v4990
        %v4992 = vrot.slane %v4991, 4
        %v4993 = vadd.f32 %v4991, %v4992
        %v4994 = vrot.slane %v4993, 2
        %v4995 = vadd.f32 %v4993, %v4994
        %v4996 = vrot.slane %v4995, 1
        %v4997 = vadd.f32 %v4995, %v4996
        %v4998 = vmul.f32 %v4997, 0.00390625
        %v4999 = vsub.f32 %v4940, %v4998
        %v5000 = vsub.f32 %v4941, %v4998
        %v5001 = vmul.f32 %v4999, %v4999
        %v5002 = vmul.f32 %v5000, %v5000
        %v5003 = vsel %vm4984, %v5001, 0.0
        %5004 = vadd.xlane.f32.xlu0 %v5003
        %v5005 = vpop.xlane.xlu0 %5004
        %v5006 = vsel %vm4984, %v5002, 0.0
        %5007 = vadd.xlane.f32.xlu0 %v5006
        %v5008 = vpop.xlane.xlu0 %5007
        %v5009 = vadd.f32 %v5005, %v5008
        %v5010 = vrot.slane %v5009, 4
        %v5011 = vadd.f32 %v5009, %v5010
        %v5012 = vrot.slane %v5011, 2
        %v5013 = vadd.f32 %v5011, %v5012
        %v5014 = vrot.slane %v5013, 1
        %v5015 = vadd.f32 %v5013, %v5014
        %v5016 = vmul.f32 %v5015, 0.00390625
        %v5017 = vadd.f32 %v5016, 1e-05
        %v5018 = vrsqrt.pop %v5017
        %v5019 = vmul.f32 %v5018, %v5017
        %v5020 = vmul.f32 %v5019, %v5018
        %v5021 = vmul.f32 0.5, %v5020
        %v5022 = vsub.f32 1.5, %v5021
        %v5023 = vmul.f32 %v5018, %v5022
        %vm5024 = vweird.f32 %v5017
        %vm5025 = vweird.f32 %v5018
        %vm5026 = vmor %vm5024, %vm5025
        %v5027 = vsel %vm5026, %v5018, %v5023
        %v5028 = vmul.f32 %v4999, %v5027
        %v5029 = vmul.f32 %v5000, %v5027
        %5030 = vst.msk [vmem:[%s258] sm:$0xff] %vm4984, %v5028
        %5031 = vst.msk [vmem:[%s258 + $0x8] sm:$0xff] %vm4984, %v5029
        %v5032 = vsel %vm4984, %v4954, 0.0
        %5033 = vadd.xlane.f32.xlu0 %v5032
        %v5034 = vpop.xlane.xlu0 %5033
        %v5035 = vsel %vm4984, %v4955, 0.0
        %5036 = vadd.xlane.f32.xlu0 %v5035
        %v5037 = vpop.xlane.xlu0 %5036
        %v5038 = vadd.f32 %v5034, %v5037
        %v5039 = vrot.slane %v5038, 4
        %v5040 = vadd.f32 %v5038, %v5039
        %v5041 = vrot.slane %v5040, 2
        %v5042 = vadd.f32 %v5040, %v5041
        %v5043 = vrot.slane %v5042, 1
        %v5044 = vadd.f32 %v5042, %v5043
        %v5045 = vmul.f32 %v5044, 0.00390625
        %v5046 = vsub.f32 %v4954, %v5045
        %v5047 = vsub.f32 %v4955, %v5045
        %v5048 = vmul.f32 %v5046, %v5046
        %v5049 = vmul.f32 %v5047, %v5047
        %v5050 = vsel %vm4984, %v5048, 0.0
        %5051 = vadd.xlane.f32.xlu0 %v5050
        %v5052 = vpop.xlane.xlu0 %5051
        %v5053 = vsel %vm4984, %v5049, 0.0
        %5054 = vadd.xlane.f32.xlu0 %v5053
        %v5055 = vpop.xlane.xlu0 %5054
        %v5056 = vadd.f32 %v5052, %v5055
        %v5057 = vrot.slane %v5056, 4
        %v5058 = vadd.f32 %v5056, %v5057
        %v5059 = vrot.slane %v5058, 2
        %v5060 = vadd.f32 %v5058, %v5059
        %v5061 = vrot.slane %v5060, 1
        %v5062 = vadd.f32 %v5060, %v5061
        %v5063 = vmul.f32 %v5062, 0.00390625
        %v5064 = vadd.f32 %v5063, 1e-05
        %v5065 = vrsqrt.pop %v5064
        %v5066 = vmul.f32 %v5065, %v5064
        %v5067 = vmul.f32 %v5066, %v5065
        %v5068 = vmul.f32 0.5, %v5067
        %v5069 = vsub.f32 1.5, %v5068
        %v5070 = vmul.f32 %v5065, %v5069
        %vm5071 = vweird.f32 %v5064
        %vm5072 = vweird.f32 %v5065
        %vm5073 = vmor %vm5071, %vm5072
        %v5074 = vsel %vm5073, %v5065, %v5070
        %v5075 = vmul.f32 %v5046, %v5074
        %v5076 = vmul.f32 %v5047, %v5074
        %s5077 = scalar_lea.vmem %s258, 16 [#allocation7]
        %5078 = vst.msk [vmem:[%s5077] sm:$0xff] %vm4984, %v5075
        %5079 = vst.msk [vmem:[%s5077 + $0x8] sm:$0xff] %vm4984, %v5076
        %v5080 = vsel %vm4984, %v4968, 0.0
        %5081 = vadd.xlane.f32.xlu0 %v5080
        %v5082 = vpop.xlane.xlu0 %5081
        %v5083 = vsel %vm4984, %v4969, 0.0
        %5084 = vadd.xlane.f32.xlu0 %v5083
        %v5085 = vpop.xlane.xlu0 %5084
        %v5086 = vadd.f32 %v5082, %v5085
        %v5087 = vrot.slane %v5086, 4
        %v5088 = vadd.f32 %v5086, %v5087
        %v5089 = vrot.slane %v5088, 2
        %v5090 = vadd.f32 %v5088, %v5089
        %v5091 = vrot.slane %v5090, 1
        %v5092 = vadd.f32 %v5090, %v5091
        %v5093 = vmul.f32 %v5092, 0.00390625
        %v5094 = vsub.f32 %v4968, %v5093
        %v5095 = vsub.f32 %v4969, %v5093
        %v5096 = vmul.f32 %v5094, %v5094
        %v5097 = vmul.f32 %v5095, %v5095
        %v5098 = vsel %vm4984, %v5096, 0.0
        %5099 = vadd.xlane.f32.xlu0 %v5098
        %v5100 = vpop.xlane.xlu0 %5099
        %v5101 = vsel %vm4984, %v5097, 0.0
        %5102 = vadd.xlane.f32.xlu0 %v5101
        %v5103 = vpop.xlane.xlu0 %5102
        %v5104 = vadd.f32 %v5100, %v5103
        %v5105 = vrot.slane %v5104, 4
        %v5106 = vadd.f32 %v5104, %v5105
        %v5107 = vrot.slane %v5106, 2
        %v5108 = vadd.f32 %v5106, %v5107
        %v5109 = vrot.slane %v5108, 1
        %v5110 = vadd.f32 %v5108, %v5109
        %v5111 = vmul.f32 %v5110, 0.00390625
        %v5112 = vadd.f32 %v5111, 1e-05
        %v5113 = vrsqrt.pop %v5112
        %v5114 = vmul.f32 %v5113, %v5112
        %v5115 = vmul.f32 %v5114, %v5113
        %v5116 = vmul.f32 0.5, %v5115
        %v5117 = vsub.f32 1.5, %v5116
        %v5118 = vmul.f32 %v5113, %v5117
        %vm5119 = vweird.f32 %v5112
        %vm5120 = vweird.f32 %v5113
        %vm5121 = vmor %vm5119, %vm5120
        %v5122 = vsel %vm5121, %v5113, %v5118
        %v5123 = vmul.f32 %v5094, %v5122
        %v5124 = vmul.f32 %v5095, %v5122
        %s5125 = scalar_lea.vmem %s258, 32 [#allocation7]
        %5126 = vst.msk [vmem:[%s5125] sm:$0xff] %vm4984, %v5123
        %5127 = vst.msk [vmem:[%s5125 + $0x8] sm:$0xff] %vm4984, %v5124
        %v5128 = vsel %vm4984, %v4982, 0.0
        %5129 = vadd.xlane.f32.xlu0 %v5128
        %v5130 = vpop.xlane.xlu0 %5129
        %v5131 = vsel %vm4984, %v4983, 0.0
        %5132 = vadd.xlane.f32.xlu0 %v5131
        %v5133 = vpop.xlane.xlu0 %5132
        %v5134 = vadd.f32 %v5130, %v5133
        %v5135 = vrot.slane %v5134, 4
        %v5136 = vadd.f32 %v5134, %v5135
        %v5137 = vrot.slane %v5136, 2
        %v5138 = vadd.f32 %v5136, %v5137
        %v5139 = vrot.slane %v5138, 1
        %v5140 = vadd.f32 %v5138, %v5139
        %v5141 = vmul.f32 %v5140, 0.00390625
        %v5142 = vsub.f32 %v4982, %v5141
        %v5143 = vsub.f32 %v4983, %v5141
        %v5144 = vmul.f32 %v5142, %v5142
        %v5145 = vmul.f32 %v5143, %v5143
        %v5146 = vsel %vm4984, %v5144, 0.0
        %5147 = vadd.xlane.f32.xlu0 %v5146
        %v5148 = vpop.xlane.xlu0 %5147
        %v5149 = vsel %vm4984, %v5145, 0.0
        %5150 = vadd.xlane.f32.xlu0 %v5149
        %v5151 = vpop.xlane.xlu0 %5150
        %v5152 = vadd.f32 %v5148, %v5151
        %v5153 = vrot.slane %v5152, 4
        %v5154 = vadd.f32 %v5152, %v5153
        %v5155 = vrot.slane %v5154, 2
        %v5156 = vadd.f32 %v5154, %v5155
        %v5157 = vrot.slane %v5156, 1
        %v5158 = vadd.f32 %v5156, %v5157
        %v5159 = vmul.f32 %v5158, 0.00390625
        %v5160 = vadd.f32 %v5159, 1e-05
        %v5161 = vrsqrt.pop %v5160
        %v5162 = vmul.f32 %v5161, %v5160
        %v5163 = vmul.f32 %v5162, %v5161
        %v5164 = vmul.f32 0.5, %v5163
        %v5165 = vsub.f32 1.5, %v5164
        %v5166 = vmul.f32 %v5161, %v5165
        %vm5167 = vweird.f32 %v5160
        %vm5168 = vweird.f32 %v5161
        %vm5169 = vmor %vm5167, %vm5168
        %v5170 = vsel %vm5169, %v5161, %v5166
        %v5171 = vmul.f32 %v5142, %v5170
        %v5172 = vmul.f32 %v5143, %v5170
        %s5173 = scalar_lea.vmem %s258, 48 [#allocation7]
        %5174 = vst.msk [vmem:[%s5173] sm:$0xff] %vm4984, %v5171
        %5175 = vst.msk [vmem:[%s5173 + $0x8] sm:$0xff] %vm4984, %v5172
        %s5176 = sand.u32 %s160, 1
        %s5177 = scalar_lea.sflag [#allocation5], %s5176
        %s5178 = sand.u32 %s160, 1
        %s5179 = smul.addr %s5178, 64
        %s5180 = scalar_lea.vmem [#allocation7], %s5179
        // Predicated region
        $region49: #{r_forward.1} parent=43 // pred_check
          %p5181 = pneg %p170
        $region50: #{r_forward.1} parent=43 // pred_check_branch
          %5183 = sbr.rel (%p5181) target = $region52
        $region51: #{r_forward.1} parent=43 // pred_region
          %5185 = vsyncadd %s5177, 0
          %s5186 = smul.addr %s21, 8
          %s5187 = smul.addr %s5186, 8
          %s5188 = scalar_lea.hbm %s6, %s5187
          %s5189 = sshll.u32 %s5180, 4
          %s5190 = int_to_ptr.vmem [resolvable:$true] %s5189
          %s5191 = sshll.u32 %s5188, 4
          %s5192 = int_to_ptr.hbm [resolvable:$true] %s5191
          %5197 = dma.vmem_to_hbm [thread:$0]  %s5190, 1024, %s5192, %s5177, 128, 128, 8
        $region52: #{r_forward.1} parent=43 // pred_fallthru
          _
      $region44: #{r_forward.1} parent=5 // pred_fallthru
        _
      %p5198 = scmp.le.s32.totalorder 2, %s16
      // Predicated region
      $region53: #{r_forward.1} parent=5 // pred_check
        %p5199 = pneg %p5198
      $region54: #{r_forward.1} parent=5 // pred_check_branch
        %5201 = sbr.rel (%p5199) target = $region56
      $region55: #{r_forward.1} parent=5 // pred_region
        %s5202 = ssub.s32 %s16, 2
        // Predicated region
        $region57: #{r_forward.1} parent=55 // pred_check
          %p5203 = pneg %p176
        $region58: #{r_forward.1} parent=55 // pred_check_branch
          %5205 = sbr.rel (%p5203) target = $region60
        $region59: #{r_forward.1} parent=55 // pred_region
          %s5206 = sand.u32 %s161, 1
          %s5207 = scalar_lea.sflag [#allocation5], %s5206
          %s5208 = sand.u32 %s161, 1
          %s5209 = smul.addr %s5208, 64
          %s5210 = scalar_lea.vmem [#allocation7], %s5209
          %5212 = dma.done %s5207, 1024
        $region60: #{r_forward.1} parent=55 // pred_fallthru
          _
      $region56: #{r_forward.1} parent=5 // pred_fallthru
        _
    $region6: #{r_forward.1} parent=1 // loop_footer
      %s20 = sadd.s32 1, %s16
    $region7: #{r_forward.1} parent=1 // loop_footer_branch
      %15 = sbr.rel target = $region3
    $region8: #{r_forward.1} parent=1 // loop_exit
      _
    %5213 = vsyncpa [#allocation5], 1
    %s5214 = scalar_lea.sflag [#allocation5], 1
    %5215 = vsyncpa %s5214, 1
    %5216 = vsyncpa [#allocation6], 1
    %s5217 = scalar_lea.sflag [#allocation6], 1
    %5218 = vsyncpa %s5217, 1

</llo_original>
